<compile_context>
chip_gen: v7x
topology: tpu7x:2x2x1
jax: 0.10.0
libtpu: 0.0.40
codegen_flags: <defaults>
</compile_context>

<pallas_src>
import jax
import jax.numpy as jnp
from jax import lax
from jax.experimental import pallas as pl
from jax.experimental.pallas import tpu as pltpu

# ----- small deterministic problem sizes -------------------------------------
B = 2        # batch
T = 8        # target length (max_len)
S = 8        # source length
H = 32       # hidden_size
E = 16       # embedding_dim  (2*E == H so every LSTM layer has input width H)
V = 20       # vocab size
V_PAD = 128  # lane-dense padded vocab for the logits store
L = 2        # number of stacked LSTM-cell layers
G = 4 * H    # gate lanes (128)

NEG_INF = -1e9


def _round8(n):
    return (n + 7) & ~7


# ----- packed weight-slab row offsets (all multiples of 8: tile-aligned) ------
_ROW_W_IH0O = 0                                     # (E, G)   prev-output half of layer-0 W_ih
_ROW_W_IH_HI = _ROW_W_IH0O + _round8(E)             # (L-1) x (H, G)
_ROW_W_HH = _ROW_W_IH_HI + (L - 1) * _round8(H)     # L x (H, G)
_ROW_B_HI = _ROW_W_HH + L * _round8(H)              # (L-1) x (1, G), each in an 8-row block
_ROW_W1T = _ROW_B_HI + (L - 1) * 8                  # (H, H)   top-hidden half of W1
_ROW_W1C = _ROW_W1T + _round8(H)                    # (H, H)   context half of W1
_ROW_B1 = _ROW_W1C + _round8(H)                     # (1, H)
_ROW_W2 = _ROW_B1 + 8                               # (H, E)
_ROW_B2 = _ROW_W2 + _round8(H)                      # (1, E)
_ROW_EMBT = _ROW_B2 + 8                             # (E, V_PAD)  tied embedding, transposed
W_ROWS = _ROW_EMBT + _round8(E)


# ----- Pallas kernel ----------------------------------------------------------
def decoder_kernel(pre0_ref,      # (T, B, G)  hoisted layer-0 gate preact (token emb + bias)
                   mem_ref,       # (B, S, H)  src_memory
                   mem_keyT_ref,  # (B, H, S)  (src_memory @ Wq^T) transposed per batch
                   sbias_ref,     # (B, S)     bq·mem + additive pad mask
                   init_h_ref,    # (L, B, H)
                   init_c_ref,    # (L, B, H)
                   init_out_ref,  # (B, E)
                   w_ref,         # (W_ROWS, 128) packed weight slab
                   logits_ref):   # (T*B, V_PAD)
    # -------- one-time static carves of the packed slab ----------------------
    w_ih0o = w_ref[_ROW_W_IH0O:_ROW_W_IH0O + E, :]                       # (E, G)
    w_ih_hi = [w_ref[_ROW_W_IH_HI + l * _round8(H):
                     _ROW_W_IH_HI + l * _round8(H) + H, :] for l in range(L - 1)]
    w_hh = [w_ref[_ROW_W_HH + l * _round8(H):
                  _ROW_W_HH + l * _round8(H) + H, :] for l in range(L)]
    b_hi = [w_ref[_ROW_B_HI + l * 8:_ROW_B_HI + l * 8 + 1, :] for l in range(L - 1)]
    w1t = w_ref[_ROW_W1T:_ROW_W1T + H, 0:H]                              # (H, H)
    w1c = w_ref[_ROW_W1C:_ROW_W1C + H, 0:H]                              # (H, H)
    b1 = w_ref[_ROW_B1:_ROW_B1 + 1, 0:H]                                 # (1, H)
    w2 = w_ref[_ROW_W2:_ROW_W2 + H, 0:E]                                 # (H, E)
    b2 = w_ref[_ROW_B2:_ROW_B2 + 1, 0:E]                                 # (1, E)
    embT = w_ref[_ROW_EMBT:_ROW_EMBT + E, :]                             # (E, V_PAD)

    sbias = sbias_ref[...]
    mem_b = [mem_ref[b] for b in range(B)]                               # (S, H) each
    mem_keyT_b = [mem_keyT_ref[b] for b in range(B)]                     # (H, S) each

    # recurrent carries live in registers across the static unroll
    h = [init_h_ref[l] for l in range(L)]
    c = [init_c_ref[l] for l in range(L)]
    dec_out = init_out_ref[...]

    dec_outs = []
    for t in range(T):                                                   # static unroll
        # ---- stacked LSTM cells (split matmuls; no lane concat) -------------
        # TODO(synk): on v7x the split-matmul+add pairs could accumulate in the
        # MRB (matmul_push_rhs/acc_lhs/pop); kept split for v5e/v6e FIFO MRF.
        x = None
        for l in range(L):
            if l == 0:
                gin = pre0_ref[t] + jnp.dot(dec_out, w_ih0o,
                                            preferred_element_type=jnp.float32)
            else:
                gin = (jnp.dot(x, w_ih_hi[l - 1],
                               preferred_element_type=jnp.float32) + b_hi[l - 1])
            gates = gin + jnp.dot(h[l], w_hh[l],
                                  preferred_element_type=jnp.float32)    # (B, 4H)
            sig = jax.nn.sigmoid(gates)                                  # full-vreg EUP
            th = jnp.tanh(gates)
            i_g = sig[:, 0:H]
            f_g = sig[:, H:2 * H]
            g_g = th[:, 2 * H:3 * H]
            o_g = sig[:, 3 * H:4 * H]
            c_new = f_g * c[l] + i_g * g_g
            h_new = o_g * jnp.tanh(c_new)
            c[l] = c_new
            h[l] = h_new
            x = h_new
        top = h[L - 1]                                                   # (B, H)

        # ---- dot-product attention on the MXU (query proj folded in) --------
        score_rows = [jnp.dot(top[b:b + 1], mem_keyT_b[b],
                              preferred_element_type=jnp.float32)        # (1, S)
                      for b in range(B)]
        scores = jnp.concatenate(score_rows, axis=0) + sbias             # (B, S)
        m = jnp.max(scores, axis=-1, keepdims=True)
        p = jnp.exp(scores - m)
        attn = p * pl.reciprocal(jnp.sum(p, axis=-1, keepdims=True), approx=True)
        ctx_rows = [jnp.dot(attn[b:b + 1], mem_b[b],
                            preferred_element_type=jnp.float32)          # (1, H)
                    for b in range(B)]
        context = jnp.concatenate(ctx_rows, axis=0)                      # (B, H)

        # ---- output projection (Linear -> Tanh -> Linear), split matmuls ----
        hid = jnp.tanh(jnp.dot(top, w1t, preferred_element_type=jnp.float32)
                       + jnp.dot(context, w1c, preferred_element_type=jnp.float32)
                       + b1)
        dec_out = jnp.dot(hid, w2, preferred_element_type=jnp.float32) + b2  # (B, E)
        dec_outs.append(dec_out)

    # ---- deferred tied-embedding logits: ONE matmul, dense full-vreg store ---
    dec_all = jnp.concatenate(dec_outs, axis=0)                          # (T*B, E)
    logits_ref[...] = jnp.dot(dec_all, embT,
                              preferred_element_type=jnp.float32)        # (T*B, V_PAD)


# ----- wrapper -----------------------------------------------------------------
def decoder_forward(trg, src_memory, src_mask, init_h, init_c, init_out, params):
    emb_w, w_ih, w_hh, b_lstm, wq, bq, w1, b1, w2, b2 = params

    # ---- recurrence-independent precomputes (one-shot XLA ops) ---------------
    tok_embs = emb_w[trg]                                                # (B, T, E)
    pre0 = jnp.einsum('bte,eg->btg', tok_embs, w_ih[0][:E, :]) + b_lstm[0]
    pre0 = jnp.transpose(pre0, (1, 0, 2))                                # (T, B, 4H)
    mem_keyT = jnp.einsum('bsh,kh->bks', src_memory, wq)                 # (B, H, S)
    sbias = (jnp.einsum('bsh,h->bs', src_memory, bq[0])
             + (1.0 - src_mask) * NEG_INF)                               # (B, S)

    # ---- pack all small weights into one lane-dense (W_ROWS, 128) slab -------
    slab = jnp.zeros((W_ROWS, 128), jnp.float32)
    slab = slab.at[_ROW_W_IH0O:_ROW_W_IH0O + E, :].set(w_ih[0][E:, :])
    for l in range(L - 1):
        r = _ROW_W_IH_HI + l * _round8(H)
        slab = slab.at[r:r + H, :].set(w_ih[l + 1])
    for l in range(L):
        r = _ROW_W_HH + l * _round8(H)
        slab = slab.at[r:r + H, :].set(w_hh[l])
    for l in range(L - 1):
        r = _ROW_B_HI + l * 8
        slab = slab.at[r:r + 1, :].set(b_lstm[l + 1])
    slab = slab.at[_ROW_W1T:_ROW_W1T + H, 0:H].set(w1[:H, :])
    slab = slab.at[_ROW_W1C:_ROW_W1C + H, 0:H].set(w1[H:, :])
    slab = slab.at[_ROW_B1:_ROW_B1 + 1, 0:H].set(b1)
    slab = slab.at[_ROW_W2:_ROW_W2 + H, 0:E].set(w2)
    slab = slab.at[_ROW_B2:_ROW_B2 + 1, 0:E].set(b2)
    slab = slab.at[_ROW_EMBT:_ROW_EMBT + E, 0:V].set(emb_w.T)

    inputs = (pre0, src_memory, mem_keyT, sbias, init_h, init_c, init_out, slab)

    vmem = pltpu.MemorySpace.VMEM
    in_specs = [pl.BlockSpec(memory_space=vmem) for _ in inputs]
    out_specs = pl.BlockSpec(memory_space=vmem)

    # advisory cost estimate (rough)
    flops_step = (2 * B * E * G + 2 * B * H * G
                  + (L - 1) * (2 * 2 * B * H * G)
                  + 2 * 2 * B * S * H
                  + 2 * 2 * B * H * H + 2 * B * H * E)
    flops = T * flops_step + 2 * (T * B) * E * V_PAD
    transcendentals = T * (L * (2 * B * G + B * H) + B * H + B * S + B)
    bytes_accessed = 4 * (sum(int(x.size) for x in inputs) + T * B * V_PAD)
    cost = pl.CostEstimate(flops=int(flops),
                           transcendentals=int(transcendentals),
                           bytes_accessed=int(bytes_accessed))

    # Single gridless invocation: everything resident in VMEM (<1 MiB), output
    # is a dense (T*B, 128) slab so every store is a full 128-lane vreg.
    logits_flat = pl.pallas_call(
        decoder_kernel,
        out_shape=jax.ShapeDtypeStruct((T * B, V_PAD), jnp.float32),
        in_specs=in_specs,
        out_specs=out_specs,
        cost_estimate=cost,
    )(*inputs)

    logits = logits_flat.reshape(T, B, V_PAD)[:, :, :V]                  # (T, B, V)
    return jnp.transpose(logits, (1, 0, 2))                             # (B, T, V)


# ----- pure-JAX reference (original math) for a sanity check --------------------
def decoder_forward_ref(trg, src_memory, src_mask, init_h, init_c, init_out, params):
    emb_w, w_ih, w_hh, b_lstm, wq, bq, w1, b1, w2, b2 = params
    h, c, dec_out = init_h, init_c, init_out
    logits = []
    for t in range(T):
        tok = trg[:, t]
        token_emb = emb_w[tok]                                           # (B, E)
        x = jnp.concatenate([token_emb, dec_out], axis=1)
        new_h, new_c = [], []
        for l in range(L):
            gates = x @ w_ih[l] + h[l] @ w_hh[l] + b_lstm[l]
            i_g = jax.nn.sigmoid(gates[:, 0:H])
            f_g = jax.nn.sigmoid(gates[:, H:2 * H])
            g_g = jnp.tanh(gates[:, 2 * H:3 * H])
            o_g = jax.nn.sigmoid(gates[:, 3 * H:4 * H])
            c_new = f_g * c[l] + i_g * g_g
            h_new = o_g * jnp.tanh(c_new)
            new_h.append(h_new)
            new_c.append(c_new)
            x = h_new
        h = jnp.stack(new_h)
        c = jnp.stack(new_c)
        top = new_h[-1]
        q = top @ wq + bq
        scores = jnp.einsum('bh,bsh->bs', q, src_memory)
        scores = jnp.where(src_mask > 0, scores, NEG_INF)
        attn = jax.nn.softmax(scores, axis=1)
        ctx = jnp.einsum('bs,bsh->bh', attn, src_memory)
        cat = jnp.concatenate([top, ctx], axis=1)
        dec_out = jnp.tanh(cat @ w1 + b1) @ w2 + b2
        logits.append(dec_out @ emb_w.T)
    return jnp.stack(logits, axis=1)


# ----- main ----------------------------------------------------------------------
if __name__ == "__main__":
    key = jax.random.PRNGKey(0)
    ks = jax.random.split(key, 16)

    # deterministic synthetic parameters
    emb_w = jax.random.normal(ks[0], (V, E), jnp.float32) * 0.1
    w_ih = jax.random.normal(ks[1], (L, 2 * E, 4 * H), jnp.float32) * 0.1   # 2E == H
    w_hh = jax.random.normal(ks[2], (L, H, 4 * H), jnp.float32) * 0.1
    b_lstm = jax.random.normal(ks[3], (L, 1, 4 * H), jnp.float32) * 0.1
    wq = jax.random.normal(ks[4], (H, H), jnp.float32) * 0.1
    bq = jax.random.normal(ks[5], (1, H), jnp.float32) * 0.1
    w1 = jax.random.normal(ks[6], (2 * H, H), jnp.float32) * 0.1
    b1 = jax.random.normal(ks[7], (1, H), jnp.float32) * 0.1
    w2 = jax.random.normal(ks[8], (H, E), jnp.float32) * 0.1
    b2 = jax.random.normal(ks[9], (1, E), jnp.float32) * 0.1
    params = (emb_w, w_ih, w_hh, b_lstm, wq, bq, w1, b1, w2, b2)

    # deterministic synthetic inputs
    trg = jax.random.randint(ks[10], (B, T), 0, V, jnp.int32)
    src_memory = jax.random.normal(ks[11], (B, S, H), jnp.float32)
    src_lens = jnp.array([S, S - 3], jnp.int32)
    src_mask = (jnp.arange(S)[None, :] < src_lens[:, None]).astype(jnp.float32)
    init_h = jax.random.normal(ks[12], (L, B, H), jnp.float32) * 0.1
    init_c = jax.random.normal(ks[13], (L, B, H), jnp.float32) * 0.1
    init_out = jax.random.normal(ks[14], (B, E), jnp.float32) * 0.1

    logits = decoder_forward(trg, src_memory, src_mask, init_h, init_c, init_out, params)
    logits = jax.block_until_ready(logits)
    assert logits.shape == (B, T, V), logits.shape

    ref = decoder_forward_ref(trg, src_memory, src_mask, init_h, init_c, init_out, params)
    assert jnp.allclose(logits, ref, atol=1e-2, rtol=1e-2), \
        float(jnp.max(jnp.abs(logits - ref)))

    print("KERNEL_OK")
</pallas_src>

<mosaic_0001>
module attributes {stable_mosaic.version = 11 : i64} {
  func.func @decoder_kernel(%arg0: memref<8x2x128xf32, #tpu.memory_space<vmem>>, %arg1: memref<2x8x32xf32, #tpu.memory_space<vmem>>, %arg2: memref<2x32x8xf32, #tpu.memory_space<vmem>>, %arg3: memref<2x8xf32, #tpu.memory_space<vmem>>, %arg4: memref<2x2x32xf32, #tpu.memory_space<vmem>>, %arg5: memref<2x2x32xf32, #tpu.memory_space<vmem>>, %arg6: memref<2x16xf32, #tpu.memory_space<vmem>>, %arg7: memref<248x128xf32, #tpu.memory_space<vmem>>, %arg8: memref<16x128xf32, #tpu.memory_space<vmem>>) attributes {dimension_semantics = [], scalar_prefetch = 0 : i64, scratch_operands = 0 : i64, tpu.core_type = #tpu.core_type<tc>} {
    %c0 = arith.constant 0 : index
    %c0_0 = arith.constant 0 : index
    %0 = vector.load %arg7[%c0, %c0_0] : memref<248x128xf32, #tpu.memory_space<vmem>>, vector<16x128xf32>
    %c16 = arith.constant 16 : index
    %c0_1 = arith.constant 0 : index
    %1 = vector.load %arg7[%c16, %c0_1] : memref<248x128xf32, #tpu.memory_space<vmem>>, vector<32x128xf32>
    %c48 = arith.constant 48 : index
    %c0_2 = arith.constant 0 : index
    %2 = vector.load %arg7[%c48, %c0_2] : memref<248x128xf32, #tpu.memory_space<vmem>>, vector<32x128xf32>
    %c80 = arith.constant 80 : index
    %c0_3 = arith.constant 0 : index
    %3 = vector.load %arg7[%c80, %c0_3] : memref<248x128xf32, #tpu.memory_space<vmem>>, vector<32x128xf32>
    %c112 = arith.constant 112 : index
    %c0_4 = arith.constant 0 : index
    %4 = vector.load %arg7[%c112, %c0_4] : memref<248x128xf32, #tpu.memory_space<vmem>>, vector<1x128xf32>
    %c120 = arith.constant 120 : index
    %c0_5 = arith.constant 0 : index
    %5 = vector.load %arg7[%c120, %c0_5] : memref<248x128xf32, #tpu.memory_space<vmem>>, vector<32x32xf32>
    %c152 = arith.constant 152 : index
    %c0_6 = arith.constant 0 : index
    %6 = vector.load %arg7[%c152, %c0_6] : memref<248x128xf32, #tpu.memory_space<vmem>>, vector<32x32xf32>
    %c184 = arith.constant 184 : index
    %c0_7 = arith.constant 0 : index
    %7 = vector.load %arg7[%c184, %c0_7] : memref<248x128xf32, #tpu.memory_space<vmem>>, vector<1x32xf32>
    %c192 = arith.constant 192 : index
    %c0_8 = arith.constant 0 : index
    %8 = vector.load %arg7[%c192, %c0_8] : memref<248x128xf32, #tpu.memory_space<vmem>>, vector<32x16xf32>
    %c224 = arith.constant 224 : index
    %c0_9 = arith.constant 0 : index
    %9 = vector.load %arg7[%c224, %c0_9] : memref<248x128xf32, #tpu.memory_space<vmem>>, vector<1x16xf32>
    %c232 = arith.constant 232 : index
    %c0_10 = arith.constant 0 : index
    %10 = vector.load %arg7[%c232, %c0_10] : memref<248x128xf32, #tpu.memory_space<vmem>>, vector<16x128xf32>
    %c0_11 = arith.constant 0 : index
    %c0_12 = arith.constant 0 : index
    %11 = vector.load %arg3[%c0_11, %c0_12] : memref<2x8xf32, #tpu.memory_space<vmem>>, vector<2x8xf32>
    %c0_13 = arith.constant 0 : index
    %c0_14 = arith.constant 0 : index
    %c0_15 = arith.constant 0 : index
    %12 = vector.load %arg1[%c0_13, %c0_14, %c0_15] : memref<2x8x32xf32, #tpu.memory_space<vmem>>, vector<1x8x32xf32>
    %13 = vector.shape_cast %12 : vector<1x8x32xf32> to vector<8x32xf32>
    %c1 = arith.constant 1 : index
    %c0_16 = arith.constant 0 : index
    %c0_17 = arith.constant 0 : index
    %14 = vector.load %arg1[%c1, %c0_16, %c0_17] : memref<2x8x32xf32, #tpu.memory_space<vmem>>, vector<1x8x32xf32>
    %15 = vector.shape_cast %14 : vector<1x8x32xf32> to vector<8x32xf32>
    %c0_18 = arith.constant 0 : index
    %c0_19 = arith.constant 0 : index
    %c0_20 = arith.constant 0 : index
    %16 = vector.load %arg2[%c0_18, %c0_19, %c0_20] : memref<2x32x8xf32, #tpu.memory_space<vmem>>, vector<1x32x8xf32>
    %17 = vector.shape_cast %16 : vector<1x32x8xf32> to vector<32x8xf32>
    %c1_21 = arith.constant 1 : index
    %c0_22 = arith.constant 0 : index
    %c0_23 = arith.constant 0 : index
    %18 = vector.load %arg2[%c1_21, %c0_22, %c0_23] : memref<2x32x8xf32, #tpu.memory_space<vmem>>, vector<1x32x8xf32>
    %19 = vector.shape_cast %18 : vector<1x32x8xf32> to vector<32x8xf32>
    %c0_24 = arith.constant 0 : index
    %c0_25 = arith.constant 0 : index
    %c0_26 = arith.constant 0 : index
    %20 = vector.load %arg4[%c0_24, %c0_25, %c0_26] : memref<2x2x32xf32, #tpu.memory_space<vmem>>, vector<1x2x32xf32>
    %21 = vector.shape_cast %20 : vector<1x2x32xf32> to vector<2x32xf32>
    %c1_27 = arith.constant 1 : index
    %c0_28 = arith.constant 0 : index
    %c0_29 = arith.constant 0 : index
    %22 = vector.load %arg4[%c1_27, %c0_28, %c0_29] : memref<2x2x32xf32, #tpu.memory_space<vmem>>, vector<1x2x32xf32>
    %23 = vector.shape_cast %22 : vector<1x2x32xf32> to vector<2x32xf32>
    %c0_30 = arith.constant 0 : index
    %c0_31 = arith.constant 0 : index
    %c0_32 = arith.constant 0 : index
    %24 = vector.load %arg5[%c0_30, %c0_31, %c0_32] : memref<2x2x32xf32, #tpu.memory_space<vmem>>, vector<1x2x32xf32>
    %25 = vector.shape_cast %24 : vector<1x2x32xf32> to vector<2x32xf32>
    %c1_33 = arith.constant 1 : index
    %c0_34 = arith.constant 0 : index
    %c0_35 = arith.constant 0 : index
    %26 = vector.load %arg5[%c1_33, %c0_34, %c0_35] : memref<2x2x32xf32, #tpu.memory_space<vmem>>, vector<1x2x32xf32>
    %27 = vector.shape_cast %26 : vector<1x2x32xf32> to vector<2x32xf32>
    %c0_36 = arith.constant 0 : index
    %c0_37 = arith.constant 0 : index
    %28 = vector.load %arg6[%c0_36, %c0_37] : memref<2x16xf32, #tpu.memory_space<vmem>>, vector<2x16xf32>
    %c0_38 = arith.constant 0 : index
    %c0_39 = arith.constant 0 : index
    %c0_40 = arith.constant 0 : index
    %29 = vector.load %arg0[%c0_38, %c0_39, %c0_40] : memref<8x2x128xf32, #tpu.memory_space<vmem>>, vector<1x2x128xf32>
    %30 = vector.shape_cast %29 : vector<1x2x128xf32> to vector<2x128xf32>
    %cst = arith.constant dense<0.000000e+00> : vector<2x128xf32>
    %31 = tpu.matmul %28, %0, %cst {dimension_numbers = #tpu.dot_dimension_numbers<[1], [0], [0], [1], [0, 0, 1, 1], [], []>} : vector<2x16xf32>, vector<16x128xf32>, vector<2x128xf32> -> vector<2x128xf32>
    %32 = arith.addf %30, %31 : vector<2x128xf32>
    %cst_41 = arith.constant dense<0.000000e+00> : vector<2x128xf32>
    %33 = tpu.matmul %21, %2, %cst_41 {dimension_numbers = #tpu.dot_dimension_numbers<[1], [0], [0], [1], [0, 0, 1, 1], [], []>} : vector<2x32xf32>, vector<32x128xf32>, vector<2x128xf32> -> vector<2x128xf32>
    %34 = arith.addf %32, %33 : vector<2x128xf32>
    %35 = arith.negf %34 : vector<2x128xf32>
    %36 = math.exp %35 : vector<2x128xf32>
    %cst_42 = arith.constant 1.000000e+00 : f32
    %37 = vector.broadcast %cst_42 : f32 to vector<2x128xf32>
    %38 = arith.addf %37, %36 : vector<2x128xf32>
    %39 = arith.divf %37, %38 : vector<2x128xf32>
    %40 = math.tanh %34 : vector<2x128xf32>
    %41 = vector.extract_strided_slice %39 {offsets = [0, 0], sizes = [2, 32], strides = [1, 1]} : vector<2x128xf32> to vector<2x32xf32>
    %42 = vector.extract_strided_slice %39 {offsets = [0, 32], sizes = [2, 32], strides = [1, 1]} : vector<2x128xf32> to vector<2x32xf32>
    %43 = vector.extract_strided_slice %40 {offsets = [0, 64], sizes = [2, 32], strides = [1, 1]} : vector<2x128xf32> to vector<2x32xf32>
    %44 = vector.extract_strided_slice %39 {offsets = [0, 96], sizes = [2, 32], strides = [1, 1]} : vector<2x128xf32> to vector<2x32xf32>
    %45 = arith.mulf %42, %25 : vector<2x32xf32>
    %46 = arith.mulf %41, %43 : vector<2x32xf32>
    %47 = arith.addf %45, %46 : vector<2x32xf32>
    %48 = math.tanh %47 : vector<2x32xf32>
    %49 = arith.mulf %44, %48 : vector<2x32xf32>
    %cst_43 = arith.constant dense<0.000000e+00> : vector<2x128xf32>
    %50 = tpu.matmul %49, %1, %cst_43 {dimension_numbers = #tpu.dot_dimension_numbers<[1], [0], [0], [1], [0, 0, 1, 1], [], []>} : vector<2x32xf32>, vector<32x128xf32>, vector<2x128xf32> -> vector<2x128xf32>
    %51 = vector.broadcast %4 : vector<1x128xf32> to vector<2x128xf32>
    %52 = arith.addf %50, %51 : vector<2x128xf32>
    %cst_44 = arith.constant dense<0.000000e+00> : vector<2x128xf32>
    %53 = tpu.matmul %23, %3, %cst_44 {dimension_numbers = #tpu.dot_dimension_numbers<[1], [0], [0], [1], [0, 0, 1, 1], [], []>} : vector<2x32xf32>, vector<32x128xf32>, vector<2x128xf32> -> vector<2x128xf32>
    %54 = arith.addf %52, %53 : vector<2x128xf32>
    %55 = arith.negf %54 : vector<2x128xf32>
    %56 = math.exp %55 : vector<2x128xf32>
    %cst_45 = arith.constant 1.000000e+00 : f32
    %57 = vector.broadcast %cst_45 : f32 to vector<2x128xf32>
    %58 = arith.addf %57, %56 : vector<2x128xf32>
    %59 = arith.divf %57, %58 : vector<2x128xf32>
    %60 = math.tanh %54 : vector<2x128xf32>
    %61 = vector.extract_strided_slice %59 {offsets = [0, 0], sizes = [2, 32], strides = [1, 1]} : vector<2x128xf32> to vector<2x32xf32>
    %62 = vector.extract_strided_slice %59 {offsets = [0, 32], sizes = [2, 32], strides = [1, 1]} : vector<2x128xf32> to vector<2x32xf32>
    %63 = vector.extract_strided_slice %60 {offsets = [0, 64], sizes = [2, 32], strides = [1, 1]} : vector<2x128xf32> to vector<2x32xf32>
    %64 = vector.extract_strided_slice %59 {offsets = [0, 96], sizes = [2, 32], strides = [1, 1]} : vector<2x128xf32> to vector<2x32xf32>
    %65 = arith.mulf %62, %27 : vector<2x32xf32>
    %66 = arith.mulf %61, %63 : vector<2x32xf32>
    %67 = arith.addf %65, %66 : vector<2x32xf32>
    %68 = math.tanh %67 : vector<2x32xf32>
    %69 = arith.mulf %64, %68 : vector<2x32xf32>
    %70 = vector.extract_strided_slice %69 {offsets = [0, 0], sizes = [1, 32], strides = [1, 1]} : vector<2x32xf32> to vector<1x32xf32>
    %cst_46 = arith.constant dense<0.000000e+00> : vector<1x8xf32>
    %71 = tpu.matmul %70, %17, %cst_46 {dimension_numbers = #tpu.dot_dimension_numbers<[1], [0], [0], [1], [0, 0, 1, 1], [], []>} : vector<1x32xf32>, vector<32x8xf32>, vector<1x8xf32> -> vector<1x8xf32>
    %72 = vector.extract_strided_slice %69 {offsets = [1, 0], sizes = [1, 32], strides = [1, 1]} : vector<2x32xf32> to vector<1x32xf32>
    %cst_47 = arith.constant dense<0.000000e+00> : vector<1x8xf32>
    %73 = tpu.matmul %72, %19, %cst_47 {dimension_numbers = #tpu.dot_dimension_numbers<[1], [0], [0], [1], [0, 0, 1, 1], [], []>} : vector<1x32xf32>, vector<32x8xf32>, vector<1x8xf32> -> vector<1x8xf32>
    %74 = tpu.concatenate %71, %73 in 0 : vector<1x8xf32>, vector<1x8xf32> -> vector<2x8xf32>
    %75 = arith.addf %74, %11 : vector<2x8xf32>
    %cst_48 = arith.constant dense<0xFF800000> : vector<2xf32>
    %76 = vector.multi_reduction <maximumf>, %75, %cst_48 [1] : vector<2x8xf32> to vector<2xf32>
    %77 = vector.shape_cast %76 : vector<2xf32> to vector<2x1xf32>
    %78 = vector.broadcast %77 : vector<2x1xf32> to vector<2x8xf32>
    %79 = arith.subf %75, %78 : vector<2x8xf32>
    %80 = math.exp %79 : vector<2x8xf32>
    %cst_49 = arith.constant dense<0.000000e+00> : vector<2xf32>
    %81 = vector.multi_reduction <add>, %80, %cst_49 [1] : vector<2x8xf32> to vector<2xf32>
    %82 = vector.shape_cast %81 : vector<2xf32> to vector<2x1xf32>
    %83 = tpu.reciprocal %82 {approx = true} : vector<2x1xf32> -> vector<2x1xf32>
    %84 = vector.broadcast %83 : vector<2x1xf32> to vector<2x8xf32>
    %85 = arith.mulf %80, %84 : vector<2x8xf32>
    %86 = vector.extract_strided_slice %85 {offsets = [0, 0], sizes = [1, 8], strides = [1, 1]} : vector<2x8xf32> to vector<1x8xf32>
    %cst_50 = arith.constant dense<0.000000e+00> : vector<1x32xf32>
    %87 = tpu.matmul %86, %13, %cst_50 {dimension_numbers = #tpu.dot_dimension_numbers<[1], [0], [0], [1], [0, 0, 1, 1], [], []>} : vector<1x8xf32>, vector<8x32xf32>, vector<1x32xf32> -> vector<1x32xf32>
    %88 = vector.extract_strided_slice %85 {offsets = [1, 0], sizes = [1, 8], strides = [1, 1]} : vector<2x8xf32> to vector<1x8xf32>
    %cst_51 = arith.constant dense<0.000000e+00> : vector<1x32xf32>
    %89 = tpu.matmul %88, %15, %cst_51 {dimension_numbers = #tpu.dot_dimension_numbers<[1], [0], [0], [1], [0, 0, 1, 1], [], []>} : vector<1x8xf32>, vector<8x32xf32>, vector<1x32xf32> -> vector<1x32xf32>
    %90 = tpu.concatenate %87, %89 in 0 : vector<1x32xf32>, vector<1x32xf32> -> vector<2x32xf32>
    %cst_52 = arith.constant dense<0.000000e+00> : vector<2x32xf32>
    %91 = tpu.matmul %69, %5, %cst_52 {dimension_numbers = #tpu.dot_dimension_numbers<[1], [0], [0], [1], [0, 0, 1, 1], [], []>} : vector<2x32xf32>, vector<32x32xf32>, vector<2x32xf32> -> vector<2x32xf32>
    %cst_53 = arith.constant dense<0.000000e+00> : vector<2x32xf32>
    %92 = tpu.matmul %90, %6, %cst_53 {dimension_numbers = #tpu.dot_dimension_numbers<[1], [0], [0], [1], [0, 0, 1, 1], [], []>} : vector<2x32xf32>, vector<32x32xf32>, vector<2x32xf32> -> vector<2x32xf32>
    %93 = arith.addf %91, %92 : vector<2x32xf32>
    %94 = vector.broadcast %7 : vector<1x32xf32> to vector<2x32xf32>
    %95 = arith.addf %93, %94 : vector<2x32xf32>
    %96 = math.tanh %95 : vector<2x32xf32>
    %cst_54 = arith.constant dense<0.000000e+00> : vector<2x16xf32>
    %97 = tpu.matmul %96, %8, %cst_54 {dimension_numbers = #tpu.dot_dimension_numbers<[1], [0], [0], [1], [0, 0, 1, 1], [], []>} : vector<2x32xf32>, vector<32x16xf32>, vector<2x16xf32> -> vector<2x16xf32>
    %98 = vector.broadcast %9 : vector<1x16xf32> to vector<2x16xf32>
    %99 = arith.addf %97, %98 : vector<2x16xf32>
    %c1_55 = arith.constant 1 : index
    %c0_56 = arith.constant 0 : index
    %c0_57 = arith.constant 0 : index
    %100 = vector.load %arg0[%c1_55, %c0_56, %c0_57] : memref<8x2x128xf32, #tpu.memory_space<vmem>>, vector<1x2x128xf32>
    %101 = vector.shape_cast %100 : vector<1x2x128xf32> to vector<2x128xf32>
    %cst_58 = arith.constant dense<0.000000e+00> : vector<2x128xf32>
    %102 = tpu.matmul %99, %0, %cst_58 {dimension_numbers = #tpu.dot_dimension_numbers<[1], [0], [0], [1], [0, 0, 1, 1], [], []>} : vector<2x16xf32>, vector<16x128xf32>, vector<2x128xf32> -> vector<2x128xf32>
    %103 = arith.addf %101, %102 : vector<2x128xf32>
    %cst_59 = arith.constant dense<0.000000e+00> : vector<2x128xf32>
    %104 = tpu.matmul %49, %2, %cst_59 {dimension_numbers = #tpu.dot_dimension_numbers<[1], [0], [0], [1], [0, 0, 1, 1], [], []>} : vector<2x32xf32>, vector<32x128xf32>, vector<2x128xf32> -> vector<2x128xf32>
    %105 = arith.addf %103, %104 : vector<2x128xf32>
    %106 = arith.negf %105 : vector<2x128xf32>
    %107 = math.exp %106 : vector<2x128xf32>
    %cst_60 = arith.constant 1.000000e+00 : f32
    %108 = vector.broadcast %cst_60 : f32 to vector<2x128xf32>
    %109 = arith.addf %108, %107 : vector<2x128xf32>
    %110 = arith.divf %108, %109 : vector<2x128xf32>
    %111 = math.tanh %105 : vector<2x128xf32>
    %112 = vector.extract_strided_slice %110 {offsets = [0, 0], sizes = [2, 32], strides = [1, 1]} : vector<2x128xf32> to vector<2x32xf32>
    %113 = vector.extract_strided_slice %110 {offsets = [0, 32], sizes = [2, 32], strides = [1, 1]} : vector<2x128xf32> to vector<2x32xf32>
    %114 = vector.extract_strided_slice %111 {offsets = [0, 64], sizes = [2, 32], strides = [1, 1]} : vector<2x128xf32> to vector<2x32xf32>
    %115 = vector.extract_strided_slice %110 {offsets = [0, 96], sizes = [2, 32], strides = [1, 1]} : vector<2x128xf32> to vector<2x32xf32>
    %116 = arith.mulf %113, %47 : vector<2x32xf32>
    %117 = arith.mulf %112, %114 : vector<2x32xf32>
    %118 = arith.addf %116, %117 : vector<2x32xf32>
    %119 = math.tanh %118 : vector<2x32xf32>
    %120 = arith.mulf %115, %119 : vector<2x32xf32>
    %cst_61 = arith.constant dense<0.000000e+00> : vector<2x128xf32>
    %121 = tpu.matmul %120, %1, %cst_61 {dimension_numbers = #tpu.dot_dimension_numbers<[1], [0], [0], [1], [0, 0, 1, 1], [], []>} : vector<2x32xf32>, vector<32x128xf32>, vector<2x128xf32> -> vector<2x128xf32>
    %122 = vector.broadcast %4 : vector<1x128xf32> to vector<2x128xf32>
    %123 = arith.addf %121, %122 : vector<2x128xf32>
    %cst_62 = arith.constant dense<0.000000e+00> : vector<2x128xf32>
    %124 = tpu.matmul %69, %3, %cst_62 {dimension_numbers = #tpu.dot_dimension_numbers<[1], [0], [0], [1], [0, 0, 1, 1], [], []>} : vector<2x32xf32>, vector<32x128xf32>, vector<2x128xf32> -> vector<2x128xf32>
    %125 = arith.addf %123, %124 : vector<2x128xf32>
    %126 = arith.negf %125 : vector<2x128xf32>
    %127 = math.exp %126 : vector<2x128xf32>
    %cst_63 = arith.constant 1.000000e+00 : f32
    %128 = vector.broadcast %cst_63 : f32 to vector<2x128xf32>
    %129 = arith.addf %128, %127 : vector<2x128xf32>
    %130 = arith.divf %128, %129 : vector<2x128xf32>
    %131 = math.tanh %125 : vector<2x128xf32>
    %132 = vector.extract_strided_slice %130 {offsets = [0, 0], sizes = [2, 32], strides = [1, 1]} : vector<2x128xf32> to vector<2x32xf32>
    %133 = vector.extract_strided_slice %130 {offsets = [0, 32], sizes = [2, 32], strides = [1, 1]} : vector<2x128xf32> to vector<2x32xf32>
    %134 = vector.extract_strided_slice %131 {offsets = [0, 64], sizes = [2, 32], strides = [1, 1]} : vector<2x128xf32> to vector<2x32xf32>
    %135 = vector.extract_strided_slice %130 {offsets = [0, 96], sizes = [2, 32], strides = [1, 1]} : vector<2x128xf32> to vector<2x32xf32>
    %136 = arith.mulf %133, %67 : vector<2x32xf32>
    %137 = arith.mulf %132, %134 : vector<2x32xf32>
    %138 = arith.addf %136, %137 : vector<2x32xf32>
    %139 = math.tanh %138 : vector<2x32xf32>
    %140 = arith.mulf %135, %139 : vector<2x32xf32>
    %141 = vector.extract_strided_slice %140 {offsets = [0, 0], sizes = [1, 32], strides = [1, 1]} : vector<2x32xf32> to vector<1x32xf32>
    %cst_64 = arith.constant dense<0.000000e+00> : vector<1x8xf32>
    %142 = tpu.matmul %141, %17, %cst_64 {dimension_numbers = #tpu.dot_dimension_numbers<[1], [0], [0], [1], [0, 0, 1, 1], [], []>} : vector<1x32xf32>, vector<32x8xf32>, vector<1x8xf32> -> vector<1x8xf32>
    %143 = vector.extract_strided_slice %140 {offsets = [1, 0], sizes = [1, 32], strides = [1, 1]} : vector<2x32xf32> to vector<1x32xf32>
    %cst_65 = arith.constant dense<0.000000e+00> : vector<1x8xf32>
    %144 = tpu.matmul %143, %19, %cst_65 {dimension_numbers = #tpu.dot_dimension_numbers<[1], [0], [0], [1], [0, 0, 1, 1], [], []>} : vector<1x32xf32>, vector<32x8xf32>, vector<1x8xf32> -> vector<1x8xf32>
    %145 = tpu.concatenate %142, %144 in 0 : vector<1x8xf32>, vector<1x8xf32> -> vector<2x8xf32>
    %146 = arith.addf %145, %11 : vector<2x8xf32>
    %cst_66 = arith.constant dense<0xFF800000> : vector<2xf32>
    %147 = vector.multi_reduction <maximumf>, %146, %cst_66 [1] : vector<2x8xf32> to vector<2xf32>
    %148 = vector.shape_cast %147 : vector<2xf32> to vector<2x1xf32>
    %149 = vector.broadcast %148 : vector<2x1xf32> to vector<2x8xf32>
    %150 = arith.subf %146, %149 : vector<2x8xf32>
    %151 = math.exp %150 : vector<2x8xf32>
    %cst_67 = arith.constant dense<0.000000e+00> : vector<2xf32>
    %152 = vector.multi_reduction <add>, %151, %cst_67 [1] : vector<2x8xf32> to vector<2xf32>
    %153 = vector.shape_cast %152 : vector<2xf32> to vector<2x1xf32>
    %154 = tpu.reciprocal %153 {approx = true} : vector<2x1xf32> -> vector<2x1xf32>
    %155 = vector.broadcast %154 : vector<2x1xf32> to vector<2x8xf32>
    %156 = arith.mulf %151, %155 : vector<2x8xf32>
    %157 = vector.extract_strided_slice %156 {offsets = [0, 0], sizes = [1, 8], strides = [1, 1]} : vector<2x8xf32> to vector<1x8xf32>
    %cst_68 = arith.constant dense<0.000000e+00> : vector<1x32xf32>
    %158 = tpu.matmul %157, %13, %cst_68 {dimension_numbers = #tpu.dot_dimension_numbers<[1], [0], [0], [1], [0, 0, 1, 1], [], []>} : vector<1x8xf32>, vector<8x32xf32>, vector<1x32xf32> -> vector<1x32xf32>
    %159 = vector.extract_strided_slice %156 {offsets = [1, 0], sizes = [1, 8], strides = [1, 1]} : vector<2x8xf32> to vector<1x8xf32>
    %cst_69 = arith.constant dense<0.000000e+00> : vector<1x32xf32>
    %160 = tpu.matmul %159, %15, %cst_69 {dimension_numbers = #tpu.dot_dimension_numbers<[1], [0], [0], [1], [0, 0, 1, 1], [], []>} : vector<1x8xf32>, vector<8x32xf32>, vector<1x32xf32> -> vector<1x32xf32>
    %161 = tpu.concatenate %158, %160 in 0 : vector<1x32xf32>, vector<1x32xf32> -> vector<2x32xf32>
    %cst_70 = arith.constant dense<0.000000e+00> : vector<2x32xf32>
    %162 = tpu.matmul %140, %5, %cst_70 {dimension_numbers = #tpu.dot_dimension_numbers<[1], [0], [0], [1], [0, 0, 1, 1], [], []>} : vector<2x32xf32>, vector<32x32xf32>, vector<2x32xf32> -> vector<2x32xf32>
    %cst_71 = arith.constant dense<0.000000e+00> : vector<2x32xf32>
    %163 = tpu.matmul %161, %6, %cst_71 {dimension_numbers = #tpu.dot_dimension_numbers<[1], [0], [0], [1], [0, 0, 1, 1], [], []>} : vector<2x32xf32>, vector<32x32xf32>, vector<2x32xf32> -> vector<2x32xf32>
    %164 = arith.addf %162, %163 : vector<2x32xf32>
    %165 = vector.broadcast %7 : vector<1x32xf32> to vector<2x32xf32>
    %166 = arith.addf %164, %165 : vector<2x32xf32>
    %167 = math.tanh %166 : vector<2x32xf32>
    %cst_72 = arith.constant dense<0.000000e+00> : vector<2x16xf32>
    %168 = tpu.matmul %167, %8, %cst_72 {dimension_numbers = #tpu.dot_dimension_numbers<[1], [0], [0], [1], [0, 0, 1, 1], [], []>} : vector<2x32xf32>, vector<32x16xf32>, vector<2x16xf32> -> vector<2x16xf32>
    %169 = vector.broadcast %9 : vector<1x16xf32> to vector<2x16xf32>
    %170 = arith.addf %168, %169 : vector<2x16xf32>
    %c2 = arith.constant 2 : index
    %c0_73 = arith.constant 0 : index
    %c0_74 = arith.constant 0 : index
    %171 = vector.load %arg0[%c2, %c0_73, %c0_74] : memref<8x2x128xf32, #tpu.memory_space<vmem>>, vector<1x2x128xf32>
    %172 = vector.shape_cast %171 : vector<1x2x128xf32> to vector<2x128xf32>
    %cst_75 = arith.constant dense<0.000000e+00> : vector<2x128xf32>
    %173 = tpu.matmul %170, %0, %cst_75 {dimension_numbers = #tpu.dot_dimension_numbers<[1], [0], [0], [1], [0, 0, 1, 1], [], []>} : vector<2x16xf32>, vector<16x128xf32>, vector<2x128xf32> -> vector<2x128xf32>
    %174 = arith.addf %172, %173 : vector<2x128xf32>
    %cst_76 = arith.constant dense<0.000000e+00> : vector<2x128xf32>
    %175 = tpu.matmul %120, %2, %cst_76 {dimension_numbers = #tpu.dot_dimension_numbers<[1], [0], [0], [1], [0, 0, 1, 1], [], []>} : vector<2x32xf32>, vector<32x128xf32>, vector<2x128xf32> -> vector<2x128xf32>
    %176 = arith.addf %174, %175 : vector<2x128xf32>
    %177 = arith.negf %176 : vector<2x128xf32>
    %178 = math.exp %177 : vector<2x128xf32>
    %cst_77 = arith.constant 1.000000e+00 : f32
    %179 = vector.broadcast %cst_77 : f32 to vector<2x128xf32>
    %180 = arith.addf %179, %178 : vector<2x128xf32>
    %181 = arith.divf %179, %180 : vector<2x128xf32>
    %182 = math.tanh %176 : vector<2x128xf32>
    %183 = vector.extract_strided_slice %181 {offsets = [0, 0], sizes = [2, 32], strides = [1, 1]} : vector<2x128xf32> to vector<2x32xf32>
    %184 = vector.extract_strided_slice %181 {offsets = [0, 32], sizes = [2, 32], strides = [1, 1]} : vector<2x128xf32> to vector<2x32xf32>
    %185 = vector.extract_strided_slice %182 {offsets = [0, 64], sizes = [2, 32], strides = [1, 1]} : vector<2x128xf32> to vector<2x32xf32>
    %186 = vector.extract_strided_slice %181 {offsets = [0, 96], sizes = [2, 32], strides = [1, 1]} : vector<2x128xf32> to vector<2x32xf32>
    %187 = arith.mulf %184, %118 : vector<2x32xf32>
    %188 = arith.mulf %183, %185 : vector<2x32xf32>
    %189 = arith.addf %187, %188 : vector<2x32xf32>
    %190 = math.tanh %189 : vector<2x32xf32>
    %191 = arith.mulf %186, %190 : vector<2x32xf32>
    %cst_78 = arith.constant dense<0.000000e+00> : vector<2x128xf32>
    %192 = tpu.matmul %191, %1, %cst_78 {dimension_numbers = #tpu.dot_dimension_numbers<[1], [0], [0], [1], [0, 0, 1, 1], [], []>} : vector<2x32xf32>, vector<32x128xf32>, vector<2x128xf32> -> vector<2x128xf32>
    %193 = vector.broadcast %4 : vector<1x128xf32> to vector<2x128xf32>
    %194 = arith.addf %192, %193 : vector<2x128xf32>
    %cst_79 = arith.constant dense<0.000000e+00> : vector<2x128xf32>
    %195 = tpu.matmul %140, %3, %cst_79 {dimension_numbers = #tpu.dot_dimension_numbers<[1], [0], [0], [1], [0, 0, 1, 1], [], []>} : vector<2x32xf32>, vector<32x128xf32>, vector<2x128xf32> -> vector<2x128xf32>
    %196 = arith.addf %194, %195 : vector<2x128xf32>
    %197 = arith.negf %196 : vector<2x128xf32>
    %198 = math.exp %197 : vector<2x128xf32>
    %cst_80 = arith.constant 1.000000e+00 : f32
    %199 = vector.broadcast %cst_80 : f32 to vector<2x128xf32>
    %200 = arith.addf %199, %198 : vector<2x128xf32>
    %201 = arith.divf %199, %200 : vector<2x128xf32>
    %202 = math.tanh %196 : vector<2x128xf32>
    %203 = vector.extract_strided_slice %201 {offsets = [0, 0], sizes = [2, 32], strides = [1, 1]} : vector<2x128xf32> to vector<2x32xf32>
    %204 = vector.extract_strided_slice %201 {offsets = [0, 32], sizes = [2, 32], strides = [1, 1]} : vector<2x128xf32> to vector<2x32xf32>
    %205 = vector.extract_strided_slice %202 {offsets = [0, 64], sizes = [2, 32], strides = [1, 1]} : vector<2x128xf32> to vector<2x32xf32>
    %206 = vector.extract_strided_slice %201 {offsets = [0, 96], sizes = [2, 32], strides = [1, 1]} : vector<2x128xf32> to vector<2x32xf32>
    %207 = arith.mulf %204, %138 : vector<2x32xf32>
    %208 = arith.mulf %203, %205 : vector<2x32xf32>
    %209 = arith.addf %207, %208 : vector<2x32xf32>
    %210 = math.tanh %209 : vector<2x32xf32>
    %211 = arith.mulf %206, %210 : vector<2x32xf32>
    %212 = vector.extract_strided_slice %211 {offsets = [0, 0], sizes = [1, 32], strides = [1, 1]} : vector<2x32xf32> to vector<1x32xf32>
    %cst_81 = arith.constant dense<0.000000e+00> : vector<1x8xf32>
    %213 = tpu.matmul %212, %17, %cst_81 {dimension_numbers = #tpu.dot_dimension_numbers<[1], [0], [0], [1], [0, 0, 1, 1], [], []>} : vector<1x32xf32>, vector<32x8xf32>, vector<1x8xf32> -> vector<1x8xf32>
    %214 = vector.extract_strided_slice %211 {offsets = [1, 0], sizes = [1, 32], strides = [1, 1]} : vector<2x32xf32> to vector<1x32xf32>
    %cst_82 = arith.constant dense<0.000000e+00> : vector<1x8xf32>
    %215 = tpu.matmul %214, %19, %cst_82 {dimension_numbers = #tpu.dot_dimension_numbers<[1], [0], [0], [1], [0, 0, 1, 1], [], []>} : vector<1x32xf32>, vector<32x8xf32>, vector<1x8xf32> -> vector<1x8xf32>
    %216 = tpu.concatenate %213, %215 in 0 : vector<1x8xf32>, vector<1x8xf32> -> vector<2x8xf32>
    %217 = arith.addf %216, %11 : vector<2x8xf32>
    %cst_83 = arith.constant dense<0xFF800000> : vector<2xf32>
    %218 = vector.multi_reduction <maximumf>, %217, %cst_83 [1] : vector<2x8xf32> to vector<2xf32>
    %219 = vector.shape_cast %218 : vector<2xf32> to vector<2x1xf32>
    %220 = vector.broadcast %219 : vector<2x1xf32> to vector<2x8xf32>
    %221 = arith.subf %217, %220 : vector<2x8xf32>
    %222 = math.exp %221 : vector<2x8xf32>
    %cst_84 = arith.constant dense<0.000000e+00> : vector<2xf32>
    %223 = vector.multi_reduction <add>, %222, %cst_84 [1] : vector<2x8xf32> to vector<2xf32>
    %224 = vector.shape_cast %223 : vector<2xf32> to vector<2x1xf32>
    %225 = tpu.reciprocal %224 {approx = true} : vector<2x1xf32> -> vector<2x1xf32>
    %226 = vector.broadcast %225 : vector<2x1xf32> to vector<2x8xf32>
    %227 = arith.mulf %222, %226 : vector<2x8xf32>
    %228 = vector.extract_strided_slice %227 {offsets = [0, 0], sizes = [1, 8], strides = [1, 1]} : vector<2x8xf32> to vector<1x8xf32>
    %cst_85 = arith.constant dense<0.000000e+00> : vector<1x32xf32>
    %229 = tpu.matmul %228, %13, %cst_85 {dimension_numbers = #tpu.dot_dimension_numbers<[1], [0], [0], [1], [0, 0, 1, 1], [], []>} : vector<1x8xf32>, vector<8x32xf32>, vector<1x32xf32> -> vector<1x32xf32>
    %230 = vector.extract_strided_slice %227 {offsets = [1, 0], sizes = [1, 8], strides = [1, 1]} : vector<2x8xf32> to vector<1x8xf32>
    %cst_86 = arith.constant dense<0.000000e+00> : vector<1x32xf32>
    %231 = tpu.matmul %230, %15, %cst_86 {dimension_numbers = #tpu.dot_dimension_numbers<[1], [0], [0], [1], [0, 0, 1, 1], [], []>} : vector<1x8xf32>, vector<8x32xf32>, vector<1x32xf32> -> vector<1x32xf32>
    %232 = tpu.concatenate %229, %231 in 0 : vector<1x32xf32>, vector<1x32xf32> -> vector<2x32xf32>
    %cst_87 = arith.constant dense<0.000000e+00> : vector<2x32xf32>
    %233 = tpu.matmul %211, %5, %cst_87 {dimension_numbers = #tpu.dot_dimension_numbers<[1], [0], [0], [1], [0, 0, 1, 1], [], []>} : vector<2x32xf32>, vector<32x32xf32>, vector<2x32xf32> -> vector<2x32xf32>
    %cst_88 = arith.constant dense<0.000000e+00> : vector<2x32xf32>
    %234 = tpu.matmul %232, %6, %cst_88 {dimension_numbers = #tpu.dot_dimension_numbers<[1], [0], [0], [1], [0, 0, 1, 1], [], []>} : vector<2x32xf32>, vector<32x32xf32>, vector<2x32xf32> -> vector<2x32xf32>
    %235 = arith.addf %233, %234 : vector<2x32xf32>
    %236 = vector.broadcast %7 : vector<1x32xf32> to vector<2x32xf32>
    %237 = arith.addf %235, %236 : vector<2x32xf32>
    %238 = math.tanh %237 : vector<2x32xf32>
    %cst_89 = arith.constant dense<0.000000e+00> : vector<2x16xf32>
    %239 = tpu.matmul %238, %8, %cst_89 {dimension_numbers = #tpu.dot_dimension_numbers<[1], [0], [0], [1], [0, 0, 1, 1], [], []>} : vector<2x32xf32>, vector<32x16xf32>, vector<2x16xf32> -> vector<2x16xf32>
    %240 = vector.broadcast %9 : vector<1x16xf32> to vector<2x16xf32>
    %241 = arith.addf %239, %240 : vector<2x16xf32>
    %c3 = arith.constant 3 : index
    %c0_90 = arith.constant 0 : index
    %c0_91 = arith.constant 0 : index
    %242 = vector.load %arg0[%c3, %c0_90, %c0_91] : memref<8x2x128xf32, #tpu.memory_space<vmem>>, vector<1x2x128xf32>
    %243 = vector.shape_cast %242 : vector<1x2x128xf32> to vector<2x128xf32>
    %cst_92 = arith.constant dense<0.000000e+00> : vector<2x128xf32>
    %244 = tpu.matmul %241, %0, %cst_92 {dimension_numbers = #tpu.dot_dimension_numbers<[1], [0], [0], [1], [0, 0, 1, 1], [], []>} : vector<2x16xf32>, vector<16x128xf32>, vector<2x128xf32> -> vector<2x128xf32>
    %245 = arith.addf %243, %244 : vector<2x128xf32>
    %cst_93 = arith.constant dense<0.000000e+00> : vector<2x128xf32>
    %246 = tpu.matmul %191, %2, %cst_93 {dimension_numbers = #tpu.dot_dimension_numbers<[1], [0], [0], [1], [0, 0, 1, 1], [], []>} : vector<2x32xf32>, vector<32x128xf32>, vector<2x128xf32> -> vector<2x128xf32>
    %247 = arith.addf %245, %246 : vector<2x128xf32>
    %248 = arith.negf %247 : vector<2x128xf32>
    %249 = math.exp %248 : vector<2x128xf32>
    %cst_94 = arith.constant 1.000000e+00 : f32
    %250 = vector.broadcast %cst_94 : f32 to vector<2x128xf32>
    %251 = arith.addf %250, %249 : vector<2x128xf32>
    %252 = arith.divf %250, %251 : vector<2x128xf32>
    %253 = math.tanh %247 : vector<2x128xf32>
    %254 = vector.extract_strided_slice %252 {offsets = [0, 0], sizes = [2, 32], strides = [1, 1]} : vector<2x128xf32> to vector<2x32xf32>
    %255 = vector.extract_strided_slice %252 {offsets = [0, 32], sizes = [2, 32], strides = [1, 1]} : vector<2x128xf32> to vector<2x32xf32>
    %256 = vector.extract_strided_slice %253 {offsets = [0, 64], sizes = [2, 32], strides = [1, 1]} : vector<2x128xf32> to vector<2x32xf32>
    %257 = vector.extract_strided_slice %252 {offsets = [0, 96], sizes = [2, 32], strides = [1, 1]} : vector<2x128xf32> to vector<2x32xf32>
    %258 = arith.mulf %255, %189 : vector<2x32xf32>
    %259 = arith.mulf %254, %256 : vector<2x32xf32>
    %260 = arith.addf %258, %259 : vector<2x32xf32>
    %261 = math.tanh %260 : vector<2x32xf32>
    %262 = arith.mulf %257, %261 : vector<2x32xf32>
    %cst_95 = arith.constant dense<0.000000e+00> : vector<2x128xf32>
    %263 = tpu.matmul %262, %1, %cst_95 {dimension_numbers = #tpu.dot_dimension_numbers<[1], [0], [0], [1], [0, 0, 1, 1], [], []>} : vector<2x32xf32>, vector<32x128xf32>, vector<2x128xf32> -> vector<2x128xf32>
    %264 = vector.broadcast %4 : vector<1x128xf32> to vector<2x128xf32>
    %265 = arith.addf %263, %264 : vector<2x128xf32>
    %cst_96 = arith.constant dense<0.000000e+00> : vector<2x128xf32>
    %266 = tpu.matmul %211, %3, %cst_96 {dimension_numbers = #tpu.dot_dimension_numbers<[1], [0], [0], [1], [0, 0, 1, 1], [], []>} : vector<2x32xf32>, vector<32x128xf32>, vector<2x128xf32> -> vector<2x128xf32>
    %267 = arith.addf %265, %266 : vector<2x128xf32>
    %268 = arith.negf %267 : vector<2x128xf32>
    %269 = math.exp %268 : vector<2x128xf32>
    %cst_97 = arith.constant 1.000000e+00 : f32
    %270 = vector.broadcast %cst_97 : f32 to vector<2x128xf32>
    %271 = arith.addf %270, %269 : vector<2x128xf32>
    %272 = arith.divf %270, %271 : vector<2x128xf32>
    %273 = math.tanh %267 : vector<2x128xf32>
    %274 = vector.extract_strided_slice %272 {offsets = [0, 0], sizes = [2, 32], strides = [1, 1]} : vector<2x128xf32> to vector<2x32xf32>
    %275 = vector.extract_strided_slice %272 {offsets = [0, 32], sizes = [2, 32], strides = [1, 1]} : vector<2x128xf32> to vector<2x32xf32>
    %276 = vector.extract_strided_slice %273 {offsets = [0, 64], sizes = [2, 32], strides = [1, 1]} : vector<2x128xf32> to vector<2x32xf32>
    %277 = vector.extract_strided_slice %272 {offsets = [0, 96], sizes = [2, 32], strides = [1, 1]} : vector<2x128xf32> to vector<2x32xf32>
    %278 = arith.mulf %275, %209 : vector<2x32xf32>
    %279 = arith.mulf %274, %276 : vector<2x32xf32>
    %280 = arith.addf %278, %279 : vector<2x32xf32>
    %281 = math.tanh %280 : vector<2x32xf32>
    %282 = arith.mulf %277, %281 : vector<2x32xf32>
    %283 = vector.extract_strided_slice %282 {offsets = [0, 0], sizes = [1, 32], strides = [1, 1]} : vector<2x32xf32> to vector<1x32xf32>
    %cst_98 = arith.constant dense<0.000000e+00> : vector<1x8xf32>
    %284 = tpu.matmul %283, %17, %cst_98 {dimension_numbers = #tpu.dot_dimension_numbers<[1], [0], [0], [1], [0, 0, 1, 1], [], []>} : vector<1x32xf32>, vector<32x8xf32>, vector<1x8xf32> -> vector<1x8xf32>
    %285 = vector.extract_strided_slice %282 {offsets = [1, 0], sizes = [1, 32], strides = [1, 1]} : vector<2x32xf32> to vector<1x32xf32>
    %cst_99 = arith.constant dense<0.000000e+00> : vector<1x8xf32>
    %286 = tpu.matmul %285, %19, %cst_99 {dimension_numbers = #tpu.dot_dimension_numbers<[1], [0], [0], [1], [0, 0, 1, 1], [], []>} : vector<1x32xf32>, vector<32x8xf32>, vector<1x8xf32> -> vector<1x8xf32>
    %287 = tpu.concatenate %284, %286 in 0 : vector<1x8xf32>, vector<1x8xf32> -> vector<2x8xf32>
    %288 = arith.addf %287, %11 : vector<2x8xf32>
    %cst_100 = arith.constant dense<0xFF800000> : vector<2xf32>
    %289 = vector.multi_reduction <maximumf>, %288, %cst_100 [1] : vector<2x8xf32> to vector<2xf32>
    %290 = vector.shape_cast %289 : vector<2xf32> to vector<2x1xf32>
    %291 = vector.broadcast %290 : vector<2x1xf32> to vector<2x8xf32>
    %292 = arith.subf %288, %291 : vector<2x8xf32>
    %293 = math.exp %292 : vector<2x8xf32>
    %cst_101 = arith.constant dense<0.000000e+00> : vector<2xf32>
    %294 = vector.multi_reduction <add>, %293, %cst_101 [1] : vector<2x8xf32> to vector<2xf32>
    %295 = vector.shape_cast %294 : vector<2xf32> to vector<2x1xf32>
    %296 = tpu.reciprocal %295 {approx = true} : vector<2x1xf32> -> vector<2x1xf32>
    %297 = vector.broadcast %296 : vector<2x1xf32> to vector<2x8xf32>
    %298 = arith.mulf %293, %297 : vector<2x8xf32>
    %299 = vector.extract_strided_slice %298 {offsets = [0, 0], sizes = [1, 8], strides = [1, 1]} : vector<2x8xf32> to vector<1x8xf32>
    %cst_102 = arith.constant dense<0.000000e+00> : vector<1x32xf32>
    %300 = tpu.matmul %299, %13, %cst_102 {dimension_numbers = #tpu.dot_dimension_numbers<[1], [0], [0], [1], [0, 0, 1, 1], [], []>} : vector<1x8xf32>, vector<8x32xf32>, vector<1x32xf32> -> vector<1x32xf32>
    %301 = vector.extract_strided_slice %298 {offsets = [1, 0], sizes = [1, 8], strides = [1, 1]} : vector<2x8xf32> to vector<1x8xf32>
    %cst_103 = arith.constant dense<0.000000e+00> : vector<1x32xf32>
    %302 = tpu.matmul %301, %15, %cst_103 {dimension_numbers = #tpu.dot_dimension_numbers<[1], [0], [0], [1], [0, 0, 1, 1], [], []>} : vector<1x8xf32>, vector<8x32xf32>, vector<1x32xf32> -> vector<1x32xf32>
    %303 = tpu.concatenate %300, %302 in 0 : vector<1x32xf32>, vector<1x32xf32> -> vector<2x32xf32>
    %cst_104 = arith.constant dense<0.000000e+00> : vector<2x32xf32>
    %304 = tpu.matmul %282, %5, %cst_104 {dimension_numbers = #tpu.dot_dimension_numbers<[1], [0], [0], [1], [0, 0, 1, 1], [], []>} : vector<2x32xf32>, vector<32x32xf32>, vector<2x32xf32> -> vector<2x32xf32>
    %cst_105 = arith.constant dense<0.000000e+00> : vector<2x32xf32>
    %305 = tpu.matmul %303, %6, %cst_105 {dimension_numbers = #tpu.dot_dimension_numbers<[1], [0], [0], [1], [0, 0, 1, 1], [], []>} : vector<2x32xf32>, vector<32x32xf32>, vector<2x32xf32> -> vector<2x32xf32>
    %306 = arith.addf %304, %305 : vector<2x32xf32>
    %307 = vector.broadcast %7 : vector<1x32xf32> to vector<2x32xf32>
    %308 = arith.addf %306, %307 : vector<2x32xf32>
    %309 = math.tanh %308 : vector<2x32xf32>
    %cst_106 = arith.constant dense<0.000000e+00> : vector<2x16xf32>
    %310 = tpu.matmul %309, %8, %cst_106 {dimension_numbers = #tpu.dot_dimension_numbers<[1], [0], [0], [1], [0, 0, 1, 1], [], []>} : vector<2x32xf32>, vector<32x16xf32>, vector<2x16xf32> -> vector<2x16xf32>
    %311 = vector.broadcast %9 : vector<1x16xf32> to vector<2x16xf32>
    %312 = arith.addf %310, %311 : vector<2x16xf32>
    %c4 = arith.constant 4 : index
    %c0_107 = arith.constant 0 : index
    %c0_108 = arith.constant 0 : index
    %313 = vector.load %arg0[%c4, %c0_107, %c0_108] : memref<8x2x128xf32, #tpu.memory_space<vmem>>, vector<1x2x128xf32>
    %314 = vector.shape_cast %313 : vector<1x2x128xf32> to vector<2x128xf32>
    %cst_109 = arith.constant dense<0.000000e+00> : vector<2x128xf32>
    %315 = tpu.matmul %312, %0, %cst_109 {dimension_numbers = #tpu.dot_dimension_numbers<[1], [0], [0], [1], [0, 0, 1, 1], [], []>} : vector<2x16xf32>, vector<16x128xf32>, vector<2x128xf32> -> vector<2x128xf32>
    %316 = arith.addf %314, %315 : vector<2x128xf32>
    %cst_110 = arith.constant dense<0.000000e+00> : vector<2x128xf32>
    %317 = tpu.matmul %262, %2, %cst_110 {dimension_numbers = #tpu.dot_dimension_numbers<[1], [0], [0], [1], [0, 0, 1, 1], [], []>} : vector<2x32xf32>, vector<32x128xf32>, vector<2x128xf32> -> vector<2x128xf32>
    %318 = arith.addf %316, %317 : vector<2x128xf32>
    %319 = arith.negf %318 : vector<2x128xf32>
    %320 = math.exp %319 : vector<2x128xf32>
    %cst_111 = arith.constant 1.000000e+00 : f32
    %321 = vector.broadcast %cst_111 : f32 to vector<2x128xf32>
    %322 = arith.addf %321, %320 : vector<2x128xf32>
    %323 = arith.divf %321, %322 : vector<2x128xf32>
    %324 = math.tanh %318 : vector<2x128xf32>
    %325 = vector.extract_strided_slice %323 {offsets = [0, 0], sizes = [2, 32], strides = [1, 1]} : vector<2x128xf32> to vector<2x32xf32>
    %326 = vector.extract_strided_slice %323 {offsets = [0, 32], sizes = [2, 32], strides = [1, 1]} : vector<2x128xf32> to vector<2x32xf32>
    %327 = vector.extract_strided_slice %324 {offsets = [0, 64], sizes = [2, 32], strides = [1, 1]} : vector<2x128xf32> to vector<2x32xf32>
    %328 = vector.extract_strided_slice %323 {offsets = [0, 96], sizes = [2, 32], strides = [1, 1]} : vector<2x128xf32> to vector<2x32xf32>
    %329 = arith.mulf %326, %260 : vector<2x32xf32>
    %330 = arith.mulf %325, %327 : vector<2x32xf32>
    %331 = arith.addf %329, %330 : vector<2x32xf32>
    %332 = math.tanh %331 : vector<2x32xf32>
    %333 = arith.mulf %328, %332 : vector<2x32xf32>
    %cst_112 = arith.constant dense<0.000000e+00> : vector<2x128xf32>
    %334 = tpu.matmul %333, %1, %cst_112 {dimension_numbers = #tpu.dot_dimension_numbers<[1], [0], [0], [1], [0, 0, 1, 1], [], []>} : vector<2x32xf32>, vector<32x128xf32>, vector<2x128xf32> -> vector<2x128xf32>
    %335 = vector.broadcast %4 : vector<1x128xf32> to vector<2x128xf32>
    %336 = arith.addf %334, %335 : vector<2x128xf32>
    %cst_113 = arith.constant dense<0.000000e+00> : vector<2x128xf32>
    %337 = tpu.matmul %282, %3, %cst_113 {dimension_numbers = #tpu.dot_dimension_numbers<[1], [0], [0], [1], [0, 0, 1, 1], [], []>} : vector<2x32xf32>, vector<32x128xf32>, vector<2x128xf32> -> vector<2x128xf32>
    %338 = arith.addf %336, %337 : vector<2x128xf32>
    %339 = arith.negf %338 : vector<2x128xf32>
    %340 = math.exp %339 : vector<2x128xf32>
    %cst_114 = arith.constant 1.000000e+00 : f32
    %341 = vector.broadcast %cst_114 : f32 to vector<2x128xf32>
    %342 = arith.addf %341, %340 : vector<2x128xf32>
    %343 = arith.divf %341, %342 : vector<2x128xf32>
    %344 = math.tanh %338 : vector<2x128xf32>
    %345 = vector.extract_strided_slice %343 {offsets = [0, 0], sizes = [2, 32], strides = [1, 1]} : vector<2x128xf32> to vector<2x32xf32>
    %346 = vector.extract_strided_slice %343 {offsets = [0, 32], sizes = [2, 32], strides = [1, 1]} : vector<2x128xf32> to vector<2x32xf32>
    %347 = vector.extract_strided_slice %344 {offsets = [0, 64], sizes = [2, 32], strides = [1, 1]} : vector<2x128xf32> to vector<2x32xf32>
    %348 = vector.extract_strided_slice %343 {offsets = [0, 96], sizes = [2, 32], strides = [1, 1]} : vector<2x128xf32> to vector<2x32xf32>
    %349 = arith.mulf %346, %280 : vector<2x32xf32>
    %350 = arith.mulf %345, %347 : vector<2x32xf32>
    %351 = arith.addf %349, %350 : vector<2x32xf32>
    %352 = math.tanh %351 : vector<2x32xf32>
    %353 = arith.mulf %348, %352 : vector<2x32xf32>
    %354 = vector.extract_strided_slice %353 {offsets = [0, 0], sizes = [1, 32], strides = [1, 1]} : vector<2x32xf32> to vector<1x32xf32>
    %cst_115 = arith.constant dense<0.000000e+00> : vector<1x8xf32>
    %355 = tpu.matmul %354, %17, %cst_115 {dimension_numbers = #tpu.dot_dimension_numbers<[1], [0], [0], [1], [0, 0, 1, 1], [], []>} : vector<1x32xf32>, vector<32x8xf32>, vector<1x8xf32> -> vector<1x8xf32>
    %356 = vector.extract_strided_slice %353 {offsets = [1, 0], sizes = [1, 32], strides = [1, 1]} : vector<2x32xf32> to vector<1x32xf32>
    %cst_116 = arith.constant dense<0.000000e+00> : vector<1x8xf32>
    %357 = tpu.matmul %356, %19, %cst_116 {dimension_numbers = #tpu.dot_dimension_numbers<[1], [0], [0], [1], [0, 0, 1, 1], [], []>} : vector<1x32xf32>, vector<32x8xf32>, vector<1x8xf32> -> vector<1x8xf32>
    %358 = tpu.concatenate %355, %357 in 0 : vector<1x8xf32>, vector<1x8xf32> -> vector<2x8xf32>
    %359 = arith.addf %358, %11 : vector<2x8xf32>
    %cst_117 = arith.constant dense<0xFF800000> : vector<2xf32>
    %360 = vector.multi_reduction <maximumf>, %359, %cst_117 [1] : vector<2x8xf32> to vector<2xf32>
    %361 = vector.shape_cast %360 : vector<2xf32> to vector<2x1xf32>
    %362 = vector.broadcast %361 : vector<2x1xf32> to vector<2x8xf32>
    %363 = arith.subf %359, %362 : vector<2x8xf32>
    %364 = math.exp %363 : vector<2x8xf32>
    %cst_118 = arith.constant dense<0.000000e+00> : vector<2xf32>
    %365 = vector.multi_reduction <add>, %364, %cst_118 [1] : vector<2x8xf32> to vector<2xf32>
    %366 = vector.shape_cast %365 : vector<2xf32> to vector<2x1xf32>
    %367 = tpu.reciprocal %366 {approx = true} : vector<2x1xf32> -> vector<2x1xf32>
    %368 = vector.broadcast %367 : vector<2x1xf32> to vector<2x8xf32>
    %369 = arith.mulf %364, %368 : vector<2x8xf32>
    %370 = vector.extract_strided_slice %369 {offsets = [0, 0], sizes = [1, 8], strides = [1, 1]} : vector<2x8xf32> to vector<1x8xf32>
    %cst_119 = arith.constant dense<0.000000e+00> : vector<1x32xf32>
    %371 = tpu.matmul %370, %13, %cst_119 {dimension_numbers = #tpu.dot_dimension_numbers<[1], [0], [0], [1], [0, 0, 1, 1], [], []>} : vector<1x8xf32>, vector<8x32xf32>, vector<1x32xf32> -> vector<1x32xf32>
    %372 = vector.extract_strided_slice %369 {offsets = [1, 0], sizes = [1, 8], strides = [1, 1]} : vector<2x8xf32> to vector<1x8xf32>
    %cst_120 = arith.constant dense<0.000000e+00> : vector<1x32xf32>
    %373 = tpu.matmul %372, %15, %cst_120 {dimension_numbers = #tpu.dot_dimension_numbers<[1], [0], [0], [1], [0, 0, 1, 1], [], []>} : vector<1x8xf32>, vector<8x32xf32>, vector<1x32xf32> -> vector<1x32xf32>
    %374 = tpu.concatenate %371, %373 in 0 : vector<1x32xf32>, vector<1x32xf32> -> vector<2x32xf32>
    %cst_121 = arith.constant dense<0.000000e+00> : vector<2x32xf32>
    %375 = tpu.matmul %353, %5, %cst_121 {dimension_numbers = #tpu.dot_dimension_numbers<[1], [0], [0], [1], [0, 0, 1, 1], [], []>} : vector<2x32xf32>, vector<32x32xf32>, vector<2x32xf32> -> vector<2x32xf32>
    %cst_122 = arith.constant dense<0.000000e+00> : vector<2x32xf32>
    %376 = tpu.matmul %374, %6, %cst_122 {dimension_numbers = #tpu.dot_dimension_numbers<[1], [0], [0], [1], [0, 0, 1, 1], [], []>} : vector<2x32xf32>, vector<32x32xf32>, vector<2x32xf32> -> vector<2x32xf32>
    %377 = arith.addf %375, %376 : vector<2x32xf32>
    %378 = vector.broadcast %7 : vector<1x32xf32> to vector<2x32xf32>
    %379 = arith.addf %377, %378 : vector<2x32xf32>
    %380 = math.tanh %379 : vector<2x32xf32>
    %cst_123 = arith.constant dense<0.000000e+00> : vector<2x16xf32>
    %381 = tpu.matmul %380, %8, %cst_123 {dimension_numbers = #tpu.dot_dimension_numbers<[1], [0], [0], [1], [0, 0, 1, 1], [], []>} : vector<2x32xf32>, vector<32x16xf32>, vector<2x16xf32> -> vector<2x16xf32>
    %382 = vector.broadcast %9 : vector<1x16xf32> to vector<2x16xf32>
    %383 = arith.addf %381, %382 : vector<2x16xf32>
    %c5 = arith.constant 5 : index
    %c0_124 = arith.constant 0 : index
    %c0_125 = arith.constant 0 : index
    %384 = vector.load %arg0[%c5, %c0_124, %c0_125] : memref<8x2x128xf32, #tpu.memory_space<vmem>>, vector<1x2x128xf32>
    %385 = vector.shape_cast %384 : vector<1x2x128xf32> to vector<2x128xf32>
    %cst_126 = arith.constant dense<0.000000e+00> : vector<2x128xf32>
    %386 = tpu.matmul %383, %0, %cst_126 {dimension_numbers = #tpu.dot_dimension_numbers<[1], [0], [0], [1], [0, 0, 1, 1], [], []>} : vector<2x16xf32>, vector<16x128xf32>, vector<2x128xf32> -> vector<2x128xf32>
    %387 = arith.addf %385, %386 : vector<2x128xf32>
    %cst_127 = arith.constant dense<0.000000e+00> : vector<2x128xf32>
    %388 = tpu.matmul %333, %2, %cst_127 {dimension_numbers = #tpu.dot_dimension_numbers<[1], [0], [0], [1], [0, 0, 1, 1], [], []>} : vector<2x32xf32>, vector<32x128xf32>, vector<2x128xf32> -> vector<2x128xf32>
    %389 = arith.addf %387, %388 : vector<2x128xf32>
    %390 = arith.negf %389 : vector<2x128xf32>
    %391 = math.exp %390 : vector<2x128xf32>
    %cst_128 = arith.constant 1.000000e+00 : f32
    %392 = vector.broadcast %cst_128 : f32 to vector<2x128xf32>
    %393 = arith.addf %392, %391 : vector<2x128xf32>
    %394 = arith.divf %392, %393 : vector<2x128xf32>
    %395 = math.tanh %389 : vector<2x128xf32>
    %396 = vector.extract_strided_slice %394 {offsets = [0, 0], sizes = [2, 32], strides = [1, 1]} : vector<2x128xf32> to vector<2x32xf32>
    %397 = vector.extract_strided_slice %394 {offsets = [0, 32], sizes = [2, 32], strides = [1, 1]} : vector<2x128xf32> to vector<2x32xf32>
    %398 = vector.extract_strided_slice %395 {offsets = [0, 64], sizes = [2, 32], strides = [1, 1]} : vector<2x128xf32> to vector<2x32xf32>
    %399 = vector.extract_strided_slice %394 {offsets = [0, 96], sizes = [2, 32], strides = [1, 1]} : vector<2x128xf32> to vector<2x32xf32>
    %400 = arith.mulf %397, %331 : vector<2x32xf32>
    %401 = arith.mulf %396, %398 : vector<2x32xf32>
    %402 = arith.addf %400, %401 : vector<2x32xf32>
    %403 = math.tanh %402 : vector<2x32xf32>
    %404 = arith.mulf %399, %403 : vector<2x32xf32>
    %cst_129 = arith.constant dense<0.000000e+00> : vector<2x128xf32>
    %405 = tpu.matmul %404, %1, %cst_129 {dimension_numbers = #tpu.dot_dimension_numbers<[1], [0], [0], [1], [0, 0, 1, 1], [], []>} : vector<2x32xf32>, vector<32x128xf32>, vector<2x128xf32> -> vector<2x128xf32>
    %406 = vector.broadcast %4 : vector<1x128xf32> to vector<2x128xf32>
    %407 = arith.addf %405, %406 : vector<2x128xf32>
    %cst_130 = arith.constant dense<0.000000e+00> : vector<2x128xf32>
    %408 = tpu.matmul %353, %3, %cst_130 {dimension_numbers = #tpu.dot_dimension_numbers<[1], [0], [0], [1], [0, 0, 1, 1], [], []>} : vector<2x32xf32>, vector<32x128xf32>, vector<2x128xf32> -> vector<2x128xf32>
    %409 = arith.addf %407, %408 : vector<2x128xf32>
    %410 = arith.negf %409 : vector<2x128xf32>
    %411 = math.exp %410 : vector<2x128xf32>
    %cst_131 = arith.constant 1.000000e+00 : f32
    %412 = vector.broadcast %cst_131 : f32 to vector<2x128xf32>
    %413 = arith.addf %412, %411 : vector<2x128xf32>
    %414 = arith.divf %412, %413 : vector<2x128xf32>
    %415 = math.tanh %409 : vector<2x128xf32>
    %416 = vector.extract_strided_slice %414 {offsets = [0, 0], sizes = [2, 32], strides = [1, 1]} : vector<2x128xf32> to vector<2x32xf32>
    %417 = vector.extract_strided_slice %414 {offsets = [0, 32], sizes = [2, 32], strides = [1, 1]} : vector<2x128xf32> to vector<2x32xf32>
    %418 = vector.extract_strided_slice %415 {offsets = [0, 64], sizes = [2, 32], strides = [1, 1]} : vector<2x128xf32> to vector<2x32xf32>
    %419 = vector.extract_strided_slice %414 {offsets = [0, 96], sizes = [2, 32], strides = [1, 1]} : vector<2x128xf32> to vector<2x32xf32>
    %420 = arith.mulf %417, %351 : vector<2x32xf32>
    %421 = arith.mulf %416, %418 : vector<2x32xf32>
    %422 = arith.addf %420, %421 : vector<2x32xf32>
    %423 = math.tanh %422 : vector<2x32xf32>
    %424 = arith.mulf %419, %423 : vector<2x32xf32>
    %425 = vector.extract_strided_slice %424 {offsets = [0, 0], sizes = [1, 32], strides = [1, 1]} : vector<2x32xf32> to vector<1x32xf32>
    %cst_132 = arith.constant dense<0.000000e+00> : vector<1x8xf32>
    %426 = tpu.matmul %425, %17, %cst_132 {dimension_numbers = #tpu.dot_dimension_numbers<[1], [0], [0], [1], [0, 0, 1, 1], [], []>} : vector<1x32xf32>, vector<32x8xf32>, vector<1x8xf32> -> vector<1x8xf32>
    %427 = vector.extract_strided_slice %424 {offsets = [1, 0], sizes = [1, 32], strides = [1, 1]} : vector<2x32xf32> to vector<1x32xf32>
    %cst_133 = arith.constant dense<0.000000e+00> : vector<1x8xf32>
    %428 = tpu.matmul %427, %19, %cst_133 {dimension_numbers = #tpu.dot_dimension_numbers<[1], [0], [0], [1], [0, 0, 1, 1], [], []>} : vector<1x32xf32>, vector<32x8xf32>, vector<1x8xf32> -> vector<1x8xf32>
    %429 = tpu.concatenate %426, %428 in 0 : vector<1x8xf32>, vector<1x8xf32> -> vector<2x8xf32>
    %430 = arith.addf %429, %11 : vector<2x8xf32>
    %cst_134 = arith.constant dense<0xFF800000> : vector<2xf32>
    %431 = vector.multi_reduction <maximumf>, %430, %cst_134 [1] : vector<2x8xf32> to vector<2xf32>
    %432 = vector.shape_cast %431 : vector<2xf32> to vector<2x1xf32>
    %433 = vector.broadcast %432 : vector<2x1xf32> to vector<2x8xf32>
    %434 = arith.subf %430, %433 : vector<2x8xf32>
    %435 = math.exp %434 : vector<2x8xf32>
    %cst_135 = arith.constant dense<0.000000e+00> : vector<2xf32>
    %436 = vector.multi_reduction <add>, %435, %cst_135 [1] : vector<2x8xf32> to vector<2xf32>
    %437 = vector.shape_cast %436 : vector<2xf32> to vector<2x1xf32>
    %438 = tpu.reciprocal %437 {approx = true} : vector<2x1xf32> -> vector<2x1xf32>
    %439 = vector.broadcast %438 : vector<2x1xf32> to vector<2x8xf32>
    %440 = arith.mulf %435, %439 : vector<2x8xf32>
    %441 = vector.extract_strided_slice %440 {offsets = [0, 0], sizes = [1, 8], strides = [1, 1]} : vector<2x8xf32> to vector<1x8xf32>
    %cst_136 = arith.constant dense<0.000000e+00> : vector<1x32xf32>
    %442 = tpu.matmul %441, %13, %cst_136 {dimension_numbers = #tpu.dot_dimension_numbers<[1], [0], [0], [1], [0, 0, 1, 1], [], []>} : vector<1x8xf32>, vector<8x32xf32>, vector<1x32xf32> -> vector<1x32xf32>
    %443 = vector.extract_strided_slice %440 {offsets = [1, 0], sizes = [1, 8], strides = [1, 1]} : vector<2x8xf32> to vector<1x8xf32>
    %cst_137 = arith.constant dense<0.000000e+00> : vector<1x32xf32>
    %444 = tpu.matmul %443, %15, %cst_137 {dimension_numbers = #tpu.dot_dimension_numbers<[1], [0], [0], [1], [0, 0, 1, 1], [], []>} : vector<1x8xf32>, vector<8x32xf32>, vector<1x32xf32> -> vector<1x32xf32>
    %445 = tpu.concatenate %442, %444 in 0 : vector<1x32xf32>, vector<1x32xf32> -> vector<2x32xf32>
    %cst_138 = arith.constant dense<0.000000e+00> : vector<2x32xf32>
    %446 = tpu.matmul %424, %5, %cst_138 {dimension_numbers = #tpu.dot_dimension_numbers<[1], [0], [0], [1], [0, 0, 1, 1], [], []>} : vector<2x32xf32>, vector<32x32xf32>, vector<2x32xf32> -> vector<2x32xf32>
    %cst_139 = arith.constant dense<0.000000e+00> : vector<2x32xf32>
    %447 = tpu.matmul %445, %6, %cst_139 {dimension_numbers = #tpu.dot_dimension_numbers<[1], [0], [0], [1], [0, 0, 1, 1], [], []>} : vector<2x32xf32>, vector<32x32xf32>, vector<2x32xf32> -> vector<2x32xf32>
    %448 = arith.addf %446, %447 : vector<2x32xf32>
    %449 = vector.broadcast %7 : vector<1x32xf32> to vector<2x32xf32>
    %450 = arith.addf %448, %449 : vector<2x32xf32>
    %451 = math.tanh %450 : vector<2x32xf32>
    %cst_140 = arith.constant dense<0.000000e+00> : vector<2x16xf32>
    %452 = tpu.matmul %451, %8, %cst_140 {dimension_numbers = #tpu.dot_dimension_numbers<[1], [0], [0], [1], [0, 0, 1, 1], [], []>} : vector<2x32xf32>, vector<32x16xf32>, vector<2x16xf32> -> vector<2x16xf32>
    %453 = vector.broadcast %9 : vector<1x16xf32> to vector<2x16xf32>
    %454 = arith.addf %452, %453 : vector<2x16xf32>
    %c6 = arith.constant 6 : index
    %c0_141 = arith.constant 0 : index
    %c0_142 = arith.constant 0 : index
    %455 = vector.load %arg0[%c6, %c0_141, %c0_142] : memref<8x2x128xf32, #tpu.memory_space<vmem>>, vector<1x2x128xf32>
    %456 = vector.shape_cast %455 : vector<1x2x128xf32> to vector<2x128xf32>
    %cst_143 = arith.constant dense<0.000000e+00> : vector<2x128xf32>
    %457 = tpu.matmul %454, %0, %cst_143 {dimension_numbers = #tpu.dot_dimension_numbers<[1], [0], [0], [1], [0, 0, 1, 1], [], []>} : vector<2x16xf32>, vector<16x128xf32>, vector<2x128xf32> -> vector<2x128xf32>
    %458 = arith.addf %456, %457 : vector<2x128xf32>
    %cst_144 = arith.constant dense<0.000000e+00> : vector<2x128xf32>
    %459 = tpu.matmul %404, %2, %cst_144 {dimension_numbers = #tpu.dot_dimension_numbers<[1], [0], [0], [1], [0, 0, 1, 1], [], []>} : vector<2x32xf32>, vector<32x128xf32>, vector<2x128xf32> -> vector<2x128xf32>
    %460 = arith.addf %458, %459 : vector<2x128xf32>
    %461 = arith.negf %460 : vector<2x128xf32>
    %462 = math.exp %461 : vector<2x128xf32>
    %cst_145 = arith.constant 1.000000e+00 : f32
    %463 = vector.broadcast %cst_145 : f32 to vector<2x128xf32>
    %464 = arith.addf %463, %462 : vector<2x128xf32>
    %465 = arith.divf %463, %464 : vector<2x128xf32>
    %466 = math.tanh %460 : vector<2x128xf32>
    %467 = vector.extract_strided_slice %465 {offsets = [0, 0], sizes = [2, 32], strides = [1, 1]} : vector<2x128xf32> to vector<2x32xf32>
    %468 = vector.extract_strided_slice %465 {offsets = [0, 32], sizes = [2, 32], strides = [1, 1]} : vector<2x128xf32> to vector<2x32xf32>
    %469 = vector.extract_strided_slice %466 {offsets = [0, 64], sizes = [2, 32], strides = [1, 1]} : vector<2x128xf32> to vector<2x32xf32>
    %470 = vector.extract_strided_slice %465 {offsets = [0, 96], sizes = [2, 32], strides = [1, 1]} : vector<2x128xf32> to vector<2x32xf32>
    %471 = arith.mulf %468, %402 : vector<2x32xf32>
    %472 = arith.mulf %467, %469 : vector<2x32xf32>
    %473 = arith.addf %471, %472 : vector<2x32xf32>
    %474 = math.tanh %473 : vector<2x32xf32>
    %475 = arith.mulf %470, %474 : vector<2x32xf32>
    %cst_146 = arith.constant dense<0.000000e+00> : vector<2x128xf32>
    %476 = tpu.matmul %475, %1, %cst_146 {dimension_numbers = #tpu.dot_dimension_numbers<[1], [0], [0], [1], [0, 0, 1, 1], [], []>} : vector<2x32xf32>, vector<32x128xf32>, vector<2x128xf32> -> vector<2x128xf32>
    %477 = vector.broadcast %4 : vector<1x128xf32> to vector<2x128xf32>
    %478 = arith.addf %476, %477 : vector<2x128xf32>
    %cst_147 = arith.constant dense<0.000000e+00> : vector<2x128xf32>
    %479 = tpu.matmul %424, %3, %cst_147 {dimension_numbers = #tpu.dot_dimension_numbers<[1], [0], [0], [1], [0, 0, 1, 1], [], []>} : vector<2x32xf32>, vector<32x128xf32>, vector<2x128xf32> -> vector<2x128xf32>
    %480 = arith.addf %478, %479 : vector<2x128xf32>
    %481 = arith.negf %480 : vector<2x128xf32>
    %482 = math.exp %481 : vector<2x128xf32>
    %cst_148 = arith.constant 1.000000e+00 : f32
    %483 = vector.broadcast %cst_148 : f32 to vector<2x128xf32>
    %484 = arith.addf %483, %482 : vector<2x128xf32>
    %485 = arith.divf %483, %484 : vector<2x128xf32>
    %486 = math.tanh %480 : vector<2x128xf32>
    %487 = vector.extract_strided_slice %485 {offsets = [0, 0], sizes = [2, 32], strides = [1, 1]} : vector<2x128xf32> to vector<2x32xf32>
    %488 = vector.extract_strided_slice %485 {offsets = [0, 32], sizes = [2, 32], strides = [1, 1]} : vector<2x128xf32> to vector<2x32xf32>
    %489 = vector.extract_strided_slice %486 {offsets = [0, 64], sizes = [2, 32], strides = [1, 1]} : vector<2x128xf32> to vector<2x32xf32>
    %490 = vector.extract_strided_slice %485 {offsets = [0, 96], sizes = [2, 32], strides = [1, 1]} : vector<2x128xf32> to vector<2x32xf32>
    %491 = arith.mulf %488, %422 : vector<2x32xf32>
    %492 = arith.mulf %487, %489 : vector<2x32xf32>
    %493 = arith.addf %491, %492 : vector<2x32xf32>
    %494 = math.tanh %493 : vector<2x32xf32>
    %495 = arith.mulf %490, %494 : vector<2x32xf32>
    %496 = vector.extract_strided_slice %495 {offsets = [0, 0], sizes = [1, 32], strides = [1, 1]} : vector<2x32xf32> to vector<1x32xf32>
    %cst_149 = arith.constant dense<0.000000e+00> : vector<1x8xf32>
    %497 = tpu.matmul %496, %17, %cst_149 {dimension_numbers = #tpu.dot_dimension_numbers<[1], [0], [0], [1], [0, 0, 1, 1], [], []>} : vector<1x32xf32>, vector<32x8xf32>, vector<1x8xf32> -> vector<1x8xf32>
    %498 = vector.extract_strided_slice %495 {offsets = [1, 0], sizes = [1, 32], strides = [1, 1]} : vector<2x32xf32> to vector<1x32xf32>
    %cst_150 = arith.constant dense<0.000000e+00> : vector<1x8xf32>
    %499 = tpu.matmul %498, %19, %cst_150 {dimension_numbers = #tpu.dot_dimension_numbers<[1], [0], [0], [1], [0, 0, 1, 1], [], []>} : vector<1x32xf32>, vector<32x8xf32>, vector<1x8xf32> -> vector<1x8xf32>
    %500 = tpu.concatenate %497, %499 in 0 : vector<1x8xf32>, vector<1x8xf32> -> vector<2x8xf32>
    %501 = arith.addf %500, %11 : vector<2x8xf32>
    %cst_151 = arith.constant dense<0xFF800000> : vector<2xf32>
    %502 = vector.multi_reduction <maximumf>, %501, %cst_151 [1] : vector<2x8xf32> to vector<2xf32>
    %503 = vector.shape_cast %502 : vector<2xf32> to vector<2x1xf32>
    %504 = vector.broadcast %503 : vector<2x1xf32> to vector<2x8xf32>
    %505 = arith.subf %501, %504 : vector<2x8xf32>
    %506 = math.exp %505 : vector<2x8xf32>
    %cst_152 = arith.constant dense<0.000000e+00> : vector<2xf32>
    %507 = vector.multi_reduction <add>, %506, %cst_152 [1] : vector<2x8xf32> to vector<2xf32>
    %508 = vector.shape_cast %507 : vector<2xf32> to vector<2x1xf32>
    %509 = tpu.reciprocal %508 {approx = true} : vector<2x1xf32> -> vector<2x1xf32>
    %510 = vector.broadcast %509 : vector<2x1xf32> to vector<2x8xf32>
    %511 = arith.mulf %506, %510 : vector<2x8xf32>
    %512 = vector.extract_strided_slice %511 {offsets = [0, 0], sizes = [1, 8], strides = [1, 1]} : vector<2x8xf32> to vector<1x8xf32>
    %cst_153 = arith.constant dense<0.000000e+00> : vector<1x32xf32>
    %513 = tpu.matmul %512, %13, %cst_153 {dimension_numbers = #tpu.dot_dimension_numbers<[1], [0], [0], [1], [0, 0, 1, 1], [], []>} : vector<1x8xf32>, vector<8x32xf32>, vector<1x32xf32> -> vector<1x32xf32>
    %514 = vector.extract_strided_slice %511 {offsets = [1, 0], sizes = [1, 8], strides = [1, 1]} : vector<2x8xf32> to vector<1x8xf32>
    %cst_154 = arith.constant dense<0.000000e+00> : vector<1x32xf32>
    %515 = tpu.matmul %514, %15, %cst_154 {dimension_numbers = #tpu.dot_dimension_numbers<[1], [0], [0], [1], [0, 0, 1, 1], [], []>} : vector<1x8xf32>, vector<8x32xf32>, vector<1x32xf32> -> vector<1x32xf32>
    %516 = tpu.concatenate %513, %515 in 0 : vector<1x32xf32>, vector<1x32xf32> -> vector<2x32xf32>
    %cst_155 = arith.constant dense<0.000000e+00> : vector<2x32xf32>
    %517 = tpu.matmul %495, %5, %cst_155 {dimension_numbers = #tpu.dot_dimension_numbers<[1], [0], [0], [1], [0, 0, 1, 1], [], []>} : vector<2x32xf32>, vector<32x32xf32>, vector<2x32xf32> -> vector<2x32xf32>
    %cst_156 = arith.constant dense<0.000000e+00> : vector<2x32xf32>
    %518 = tpu.matmul %516, %6, %cst_156 {dimension_numbers = #tpu.dot_dimension_numbers<[1], [0], [0], [1], [0, 0, 1, 1], [], []>} : vector<2x32xf32>, vector<32x32xf32>, vector<2x32xf32> -> vector<2x32xf32>
    %519 = arith.addf %517, %518 : vector<2x32xf32>
    %520 = vector.broadcast %7 : vector<1x32xf32> to vector<2x32xf32>
    %521 = arith.addf %519, %520 : vector<2x32xf32>
    %522 = math.tanh %521 : vector<2x32xf32>
    %cst_157 = arith.constant dense<0.000000e+00> : vector<2x16xf32>
    %523 = tpu.matmul %522, %8, %cst_157 {dimension_numbers = #tpu.dot_dimension_numbers<[1], [0], [0], [1], [0, 0, 1, 1], [], []>} : vector<2x32xf32>, vector<32x16xf32>, vector<2x16xf32> -> vector<2x16xf32>
    %524 = vector.broadcast %9 : vector<1x16xf32> to vector<2x16xf32>
    %525 = arith.addf %523, %524 : vector<2x16xf32>
    %c7 = arith.constant 7 : index
    %c0_158 = arith.constant 0 : index
    %c0_159 = arith.constant 0 : index
    %526 = vector.load %arg0[%c7, %c0_158, %c0_159] : memref<8x2x128xf32, #tpu.memory_space<vmem>>, vector<1x2x128xf32>
    %527 = vector.shape_cast %526 : vector<1x2x128xf32> to vector<2x128xf32>
    %cst_160 = arith.constant dense<0.000000e+00> : vector<2x128xf32>
    %528 = tpu.matmul %525, %0, %cst_160 {dimension_numbers = #tpu.dot_dimension_numbers<[1], [0], [0], [1], [0, 0, 1, 1], [], []>} : vector<2x16xf32>, vector<16x128xf32>, vector<2x128xf32> -> vector<2x128xf32>
    %529 = arith.addf %527, %528 : vector<2x128xf32>
    %cst_161 = arith.constant dense<0.000000e+00> : vector<2x128xf32>
    %530 = tpu.matmul %475, %2, %cst_161 {dimension_numbers = #tpu.dot_dimension_numbers<[1], [0], [0], [1], [0, 0, 1, 1], [], []>} : vector<2x32xf32>, vector<32x128xf32>, vector<2x128xf32> -> vector<2x128xf32>
    %531 = arith.addf %529, %530 : vector<2x128xf32>
    %532 = arith.negf %531 : vector<2x128xf32>
    %533 = math.exp %532 : vector<2x128xf32>
    %cst_162 = arith.constant 1.000000e+00 : f32
    %534 = vector.broadcast %cst_162 : f32 to vector<2x128xf32>
    %535 = arith.addf %534, %533 : vector<2x128xf32>
    %536 = arith.divf %534, %535 : vector<2x128xf32>
    %537 = math.tanh %531 : vector<2x128xf32>
    %538 = vector.extract_strided_slice %536 {offsets = [0, 0], sizes = [2, 32], strides = [1, 1]} : vector<2x128xf32> to vector<2x32xf32>
    %539 = vector.extract_strided_slice %536 {offsets = [0, 32], sizes = [2, 32], strides = [1, 1]} : vector<2x128xf32> to vector<2x32xf32>
    %540 = vector.extract_strided_slice %537 {offsets = [0, 64], sizes = [2, 32], strides = [1, 1]} : vector<2x128xf32> to vector<2x32xf32>
    %541 = vector.extract_strided_slice %536 {offsets = [0, 96], sizes = [2, 32], strides = [1, 1]} : vector<2x128xf32> to vector<2x32xf32>
    %542 = arith.mulf %539, %473 : vector<2x32xf32>
    %543 = arith.mulf %538, %540 : vector<2x32xf32>
    %544 = arith.addf %542, %543 : vector<2x32xf32>
    %545 = math.tanh %544 : vector<2x32xf32>
    %546 = arith.mulf %541, %545 : vector<2x32xf32>
    %cst_163 = arith.constant dense<0.000000e+00> : vector<2x128xf32>
    %547 = tpu.matmul %546, %1, %cst_163 {dimension_numbers = #tpu.dot_dimension_numbers<[1], [0], [0], [1], [0, 0, 1, 1], [], []>} : vector<2x32xf32>, vector<32x128xf32>, vector<2x128xf32> -> vector<2x128xf32>
    %548 = vector.broadcast %4 : vector<1x128xf32> to vector<2x128xf32>
    %549 = arith.addf %547, %548 : vector<2x128xf32>
    %cst_164 = arith.constant dense<0.000000e+00> : vector<2x128xf32>
    %550 = tpu.matmul %495, %3, %cst_164 {dimension_numbers = #tpu.dot_dimension_numbers<[1], [0], [0], [1], [0, 0, 1, 1], [], []>} : vector<2x32xf32>, vector<32x128xf32>, vector<2x128xf32> -> vector<2x128xf32>
    %551 = arith.addf %549, %550 : vector<2x128xf32>
    %552 = arith.negf %551 : vector<2x128xf32>
    %553 = math.exp %552 : vector<2x128xf32>
    %cst_165 = arith.constant 1.000000e+00 : f32
    %554 = vector.broadcast %cst_165 : f32 to vector<2x128xf32>
    %555 = arith.addf %554, %553 : vector<2x128xf32>
    %556 = arith.divf %554, %555 : vector<2x128xf32>
    %557 = math.tanh %551 : vector<2x128xf32>
    %558 = vector.extract_strided_slice %556 {offsets = [0, 0], sizes = [2, 32], strides = [1, 1]} : vector<2x128xf32> to vector<2x32xf32>
    %559 = vector.extract_strided_slice %556 {offsets = [0, 32], sizes = [2, 32], strides = [1, 1]} : vector<2x128xf32> to vector<2x32xf32>
    %560 = vector.extract_strided_slice %557 {offsets = [0, 64], sizes = [2, 32], strides = [1, 1]} : vector<2x128xf32> to vector<2x32xf32>
    %561 = vector.extract_strided_slice %556 {offsets = [0, 96], sizes = [2, 32], strides = [1, 1]} : vector<2x128xf32> to vector<2x32xf32>
    %562 = arith.mulf %559, %493 : vector<2x32xf32>
    %563 = arith.mulf %558, %560 : vector<2x32xf32>
    %564 = arith.addf %562, %563 : vector<2x32xf32>
    %565 = math.tanh %564 : vector<2x32xf32>
    %566 = arith.mulf %561, %565 : vector<2x32xf32>
    %567 = vector.extract_strided_slice %566 {offsets = [0, 0], sizes = [1, 32], strides = [1, 1]} : vector<2x32xf32> to vector<1x32xf32>
    %cst_166 = arith.constant dense<0.000000e+00> : vector<1x8xf32>
    %568 = tpu.matmul %567, %17, %cst_166 {dimension_numbers = #tpu.dot_dimension_numbers<[1], [0], [0], [1], [0, 0, 1, 1], [], []>} : vector<1x32xf32>, vector<32x8xf32>, vector<1x8xf32> -> vector<1x8xf32>
    %569 = vector.extract_strided_slice %566 {offsets = [1, 0], sizes = [1, 32], strides = [1, 1]} : vector<2x32xf32> to vector<1x32xf32>
    %cst_167 = arith.constant dense<0.000000e+00> : vector<1x8xf32>
    %570 = tpu.matmul %569, %19, %cst_167 {dimension_numbers = #tpu.dot_dimension_numbers<[1], [0], [0], [1], [0, 0, 1, 1], [], []>} : vector<1x32xf32>, vector<32x8xf32>, vector<1x8xf32> -> vector<1x8xf32>
    %571 = tpu.concatenate %568, %570 in 0 : vector<1x8xf32>, vector<1x8xf32> -> vector<2x8xf32>
    %572 = arith.addf %571, %11 : vector<2x8xf32>
    %cst_168 = arith.constant dense<0xFF800000> : vector<2xf32>
    %573 = vector.multi_reduction <maximumf>, %572, %cst_168 [1] : vector<2x8xf32> to vector<2xf32>
    %574 = vector.shape_cast %573 : vector<2xf32> to vector<2x1xf32>
    %575 = vector.broadcast %574 : vector<2x1xf32> to vector<2x8xf32>
    %576 = arith.subf %572, %575 : vector<2x8xf32>
    %577 = math.exp %576 : vector<2x8xf32>
    %cst_169 = arith.constant dense<0.000000e+00> : vector<2xf32>
    %578 = vector.multi_reduction <add>, %577, %cst_169 [1] : vector<2x8xf32> to vector<2xf32>
    %579 = vector.shape_cast %578 : vector<2xf32> to vector<2x1xf32>
    %580 = tpu.reciprocal %579 {approx = true} : vector<2x1xf32> -> vector<2x1xf32>
    %581 = vector.broadcast %580 : vector<2x1xf32> to vector<2x8xf32>
    %582 = arith.mulf %577, %581 : vector<2x8xf32>
    %583 = vector.extract_strided_slice %582 {offsets = [0, 0], sizes = [1, 8], strides = [1, 1]} : vector<2x8xf32> to vector<1x8xf32>
    %cst_170 = arith.constant dense<0.000000e+00> : vector<1x32xf32>
    %584 = tpu.matmul %583, %13, %cst_170 {dimension_numbers = #tpu.dot_dimension_numbers<[1], [0], [0], [1], [0, 0, 1, 1], [], []>} : vector<1x8xf32>, vector<8x32xf32>, vector<1x32xf32> -> vector<1x32xf32>
    %585 = vector.extract_strided_slice %582 {offsets = [1, 0], sizes = [1, 8], strides = [1, 1]} : vector<2x8xf32> to vector<1x8xf32>
    %cst_171 = arith.constant dense<0.000000e+00> : vector<1x32xf32>
    %586 = tpu.matmul %585, %15, %cst_171 {dimension_numbers = #tpu.dot_dimension_numbers<[1], [0], [0], [1], [0, 0, 1, 1], [], []>} : vector<1x8xf32>, vector<8x32xf32>, vector<1x32xf32> -> vector<1x32xf32>
    %587 = tpu.concatenate %584, %586 in 0 : vector<1x32xf32>, vector<1x32xf32> -> vector<2x32xf32>
    %cst_172 = arith.constant dense<0.000000e+00> : vector<2x32xf32>
    %588 = tpu.matmul %566, %5, %cst_172 {dimension_numbers = #tpu.dot_dimension_numbers<[1], [0], [0], [1], [0, 0, 1, 1], [], []>} : vector<2x32xf32>, vector<32x32xf32>, vector<2x32xf32> -> vector<2x32xf32>
    %cst_173 = arith.constant dense<0.000000e+00> : vector<2x32xf32>
    %589 = tpu.matmul %587, %6, %cst_173 {dimension_numbers = #tpu.dot_dimension_numbers<[1], [0], [0], [1], [0, 0, 1, 1], [], []>} : vector<2x32xf32>, vector<32x32xf32>, vector<2x32xf32> -> vector<2x32xf32>
    %590 = arith.addf %588, %589 : vector<2x32xf32>
    %591 = vector.broadcast %7 : vector<1x32xf32> to vector<2x32xf32>
    %592 = arith.addf %590, %591 : vector<2x32xf32>
    %593 = math.tanh %592 : vector<2x32xf32>
    %cst_174 = arith.constant dense<0.000000e+00> : vector<2x16xf32>
    %594 = tpu.matmul %593, %8, %cst_174 {dimension_numbers = #tpu.dot_dimension_numbers<[1], [0], [0], [1], [0, 0, 1, 1], [], []>} : vector<2x32xf32>, vector<32x16xf32>, vector<2x16xf32> -> vector<2x16xf32>
    %595 = vector.broadcast %9 : vector<1x16xf32> to vector<2x16xf32>
    %596 = arith.addf %594, %595 : vector<2x16xf32>
    %597 = tpu.concatenate %99, %170, %241, %312, %383, %454, %525, %596 in 0 : vector<2x16xf32>, vector<2x16xf32>, vector<2x16xf32>, vector<2x16xf32>, vector<2x16xf32>, vector<2x16xf32>, vector<2x16xf32>, vector<2x16xf32> -> vector<16x16xf32>
    %cst_175 = arith.constant dense<0.000000e+00> : vector<16x128xf32>
    %598 = tpu.matmul %597, %10, %cst_175 {dimension_numbers = #tpu.dot_dimension_numbers<[1], [0], [0], [1], [0, 0, 1, 1], [], []>} : vector<16x16xf32>, vector<16x128xf32>, vector<16x128xf32> -> vector<16x128xf32>
    %c0_176 = arith.constant 0 : index
    %c0_177 = arith.constant 0 : index
    %599 = vector.load %arg8[%c0_176, %c0_177] : memref<16x128xf32, #tpu.memory_space<vmem>>, vector<16x128xf32>
    tpu.vector_store %arg8[%c0_176, %c0_177], %598 {strides = array<i32>} : memref<16x128xf32, #tpu.memory_space<vmem>>, vector<16x128xf32>,
    return
  }
}

</mosaic_0001>

<llo_original>
// kernel: tpu_custom_call.1
$region0: #{tpu_custom_call.1}
  #allocation0 [shape = 'u32[]', space=smem, size = 0x4, offset = 0x4, fixed_abs, tag = 'smem constant byte address 0x4 - core index']
  #allocation1 [shape = 'u32[144,128]{1,0:T(1,128)}', space=vmem, size = 0x12000, scoped, tag = 'internal scratch']
  %s0 = inlined_call_operand.vmem [shape: f32[8,2,128], index: 0, kind: input, shape index: {}]
  %s1 = inlined_call_operand.vmem [shape: f32[2,8,32], index: 1, kind: input, shape index: {}]
  %s2 = inlined_call_operand.vmem [shape: f32[2,32,8], index: 2, kind: input, shape index: {}]
  %s3 = inlined_call_operand.vmem [shape: f32[2,8], index: 3, kind: input, shape index: {}]
  %s4 = inlined_call_operand.vmem [shape: f32[2,2,32], index: 4, kind: input, shape index: {}]
  %s5 = inlined_call_operand.vmem [shape: f32[2,2,32], index: 5, kind: input, shape index: {}]
  %s6 = inlined_call_operand.vmem [shape: f32[2,16], index: 6, kind: input, shape index: {}]
  %s7 = inlined_call_operand.hbm [shape: f32[248,128], index: 7, kind: input, shape index: {}]
  %s8 = inlined_call_operand.hbm [shape: f32[16,128], index: 8, kind: output, shape index: {}]
  %s9 = sld [smem:[#allocation0]]
  $region46: #{tpu_custom_call.1} parent=0
    _
  %s11 = ssub.s32 1, %s9
  %s12 = scalar_select 0, %s11, %s9
  $region1: #{tpu_custom_call.1} parent=0
    #allocation2 [shape = 'u8[126976]{0}', space=vmem, size = 0x1f000, scoped, tag = 'input window, operand 7, single buffered']
    #allocation3 [shape = 's32[1]{0}', space=sflag, size = 0x4, scoped, tag = 'scoped memory for tpu_custom_call.1']
    #allocation4 [shape = 's32[1]{0}', space=sflag, size = 0x4, scoped, tag = 'scoped memory for tpu_custom_call.1']
    #allocation5 [shape = 'u8[8192]{0}', space=vmem, size = 0x2000, scoped, tag = 'output window, operand 0, single buffered']
    %13 = vsyncpa [#allocation3], 0
    %14 = vsyncpa [#allocation4], 0
    // Predicated region
    $region2: #{tpu_custom_call.1} parent=1 // pred_check
      _
    $region3: #{tpu_custom_call.1} parent=1 // pred_check_branch
      %16 = sbr.rel (0) target = $region5
    $region4: #{tpu_custom_call.1} parent=1 // pred_region
      _
    $region5: #{tpu_custom_call.1} parent=1 // pred_fallthru
      _
    // Predicated region
    $region6: #{tpu_custom_call.1} parent=1 // pred_check
      _
    $region7: #{tpu_custom_call.1} parent=1 // pred_check_branch
      %18 = sbr.rel (0) target = $region9
    $region8: #{tpu_custom_call.1} parent=1 // pred_region
      _
    $region9: #{tpu_custom_call.1} parent=1 // pred_fallthru
      _
    // Predicated region
    $region10: #{tpu_custom_call.1} parent=1 // pred_check
      _
    $region11: #{tpu_custom_call.1} parent=1 // pred_check_branch
      %20 = sbr.rel (0) target = $region13
    $region12: #{tpu_custom_call.1} parent=1 // pred_region
      _
    $region13: #{tpu_custom_call.1} parent=1 // pred_fallthru
      _
    // Predicated region
    $region14: #{tpu_custom_call.1} parent=1 // pred_check
      _
    $region15: #{tpu_custom_call.1} parent=1 // pred_check_branch
      %22 = sbr.rel (0) target = $region17
    $region16: #{tpu_custom_call.1} parent=1 // pred_region
      _
    $region17: #{tpu_custom_call.1} parent=1 // pred_fallthru
      _
    // Predicated region
    $region18: #{tpu_custom_call.1} parent=1 // pred_check
      _
    $region19: #{tpu_custom_call.1} parent=1 // pred_check_branch
      %24 = sbr.rel (0) target = $region21
    $region20: #{tpu_custom_call.1} parent=1 // pred_region
      _
    $region21: #{tpu_custom_call.1} parent=1 // pred_fallthru
      _
    // Predicated region
    $region22: #{tpu_custom_call.1} parent=1 // pred_check
      _
    $region23: #{tpu_custom_call.1} parent=1 // pred_check_branch
      %26 = sbr.rel (0) target = $region25
    $region24: #{tpu_custom_call.1} parent=1 // pred_region
      _
    $region25: #{tpu_custom_call.1} parent=1 // pred_fallthru
      _
    // Predicated region
    $region26: #{tpu_custom_call.1} parent=1 // pred_check
      _
    $region27: #{tpu_custom_call.1} parent=1 // pred_check_branch
      %28 = sbr.rel (0) target = $region29
    $region28: #{tpu_custom_call.1} parent=1 // pred_region
      _
    $region29: #{tpu_custom_call.1} parent=1 // pred_fallthru
      _
    // Predicated region
    $region30: #{tpu_custom_call.1} parent=1 // pred_check
      _
    $region31: #{tpu_custom_call.1} parent=1 // pred_check_branch
      %30 = sbr.rel (0) target = $region33
    $region32: #{tpu_custom_call.1} parent=1 // pred_region
      %s32 = ssub.s32 3968, 3968
      %33 = vsyncadd [#allocation3], %s32
      %s34 = sshll.u32 [#allocation2], 4
      %s35 = int_to_ptr.vmem [resolvable:$true] %s34
      %40 = dma.hbm_to_vmem [thread:$0]  %s7, 3968, %s35, [#allocation3], 128, 128, 8
    $region33: #{tpu_custom_call.1} parent=1 // pred_fallthru
      _
    // Predicated region
    $region34: #{tpu_custom_call.1} parent=1 // pred_check
      _
    $region35: #{tpu_custom_call.1} parent=1 // pred_check_branch
      %42 = sbr.rel (0) target = $region37
    $region36: #{tpu_custom_call.1} parent=1 // pred_region
      %43 = dma.done [#allocation3], 3968
    $region37: #{tpu_custom_call.1} parent=1 // pred_fallthru
      _
    %v44 = vld [vmem:[#allocation2] sm:$0xff]
    %v45 = vld [vmem:[#allocation2 + $0x8] sm:$0xff]
    %v46 = vld [vmem:[#allocation2 + $0x10] sm:$0xff]
    %v47 = vld [vmem:[#allocation2 + $0x18] sm:$0xff]
    %v48 = vld [vmem:[#allocation2 + $0x20] sm:$0xff]
    %v49 = vld [vmem:[#allocation2 + $0x28] sm:$0xff]
    %v50 = vld [vmem:[#allocation2 + $0x30] sm:$0xff]
    %v51 = vld [vmem:[#allocation2 + $0x38] sm:$0xff]
    %v52 = vld [vmem:[#allocation2 + $0x40] sm:$0xff]
    %v53 = vld [vmem:[#allocation2 + $0x48] sm:$0xff]
    %v54 = vld [vmem:[#allocation2 + $0x50] sm:$0xff]
    %v55 = vld [vmem:[#allocation2 + $0x58] sm:$0xff]
    %v56 = vld [vmem:[#allocation2 + $0x60] sm:$0xff]
    %v57 = vld [vmem:[#allocation2 + $0x68] sm:$0xff]
    %v58 = vld [vmem:[#allocation2 + $0x70] sm:$0x1]
    %v59 = vld [vmem:[#allocation2 + $0x78] sm:$0xff]
    %v60 = vld [vmem:[#allocation2 + $0x80] sm:$0xff]
    %v61 = vld [vmem:[#allocation2 + $0x88] sm:$0xff]
    %v62 = vld [vmem:[#allocation2 + $0x90] sm:$0xff]
    %v63 = vld [vmem:[#allocation2 + $0x98] sm:$0xff]
    %v64 = vld [vmem:[#allocation2 + $0xa0] sm:$0xff]
    %v65 = vld [vmem:[#allocation2 + $0xa8] sm:$0xff]
    %v66 = vld [vmem:[#allocation2 + $0xb0] sm:$0xff]
    %v67 = vld [vmem:[#allocation2 + $0xb8] sm:$0x1]
    %v68 = vld [vmem:[#allocation2 + $0xc0] sm:$0xff]
    %v69 = vld [vmem:[#allocation2 + $0xc8] sm:$0xff]
    %v70 = vld [vmem:[#allocation2 + $0xd0] sm:$0xff]
    %v71 = vld [vmem:[#allocation2 + $0xd8] sm:$0xff]
    %v72 = vld [vmem:[#allocation2 + $0xe0] sm:$0x1]
    %v73 = vld [vmem:[#allocation2 + $0xe8] sm:$0xff]
    %v74 = vld [vmem:[#allocation2 + $0xf0] sm:$0xff]
    %v75 = vld [vmem:[%s3] sm:$0x3]
    %v76 = vld [vmem:[%s1] sm:$0xff]
    %s77 = scalar_lea.vmem %s1, 8
    %v78 = vld [vmem:[%s77] sm:$0xff]
    %v79 = vld [vmem:[%s2] sm:$0xff]
    %v80 = vld [vmem:[%s2 + $0x8] sm:$0xff]
    %v81 = vld [vmem:[%s2 + $0x10] sm:$0xff]
    %v82 = vld [vmem:[%s2 + $0x18] sm:$0xff]
    %s83 = scalar_lea.vmem %s2, 32
    %v84 = vld [vmem:[%s83] sm:$0xff]
    %v85 = vld [vmem:[%s83 + $0x8] sm:$0xff]
    %v86 = vld [vmem:[%s83 + $0x10] sm:$0xff]
    %v87 = vld [vmem:[%s83 + $0x18] sm:$0xff]
    %v88 = vld [vmem:[%s4] sm:$0x3]
    %s89 = scalar_lea.vmem %s4, 2
    %v90 = vld [vmem:[%s89] sm:$0x3]
    %v91 = vld [vmem:[%s5] sm:$0x3]
    %s92 = scalar_lea.vmem %s5, 2
    %v93 = vld [vmem:[%s92] sm:$0x3]
    %v94 = vld [vmem:[%s6] sm:$0x3]
    %v95 = vld [vmem:[%s0] sm:$0x3]
    %vm96 = vcmask 130048
    %v98 = vsel %vm96, %v94, 0
    %100 = vmatprep.subr.mxu0 0.0
    %101 = vmatpush1.msra.mxu0 %v44
    %102 = vmatprep.subr.mxu0 0.0
    %103 = vmatpush1.msra.mxu0 %v45
    %104 = vmatprep.subr.mxu0 0.0
    %105 = vmatpush1.msra.mxu0 0.0
    %106 = vmatprep.subr.mxu0 0.0
    %107 = vmatpush1.msra.mxu0 0.0
    %108 = vmatprep.subr.mxu0 0.0
    %109 = vmatpush1.msra.mxu0 0.0
    %110 = vmatprep.subr.mxu0 0.0
    %111 = vmatpush1.msra.mxu0 0.0
    %112 = vmatprep.subr.mxu0 0.0
    %113 = vmatpush1.msra.mxu0 0.0
    %114 = vmatprep.subr.mxu0 0.0
    %115 = vmatpush1.msra.mxu0 0.0
    %116 = vmatprep.subr.mxu0 0.0
    %117 = vmatpush1.msra.mxu0 0.0
    %118 = vmatprep.subr.mxu0 0.0
    %119 = vmatpush1.msra.mxu0 0.0
    %120 = vmatprep.subr.mxu0 0.0
    %121 = vmatpush1.msra.mxu0 0.0
    %122 = vmatprep.subr.mxu0 0.0
    %123 = vmatpush1.msra.mxu0 0.0
    %124 = vmatprep.subr.mxu0 0.0
    %125 = vmatpush1.msra.mxu0 0.0
    %126 = vmatprep.subr.mxu0 0.0
    %127 = vmatpush1.msra.mxu0 0.0
    %128 = vmatprep.subr.mxu0 0.0
    %129 = vmatpush1.msra.mxu0 0.0
    %130 = vmatprep.subr.mxu0 0.0
    %131 = vmatpush1.msra.mxu0 0.0
    %132 = vmatprep.subr.mxu0 0.0
    %133 = vmatpush1.msra.mxu0 0.0
    %134 = vmatprep.subr.mxu0 0.0
    %135 = vmatpush1.msra.mxu0 0.0
    %136 = vmatprep.subr.mxu0 0.0
    %137 = vmatpush1.msra.mxu0 0.0
    %138 = vmatprep.subr.mxu0 0.0
    %139 = vmatpush1.msra.mxu0 0.0
    %140 = vmatprep.subr.mxu0 0.0
    %141 = vmatpush1.msra.mxu0 0.0
    %142 = vmatprep.subr.mxu0 0.0
    %143 = vmatpush1.msra.mxu0 0.0
    %144 = vmatprep.subr.mxu0 0.0
    %145 = vmatpush1.msra.mxu0 0.0
    %146 = vmatprep.subr.mxu0 0.0
    %147 = vmatpush1.msra.mxu0 0.0
    %148 = vmatprep.subr.mxu0 0.0
    %149 = vmatpush1.msra.mxu0 0.0
    %150 = vmatprep.subr.mxu0 0.0
    %151 = vmatpush1.msra.mxu0 0.0
    %152 = vmatprep.subr.mxu0 0.0
    %153 = vmatpush1.msra.mxu0 0.0
    %154 = vmatprep.subr.mxu0 0.0
    %155 = vmatpush1.msra.mxu0 0.0
    %156 = vmatprep.subr.mxu0 0.0
    %157 = vmatpush1.msra.mxu0 0.0
    %158 = vmatprep.subr.mxu0 0.0
    %159 = vmatpush1.msra.mxu0 0.0
    %160 = vmatprep.subr.mxu0 0.0
    %161 = vmatpush1.msra.mxu0 0.0
    %162 = vmatprep.subr.mxu0 0.0
    %163 = vmatpush1.msra.mxu0 0.0
    %164 = vmatprep.mubr.f32.mxu0 0.0
    %165 = vmatmul.mubr.f32.gmra.mrb[0].mxu0 %v98
    %v166 = vpop.f32.mrb[0].mxu0
    %v167 = vadd.f32 0.0, %v166
    %v168 = vpop.f32.mrb[0].mxu0
    %169 = vdwg.mxu0
    %v170 = vadd.f32 %v95, %v167
    %vm171 = vcmask 261120
    %v173 = vsel %vm171, %v88, 0
    %175 = vmatprep.subr.mxu0 0.0
    %176 = vmatpush1.msra.mxu0 %v50
    %177 = vmatprep.subr.mxu0 0.0
    %178 = vmatpush1.msra.mxu0 %v51
    %179 = vmatprep.subr.mxu0 0.0
    %180 = vmatpush1.msra.mxu0 %v52
    %181 = vmatprep.subr.mxu0 0.0
    %182 = vmatpush1.msra.mxu0 %v53
    %183 = vmatprep.subr.mxu0 0.0
    %184 = vmatpush1.msra.mxu0 0.0
    %185 = vmatprep.subr.mxu0 0.0
    %186 = vmatpush1.msra.mxu0 0.0
    %187 = vmatprep.subr.mxu0 0.0
    %188 = vmatpush1.msra.mxu0 0.0
    %189 = vmatprep.subr.mxu0 0.0
    %190 = vmatpush1.msra.mxu0 0.0
    %191 = vmatprep.subr.mxu0 0.0
    %192 = vmatpush1.msra.mxu0 0.0
    %193 = vmatprep.subr.mxu0 0.0
    %194 = vmatpush1.msra.mxu0 0.0
    %195 = vmatprep.subr.mxu0 0.0
    %196 = vmatpush1.msra.mxu0 0.0
    %197 = vmatprep.subr.mxu0 0.0
    %198 = vmatpush1.msra.mxu0 0.0
    %199 = vmatprep.subr.mxu0 0.0
    %200 = vmatpush1.msra.mxu0 0.0
    %201 = vmatprep.subr.mxu0 0.0
    %202 = vmatpush1.msra.mxu0 0.0
    %203 = vmatprep.subr.mxu0 0.0
    %204 = vmatpush1.msra.mxu0 0.0
    %205 = vmatprep.subr.mxu0 0.0
    %206 = vmatpush1.msra.mxu0 0.0
    %207 = vmatprep.subr.mxu0 0.0
    %208 = vmatpush1.msra.mxu0 0.0
    %209 = vmatprep.subr.mxu0 0.0
    %210 = vmatpush1.msra.mxu0 0.0
    %211 = vmatprep.subr.mxu0 0.0
    %212 = vmatpush1.msra.mxu0 0.0
    %213 = vmatprep.subr.mxu0 0.0
    %214 = vmatpush1.msra.mxu0 0.0
    %215 = vmatprep.subr.mxu0 0.0
    %216 = vmatpush1.msra.mxu0 0.0
    %217 = vmatprep.subr.mxu0 0.0
    %218 = vmatpush1.msra.mxu0 0.0
    %219 = vmatprep.subr.mxu0 0.0
    %220 = vmatpush1.msra.mxu0 0.0
    %221 = vmatprep.subr.mxu0 0.0
    %222 = vmatpush1.msra.mxu0 0.0
    %223 = vmatprep.subr.mxu0 0.0
    %224 = vmatpush1.msra.mxu0 0.0
    %225 = vmatprep.subr.mxu0 0.0
    %226 = vmatpush1.msra.mxu0 0.0
    %227 = vmatprep.subr.mxu0 0.0
    %228 = vmatpush1.msra.mxu0 0.0
    %229 = vmatprep.subr.mxu0 0.0
    %230 = vmatpush1.msra.mxu0 0.0
    %231 = vmatprep.subr.mxu0 0.0
    %232 = vmatpush1.msra.mxu0 0.0
    %233 = vmatprep.subr.mxu0 0.0
    %234 = vmatpush1.msra.mxu0 0.0
    %235 = vmatprep.subr.mxu0 0.0
    %236 = vmatpush1.msra.mxu0 0.0
    %237 = vmatprep.subr.mxu0 0.0
    %238 = vmatpush1.msra.mxu0 0.0
    %239 = vmatprep.mubr.f32.mxu0 0.0
    %240 = vmatmul.mubr.f32.gmra.mrb[0].mxu0 %v173
    %v241 = vpop.f32.mrb[0].mxu0
    %v242 = vadd.f32 0.0, %v241
    %v243 = vpop.f32.mrb[0].mxu0
    %244 = vdwg.mxu0
    %v245 = vadd.f32 %v170, %v242
    %v246 = vxor.u32 %v245, 2147483648
    %v247 = vmul.f32 %v246, 1.442695
    %v248 = vpow.pop %v247
    %v249 = vadd.f32 %v248, 1.0
    %v250 = vrcp.pop %v249
    %v251 = vmul.f32 1.0, %v250
    %v252 = vtanh.pop %v245
    %254 = vrot.lane.b32.xlu0 %v91, 32
    %v255 = vpop.permute.xlu0 %254
    %v257 = vmul.f32 %v251, %v255
    %259 = vrot.lane.b32.xlu0 %v252, 64
    %v260 = vpop.permute.xlu0 %259
    %v262 = vmul.f32 %v251, %v260
    %264 = vrot.lane.b32.xlu0 %v262, 32
    %v265 = vpop.permute.xlu0 %264
    %v267 = vadd.f32 %v257, %v265
    %v268 = vtanh.pop %v267
    %270 = vrot.lane.b32.xlu0 %v268, 64
    %v271 = vpop.permute.xlu0 %270
    %v273 = vmul.f32 %v251, %v271
    %v274 = vlaneseq
    %v275 = vshrl.u32 %v274, 7
    %v276 = vsub.s32 0, %v275
    %v277 = vrot.slane %v58, %v276
    %279 = vrot.lane.b32.xlu0 %v273, 32
    %v280 = vpop.permute.xlu0 %279
    %v281 = vsel %vm171, %v280, 0
    %283 = vmatprep.subr.mxu0 0.0
    %284 = vmatpush1.msra.mxu0 %v46
    %285 = vmatprep.subr.mxu0 0.0
    %286 = vmatpush1.msra.mxu0 %v47
    %287 = vmatprep.subr.mxu0 0.0
    %288 = vmatpush1.msra.mxu0 %v48
    %289 = vmatprep.subr.mxu0 0.0
    %290 = vmatpush1.msra.mxu0 %v49
    %291 = vmatprep.subr.mxu0 0.0
    %292 = vmatpush1.msra.mxu0 0.0
    %293 = vmatprep.subr.mxu0 0.0
    %294 = vmatpush1.msra.mxu0 0.0
    %295 = vmatprep.subr.mxu0 0.0
    %296 = vmatpush1.msra.mxu0 0.0
    %297 = vmatprep.subr.mxu0 0.0
    %298 = vmatpush1.msra.mxu0 0.0
    %299 = vmatprep.subr.mxu0 0.0
    %300 = vmatpush1.msra.mxu0 0.0
    %301 = vmatprep.subr.mxu0 0.0
    %302 = vmatpush1.msra.mxu0 0.0
    %303 = vmatprep.subr.mxu0 0.0
    %304 = vmatpush1.msra.mxu0 0.0
    %305 = vmatprep.subr.mxu0 0.0
    %306 = vmatpush1.msra.mxu0 0.0
    %307 = vmatprep.subr.mxu0 0.0
    %308 = vmatpush1.msra.mxu0 0.0
    %309 = vmatprep.subr.mxu0 0.0
    %310 = vmatpush1.msra.mxu0 0.0
    %311 = vmatprep.subr.mxu0 0.0
    %312 = vmatpush1.msra.mxu0 0.0
    %313 = vmatprep.subr.mxu0 0.0
    %314 = vmatpush1.msra.mxu0 0.0
    %315 = vmatprep.subr.mxu0 0.0
    %316 = vmatpush1.msra.mxu0 0.0
    %317 = vmatprep.subr.mxu0 0.0
    %318 = vmatpush1.msra.mxu0 0.0
    %319 = vmatprep.subr.mxu0 0.0
    %320 = vmatpush1.msra.mxu0 0.0
    %321 = vmatprep.subr.mxu0 0.0
    %322 = vmatpush1.msra.mxu0 0.0
    %323 = vmatprep.subr.mxu0 0.0
    %324 = vmatpush1.msra.mxu0 0.0
    %325 = vmatprep.subr.mxu0 0.0
    %326 = vmatpush1.msra.mxu0 0.0
    %327 = vmatprep.subr.mxu0 0.0
    %328 = vmatpush1.msra.mxu0 0.0
    %329 = vmatprep.subr.mxu0 0.0
    %330 = vmatpush1.msra.mxu0 0.0
    %331 = vmatprep.subr.mxu0 0.0
    %332 = vmatpush1.msra.mxu0 0.0
    %333 = vmatprep.subr.mxu0 0.0
    %334 = vmatpush1.msra.mxu0 0.0
    %335 = vmatprep.subr.mxu0 0.0
    %336 = vmatpush1.msra.mxu0 0.0
    %337 = vmatprep.subr.mxu0 0.0
    %338 = vmatpush1.msra.mxu0 0.0
    %339 = vmatprep.subr.mxu0 0.0
    %340 = vmatpush1.msra.mxu0 0.0
    %341 = vmatprep.subr.mxu0 0.0
    %342 = vmatpush1.msra.mxu0 0.0
    %343 = vmatprep.subr.mxu0 0.0
    %344 = vmatpush1.msra.mxu0 0.0
    %345 = vmatprep.subr.mxu0 0.0
    %346 = vmatpush1.msra.mxu0 0.0
    %347 = vmatprep.mubr.f32.mxu0 0.0
    %348 = vmatmul.mubr.f32.gmra.mrb[0].mxu0 %v281
    %v349 = vpop.f32.mrb[0].mxu0
    %v350 = vadd.f32 %v277, %v349
    %v351 = vpop.f32.mrb[0].mxu0
    %352 = vdwg.mxu0
    %v354 = vsel %vm171, %v90, 0
    %356 = vmatprep.subr.mxu0 0.0
    %357 = vmatpush1.msra.mxu0 %v54
    %358 = vmatprep.subr.mxu0 0.0
    %359 = vmatpush1.msra.mxu0 %v55
    %360 = vmatprep.subr.mxu0 0.0
    %361 = vmatpush1.msra.mxu0 %v56
    %362 = vmatprep.subr.mxu0 0.0
    %363 = vmatpush1.msra.mxu0 %v57
    %364 = vmatprep.subr.mxu0 0.0
    %365 = vmatpush1.msra.mxu0 0.0
    %366 = vmatprep.subr.mxu0 0.0
    %367 = vmatpush1.msra.mxu0 0.0
    %368 = vmatprep.subr.mxu0 0.0
    %369 = vmatpush1.msra.mxu0 0.0
    %370 = vmatprep.subr.mxu0 0.0
    %371 = vmatpush1.msra.mxu0 0.0
    %372 = vmatprep.subr.mxu0 0.0
    %373 = vmatpush1.msra.mxu0 0.0
    %374 = vmatprep.subr.mxu0 0.0
    %375 = vmatpush1.msra.mxu0 0.0
    %376 = vmatprep.subr.mxu0 0.0
    %377 = vmatpush1.msra.mxu0 0.0
    %378 = vmatprep.subr.mxu0 0.0
    %379 = vmatpush1.msra.mxu0 0.0
    %380 = vmatprep.subr.mxu0 0.0
    %381 = vmatpush1.msra.mxu0 0.0
    %382 = vmatprep.subr.mxu0 0.0
    %383 = vmatpush1.msra.mxu0 0.0
    %384 = vmatprep.subr.mxu0 0.0
    %385 = vmatpush1.msra.mxu0 0.0
    %386 = vmatprep.subr.mxu0 0.0
    %387 = vmatpush1.msra.mxu0 0.0
    %388 = vmatprep.subr.mxu0 0.0
    %389 = vmatpush1.msra.mxu0 0.0
    %390 = vmatprep.subr.mxu0 0.0
    %391 = vmatpush1.msra.mxu0 0.0
    %392 = vmatprep.subr.mxu0 0.0
    %393 = vmatpush1.msra.mxu0 0.0
    %394 = vmatprep.subr.mxu0 0.0
    %395 = vmatpush1.msra.mxu0 0.0
    %396 = vmatprep.subr.mxu0 0.0
    %397 = vmatpush1.msra.mxu0 0.0
    %398 = vmatprep.subr.mxu0 0.0
    %399 = vmatpush1.msra.mxu0 0.0
    %400 = vmatprep.subr.mxu0 0.0
    %401 = vmatpush1.msra.mxu0 0.0
    %402 = vmatprep.subr.mxu0 0.0
    %403 = vmatpush1.msra.mxu0 0.0
    %404 = vmatprep.subr.mxu0 0.0
    %405 = vmatpush1.msra.mxu0 0.0
    %406 = vmatprep.subr.mxu0 0.0
    %407 = vmatpush1.msra.mxu0 0.0
    %408 = vmatprep.subr.mxu0 0.0
    %409 = vmatpush1.msra.mxu0 0.0
    %410 = vmatprep.subr.mxu0 0.0
    %411 = vmatpush1.msra.mxu0 0.0
    %412 = vmatprep.subr.mxu0 0.0
    %413 = vmatpush1.msra.mxu0 0.0
    %414 = vmatprep.subr.mxu0 0.0
    %415 = vmatpush1.msra.mxu0 0.0
    %416 = vmatprep.subr.mxu0 0.0
    %417 = vmatpush1.msra.mxu0 0.0
    %418 = vmatprep.subr.mxu0 0.0
    %419 = vmatpush1.msra.mxu0 0.0
    %420 = vmatprep.mubr.f32.mxu0 0.0
    %421 = vmatmul.mubr.f32.gmra.mrb[0].mxu0 %v354
    %v422 = vpop.f32.mrb[0].mxu0
    %v423 = vadd.f32 0.0, %v422
    %v424 = vpop.f32.mrb[0].mxu0
    %425 = vdwg.mxu0
    %v426 = vadd.f32 %v350, %v423
    %v427 = vxor.u32 %v426, 2147483648
    %v428 = vmul.f32 %v427, 1.442695
    %v429 = vpow.pop %v428
    %v430 = vadd.f32 %v429, 1.0
    %v431 = vrcp.pop %v430
    %v432 = vmul.f32 1.0, %v431
    %v433 = vtanh.pop %v426
    %435 = vrot.lane.b32.xlu0 %v93, 32
    %v436 = vpop.permute.xlu0 %435
    %v438 = vmul.f32 %v432, %v436
    %440 = vrot.lane.b32.xlu0 %v433, 64
    %v441 = vpop.permute.xlu0 %440
    %v443 = vmul.f32 %v432, %v441
    %445 = vrot.lane.b32.xlu0 %v443, 32
    %v446 = vpop.permute.xlu0 %445
    %v448 = vadd.f32 %v438, %v446
    %v449 = vtanh.pop %v448
    %451 = vrot.lane.b32.xlu0 %v449, 64
    %v452 = vpop.permute.xlu0 %451
    %v454 = vmul.f32 %v432, %v452
    %456 = vrot.lane.b32.xlu0 %v454, 32
    %v457 = vpop.permute.xlu0 %456
    %v458 = vsel %vm171, %v457, 0
    %460 = vmatprep.subr.mxu0 0.0
    %461 = vmatpush1.msra.mxu0 %v79
    %462 = vmatprep.subr.mxu0 0.0
    %463 = vmatpush1.msra.mxu0 %v80
    %464 = vmatprep.subr.mxu0 0.0
    %465 = vmatpush1.msra.mxu0 %v81
    %466 = vmatprep.subr.mxu0 0.0
    %467 = vmatpush1.msra.mxu0 %v82
    %468 = vmatprep.subr.mxu0 0.0
    %469 = vmatpush1.msra.mxu0 0.0
    %470 = vmatprep.subr.mxu0 0.0
    %471 = vmatpush1.msra.mxu0 0.0
    %472 = vmatprep.subr.mxu0 0.0
    %473 = vmatpush1.msra.mxu0 0.0
    %474 = vmatprep.subr.mxu0 0.0
    %475 = vmatpush1.msra.mxu0 0.0
    %476 = vmatprep.subr.mxu0 0.0
    %477 = vmatpush1.msra.mxu0 0.0
    %478 = vmatprep.subr.mxu0 0.0
    %479 = vmatpush1.msra.mxu0 0.0
    %480 = vmatprep.subr.mxu0 0.0
    %481 = vmatpush1.msra.mxu0 0.0
    %482 = vmatprep.subr.mxu0 0.0
    %483 = vmatpush1.msra.mxu0 0.0
    %484 = vmatprep.subr.mxu0 0.0
    %485 = vmatpush1.msra.mxu0 0.0
    %486 = vmatprep.subr.mxu0 0.0
    %487 = vmatpush1.msra.mxu0 0.0
    %488 = vmatprep.subr.mxu0 0.0
    %489 = vmatpush1.msra.mxu0 0.0
    %490 = vmatprep.subr.mxu0 0.0
    %491 = vmatpush1.msra.mxu0 0.0
    %492 = vmatprep.subr.mxu0 0.0
    %493 = vmatpush1.msra.mxu0 0.0
    %494 = vmatprep.subr.mxu0 0.0
    %495 = vmatpush1.msra.mxu0 0.0
    %496 = vmatprep.subr.mxu0 0.0
    %497 = vmatpush1.msra.mxu0 0.0
    %498 = vmatprep.subr.mxu0 0.0
    %499 = vmatpush1.msra.mxu0 0.0
    %500 = vmatprep.subr.mxu0 0.0
    %501 = vmatpush1.msra.mxu0 0.0
    %502 = vmatprep.subr.mxu0 0.0
    %503 = vmatpush1.msra.mxu0 0.0
    %504 = vmatprep.subr.mxu0 0.0
    %505 = vmatpush1.msra.mxu0 0.0
    %506 = vmatprep.subr.mxu0 0.0
    %507 = vmatpush1.msra.mxu0 0.0
    %508 = vmatprep.subr.mxu0 0.0
    %509 = vmatpush1.msra.mxu0 0.0
    %510 = vmatprep.subr.mxu0 0.0
    %511 = vmatpush1.msra.mxu0 0.0
    %512 = vmatprep.subr.mxu0 0.0
    %513 = vmatpush1.msra.mxu0 0.0
    %514 = vmatprep.subr.mxu0 0.0
    %515 = vmatpush1.msra.mxu0 0.0
    %516 = vmatprep.subr.mxu0 0.0
    %517 = vmatpush1.msra.mxu0 0.0
    %518 = vmatprep.subr.mxu0 0.0
    %519 = vmatpush1.msra.mxu0 0.0
    %520 = vmatprep.subr.mxu0 0.0
    %521 = vmatpush1.msra.mxu0 0.0
    %522 = vmatprep.subr.mxu0 0.0
    %523 = vmatpush1.msra.mxu0 0.0
    %524 = vmatprep.mubr.f32.mxu0 0.0
    %525 = vmatmul.mubr.f32.gmra.mrb[0].mxu0 %v458
    %v526 = vpop.f32.mrb[0].mxu0
    %v527 = vadd.f32 0.0, %v526
    %v528 = vpop.f32.mrb[0].mxu0
    %529 = vdwg.mxu0
    %v530 = vrot.slane %v454, 1
    %531 = vrot.lane.b32.xlu0 %v530, 32
    %v532 = vpop.permute.xlu0 %531
    %v533 = vsel %vm171, %v532, 0
    %535 = vmatprep.subr.mxu0 0.0
    %536 = vmatpush1.msra.mxu0 %v84
    %537 = vmatprep.subr.mxu0 0.0
    %538 = vmatpush1.msra.mxu0 %v85
    %539 = vmatprep.subr.mxu0 0.0
    %540 = vmatpush1.msra.mxu0 %v86
    %541 = vmatprep.subr.mxu0 0.0
    %542 = vmatpush1.msra.mxu0 %v87
    %543 = vmatprep.subr.mxu0 0.0
    %544 = vmatpush1.msra.mxu0 0.0
    %545 = vmatprep.subr.mxu0 0.0
    %546 = vmatpush1.msra.mxu0 0.0
    %547 = vmatprep.subr.mxu0 0.0
    %548 = vmatpush1.msra.mxu0 0.0
    %549 = vmatprep.subr.mxu0 0.0
    %550 = vmatpush1.msra.mxu0 0.0
    %551 = vmatprep.subr.mxu0 0.0
    %552 = vmatpush1.msra.mxu0 0.0
    %553 = vmatprep.subr.mxu0 0.0
    %554 = vmatpush1.msra.mxu0 0.0
    %555 = vmatprep.subr.mxu0 0.0
    %556 = vmatpush1.msra.mxu0 0.0
    %557 = vmatprep.subr.mxu0 0.0
    %558 = vmatpush1.msra.mxu0 0.0
    %559 = vmatprep.subr.mxu0 0.0
    %560 = vmatpush1.msra.mxu0 0.0
    %561 = vmatprep.subr.mxu0 0.0
    %562 = vmatpush1.msra.mxu0 0.0
    %563 = vmatprep.subr.mxu0 0.0
    %564 = vmatpush1.msra.mxu0 0.0
    %565 = vmatprep.subr.mxu0 0.0
    %566 = vmatpush1.msra.mxu0 0.0
    %567 = vmatprep.subr.mxu0 0.0
    %568 = vmatpush1.msra.mxu0 0.0
    %569 = vmatprep.subr.mxu0 0.0
    %570 = vmatpush1.msra.mxu0 0.0
    %571 = vmatprep.subr.mxu0 0.0
    %572 = vmatpush1.msra.mxu0 0.0
    %573 = vmatprep.subr.mxu0 0.0
    %574 = vmatpush1.msra.mxu0 0.0
    %575 = vmatprep.subr.mxu0 0.0
    %576 = vmatpush1.msra.mxu0 0.0
    %577 = vmatprep.subr.mxu0 0.0
    %578 = vmatpush1.msra.mxu0 0.0
    %579 = vmatprep.subr.mxu0 0.0
    %580 = vmatpush1.msra.mxu0 0.0
    %581 = vmatprep.subr.mxu0 0.0
    %582 = vmatpush1.msra.mxu0 0.0
    %583 = vmatprep.subr.mxu0 0.0
    %584 = vmatpush1.msra.mxu0 0.0
    %585 = vmatprep.subr.mxu0 0.0
    %586 = vmatpush1.msra.mxu0 0.0
    %587 = vmatprep.subr.mxu0 0.0
    %588 = vmatpush1.msra.mxu0 0.0
    %589 = vmatprep.subr.mxu0 0.0
    %590 = vmatpush1.msra.mxu0 0.0
    %591 = vmatprep.subr.mxu0 0.0
    %592 = vmatpush1.msra.mxu0 0.0
    %593 = vmatprep.subr.mxu0 0.0
    %594 = vmatpush1.msra.mxu0 0.0
    %595 = vmatprep.subr.mxu0 0.0
    %596 = vmatpush1.msra.mxu0 0.0
    %597 = vmatprep.subr.mxu0 0.0
    %598 = vmatpush1.msra.mxu0 0.0
    %599 = vmatprep.mubr.f32.mxu0 0.0
    %600 = vmatmul.mubr.f32.gmra.mrb[0].mxu0 %v533
    %v601 = vpop.f32.mrb[0].mxu0
    %v602 = vadd.f32 0.0, %v601
    %v603 = vpop.f32.mrb[0].mxu0
    %604 = vdwg.mxu0
    %v606 = vrot.slane %v602, 7
    %vm608 = vcmask 1040384
    %v609 = vsel %vm608, %v527, %v606
    %v610 = vadd.f32 %v609, %v75
    %vm611 = vcmask 58368
    %v612 = vsel %vm611, %v610, -inf
    %613 = vmax.xlane.f32.xlu0 %v612
    %v614 = vpop.xlane.xlu0 %613
    %v615 = vsub.f32 %v610, %v614
    %v616 = vmul.f32 %v615, 1.442695
    %v617 = vpow.pop %v616
    %v618 = vsel %vm611, %v617, 0.0
    %619 = vadd.xlane.f32.xlu0 %v618
    %v620 = vpop.xlane.xlu0 %619
    %v621 = vrcp.pop %v620
    %v622 = vmul.f32 %v617, %v621
    %vm623 = vcmask 64512
    %v625 = vsel %vm623, %v622, 0
    %627 = vmatprep.subr.mxu0 0.0
    %628 = vmatpush1.msra.mxu0 %v76
    %629 = vmatprep.subr.mxu0 0.0
    %630 = vmatpush1.msra.mxu0 0.0
    %631 = vmatprep.subr.mxu0 0.0
    %632 = vmatpush1.msra.mxu0 0.0
    %633 = vmatprep.subr.mxu0 0.0
    %634 = vmatpush1.msra.mxu0 0.0
    %635 = vmatprep.subr.mxu0 0.0
    %636 = vmatpush1.msra.mxu0 0.0
    %637 = vmatprep.subr.mxu0 0.0
    %638 = vmatpush1.msra.mxu0 0.0
    %639 = vmatprep.subr.mxu0 0.0
    %640 = vmatpush1.msra.mxu0 0.0
    %641 = vmatprep.subr.mxu0 0.0
    %642 = vmatpush1.msra.mxu0 0.0
    %643 = vmatprep.subr.mxu0 0.0
    %644 = vmatpush1.msra.mxu0 0.0
    %645 = vmatprep.subr.mxu0 0.0
    %646 = vmatpush1.msra.mxu0 0.0
    %647 = vmatprep.subr.mxu0 0.0
    %648 = vmatpush1.msra.mxu0 0.0
    %649 = vmatprep.subr.mxu0 0.0
    %650 = vmatpush1.msra.mxu0 0.0
    %651 = vmatprep.subr.mxu0 0.0
    %652 = vmatpush1.msra.mxu0 0.0
    %653 = vmatprep.subr.mxu0 0.0
    %654 = vmatpush1.msra.mxu0 0.0
    %655 = vmatprep.subr.mxu0 0.0
    %656 = vmatpush1.msra.mxu0 0.0
    %657 = vmatprep.subr.mxu0 0.0
    %658 = vmatpush1.msra.mxu0 0.0
    %659 = vmatprep.subr.mxu0 0.0
    %660 = vmatpush1.msra.mxu0 0.0
    %661 = vmatprep.subr.mxu0 0.0
    %662 = vmatpush1.msra.mxu0 0.0
    %663 = vmatprep.subr.mxu0 0.0
    %664 = vmatpush1.msra.mxu0 0.0
    %665 = vmatprep.subr.mxu0 0.0
    %666 = vmatpush1.msra.mxu0 0.0
    %667 = vmatprep.subr.mxu0 0.0
    %668 = vmatpush1.msra.mxu0 0.0
    %669 = vmatprep.subr.mxu0 0.0
    %670 = vmatpush1.msra.mxu0 0.0
    %671 = vmatprep.subr.mxu0 0.0
    %672 = vmatpush1.msra.mxu0 0.0
    %673 = vmatprep.subr.mxu0 0.0
    %674 = vmatpush1.msra.mxu0 0.0
    %675 = vmatprep.subr.mxu0 0.0
    %676 = vmatpush1.msra.mxu0 0.0
    %677 = vmatprep.subr.mxu0 0.0
    %678 = vmatpush1.msra.mxu0 0.0
    %679 = vmatprep.subr.mxu0 0.0
    %680 = vmatpush1.msra.mxu0 0.0
    %681 = vmatprep.subr.mxu0 0.0
    %682 = vmatpush1.msra.mxu0 0.0
    %683 = vmatprep.subr.mxu0 0.0
    %684 = vmatpush1.msra.mxu0 0.0
    %685 = vmatprep.subr.mxu0 0.0
    %686 = vmatpush1.msra.mxu0 0.0
    %687 = vmatprep.subr.mxu0 0.0
    %688 = vmatpush1.msra.mxu0 0.0
    %689 = vmatprep.subr.mxu0 0.0
    %690 = vmatpush1.msra.mxu0 0.0
    %691 = vmatprep.mubr.f32.mxu0 0.0
    %692 = vmatmul.mubr.f32.gmra.mrb[0].mxu0 %v625
    %v693 = vpop.f32.mrb[0].mxu0
    %v694 = vadd.f32 0.0, %v693
    %v695 = vpop.f32.mrb[0].mxu0
    %696 = vdwg.mxu0
    %v697 = vrot.slane %v622, 1
    %v698 = vsel %vm623, %v697, 0
    %700 = vmatprep.subr.mxu0 0.0
    %701 = vmatpush1.msra.mxu0 %v78
    %702 = vmatprep.subr.mxu0 0.0
    %703 = vmatpush1.msra.mxu0 0.0
    %704 = vmatprep.subr.mxu0 0.0
    %705 = vmatpush1.msra.mxu0 0.0
    %706 = vmatprep.subr.mxu0 0.0
    %707 = vmatpush1.msra.mxu0 0.0
    %708 = vmatprep.subr.mxu0 0.0
    %709 = vmatpush1.msra.mxu0 0.0
    %710 = vmatprep.subr.mxu0 0.0
    %711 = vmatpush1.msra.mxu0 0.0
    %712 = vmatprep.subr.mxu0 0.0
    %713 = vmatpush1.msra.mxu0 0.0
    %714 = vmatprep.subr.mxu0 0.0
    %715 = vmatpush1.msra.mxu0 0.0
    %716 = vmatprep.subr.mxu0 0.0
    %717 = vmatpush1.msra.mxu0 0.0
    %718 = vmatprep.subr.mxu0 0.0
    %719 = vmatpush1.msra.mxu0 0.0
    %720 = vmatprep.subr.mxu0 0.0
    %721 = vmatpush1.msra.mxu0 0.0
    %722 = vmatprep.subr.mxu0 0.0
    %723 = vmatpush1.msra.mxu0 0.0
    %724 = vmatprep.subr.mxu0 0.0
    %725 = vmatpush1.msra.mxu0 0.0
    %726 = vmatprep.subr.mxu0 0.0
    %727 = vmatpush1.msra.mxu0 0.0
    %728 = vmatprep.subr.mxu0 0.0
    %729 = vmatpush1.msra.mxu0 0.0
    %730 = vmatprep.subr.mxu0 0.0
    %731 = vmatpush1.msra.mxu0 0.0
    %732 = vmatprep.subr.mxu0 0.0
    %733 = vmatpush1.msra.mxu0 0.0
    %734 = vmatprep.subr.mxu0 0.0
    %735 = vmatpush1.msra.mxu0 0.0
    %736 = vmatprep.subr.mxu0 0.0
    %737 = vmatpush1.msra.mxu0 0.0
    %738 = vmatprep.subr.mxu0 0.0
    %739 = vmatpush1.msra.mxu0 0.0
    %740 = vmatprep.subr.mxu0 0.0
    %741 = vmatpush1.msra.mxu0 0.0
    %742 = vmatprep.subr.mxu0 0.0
    %743 = vmatpush1.msra.mxu0 0.0
    %744 = vmatprep.subr.mxu0 0.0
    %745 = vmatpush1.msra.mxu0 0.0
    %746 = vmatprep.subr.mxu0 0.0
    %747 = vmatpush1.msra.mxu0 0.0
    %748 = vmatprep.subr.mxu0 0.0
    %749 = vmatpush1.msra.mxu0 0.0
    %750 = vmatprep.subr.mxu0 0.0
    %751 = vmatpush1.msra.mxu0 0.0
    %752 = vmatprep.subr.mxu0 0.0
    %753 = vmatpush1.msra.mxu0 0.0
    %754 = vmatprep.subr.mxu0 0.0
    %755 = vmatpush1.msra.mxu0 0.0
    %756 = vmatprep.subr.mxu0 0.0
    %757 = vmatpush1.msra.mxu0 0.0
    %758 = vmatprep.subr.mxu0 0.0
    %759 = vmatpush1.msra.mxu0 0.0
    %760 = vmatprep.subr.mxu0 0.0
    %761 = vmatpush1.msra.mxu0 0.0
    %762 = vmatprep.subr.mxu0 0.0
    %763 = vmatpush1.msra.mxu0 0.0
    %764 = vmatprep.mubr.f32.mxu0 0.0
    %765 = vmatmul.mubr.f32.gmra.mrb[0].mxu0 %v698
    %v766 = vpop.f32.mrb[0].mxu0
    %v767 = vadd.f32 0.0, %v766
    %v768 = vpop.f32.mrb[0].mxu0
    %769 = vdwg.mxu0
    %v771 = vrot.slane %v767, 7
    %v773 = vsel %vm608, %v694, %v771
    %v775 = vsel %vm171, %v773, 0
    %777 = vmatprep.subr.mxu0 0.0
    %778 = vmatpush1.msra.mxu0 %v63
    %779 = vmatprep.subr.mxu0 0.0
    %780 = vmatpush1.msra.mxu0 %v64
    %781 = vmatprep.subr.mxu0 0.0
    %782 = vmatpush1.msra.mxu0 %v65
    %783 = vmatprep.subr.mxu0 0.0
    %784 = vmatpush1.msra.mxu0 %v66
    %785 = vmatprep.subr.mxu0 0.0
    %786 = vmatpush1.msra.mxu0 0.0
    %787 = vmatprep.subr.mxu0 0.0
    %788 = vmatpush1.msra.mxu0 0.0
    %789 = vmatprep.subr.mxu0 0.0
    %790 = vmatpush1.msra.mxu0 0.0
    %791 = vmatprep.subr.mxu0 0.0
    %792 = vmatpush1.msra.mxu0 0.0
    %793 = vmatprep.subr.mxu0 0.0
    %794 = vmatpush1.msra.mxu0 0.0
    %795 = vmatprep.subr.mxu0 0.0
    %796 = vmatpush1.msra.mxu0 0.0
    %797 = vmatprep.subr.mxu0 0.0
    %798 = vmatpush1.msra.mxu0 0.0
    %799 = vmatprep.subr.mxu0 0.0
    %800 = vmatpush1.msra.mxu0 0.0
    %801 = vmatprep.subr.mxu0 0.0
    %802 = vmatpush1.msra.mxu0 0.0
    %803 = vmatprep.subr.mxu0 0.0
    %804 = vmatpush1.msra.mxu0 0.0
    %805 = vmatprep.subr.mxu0 0.0
    %806 = vmatpush1.msra.mxu0 0.0
    %807 = vmatprep.subr.mxu0 0.0
    %808 = vmatpush1.msra.mxu0 0.0
    %809 = vmatprep.subr.mxu0 0.0
    %810 = vmatpush1.msra.mxu0 0.0
    %811 = vmatprep.subr.mxu0 0.0
    %812 = vmatpush1.msra.mxu0 0.0
    %813 = vmatprep.subr.mxu0 0.0
    %814 = vmatpush1.msra.mxu0 0.0
    %815 = vmatprep.subr.mxu0 0.0
    %816 = vmatpush1.msra.mxu0 0.0
    %817 = vmatprep.subr.mxu0 0.0
    %818 = vmatpush1.msra.mxu0 0.0
    %819 = vmatprep.subr.mxu0 0.0
    %820 = vmatpush1.msra.mxu0 0.0
    %821 = vmatprep.subr.mxu0 0.0
    %822 = vmatpush1.msra.mxu0 0.0
    %823 = vmatprep.subr.mxu0 0.0
    %824 = vmatpush1.msra.mxu0 0.0
    %825 = vmatprep.subr.mxu0 0.0
    %826 = vmatpush1.msra.mxu0 0.0
    %827 = vmatprep.subr.mxu0 0.0
    %828 = vmatpush1.msra.mxu0 0.0
    %829 = vmatprep.subr.mxu0 0.0
    %830 = vmatpush1.msra.mxu0 0.0
    %831 = vmatprep.subr.mxu0 0.0
    %832 = vmatpush1.msra.mxu0 0.0
    %833 = vmatprep.subr.mxu0 0.0
    %834 = vmatpush1.msra.mxu0 0.0
    %835 = vmatprep.subr.mxu0 0.0
    %836 = vmatpush1.msra.mxu0 0.0
    %837 = vmatprep.subr.mxu0 0.0
    %838 = vmatpush1.msra.mxu0 0.0
    %839 = vmatprep.subr.mxu0 0.0
    %840 = vmatpush1.msra.mxu0 0.0
    %841 = vmatprep.mubr.f32.mxu0 0.0
    %842 = vmatmul.mubr.f32.gmra.mrb[0].mxu0 %v775
    %v843 = vpop.f32.mrb[0].mxu0
    %v844 = vadd.f32 0.0, %v843
    %v845 = vpop.f32.mrb[0].mxu0
    %846 = vdwg.mxu0
    %847 = vmatprep.subr.mxu0 0.0
    %848 = vmatpush1.msra.mxu0 %v59
    %849 = vmatprep.subr.mxu0 0.0
    %850 = vmatpush1.msra.mxu0 %v60
    %851 = vmatprep.subr.mxu0 0.0
    %852 = vmatpush1.msra.mxu0 %v61
    %853 = vmatprep.subr.mxu0 0.0
    %854 = vmatpush1.msra.mxu0 %v62
    %855 = vmatprep.subr.mxu0 0.0
    %856 = vmatpush1.msra.mxu0 0.0
    %857 = vmatprep.subr.mxu0 0.0
    %858 = vmatpush1.msra.mxu0 0.0
    %859 = vmatprep.subr.mxu0 0.0
    %860 = vmatpush1.msra.mxu0 0.0
    %861 = vmatprep.subr.mxu0 0.0
    %862 = vmatpush1.msra.mxu0 0.0
    %863 = vmatprep.subr.mxu0 0.0
    %864 = vmatpush1.msra.mxu0 0.0
    %865 = vmatprep.subr.mxu0 0.0
    %866 = vmatpush1.msra.mxu0 0.0
    %867 = vmatprep.subr.mxu0 0.0
    %868 = vmatpush1.msra.mxu0 0.0
    %869 = vmatprep.subr.mxu0 0.0
    %870 = vmatpush1.msra.mxu0 0.0
    %871 = vmatprep.subr.mxu0 0.0
    %872 = vmatpush1.msra.mxu0 0.0
    %873 = vmatprep.subr.mxu0 0.0
    %874 = vmatpush1.msra.mxu0 0.0
    %875 = vmatprep.subr.mxu0 0.0
    %876 = vmatpush1.msra.mxu0 0.0
    %877 = vmatprep.subr.mxu0 0.0
    %878 = vmatpush1.msra.mxu0 0.0
    %879 = vmatprep.subr.mxu0 0.0
    %880 = vmatpush1.msra.mxu0 0.0
    %881 = vmatprep.subr.mxu0 0.0
    %882 = vmatpush1.msra.mxu0 0.0
    %883 = vmatprep.subr.mxu0 0.0
    %884 = vmatpush1.msra.mxu0 0.0
    %885 = vmatprep.subr.mxu0 0.0
    %886 = vmatpush1.msra.mxu0 0.0
    %887 = vmatprep.subr.mxu0 0.0
    %888 = vmatpush1.msra.mxu0 0.0
    %889 = vmatprep.subr.mxu0 0.0
    %890 = vmatpush1.msra.mxu0 0.0
    %891 = vmatprep.subr.mxu0 0.0
    %892 = vmatpush1.msra.mxu0 0.0
    %893 = vmatprep.subr.mxu0 0.0
    %894 = vmatpush1.msra.mxu0 0.0
    %895 = vmatprep.subr.mxu0 0.0
    %896 = vmatpush1.msra.mxu0 0.0
    %897 = vmatprep.subr.mxu0 0.0
    %898 = vmatpush1.msra.mxu0 0.0
    %899 = vmatprep.subr.mxu0 0.0
    %900 = vmatpush1.msra.mxu0 0.0
    %901 = vmatprep.subr.mxu0 0.0
    %902 = vmatpush1.msra.mxu0 0.0
    %903 = vmatprep.subr.mxu0 0.0
    %904 = vmatpush1.msra.mxu0 0.0
    %905 = vmatprep.subr.mxu0 0.0
    %906 = vmatpush1.msra.mxu0 0.0
    %907 = vmatprep.subr.mxu0 0.0
    %908 = vmatpush1.msra.mxu0 0.0
    %909 = vmatprep.subr.mxu0 0.0
    %910 = vmatpush1.msra.mxu0 0.0
    %911 = vmatprep.mubr.f32.mxu0 0.0
    %912 = vmatmul.mubr.f32.gmra.mrb[0].mxu0 %v458
    %v913 = vpop.f32.mrb[0].mxu0
    %v914 = vadd.f32 %v844, %v913
    %v915 = vpop.f32.mrb[0].mxu0
    %916 = vdwg.mxu0
    %v917 = vlaneseq
    %v918 = vshrl.u32 %v917, 7
    %v919 = vsub.s32 0, %v918
    %v920 = vrot.slane %v67, %v919
    %v921 = vadd.f32 %v914, %v920
    %v922 = vtanh.pop %v921
    %v923 = vlaneseq
    %v924 = vshrl.u32 %v923, 7
    %v925 = vsub.s32 0, %v924
    %v926 = vrot.slane %v72, %v925
    %v928 = vsel %vm171, %v922, 0
    %930 = vmatprep.subr.mxu0 0.0
    %931 = vmatpush1.msra.mxu0 %v68
    %932 = vmatprep.subr.mxu0 0.0
    %933 = vmatpush1.msra.mxu0 %v69
    %934 = vmatprep.subr.mxu0 0.0
    %935 = vmatpush1.msra.mxu0 %v70
    %936 = vmatprep.subr.mxu0 0.0
    %937 = vmatpush1.msra.mxu0 %v71
    %938 = vmatprep.subr.mxu0 0.0
    %939 = vmatpush1.msra.mxu0 0.0
    %940 = vmatprep.subr.mxu0 0.0
    %941 = vmatpush1.msra.mxu0 0.0
    %942 = vmatprep.subr.mxu0 0.0
    %943 = vmatpush1.msra.mxu0 0.0
    %944 = vmatprep.subr.mxu0 0.0
    %945 = vmatpush1.msra.mxu0 0.0
    %946 = vmatprep.subr.mxu0 0.0
    %947 = vmatpush1.msra.mxu0 0.0
    %948 = vmatprep.subr.mxu0 0.0
    %949 = vmatpush1.msra.mxu0 0.0
    %950 = vmatprep.subr.mxu0 0.0
    %951 = vmatpush1.msra.mxu0 0.0
    %952 = vmatprep.subr.mxu0 0.0
    %953 = vmatpush1.msra.mxu0 0.0
    %954 = vmatprep.subr.mxu0 0.0
    %955 = vmatpush1.msra.mxu0 0.0
    %956 = vmatprep.subr.mxu0 0.0
    %957 = vmatpush1.msra.mxu0 0.0
    %958 = vmatprep.subr.mxu0 0.0
    %959 = vmatpush1.msra.mxu0 0.0
    %960 = vmatprep.subr.mxu0 0.0
    %961 = vmatpush1.msra.mxu0 0.0
    %962 = vmatprep.subr.mxu0 0.0
    %963 = vmatpush1.msra.mxu0 0.0
    %964 = vmatprep.subr.mxu0 0.0
    %965 = vmatpush1.msra.mxu0 0.0
    %966 = vmatprep.subr.mxu0 0.0
    %967 = vmatpush1.msra.mxu0 0.0
    %968 = vmatprep.subr.mxu0 0.0
    %969 = vmatpush1.msra.mxu0 0.0
    %970 = vmatprep.subr.mxu0 0.0
    %971 = vmatpush1.msra.mxu0 0.0
    %972 = vmatprep.subr.mxu0 0.0
    %973 = vmatpush1.msra.mxu0 0.0
    %974 = vmatprep.subr.mxu0 0.0
    %975 = vmatpush1.msra.mxu0 0.0
    %976 = vmatprep.subr.mxu0 0.0
    %977 = vmatpush1.msra.mxu0 0.0
    %978 = vmatprep.subr.mxu0 0.0
    %979 = vmatpush1.msra.mxu0 0.0
    %980 = vmatprep.subr.mxu0 0.0
    %981 = vmatpush1.msra.mxu0 0.0
    %982 = vmatprep.subr.mxu0 0.0
    %983 = vmatpush1.msra.mxu0 0.0
    %984 = vmatprep.subr.mxu0 0.0
    %985 = vmatpush1.msra.mxu0 0.0
    %986 = vmatprep.subr.mxu0 0.0
    %987 = vmatpush1.msra.mxu0 0.0
    %988 = vmatprep.subr.mxu0 0.0
    %989 = vmatpush1.msra.mxu0 0.0
    %990 = vmatprep.subr.mxu0 0.0
    %991 = vmatpush1.msra.mxu0 0.0
    %992 = vmatprep.subr.mxu0 0.0
    %993 = vmatpush1.msra.mxu0 0.0
    %994 = vmatprep.mubr.f32.mxu0 0.0
    %995 = vmatmul.mubr.f32.gmra.mrb[0].mxu0 %v928
    %v996 = vpop.f32.mrb[0].mxu0
    %v997 = vadd.f32 %v926, %v996
    %v998 = vpop.f32.mrb[0].mxu0
    %999 = vdwg.mxu0
    %s1000 = scalar_lea.vmem %s0, 2
    %v1001 = vld [vmem:[%s1000] sm:$0x3]
    %v1003 = vsel %vm96, %v997, 0
    %1005 = vmatprep.subr.mxu0 0.0
    %1006 = vmatpush1.msra.mxu0 %v44
    %1007 = vmatprep.subr.mxu0 0.0
    %1008 = vmatpush1.msra.mxu0 %v45
    %1009 = vmatprep.subr.mxu0 0.0
    %1010 = vmatpush1.msra.mxu0 0.0
    %1011 = vmatprep.subr.mxu0 0.0
    %1012 = vmatpush1.msra.mxu0 0.0
    %1013 = vmatprep.subr.mxu0 0.0
    %1014 = vmatpush1.msra.mxu0 0.0
    %1015 = vmatprep.subr.mxu0 0.0
    %1016 = vmatpush1.msra.mxu0 0.0
    %1017 = vmatprep.subr.mxu0 0.0
    %1018 = vmatpush1.msra.mxu0 0.0
    %1019 = vmatprep.subr.mxu0 0.0
    %1020 = vmatpush1.msra.mxu0 0.0
    %1021 = vmatprep.subr.mxu0 0.0
    %1022 = vmatpush1.msra.mxu0 0.0
    %1023 = vmatprep.subr.mxu0 0.0
    %1024 = vmatpush1.msra.mxu0 0.0
    %1025 = vmatprep.subr.mxu0 0.0
    %1026 = vmatpush1.msra.mxu0 0.0
    %1027 = vmatprep.subr.mxu0 0.0
    %1028 = vmatpush1.msra.mxu0 0.0
    %1029 = vmatprep.subr.mxu0 0.0
    %1030 = vmatpush1.msra.mxu0 0.0
    %1031 = vmatprep.subr.mxu0 0.0
    %1032 = vmatpush1.msra.mxu0 0.0
    %1033 = vmatprep.subr.mxu0 0.0
    %1034 = vmatpush1.msra.mxu0 0.0
    %1035 = vmatprep.subr.mxu0 0.0
    %1036 = vmatpush1.msra.mxu0 0.0
    %1037 = vmatprep.subr.mxu0 0.0
    %1038 = vmatpush1.msra.mxu0 0.0
    %1039 = vmatprep.subr.mxu0 0.0
    %1040 = vmatpush1.msra.mxu0 0.0
    %1041 = vmatprep.subr.mxu0 0.0
    %1042 = vmatpush1.msra.mxu0 0.0
    %1043 = vmatprep.subr.mxu0 0.0
    %1044 = vmatpush1.msra.mxu0 0.0
    %1045 = vmatprep.subr.mxu0 0.0
    %1046 = vmatpush1.msra.mxu0 0.0
    %1047 = vmatprep.subr.mxu0 0.0
    %1048 = vmatpush1.msra.mxu0 0.0
    %1049 = vmatprep.subr.mxu0 0.0
    %1050 = vmatpush1.msra.mxu0 0.0
    %1051 = vmatprep.subr.mxu0 0.0
    %1052 = vmatpush1.msra.mxu0 0.0
    %1053 = vmatprep.subr.mxu0 0.0
    %1054 = vmatpush1.msra.mxu0 0.0
    %1055 = vmatprep.subr.mxu0 0.0
    %1056 = vmatpush1.msra.mxu0 0.0
    %1057 = vmatprep.subr.mxu0 0.0
    %1058 = vmatpush1.msra.mxu0 0.0
    %1059 = vmatprep.subr.mxu0 0.0
    %1060 = vmatpush1.msra.mxu0 0.0
    %1061 = vmatprep.subr.mxu0 0.0
    %1062 = vmatpush1.msra.mxu0 0.0
    %1063 = vmatprep.subr.mxu0 0.0
    %1064 = vmatpush1.msra.mxu0 0.0
    %1065 = vmatprep.subr.mxu0 0.0
    %1066 = vmatpush1.msra.mxu0 0.0
    %1067 = vmatprep.subr.mxu0 0.0
    %1068 = vmatpush1.msra.mxu0 0.0
    %1069 = vmatprep.mubr.f32.mxu0 0.0
    %1070 = vmatmul.mubr.f32.gmra.mrb[0].mxu0 %v1003
    %v1071 = vpop.f32.mrb[0].mxu0
    %v1072 = vadd.f32 0.0, %v1071
    %v1073 = vpop.f32.mrb[0].mxu0
    %1074 = vdwg.mxu0
    %v1075 = vadd.f32 %v1001, %v1072
    %1076 = vmatprep.subr.mxu0 0.0
    %1077 = vmatpush1.msra.mxu0 %v50
    %1078 = vmatprep.subr.mxu0 0.0
    %1079 = vmatpush1.msra.mxu0 %v51
    %1080 = vmatprep.subr.mxu0 0.0
    %1081 = vmatpush1.msra.mxu0 %v52
    %1082 = vmatprep.subr.mxu0 0.0
    %1083 = vmatpush1.msra.mxu0 %v53
    %1084 = vmatprep.subr.mxu0 0.0
    %1085 = vmatpush1.msra.mxu0 0.0
    %1086 = vmatprep.subr.mxu0 0.0
    %1087 = vmatpush1.msra.mxu0 0.0
    %1088 = vmatprep.subr.mxu0 0.0
    %1089 = vmatpush1.msra.mxu0 0.0
    %1090 = vmatprep.subr.mxu0 0.0
    %1091 = vmatpush1.msra.mxu0 0.0
    %1092 = vmatprep.subr.mxu0 0.0
    %1093 = vmatpush1.msra.mxu0 0.0
    %1094 = vmatprep.subr.mxu0 0.0
    %1095 = vmatpush1.msra.mxu0 0.0
    %1096 = vmatprep.subr.mxu0 0.0
    %1097 = vmatpush1.msra.mxu0 0.0
    %1098 = vmatprep.subr.mxu0 0.0
    %1099 = vmatpush1.msra.mxu0 0.0
    %1100 = vmatprep.subr.mxu0 0.0
    %1101 = vmatpush1.msra.mxu0 0.0
    %1102 = vmatprep.subr.mxu0 0.0
    %1103 = vmatpush1.msra.mxu0 0.0
    %1104 = vmatprep.subr.mxu0 0.0
    %1105 = vmatpush1.msra.mxu0 0.0
    %1106 = vmatprep.subr.mxu0 0.0
    %1107 = vmatpush1.msra.mxu0 0.0
    %1108 = vmatprep.subr.mxu0 0.0
    %1109 = vmatpush1.msra.mxu0 0.0
    %1110 = vmatprep.subr.mxu0 0.0
    %1111 = vmatpush1.msra.mxu0 0.0
    %1112 = vmatprep.subr.mxu0 0.0
    %1113 = vmatpush1.msra.mxu0 0.0
    %1114 = vmatprep.subr.mxu0 0.0
    %1115 = vmatpush1.msra.mxu0 0.0
    %1116 = vmatprep.subr.mxu0 0.0
    %1117 = vmatpush1.msra.mxu0 0.0
    %1118 = vmatprep.subr.mxu0 0.0
    %1119 = vmatpush1.msra.mxu0 0.0
    %1120 = vmatprep.subr.mxu0 0.0
    %1121 = vmatpush1.msra.mxu0 0.0
    %1122 = vmatprep.subr.mxu0 0.0
    %1123 = vmatpush1.msra.mxu0 0.0
    %1124 = vmatprep.subr.mxu0 0.0
    %1125 = vmatpush1.msra.mxu0 0.0
    %1126 = vmatprep.subr.mxu0 0.0
    %1127 = vmatpush1.msra.mxu0 0.0
    %1128 = vmatprep.subr.mxu0 0.0
    %1129 = vmatpush1.msra.mxu0 0.0
    %1130 = vmatprep.subr.mxu0 0.0
    %1131 = vmatpush1.msra.mxu0 0.0
    %1132 = vmatprep.subr.mxu0 0.0
    %1133 = vmatpush1.msra.mxu0 0.0
    %1134 = vmatprep.subr.mxu0 0.0
    %1135 = vmatpush1.msra.mxu0 0.0
    %1136 = vmatprep.subr.mxu0 0.0
    %1137 = vmatpush1.msra.mxu0 0.0
    %1138 = vmatprep.subr.mxu0 0.0
    %1139 = vmatpush1.msra.mxu0 0.0
    %1140 = vmatprep.mubr.f32.mxu0 0.0
    %1141 = vmatmul.mubr.f32.gmra.mrb[0].mxu0 %v281
    %v1142 = vpop.f32.mrb[0].mxu0
    %v1143 = vadd.f32 0.0, %v1142
    %v1144 = vpop.f32.mrb[0].mxu0
    %1145 = vdwg.mxu0
    %v1146 = vadd.f32 %v1075, %v1143
    %v1147 = vxor.u32 %v1146, 2147483648
    %v1148 = vmul.f32 %v1147, 1.442695
    %v1149 = vpow.pop %v1148
    %v1150 = vadd.f32 %v1149, 1.0
    %v1151 = vrcp.pop %v1150
    %v1152 = vmul.f32 1.0, %v1151
    %v1153 = vtanh.pop %v1146
    %v1154 = vmul.f32 %v1152, %v267
    %1156 = vrot.lane.b32.xlu0 %v1153, 64
    %v1157 = vpop.permute.xlu0 %1156
    %v1159 = vmul.f32 %v1152, %v1157
    %1161 = vrot.lane.b32.xlu0 %v1159, 32
    %v1162 = vpop.permute.xlu0 %1161
    %v1164 = vadd.f32 %v1154, %v1162
    %v1165 = vtanh.pop %v1164
    %1167 = vrot.lane.b32.xlu0 %v1165, 64
    %v1168 = vpop.permute.xlu0 %1167
    %v1170 = vmul.f32 %v1152, %v1168
    %1172 = vrot.lane.b32.xlu0 %v1170, 32
    %v1173 = vpop.permute.xlu0 %1172
    %v1174 = vsel %vm171, %v1173, 0
    %1176 = vmatprep.subr.mxu0 0.0
    %1177 = vmatpush1.msra.mxu0 %v46
    %1178 = vmatprep.subr.mxu0 0.0
    %1179 = vmatpush1.msra.mxu0 %v47
    %1180 = vmatprep.subr.mxu0 0.0
    %1181 = vmatpush1.msra.mxu0 %v48
    %1182 = vmatprep.subr.mxu0 0.0
    %1183 = vmatpush1.msra.mxu0 %v49
    %1184 = vmatprep.subr.mxu0 0.0
    %1185 = vmatpush1.msra.mxu0 0.0
    %1186 = vmatprep.subr.mxu0 0.0
    %1187 = vmatpush1.msra.mxu0 0.0
    %1188 = vmatprep.subr.mxu0 0.0
    %1189 = vmatpush1.msra.mxu0 0.0
    %1190 = vmatprep.subr.mxu0 0.0
    %1191 = vmatpush1.msra.mxu0 0.0
    %1192 = vmatprep.subr.mxu0 0.0
    %1193 = vmatpush1.msra.mxu0 0.0
    %1194 = vmatprep.subr.mxu0 0.0
    %1195 = vmatpush1.msra.mxu0 0.0
    %1196 = vmatprep.subr.mxu0 0.0
    %1197 = vmatpush1.msra.mxu0 0.0
    %1198 = vmatprep.subr.mxu0 0.0
    %1199 = vmatpush1.msra.mxu0 0.0
    %1200 = vmatprep.subr.mxu0 0.0
    %1201 = vmatpush1.msra.mxu0 0.0
    %1202 = vmatprep.subr.mxu0 0.0
    %1203 = vmatpush1.msra.mxu0 0.0
    %1204 = vmatprep.subr.mxu0 0.0
    %1205 = vmatpush1.msra.mxu0 0.0
    %1206 = vmatprep.subr.mxu0 0.0
    %1207 = vmatpush1.msra.mxu0 0.0
    %1208 = vmatprep.subr.mxu0 0.0
    %1209 = vmatpush1.msra.mxu0 0.0
    %1210 = vmatprep.subr.mxu0 0.0
    %1211 = vmatpush1.msra.mxu0 0.0
    %1212 = vmatprep.subr.mxu0 0.0
    %1213 = vmatpush1.msra.mxu0 0.0
    %1214 = vmatprep.subr.mxu0 0.0
    %1215 = vmatpush1.msra.mxu0 0.0
    %1216 = vmatprep.subr.mxu0 0.0
    %1217 = vmatpush1.msra.mxu0 0.0
    %1218 = vmatprep.subr.mxu0 0.0
    %1219 = vmatpush1.msra.mxu0 0.0
    %1220 = vmatprep.subr.mxu0 0.0
    %1221 = vmatpush1.msra.mxu0 0.0
    %1222 = vmatprep.subr.mxu0 0.0
    %1223 = vmatpush1.msra.mxu0 0.0
    %1224 = vmatprep.subr.mxu0 0.0
    %1225 = vmatpush1.msra.mxu0 0.0
    %1226 = vmatprep.subr.mxu0 0.0
    %1227 = vmatpush1.msra.mxu0 0.0
    %1228 = vmatprep.subr.mxu0 0.0
    %1229 = vmatpush1.msra.mxu0 0.0
    %1230 = vmatprep.subr.mxu0 0.0
    %1231 = vmatpush1.msra.mxu0 0.0
    %1232 = vmatprep.subr.mxu0 0.0
    %1233 = vmatpush1.msra.mxu0 0.0
    %1234 = vmatprep.subr.mxu0 0.0
    %1235 = vmatpush1.msra.mxu0 0.0
    %1236 = vmatprep.subr.mxu0 0.0
    %1237 = vmatpush1.msra.mxu0 0.0
    %1238 = vmatprep.subr.mxu0 0.0
    %1239 = vmatpush1.msra.mxu0 0.0
    %1240 = vmatprep.mubr.f32.mxu0 0.0
    %1241 = vmatmul.mubr.f32.gmra.mrb[0].mxu0 %v1174
    %v1242 = vpop.f32.mrb[0].mxu0
    %v1243 = vadd.f32 %v277, %v1242
    %v1244 = vpop.f32.mrb[0].mxu0
    %1245 = vdwg.mxu0
    %1246 = vmatprep.subr.mxu0 0.0
    %1247 = vmatpush1.msra.mxu0 %v54
    %1248 = vmatprep.subr.mxu0 0.0
    %1249 = vmatpush1.msra.mxu0 %v55
    %1250 = vmatprep.subr.mxu0 0.0
    %1251 = vmatpush1.msra.mxu0 %v56
    %1252 = vmatprep.subr.mxu0 0.0
    %1253 = vmatpush1.msra.mxu0 %v57
    %1254 = vmatprep.subr.mxu0 0.0
    %1255 = vmatpush1.msra.mxu0 0.0
    %1256 = vmatprep.subr.mxu0 0.0
    %1257 = vmatpush1.msra.mxu0 0.0
    %1258 = vmatprep.subr.mxu0 0.0
    %1259 = vmatpush1.msra.mxu0 0.0
    %1260 = vmatprep.subr.mxu0 0.0
    %1261 = vmatpush1.msra.mxu0 0.0
    %1262 = vmatprep.subr.mxu0 0.0
    %1263 = vmatpush1.msra.mxu0 0.0
    %1264 = vmatprep.subr.mxu0 0.0
    %1265 = vmatpush1.msra.mxu0 0.0
    %1266 = vmatprep.subr.mxu0 0.0
    %1267 = vmatpush1.msra.mxu0 0.0
    %1268 = vmatprep.subr.mxu0 0.0
    %1269 = vmatpush1.msra.mxu0 0.0
    %1270 = vmatprep.subr.mxu0 0.0
    %1271 = vmatpush1.msra.mxu0 0.0
    %1272 = vmatprep.subr.mxu0 0.0
    %1273 = vmatpush1.msra.mxu0 0.0
    %1274 = vmatprep.subr.mxu0 0.0
    %1275 = vmatpush1.msra.mxu0 0.0
    %1276 = vmatprep.subr.mxu0 0.0
    %1277 = vmatpush1.msra.mxu0 0.0
    %1278 = vmatprep.subr.mxu0 0.0
    %1279 = vmatpush1.msra.mxu0 0.0
    %1280 = vmatprep.subr.mxu0 0.0
    %1281 = vmatpush1.msra.mxu0 0.0
    %1282 = vmatprep.subr.mxu0 0.0
    %1283 = vmatpush1.msra.mxu0 0.0
    %1284 = vmatprep.subr.mxu0 0.0
    %1285 = vmatpush1.msra.mxu0 0.0
    %1286 = vmatprep.subr.mxu0 0.0
    %1287 = vmatpush1.msra.mxu0 0.0
    %1288 = vmatprep.subr.mxu0 0.0
    %1289 = vmatpush1.msra.mxu0 0.0
    %1290 = vmatprep.subr.mxu0 0.0
    %1291 = vmatpush1.msra.mxu0 0.0
    %1292 = vmatprep.subr.mxu0 0.0
    %1293 = vmatpush1.msra.mxu0 0.0
    %1294 = vmatprep.subr.mxu0 0.0
    %1295 = vmatpush1.msra.mxu0 0.0
    %1296 = vmatprep.subr.mxu0 0.0
    %1297 = vmatpush1.msra.mxu0 0.0
    %1298 = vmatprep.subr.mxu0 0.0
    %1299 = vmatpush1.msra.mxu0 0.0
    %1300 = vmatprep.subr.mxu0 0.0
    %1301 = vmatpush1.msra.mxu0 0.0
    %1302 = vmatprep.subr.mxu0 0.0
    %1303 = vmatpush1.msra.mxu0 0.0
    %1304 = vmatprep.subr.mxu0 0.0
    %1305 = vmatpush1.msra.mxu0 0.0
    %1306 = vmatprep.subr.mxu0 0.0
    %1307 = vmatpush1.msra.mxu0 0.0
    %1308 = vmatprep.subr.mxu0 0.0
    %1309 = vmatpush1.msra.mxu0 0.0
    %1310 = vmatprep.mubr.f32.mxu0 0.0
    %1311 = vmatmul.mubr.f32.gmra.mrb[0].mxu0 %v458
    %v1312 = vpop.f32.mrb[0].mxu0
    %v1313 = vadd.f32 0.0, %v1312
    %v1314 = vpop.f32.mrb[0].mxu0
    %1315 = vdwg.mxu0
    %v1316 = vadd.f32 %v1243, %v1313
    %v1317 = vxor.u32 %v1316, 2147483648
    %v1318 = vmul.f32 %v1317, 1.442695
    %v1319 = vpow.pop %v1318
    %v1320 = vadd.f32 %v1319, 1.0
    %v1321 = vrcp.pop %v1320
    %v1322 = vmul.f32 1.0, %v1321
    %v1323 = vtanh.pop %v1316
    %v1324 = vmul.f32 %v1322, %v448
    %1326 = vrot.lane.b32.xlu0 %v1323, 64
    %v1327 = vpop.permute.xlu0 %1326
    %v1329 = vmul.f32 %v1322, %v1327
    %1331 = vrot.lane.b32.xlu0 %v1329, 32
    %v1332 = vpop.permute.xlu0 %1331
    %v1334 = vadd.f32 %v1324, %v1332
    %v1335 = vtanh.pop %v1334
    %1337 = vrot.lane.b32.xlu0 %v1335, 64
    %v1338 = vpop.permute.xlu0 %1337
    %v1340 = vmul.f32 %v1322, %v1338
    %1342 = vrot.lane.b32.xlu0 %v1340, 32
    %v1343 = vpop.permute.xlu0 %1342
    %v1344 = vsel %vm171, %v1343, 0
    %1346 = vmatprep.subr.mxu0 0.0
    %1347 = vmatpush1.msra.mxu0 %v79
    %1348 = vmatprep.subr.mxu0 0.0
    %1349 = vmatpush1.msra.mxu0 %v80
    %1350 = vmatprep.subr.mxu0 0.0
    %1351 = vmatpush1.msra.mxu0 %v81
    %1352 = vmatprep.subr.mxu0 0.0
    %1353 = vmatpush1.msra.mxu0 %v82
    %1354 = vmatprep.subr.mxu0 0.0
    %1355 = vmatpush1.msra.mxu0 0.0
    %1356 = vmatprep.subr.mxu0 0.0
    %1357 = vmatpush1.msra.mxu0 0.0
    %1358 = vmatprep.subr.mxu0 0.0
    %1359 = vmatpush1.msra.mxu0 0.0
    %1360 = vmatprep.subr.mxu0 0.0
    %1361 = vmatpush1.msra.mxu0 0.0
    %1362 = vmatprep.subr.mxu0 0.0
    %1363 = vmatpush1.msra.mxu0 0.0
    %1364 = vmatprep.subr.mxu0 0.0
    %1365 = vmatpush1.msra.mxu0 0.0
    %1366 = vmatprep.subr.mxu0 0.0
    %1367 = vmatpush1.msra.mxu0 0.0
    %1368 = vmatprep.subr.mxu0 0.0
    %1369 = vmatpush1.msra.mxu0 0.0
    %1370 = vmatprep.subr.mxu0 0.0
    %1371 = vmatpush1.msra.mxu0 0.0
    %1372 = vmatprep.subr.mxu0 0.0
    %1373 = vmatpush1.msra.mxu0 0.0
    %1374 = vmatprep.subr.mxu0 0.0
    %1375 = vmatpush1.msra.mxu0 0.0
    %1376 = vmatprep.subr.mxu0 0.0
    %1377 = vmatpush1.msra.mxu0 0.0
    %1378 = vmatprep.subr.mxu0 0.0
    %1379 = vmatpush1.msra.mxu0 0.0
    %1380 = vmatprep.subr.mxu0 0.0
    %1381 = vmatpush1.msra.mxu0 0.0
    %1382 = vmatprep.subr.mxu0 0.0
    %1383 = vmatpush1.msra.mxu0 0.0
    %1384 = vmatprep.subr.mxu0 0.0
    %1385 = vmatpush1.msra.mxu0 0.0
    %1386 = vmatprep.subr.mxu0 0.0
    %1387 = vmatpush1.msra.mxu0 0.0
    %1388 = vmatprep.subr.mxu0 0.0
    %1389 = vmatpush1.msra.mxu0 0.0
    %1390 = vmatprep.subr.mxu0 0.0
    %1391 = vmatpush1.msra.mxu0 0.0
    %1392 = vmatprep.subr.mxu0 0.0
    %1393 = vmatpush1.msra.mxu0 0.0
    %1394 = vmatprep.subr.mxu0 0.0
    %1395 = vmatpush1.msra.mxu0 0.0
    %1396 = vmatprep.subr.mxu0 0.0
    %1397 = vmatpush1.msra.mxu0 0.0
    %1398 = vmatprep.subr.mxu0 0.0
    %1399 = vmatpush1.msra.mxu0 0.0
    %1400 = vmatprep.subr.mxu0 0.0
    %1401 = vmatpush1.msra.mxu0 0.0
    %1402 = vmatprep.subr.mxu0 0.0
    %1403 = vmatpush1.msra.mxu0 0.0
    %1404 = vmatprep.subr.mxu0 0.0
    %1405 = vmatpush1.msra.mxu0 0.0
    %1406 = vmatprep.subr.mxu0 0.0
    %1407 = vmatpush1.msra.mxu0 0.0
    %1408 = vmatprep.subr.mxu0 0.0
    %1409 = vmatpush1.msra.mxu0 0.0
    %1410 = vmatprep.mubr.f32.mxu0 0.0
    %1411 = vmatmul.mubr.f32.gmra.mrb[0].mxu0 %v1344
    %v1412 = vpop.f32.mrb[0].mxu0
    %v1413 = vadd.f32 0.0, %v1412
    %v1414 = vpop.f32.mrb[0].mxu0
    %1415 = vdwg.mxu0
    %v1416 = vrot.slane %v1340, 1
    %1417 = vrot.lane.b32.xlu0 %v1416, 32
    %v1418 = vpop.permute.xlu0 %1417
    %v1419 = vsel %vm171, %v1418, 0
    %1421 = vmatprep.subr.mxu0 0.0
    %1422 = vmatpush1.msra.mxu0 %v84
    %1423 = vmatprep.subr.mxu0 0.0
    %1424 = vmatpush1.msra.mxu0 %v85
    %1425 = vmatprep.subr.mxu0 0.0
    %1426 = vmatpush1.msra.mxu0 %v86
    %1427 = vmatprep.subr.mxu0 0.0
    %1428 = vmatpush1.msra.mxu0 %v87
    %1429 = vmatprep.subr.mxu0 0.0
    %1430 = vmatpush1.msra.mxu0 0.0
    %1431 = vmatprep.subr.mxu0 0.0
    %1432 = vmatpush1.msra.mxu0 0.0
    %1433 = vmatprep.subr.mxu0 0.0
    %1434 = vmatpush1.msra.mxu0 0.0
    %1435 = vmatprep.subr.mxu0 0.0
    %1436 = vmatpush1.msra.mxu0 0.0
    %1437 = vmatprep.subr.mxu0 0.0
    %1438 = vmatpush1.msra.mxu0 0.0
    %1439 = vmatprep.subr.mxu0 0.0
    %1440 = vmatpush1.msra.mxu0 0.0
    %1441 = vmatprep.subr.mxu0 0.0
    %1442 = vmatpush1.msra.mxu0 0.0
    %1443 = vmatprep.subr.mxu0 0.0
    %1444 = vmatpush1.msra.mxu0 0.0
    %1445 = vmatprep.subr.mxu0 0.0
    %1446 = vmatpush1.msra.mxu0 0.0
    %1447 = vmatprep.subr.mxu0 0.0
    %1448 = vmatpush1.msra.mxu0 0.0
    %1449 = vmatprep.subr.mxu0 0.0
    %1450 = vmatpush1.msra.mxu0 0.0
    %1451 = vmatprep.subr.mxu0 0.0
    %1452 = vmatpush1.msra.mxu0 0.0
    %1453 = vmatprep.subr.mxu0 0.0
    %1454 = vmatpush1.msra.mxu0 0.0
    %1455 = vmatprep.subr.mxu0 0.0
    %1456 = vmatpush1.msra.mxu0 0.0
    %1457 = vmatprep.subr.mxu0 0.0
    %1458 = vmatpush1.msra.mxu0 0.0
    %1459 = vmatprep.subr.mxu0 0.0
    %1460 = vmatpush1.msra.mxu0 0.0
    %1461 = vmatprep.subr.mxu0 0.0
    %1462 = vmatpush1.msra.mxu0 0.0
    %1463 = vmatprep.subr.mxu0 0.0
    %1464 = vmatpush1.msra.mxu0 0.0
    %1465 = vmatprep.subr.mxu0 0.0
    %1466 = vmatpush1.msra.mxu0 0.0
    %1467 = vmatprep.subr.mxu0 0.0
    %1468 = vmatpush1.msra.mxu0 0.0
    %1469 = vmatprep.subr.mxu0 0.0
    %1470 = vmatpush1.msra.mxu0 0.0
    %1471 = vmatprep.subr.mxu0 0.0
    %1472 = vmatpush1.msra.mxu0 0.0
    %1473 = vmatprep.subr.mxu0 0.0
    %1474 = vmatpush1.msra.mxu0 0.0
    %1475 = vmatprep.subr.mxu0 0.0
    %1476 = vmatpush1.msra.mxu0 0.0
    %1477 = vmatprep.subr.mxu0 0.0
    %1478 = vmatpush1.msra.mxu0 0.0
    %1479 = vmatprep.subr.mxu0 0.0
    %1480 = vmatpush1.msra.mxu0 0.0
    %1481 = vmatprep.subr.mxu0 0.0
    %1482 = vmatpush1.msra.mxu0 0.0
    %1483 = vmatprep.subr.mxu0 0.0
    %1484 = vmatpush1.msra.mxu0 0.0
    %1485 = vmatprep.mubr.f32.mxu0 0.0
    %1486 = vmatmul.mubr.f32.gmra.mrb[0].mxu0 %v1419
    %v1487 = vpop.f32.mrb[0].mxu0
    %v1488 = vadd.f32 0.0, %v1487
    %v1489 = vpop.f32.mrb[0].mxu0
    %1490 = vdwg.mxu0
    %v1492 = vrot.slane %v1488, 7
    %v1494 = vsel %vm608, %v1413, %v1492
    %v1495 = vadd.f32 %v1494, %v75
    %v1496 = vsel %vm611, %v1495, -inf
    %1497 = vmax.xlane.f32.xlu0 %v1496
    %v1498 = vpop.xlane.xlu0 %1497
    %v1499 = vsub.f32 %v1495, %v1498
    %v1500 = vmul.f32 %v1499, 1.442695
    %v1501 = vpow.pop %v1500
    %v1502 = vsel %vm611, %v1501, 0.0
    %1503 = vadd.xlane.f32.xlu0 %v1502
    %v1504 = vpop.xlane.xlu0 %1503
    %v1505 = vrcp.pop %v1504
    %v1506 = vmul.f32 %v1501, %v1505
    %v1508 = vsel %vm623, %v1506, 0
    %1510 = vmatprep.subr.mxu0 0.0
    %1511 = vmatpush1.msra.mxu0 %v76
    %1512 = vmatprep.subr.mxu0 0.0
    %1513 = vmatpush1.msra.mxu0 0.0
    %1514 = vmatprep.subr.mxu0 0.0
    %1515 = vmatpush1.msra.mxu0 0.0
    %1516 = vmatprep.subr.mxu0 0.0
    %1517 = vmatpush1.msra.mxu0 0.0
    %1518 = vmatprep.subr.mxu0 0.0
    %1519 = vmatpush1.msra.mxu0 0.0
    %1520 = vmatprep.subr.mxu0 0.0
    %1521 = vmatpush1.msra.mxu0 0.0
    %1522 = vmatprep.subr.mxu0 0.0
    %1523 = vmatpush1.msra.mxu0 0.0
    %1524 = vmatprep.subr.mxu0 0.0
    %1525 = vmatpush1.msra.mxu0 0.0
    %1526 = vmatprep.subr.mxu0 0.0
    %1527 = vmatpush1.msra.mxu0 0.0
    %1528 = vmatprep.subr.mxu0 0.0
    %1529 = vmatpush1.msra.mxu0 0.0
    %1530 = vmatprep.subr.mxu0 0.0
    %1531 = vmatpush1.msra.mxu0 0.0
    %1532 = vmatprep.subr.mxu0 0.0
    %1533 = vmatpush1.msra.mxu0 0.0
    %1534 = vmatprep.subr.mxu0 0.0
    %1535 = vmatpush1.msra.mxu0 0.0
    %1536 = vmatprep.subr.mxu0 0.0
    %1537 = vmatpush1.msra.mxu0 0.0
    %1538 = vmatprep.subr.mxu0 0.0
    %1539 = vmatpush1.msra.mxu0 0.0
    %1540 = vmatprep.subr.mxu0 0.0
    %1541 = vmatpush1.msra.mxu0 0.0
    %1542 = vmatprep.subr.mxu0 0.0
    %1543 = vmatpush1.msra.mxu0 0.0
    %1544 = vmatprep.subr.mxu0 0.0
    %1545 = vmatpush1.msra.mxu0 0.0
    %1546 = vmatprep.subr.mxu0 0.0
    %1547 = vmatpush1.msra.mxu0 0.0
    %1548 = vmatprep.subr.mxu0 0.0
    %1549 = vmatpush1.msra.mxu0 0.0
    %1550 = vmatprep.subr.mxu0 0.0
    %1551 = vmatpush1.msra.mxu0 0.0
    %1552 = vmatprep.subr.mxu0 0.0
    %1553 = vmatpush1.msra.mxu0 0.0
    %1554 = vmatprep.subr.mxu0 0.0
    %1555 = vmatpush1.msra.mxu0 0.0
    %1556 = vmatprep.subr.mxu0 0.0
    %1557 = vmatpush1.msra.mxu0 0.0
    %1558 = vmatprep.subr.mxu0 0.0
    %1559 = vmatpush1.msra.mxu0 0.0
    %1560 = vmatprep.subr.mxu0 0.0
    %1561 = vmatpush1.msra.mxu0 0.0
    %1562 = vmatprep.subr.mxu0 0.0
    %1563 = vmatpush1.msra.mxu0 0.0
    %1564 = vmatprep.subr.mxu0 0.0
    %1565 = vmatpush1.msra.mxu0 0.0
    %1566 = vmatprep.subr.mxu0 0.0
    %1567 = vmatpush1.msra.mxu0 0.0
    %1568 = vmatprep.subr.mxu0 0.0
    %1569 = vmatpush1.msra.mxu0 0.0
    %1570 = vmatprep.subr.mxu0 0.0
    %1571 = vmatpush1.msra.mxu0 0.0
    %1572 = vmatprep.subr.mxu0 0.0
    %1573 = vmatpush1.msra.mxu0 0.0
    %1574 = vmatprep.mubr.f32.mxu0 0.0
    %1575 = vmatmul.mubr.f32.gmra.mrb[0].mxu0 %v1508
    %v1576 = vpop.f32.mrb[0].mxu0
    %v1577 = vadd.f32 0.0, %v1576
    %v1578 = vpop.f32.mrb[0].mxu0
    %1579 = vdwg.mxu0
    %v1580 = vrot.slane %v1506, 1
    %v1581 = vsel %vm623, %v1580, 0
    %1583 = vmatprep.subr.mxu0 0.0
    %1584 = vmatpush1.msra.mxu0 %v78
    %1585 = vmatprep.subr.mxu0 0.0
    %1586 = vmatpush1.msra.mxu0 0.0
    %1587 = vmatprep.subr.mxu0 0.0
    %1588 = vmatpush1.msra.mxu0 0.0
    %1589 = vmatprep.subr.mxu0 0.0
    %1590 = vmatpush1.msra.mxu0 0.0
    %1591 = vmatprep.subr.mxu0 0.0
    %1592 = vmatpush1.msra.mxu0 0.0
    %1593 = vmatprep.subr.mxu0 0.0
    %1594 = vmatpush1.msra.mxu0 0.0
    %1595 = vmatprep.subr.mxu0 0.0
    %1596 = vmatpush1.msra.mxu0 0.0
    %1597 = vmatprep.subr.mxu0 0.0
    %1598 = vmatpush1.msra.mxu0 0.0
    %1599 = vmatprep.subr.mxu0 0.0
    %1600 = vmatpush1.msra.mxu0 0.0
    %1601 = vmatprep.subr.mxu0 0.0
    %1602 = vmatpush1.msra.mxu0 0.0
    %1603 = vmatprep.subr.mxu0 0.0
    %1604 = vmatpush1.msra.mxu0 0.0
    %1605 = vmatprep.subr.mxu0 0.0
    %1606 = vmatpush1.msra.mxu0 0.0
    %1607 = vmatprep.subr.mxu0 0.0
    %1608 = vmatpush1.msra.mxu0 0.0
    %1609 = vmatprep.subr.mxu0 0.0
    %1610 = vmatpush1.msra.mxu0 0.0
    %1611 = vmatprep.subr.mxu0 0.0
    %1612 = vmatpush1.msra.mxu0 0.0
    %1613 = vmatprep.subr.mxu0 0.0
    %1614 = vmatpush1.msra.mxu0 0.0
    %1615 = vmatprep.subr.mxu0 0.0
    %1616 = vmatpush1.msra.mxu0 0.0
    %1617 = vmatprep.subr.mxu0 0.0
    %1618 = vmatpush1.msra.mxu0 0.0
    %1619 = vmatprep.subr.mxu0 0.0
    %1620 = vmatpush1.msra.mxu0 0.0
    %1621 = vmatprep.subr.mxu0 0.0
    %1622 = vmatpush1.msra.mxu0 0.0
    %1623 = vmatprep.subr.mxu0 0.0
    %1624 = vmatpush1.msra.mxu0 0.0
    %1625 = vmatprep.subr.mxu0 0.0
    %1626 = vmatpush1.msra.mxu0 0.0
    %1627 = vmatprep.subr.mxu0 0.0
    %1628 = vmatpush1.msra.mxu0 0.0
    %1629 = vmatprep.subr.mxu0 0.0
    %1630 = vmatpush1.msra.mxu0 0.0
    %1631 = vmatprep.subr.mxu0 0.0
    %1632 = vmatpush1.msra.mxu0 0.0
    %1633 = vmatprep.subr.mxu0 0.0
    %1634 = vmatpush1.msra.mxu0 0.0
    %1635 = vmatprep.subr.mxu0 0.0
    %1636 = vmatpush1.msra.mxu0 0.0
    %1637 = vmatprep.subr.mxu0 0.0
    %1638 = vmatpush1.msra.mxu0 0.0
    %1639 = vmatprep.subr.mxu0 0.0
    %1640 = vmatpush1.msra.mxu0 0.0
    %1641 = vmatprep.subr.mxu0 0.0
    %1642 = vmatpush1.msra.mxu0 0.0
    %1643 = vmatprep.subr.mxu0 0.0
    %1644 = vmatpush1.msra.mxu0 0.0
    %1645 = vmatprep.subr.mxu0 0.0
    %1646 = vmatpush1.msra.mxu0 0.0
    %1647 = vmatprep.mubr.f32.mxu0 0.0
    %1648 = vmatmul.mubr.f32.gmra.mrb[0].mxu0 %v1581
    %v1649 = vpop.f32.mrb[0].mxu0
    %v1650 = vadd.f32 0.0, %v1649
    %v1651 = vpop.f32.mrb[0].mxu0
    %1652 = vdwg.mxu0
    %v1654 = vrot.slane %v1650, 7
    %v1656 = vsel %vm608, %v1577, %v1654
    %v1658 = vsel %vm171, %v1656, 0
    %1660 = vmatprep.subr.mxu0 0.0
    %1661 = vmatpush1.msra.mxu0 %v63
    %1662 = vmatprep.subr.mxu0 0.0
    %1663 = vmatpush1.msra.mxu0 %v64
    %1664 = vmatprep.subr.mxu0 0.0
    %1665 = vmatpush1.msra.mxu0 %v65
    %1666 = vmatprep.subr.mxu0 0.0
    %1667 = vmatpush1.msra.mxu0 %v66
    %1668 = vmatprep.subr.mxu0 0.0
    %1669 = vmatpush1.msra.mxu0 0.0
    %1670 = vmatprep.subr.mxu0 0.0
    %1671 = vmatpush1.msra.mxu0 0.0
    %1672 = vmatprep.subr.mxu0 0.0
    %1673 = vmatpush1.msra.mxu0 0.0
    %1674 = vmatprep.subr.mxu0 0.0
    %1675 = vmatpush1.msra.mxu0 0.0
    %1676 = vmatprep.subr.mxu0 0.0
    %1677 = vmatpush1.msra.mxu0 0.0
    %1678 = vmatprep.subr.mxu0 0.0
    %1679 = vmatpush1.msra.mxu0 0.0
    %1680 = vmatprep.subr.mxu0 0.0
    %1681 = vmatpush1.msra.mxu0 0.0
    %1682 = vmatprep.subr.mxu0 0.0
    %1683 = vmatpush1.msra.mxu0 0.0
    %1684 = vmatprep.subr.mxu0 0.0
    %1685 = vmatpush1.msra.mxu0 0.0
    %1686 = vmatprep.subr.mxu0 0.0
    %1687 = vmatpush1.msra.mxu0 0.0
    %1688 = vmatprep.subr.mxu0 0.0
    %1689 = vmatpush1.msra.mxu0 0.0
    %1690 = vmatprep.subr.mxu0 0.0
    %1691 = vmatpush1.msra.mxu0 0.0
    %1692 = vmatprep.subr.mxu0 0.0
    %1693 = vmatpush1.msra.mxu0 0.0
    %1694 = vmatprep.subr.mxu0 0.0
    %1695 = vmatpush1.msra.mxu0 0.0
    %1696 = vmatprep.subr.mxu0 0.0
    %1697 = vmatpush1.msra.mxu0 0.0
    %1698 = vmatprep.subr.mxu0 0.0
    %1699 = vmatpush1.msra.mxu0 0.0
    %1700 = vmatprep.subr.mxu0 0.0
    %1701 = vmatpush1.msra.mxu0 0.0
    %1702 = vmatprep.subr.mxu0 0.0
    %1703 = vmatpush1.msra.mxu0 0.0
    %1704 = vmatprep.subr.mxu0 0.0
    %1705 = vmatpush1.msra.mxu0 0.0
    %1706 = vmatprep.subr.mxu0 0.0
    %1707 = vmatpush1.msra.mxu0 0.0
    %1708 = vmatprep.subr.mxu0 0.0
    %1709 = vmatpush1.msra.mxu0 0.0
    %1710 = vmatprep.subr.mxu0 0.0
    %1711 = vmatpush1.msra.mxu0 0.0
    %1712 = vmatprep.subr.mxu0 0.0
    %1713 = vmatpush1.msra.mxu0 0.0
    %1714 = vmatprep.subr.mxu0 0.0
    %1715 = vmatpush1.msra.mxu0 0.0
    %1716 = vmatprep.subr.mxu0 0.0
    %1717 = vmatpush1.msra.mxu0 0.0
    %1718 = vmatprep.subr.mxu0 0.0
    %1719 = vmatpush1.msra.mxu0 0.0
    %1720 = vmatprep.subr.mxu0 0.0
    %1721 = vmatpush1.msra.mxu0 0.0
    %1722 = vmatprep.subr.mxu0 0.0
    %1723 = vmatpush1.msra.mxu0 0.0
    %1724 = vmatprep.mubr.f32.mxu0 0.0
    %1725 = vmatmul.mubr.f32.gmra.mrb[0].mxu0 %v1658
    %v1726 = vpop.f32.mrb[0].mxu0
    %v1727 = vadd.f32 0.0, %v1726
    %v1728 = vpop.f32.mrb[0].mxu0
    %1729 = vdwg.mxu0
    %1730 = vmatprep.subr.mxu0 0.0
    %1731 = vmatpush1.msra.mxu0 %v59
    %1732 = vmatprep.subr.mxu0 0.0
    %1733 = vmatpush1.msra.mxu0 %v60
    %1734 = vmatprep.subr.mxu0 0.0
    %1735 = vmatpush1.msra.mxu0 %v61
    %1736 = vmatprep.subr.mxu0 0.0
    %1737 = vmatpush1.msra.mxu0 %v62
    %1738 = vmatprep.subr.mxu0 0.0
    %1739 = vmatpush1.msra.mxu0 0.0
    %1740 = vmatprep.subr.mxu0 0.0
    %1741 = vmatpush1.msra.mxu0 0.0
    %1742 = vmatprep.subr.mxu0 0.0
    %1743 = vmatpush1.msra.mxu0 0.0
    %1744 = vmatprep.subr.mxu0 0.0
    %1745 = vmatpush1.msra.mxu0 0.0
    %1746 = vmatprep.subr.mxu0 0.0
    %1747 = vmatpush1.msra.mxu0 0.0
    %1748 = vmatprep.subr.mxu0 0.0
    %1749 = vmatpush1.msra.mxu0 0.0
    %1750 = vmatprep.subr.mxu0 0.0
    %1751 = vmatpush1.msra.mxu0 0.0
    %1752 = vmatprep.subr.mxu0 0.0
    %1753 = vmatpush1.msra.mxu0 0.0
    %1754 = vmatprep.subr.mxu0 0.0
    %1755 = vmatpush1.msra.mxu0 0.0
    %1756 = vmatprep.subr.mxu0 0.0
    %1757 = vmatpush1.msra.mxu0 0.0
    %1758 = vmatprep.subr.mxu0 0.0
    %1759 = vmatpush1.msra.mxu0 0.0
    %1760 = vmatprep.subr.mxu0 0.0
    %1761 = vmatpush1.msra.mxu0 0.0
    %1762 = vmatprep.subr.mxu0 0.0
    %1763 = vmatpush1.msra.mxu0 0.0
    %1764 = vmatprep.subr.mxu0 0.0
    %1765 = vmatpush1.msra.mxu0 0.0
    %1766 = vmatprep.subr.mxu0 0.0
    %1767 = vmatpush1.msra.mxu0 0.0
    %1768 = vmatprep.subr.mxu0 0.0
    %1769 = vmatpush1.msra.mxu0 0.0
    %1770 = vmatprep.subr.mxu0 0.0
    %1771 = vmatpush1.msra.mxu0 0.0
    %1772 = vmatprep.subr.mxu0 0.0
    %1773 = vmatpush1.msra.mxu0 0.0
    %1774 = vmatprep.subr.mxu0 0.0
    %1775 = vmatpush1.msra.mxu0 0.0
    %1776 = vmatprep.subr.mxu0 0.0
    %1777 = vmatpush1.msra.mxu0 0.0
    %1778 = vmatprep.subr.mxu0 0.0
    %1779 = vmatpush1.msra.mxu0 0.0
    %1780 = vmatprep.subr.mxu0 0.0
    %1781 = vmatpush1.msra.mxu0 0.0
    %1782 = vmatprep.subr.mxu0 0.0
    %1783 = vmatpush1.msra.mxu0 0.0
    %1784 = vmatprep.subr.mxu0 0.0
    %1785 = vmatpush1.msra.mxu0 0.0
    %1786 = vmatprep.subr.mxu0 0.0
    %1787 = vmatpush1.msra.mxu0 0.0
    %1788 = vmatprep.subr.mxu0 0.0
    %1789 = vmatpush1.msra.mxu0 0.0
    %1790 = vmatprep.subr.mxu0 0.0
    %1791 = vmatpush1.msra.mxu0 0.0
    %1792 = vmatprep.subr.mxu0 0.0
    %1793 = vmatpush1.msra.mxu0 0.0
    %1794 = vmatprep.mubr.f32.mxu0 0.0
    %1795 = vmatmul.mubr.f32.gmra.mrb[0].mxu0 %v1344
    %v1796 = vpop.f32.mrb[0].mxu0
    %v1797 = vadd.f32 %v1727, %v1796
    %v1798 = vpop.f32.mrb[0].mxu0
    %1799 = vdwg.mxu0
    %v1800 = vadd.f32 %v1797, %v920
    %v1801 = vtanh.pop %v1800
    %v1803 = vsel %vm171, %v1801, 0
    %1805 = vmatprep.subr.mxu0 0.0
    %1806 = vmatpush1.msra.mxu0 %v68
    %1807 = vmatprep.subr.mxu0 0.0
    %1808 = vmatpush1.msra.mxu0 %v69
    %1809 = vmatprep.subr.mxu0 0.0
    %1810 = vmatpush1.msra.mxu0 %v70
    %1811 = vmatprep.subr.mxu0 0.0
    %1812 = vmatpush1.msra.mxu0 %v71
    %1813 = vmatprep.subr.mxu0 0.0
    %1814 = vmatpush1.msra.mxu0 0.0
    %1815 = vmatprep.subr.mxu0 0.0
    %1816 = vmatpush1.msra.mxu0 0.0
    %1817 = vmatprep.subr.mxu0 0.0
    %1818 = vmatpush1.msra.mxu0 0.0
    %1819 = vmatprep.subr.mxu0 0.0
    %1820 = vmatpush1.msra.mxu0 0.0
    %1821 = vmatprep.subr.mxu0 0.0
    %1822 = vmatpush1.msra.mxu0 0.0
    %1823 = vmatprep.subr.mxu0 0.0
    %1824 = vmatpush1.msra.mxu0 0.0
    %1825 = vmatprep.subr.mxu0 0.0
    %1826 = vmatpush1.msra.mxu0 0.0
    %1827 = vmatprep.subr.mxu0 0.0
    %1828 = vmatpush1.msra.mxu0 0.0
    %1829 = vmatprep.subr.mxu0 0.0
    %1830 = vmatpush1.msra.mxu0 0.0
    %1831 = vmatprep.subr.mxu0 0.0
    %1832 = vmatpush1.msra.mxu0 0.0
    %1833 = vmatprep.subr.mxu0 0.0
    %1834 = vmatpush1.msra.mxu0 0.0
    %1835 = vmatprep.subr.mxu0 0.0
    %1836 = vmatpush1.msra.mxu0 0.0
    %1837 = vmatprep.subr.mxu0 0.0
    %1838 = vmatpush1.msra.mxu0 0.0
    %1839 = vmatprep.subr.mxu0 0.0
    %1840 = vmatpush1.msra.mxu0 0.0
    %1841 = vmatprep.subr.mxu0 0.0
    %1842 = vmatpush1.msra.mxu0 0.0
    %1843 = vmatprep.subr.mxu0 0.0
    %1844 = vmatpush1.msra.mxu0 0.0
    %1845 = vmatprep.subr.mxu0 0.0
    %1846 = vmatpush1.msra.mxu0 0.0
    %1847 = vmatprep.subr.mxu0 0.0
    %1848 = vmatpush1.msra.mxu0 0.0
    %1849 = vmatprep.subr.mxu0 0.0
    %1850 = vmatpush1.msra.mxu0 0.0
    %1851 = vmatprep.subr.mxu0 0.0
    %1852 = vmatpush1.msra.mxu0 0.0
    %1853 = vmatprep.subr.mxu0 0.0
    %1854 = vmatpush1.msra.mxu0 0.0
    %1855 = vmatprep.subr.mxu0 0.0
    %1856 = vmatpush1.msra.mxu0 0.0
    %1857 = vmatprep.subr.mxu0 0.0
    %1858 = vmatpush1.msra.mxu0 0.0
    %1859 = vmatprep.subr.mxu0 0.0
    %1860 = vmatpush1.msra.mxu0 0.0
    %1861 = vmatprep.subr.mxu0 0.0
    %1862 = vmatpush1.msra.mxu0 0.0
    %1863 = vmatprep.subr.mxu0 0.0
    %1864 = vmatpush1.msra.mxu0 0.0
    %1865 = vmatprep.subr.mxu0 0.0
    %1866 = vmatpush1.msra.mxu0 0.0
    %1867 = vmatprep.subr.mxu0 0.0
    %1868 = vmatpush1.msra.mxu0 0.0
    %1869 = vmatprep.mubr.f32.mxu0 0.0
    %1870 = vmatmul.mubr.f32.gmra.mrb[0].mxu0 %v1803
    %v1871 = vpop.f32.mrb[0].mxu0
    %v1872 = vadd.f32 %v926, %v1871
    %v1873 = vpop.f32.mrb[0].mxu0
    %1874 = vdwg.mxu0
    %s1875 = scalar_lea.vmem %s0, 4
    %v1876 = vld [vmem:[%s1875] sm:$0x3]
    %v1878 = vsel %vm96, %v1872, 0
    %1880 = vmatprep.subr.mxu0 0.0
    %1881 = vmatpush1.msra.mxu0 %v44
    %1882 = vmatprep.subr.mxu0 0.0
    %1883 = vmatpush1.msra.mxu0 %v45
    %1884 = vmatprep.subr.mxu0 0.0
    %1885 = vmatpush1.msra.mxu0 0.0
    %1886 = vmatprep.subr.mxu0 0.0
    %1887 = vmatpush1.msra.mxu0 0.0
    %1888 = vmatprep.subr.mxu0 0.0
    %1889 = vmatpush1.msra.mxu0 0.0
    %1890 = vmatprep.subr.mxu0 0.0
    %1891 = vmatpush1.msra.mxu0 0.0
    %1892 = vmatprep.subr.mxu0 0.0
    %1893 = vmatpush1.msra.mxu0 0.0
    %1894 = vmatprep.subr.mxu0 0.0
    %1895 = vmatpush1.msra.mxu0 0.0
    %1896 = vmatprep.subr.mxu0 0.0
    %1897 = vmatpush1.msra.mxu0 0.0
    %1898 = vmatprep.subr.mxu0 0.0
    %1899 = vmatpush1.msra.mxu0 0.0
    %1900 = vmatprep.subr.mxu0 0.0
    %1901 = vmatpush1.msra.mxu0 0.0
    %1902 = vmatprep.subr.mxu0 0.0
    %1903 = vmatpush1.msra.mxu0 0.0
    %1904 = vmatprep.subr.mxu0 0.0
    %1905 = vmatpush1.msra.mxu0 0.0
    %1906 = vmatprep.subr.mxu0 0.0
    %1907 = vmatpush1.msra.mxu0 0.0
    %1908 = vmatprep.subr.mxu0 0.0
    %1909 = vmatpush1.msra.mxu0 0.0
    %1910 = vmatprep.subr.mxu0 0.0
    %1911 = vmatpush1.msra.mxu0 0.0
    %1912 = vmatprep.subr.mxu0 0.0
    %1913 = vmatpush1.msra.mxu0 0.0
    %1914 = vmatprep.subr.mxu0 0.0
    %1915 = vmatpush1.msra.mxu0 0.0
    %1916 = vmatprep.subr.mxu0 0.0
    %1917 = vmatpush1.msra.mxu0 0.0
    %1918 = vmatprep.subr.mxu0 0.0
    %1919 = vmatpush1.msra.mxu0 0.0
    %1920 = vmatprep.subr.mxu0 0.0
    %1921 = vmatpush1.msra.mxu0 0.0
    %1922 = vmatprep.subr.mxu0 0.0
    %1923 = vmatpush1.msra.mxu0 0.0
    %1924 = vmatprep.subr.mxu0 0.0
    %1925 = vmatpush1.msra.mxu0 0.0
    %1926 = vmatprep.subr.mxu0 0.0
    %1927 = vmatpush1.msra.mxu0 0.0
    %1928 = vmatprep.subr.mxu0 0.0
    %1929 = vmatpush1.msra.mxu0 0.0
    %1930 = vmatprep.subr.mxu0 0.0
    %1931 = vmatpush1.msra.mxu0 0.0
    %1932 = vmatprep.subr.mxu0 0.0
    %1933 = vmatpush1.msra.mxu0 0.0
    %1934 = vmatprep.subr.mxu0 0.0
    %1935 = vmatpush1.msra.mxu0 0.0
    %1936 = vmatprep.subr.mxu0 0.0
    %1937 = vmatpush1.msra.mxu0 0.0
    %1938 = vmatprep.subr.mxu0 0.0
    %1939 = vmatpush1.msra.mxu0 0.0
    %1940 = vmatprep.subr.mxu0 0.0
    %1941 = vmatpush1.msra.mxu0 0.0
    %1942 = vmatprep.subr.mxu0 0.0
    %1943 = vmatpush1.msra.mxu0 0.0
    %1944 = vmatprep.mubr.f32.mxu0 0.0
    %1945 = vmatmul.mubr.f32.gmra.mrb[0].mxu0 %v1878
    %v1946 = vpop.f32.mrb[0].mxu0
    %v1947 = vadd.f32 0.0, %v1946
    %v1948 = vpop.f32.mrb[0].mxu0
    %1949 = vdwg.mxu0
    %v1950 = vadd.f32 %v1876, %v1947
    %1951 = vmatprep.subr.mxu0 0.0
    %1952 = vmatpush1.msra.mxu0 %v50
    %1953 = vmatprep.subr.mxu0 0.0
    %1954 = vmatpush1.msra.mxu0 %v51
    %1955 = vmatprep.subr.mxu0 0.0
    %1956 = vmatpush1.msra.mxu0 %v52
    %1957 = vmatprep.subr.mxu0 0.0
    %1958 = vmatpush1.msra.mxu0 %v53
    %1959 = vmatprep.subr.mxu0 0.0
    %1960 = vmatpush1.msra.mxu0 0.0
    %1961 = vmatprep.subr.mxu0 0.0
    %1962 = vmatpush1.msra.mxu0 0.0
    %1963 = vmatprep.subr.mxu0 0.0
    %1964 = vmatpush1.msra.mxu0 0.0
    %1965 = vmatprep.subr.mxu0 0.0
    %1966 = vmatpush1.msra.mxu0 0.0
    %1967 = vmatprep.subr.mxu0 0.0
    %1968 = vmatpush1.msra.mxu0 0.0
    %1969 = vmatprep.subr.mxu0 0.0
    %1970 = vmatpush1.msra.mxu0 0.0
    %1971 = vmatprep.subr.mxu0 0.0
    %1972 = vmatpush1.msra.mxu0 0.0
    %1973 = vmatprep.subr.mxu0 0.0
    %1974 = vmatpush1.msra.mxu0 0.0
    %1975 = vmatprep.subr.mxu0 0.0
    %1976 = vmatpush1.msra.mxu0 0.0
    %1977 = vmatprep.subr.mxu0 0.0
    %1978 = vmatpush1.msra.mxu0 0.0
    %1979 = vmatprep.subr.mxu0 0.0
    %1980 = vmatpush1.msra.mxu0 0.0
    %1981 = vmatprep.subr.mxu0 0.0
    %1982 = vmatpush1.msra.mxu0 0.0
    %1983 = vmatprep.subr.mxu0 0.0
    %1984 = vmatpush1.msra.mxu0 0.0
    %1985 = vmatprep.subr.mxu0 0.0
    %1986 = vmatpush1.msra.mxu0 0.0
    %1987 = vmatprep.subr.mxu0 0.0
    %1988 = vmatpush1.msra.mxu0 0.0
    %1989 = vmatprep.subr.mxu0 0.0
    %1990 = vmatpush1.msra.mxu0 0.0
    %1991 = vmatprep.subr.mxu0 0.0
    %1992 = vmatpush1.msra.mxu0 0.0
    %1993 = vmatprep.subr.mxu0 0.0
    %1994 = vmatpush1.msra.mxu0 0.0
    %1995 = vmatprep.subr.mxu0 0.0
    %1996 = vmatpush1.msra.mxu0 0.0
    %1997 = vmatprep.subr.mxu0 0.0
    %1998 = vmatpush1.msra.mxu0 0.0
    %1999 = vmatprep.subr.mxu0 0.0
    %2000 = vmatpush1.msra.mxu0 0.0
    %2001 = vmatprep.subr.mxu0 0.0
    %2002 = vmatpush1.msra.mxu0 0.0
    %2003 = vmatprep.subr.mxu0 0.0
    %2004 = vmatpush1.msra.mxu0 0.0
    %2005 = vmatprep.subr.mxu0 0.0
    %2006 = vmatpush1.msra.mxu0 0.0
    %2007 = vmatprep.subr.mxu0 0.0
    %2008 = vmatpush1.msra.mxu0 0.0
    %2009 = vmatprep.subr.mxu0 0.0
    %2010 = vmatpush1.msra.mxu0 0.0
    %2011 = vmatprep.subr.mxu0 0.0
    %2012 = vmatpush1.msra.mxu0 0.0
    %2013 = vmatprep.subr.mxu0 0.0
    %2014 = vmatpush1.msra.mxu0 0.0
    %2015 = vmatprep.mubr.f32.mxu0 0.0
    %2016 = vmatmul.mubr.f32.gmra.mrb[0].mxu0 %v1174
    %v2017 = vpop.f32.mrb[0].mxu0
    %v2018 = vadd.f32 0.0, %v2017
    %v2019 = vpop.f32.mrb[0].mxu0
    %2020 = vdwg.mxu0
    %v2021 = vadd.f32 %v1950, %v2018
    %v2022 = vxor.u32 %v2021, 2147483648
    %v2023 = vmul.f32 %v2022, 1.442695
    %v2024 = vpow.pop %v2023
    %v2025 = vadd.f32 %v2024, 1.0
    %v2026 = vrcp.pop %v2025
    %v2027 = vmul.f32 1.0, %v2026
    %v2028 = vtanh.pop %v2021
    %v2029 = vmul.f32 %v2027, %v1164
    %2031 = vrot.lane.b32.xlu0 %v2028, 64
    %v2032 = vpop.permute.xlu0 %2031
    %v2034 = vmul.f32 %v2027, %v2032
    %2036 = vrot.lane.b32.xlu0 %v2034, 32
    %v2037 = vpop.permute.xlu0 %2036
    %v2039 = vadd.f32 %v2029, %v2037
    %v2040 = vtanh.pop %v2039
    %2042 = vrot.lane.b32.xlu0 %v2040, 64
    %v2043 = vpop.permute.xlu0 %2042
    %v2045 = vmul.f32 %v2027, %v2043
    %2047 = vrot.lane.b32.xlu0 %v2045, 32
    %v2048 = vpop.permute.xlu0 %2047
    %v2049 = vsel %vm171, %v2048, 0
    %2051 = vmatprep.subr.mxu0 0.0
    %2052 = vmatpush1.msra.mxu0 %v46
    %2053 = vmatprep.subr.mxu0 0.0
    %2054 = vmatpush1.msra.mxu0 %v47
    %2055 = vmatprep.subr.mxu0 0.0
    %2056 = vmatpush1.msra.mxu0 %v48
    %2057 = vmatprep.subr.mxu0 0.0
    %2058 = vmatpush1.msra.mxu0 %v49
    %2059 = vmatprep.subr.mxu0 0.0
    %2060 = vmatpush1.msra.mxu0 0.0
    %2061 = vmatprep.subr.mxu0 0.0
    %2062 = vmatpush1.msra.mxu0 0.0
    %2063 = vmatprep.subr.mxu0 0.0
    %2064 = vmatpush1.msra.mxu0 0.0
    %2065 = vmatprep.subr.mxu0 0.0
    %2066 = vmatpush1.msra.mxu0 0.0
    %2067 = vmatprep.subr.mxu0 0.0
    %2068 = vmatpush1.msra.mxu0 0.0
    %2069 = vmatprep.subr.mxu0 0.0
    %2070 = vmatpush1.msra.mxu0 0.0
    %2071 = vmatprep.subr.mxu0 0.0
    %2072 = vmatpush1.msra.mxu0 0.0
    %2073 = vmatprep.subr.mxu0 0.0
    %2074 = vmatpush1.msra.mxu0 0.0
    %2075 = vmatprep.subr.mxu0 0.0
    %2076 = vmatpush1.msra.mxu0 0.0
    %2077 = vmatprep.subr.mxu0 0.0
    %2078 = vmatpush1.msra.mxu0 0.0
    %2079 = vmatprep.subr.mxu0 0.0
    %2080 = vmatpush1.msra.mxu0 0.0
    %2081 = vmatprep.subr.mxu0 0.0
    %2082 = vmatpush1.msra.mxu0 0.0
    %2083 = vmatprep.subr.mxu0 0.0
    %2084 = vmatpush1.msra.mxu0 0.0
    %2085 = vmatprep.subr.mxu0 0.0
    %2086 = vmatpush1.msra.mxu0 0.0
    %2087 = vmatprep.subr.mxu0 0.0
    %2088 = vmatpush1.msra.mxu0 0.0
    %2089 = vmatprep.subr.mxu0 0.0
    %2090 = vmatpush1.msra.mxu0 0.0
    %2091 = vmatprep.subr.mxu0 0.0
    %2092 = vmatpush1.msra.mxu0 0.0
    %2093 = vmatprep.subr.mxu0 0.0
    %2094 = vmatpush1.msra.mxu0 0.0
    %2095 = vmatprep.subr.mxu0 0.0
    %2096 = vmatpush1.msra.mxu0 0.0
    %2097 = vmatprep.subr.mxu0 0.0
    %2098 = vmatpush1.msra.mxu0 0.0
    %2099 = vmatprep.subr.mxu0 0.0
    %2100 = vmatpush1.msra.mxu0 0.0
    %2101 = vmatprep.subr.mxu0 0.0
    %2102 = vmatpush1.msra.mxu0 0.0
    %2103 = vmatprep.subr.mxu0 0.0
    %2104 = vmatpush1.msra.mxu0 0.0
    %2105 = vmatprep.subr.mxu0 0.0
    %2106 = vmatpush1.msra.mxu0 0.0
    %2107 = vmatprep.subr.mxu0 0.0
    %2108 = vmatpush1.msra.mxu0 0.0
    %2109 = vmatprep.subr.mxu0 0.0
    %2110 = vmatpush1.msra.mxu0 0.0
    %2111 = vmatprep.subr.mxu0 0.0
    %2112 = vmatpush1.msra.mxu0 0.0
    %2113 = vmatprep.subr.mxu0 0.0
    %2114 = vmatpush1.msra.mxu0 0.0
    %2115 = vmatprep.mubr.f32.mxu0 0.0
    %2116 = vmatmul.mubr.f32.gmra.mrb[0].mxu0 %v2049
    %v2117 = vpop.f32.mrb[0].mxu0
    %v2118 = vadd.f32 %v277, %v2117
    %v2119 = vpop.f32.mrb[0].mxu0
    %2120 = vdwg.mxu0
    %2121 = vmatprep.subr.mxu0 0.0
    %2122 = vmatpush1.msra.mxu0 %v54
    %2123 = vmatprep.subr.mxu0 0.0
    %2124 = vmatpush1.msra.mxu0 %v55
    %2125 = vmatprep.subr.mxu0 0.0
    %2126 = vmatpush1.msra.mxu0 %v56
    %2127 = vmatprep.subr.mxu0 0.0
    %2128 = vmatpush1.msra.mxu0 %v57
    %2129 = vmatprep.subr.mxu0 0.0
    %2130 = vmatpush1.msra.mxu0 0.0
    %2131 = vmatprep.subr.mxu0 0.0
    %2132 = vmatpush1.msra.mxu0 0.0
    %2133 = vmatprep.subr.mxu0 0.0
    %2134 = vmatpush1.msra.mxu0 0.0
    %2135 = vmatprep.subr.mxu0 0.0
    %2136 = vmatpush1.msra.mxu0 0.0
    %2137 = vmatprep.subr.mxu0 0.0
    %2138 = vmatpush1.msra.mxu0 0.0
    %2139 = vmatprep.subr.mxu0 0.0
    %2140 = vmatpush1.msra.mxu0 0.0
    %2141 = vmatprep.subr.mxu0 0.0
    %2142 = vmatpush1.msra.mxu0 0.0
    %2143 = vmatprep.subr.mxu0 0.0
    %2144 = vmatpush1.msra.mxu0 0.0
    %2145 = vmatprep.subr.mxu0 0.0
    %2146 = vmatpush1.msra.mxu0 0.0
    %2147 = vmatprep.subr.mxu0 0.0
    %2148 = vmatpush1.msra.mxu0 0.0
    %2149 = vmatprep.subr.mxu0 0.0
    %2150 = vmatpush1.msra.mxu0 0.0
    %2151 = vmatprep.subr.mxu0 0.0
    %2152 = vmatpush1.msra.mxu0 0.0
    %2153 = vmatprep.subr.mxu0 0.0
    %2154 = vmatpush1.msra.mxu0 0.0
    %2155 = vmatprep.subr.mxu0 0.0
    %2156 = vmatpush1.msra.mxu0 0.0
    %2157 = vmatprep.subr.mxu0 0.0
    %2158 = vmatpush1.msra.mxu0 0.0
    %2159 = vmatprep.subr.mxu0 0.0
    %2160 = vmatpush1.msra.mxu0 0.0
    %2161 = vmatprep.subr.mxu0 0.0
    %2162 = vmatpush1.msra.mxu0 0.0
    %2163 = vmatprep.subr.mxu0 0.0
    %2164 = vmatpush1.msra.mxu0 0.0
    %2165 = vmatprep.subr.mxu0 0.0
    %2166 = vmatpush1.msra.mxu0 0.0
    %2167 = vmatprep.subr.mxu0 0.0
    %2168 = vmatpush1.msra.mxu0 0.0
    %2169 = vmatprep.subr.mxu0 0.0
    %2170 = vmatpush1.msra.mxu0 0.0
    %2171 = vmatprep.subr.mxu0 0.0
    %2172 = vmatpush1.msra.mxu0 0.0
    %2173 = vmatprep.subr.mxu0 0.0
    %2174 = vmatpush1.msra.mxu0 0.0
    %2175 = vmatprep.subr.mxu0 0.0
    %2176 = vmatpush1.msra.mxu0 0.0
    %2177 = vmatprep.subr.mxu0 0.0
    %2178 = vmatpush1.msra.mxu0 0.0
    %2179 = vmatprep.subr.mxu0 0.0
    %2180 = vmatpush1.msra.mxu0 0.0
    %2181 = vmatprep.subr.mxu0 0.0
    %2182 = vmatpush1.msra.mxu0 0.0
    %2183 = vmatprep.subr.mxu0 0.0
    %2184 = vmatpush1.msra.mxu0 0.0
    %2185 = vmatprep.mubr.f32.mxu0 0.0
    %2186 = vmatmul.mubr.f32.gmra.mrb[0].mxu0 %v1344
    %v2187 = vpop.f32.mrb[0].mxu0
    %v2188 = vadd.f32 0.0, %v2187
    %v2189 = vpop.f32.mrb[0].mxu0
    %2190 = vdwg.mxu0
    %v2191 = vadd.f32 %v2118, %v2188
    %v2192 = vxor.u32 %v2191, 2147483648
    %v2193 = vmul.f32 %v2192, 1.442695
    %v2194 = vpow.pop %v2193
    %v2195 = vadd.f32 %v2194, 1.0
    %v2196 = vrcp.pop %v2195
    %v2197 = vmul.f32 1.0, %v2196
    %v2198 = vtanh.pop %v2191
    %v2199 = vmul.f32 %v2197, %v1334
    %2201 = vrot.lane.b32.xlu0 %v2198, 64
    %v2202 = vpop.permute.xlu0 %2201
    %v2204 = vmul.f32 %v2197, %v2202
    %2206 = vrot.lane.b32.xlu0 %v2204, 32
    %v2207 = vpop.permute.xlu0 %2206
    %v2209 = vadd.f32 %v2199, %v2207
    %v2210 = vtanh.pop %v2209
    %2212 = vrot.lane.b32.xlu0 %v2210, 64
    %v2213 = vpop.permute.xlu0 %2212
    %v2215 = vmul.f32 %v2197, %v2213
    %2217 = vrot.lane.b32.xlu0 %v2215, 32
    %v2218 = vpop.permute.xlu0 %2217
    %v2219 = vsel %vm171, %v2218, 0
    %2221 = vmatprep.subr.mxu0 0.0
    %2222 = vmatpush1.msra.mxu0 %v79
    %2223 = vmatprep.subr.mxu0 0.0
    %2224 = vmatpush1.msra.mxu0 %v80
    %2225 = vmatprep.subr.mxu0 0.0
    %2226 = vmatpush1.msra.mxu0 %v81
    %2227 = vmatprep.subr.mxu0 0.0
    %2228 = vmatpush1.msra.mxu0 %v82
    %2229 = vmatprep.subr.mxu0 0.0
    %2230 = vmatpush1.msra.mxu0 0.0
    %2231 = vmatprep.subr.mxu0 0.0
    %2232 = vmatpush1.msra.mxu0 0.0
    %2233 = vmatprep.subr.mxu0 0.0
    %2234 = vmatpush1.msra.mxu0 0.0
    %2235 = vmatprep.subr.mxu0 0.0
    %2236 = vmatpush1.msra.mxu0 0.0
    %2237 = vmatprep.subr.mxu0 0.0
    %2238 = vmatpush1.msra.mxu0 0.0
    %2239 = vmatprep.subr.mxu0 0.0
    %2240 = vmatpush1.msra.mxu0 0.0
    %2241 = vmatprep.subr.mxu0 0.0
    %2242 = vmatpush1.msra.mxu0 0.0
    %2243 = vmatprep.subr.mxu0 0.0
    %2244 = vmatpush1.msra.mxu0 0.0
    %2245 = vmatprep.subr.mxu0 0.0
    %2246 = vmatpush1.msra.mxu0 0.0
    %2247 = vmatprep.subr.mxu0 0.0
    %2248 = vmatpush1.msra.mxu0 0.0
    %2249 = vmatprep.subr.mxu0 0.0
    %2250 = vmatpush1.msra.mxu0 0.0
    %2251 = vmatprep.subr.mxu0 0.0
    %2252 = vmatpush1.msra.mxu0 0.0
    %2253 = vmatprep.subr.mxu0 0.0
    %2254 = vmatpush1.msra.mxu0 0.0
    %2255 = vmatprep.subr.mxu0 0.0
    %2256 = vmatpush1.msra.mxu0 0.0
    %2257 = vmatprep.subr.mxu0 0.0
    %2258 = vmatpush1.msra.mxu0 0.0
    %2259 = vmatprep.subr.mxu0 0.0
    %2260 = vmatpush1.msra.mxu0 0.0
    %2261 = vmatprep.subr.mxu0 0.0
    %2262 = vmatpush1.msra.mxu0 0.0
    %2263 = vmatprep.subr.mxu0 0.0
    %2264 = vmatpush1.msra.mxu0 0.0
    %2265 = vmatprep.subr.mxu0 0.0
    %2266 = vmatpush1.msra.mxu0 0.0
    %2267 = vmatprep.subr.mxu0 0.0
    %2268 = vmatpush1.msra.mxu0 0.0
    %2269 = vmatprep.subr.mxu0 0.0
    %2270 = vmatpush1.msra.mxu0 0.0
    %2271 = vmatprep.subr.mxu0 0.0
    %2272 = vmatpush1.msra.mxu0 0.0
    %2273 = vmatprep.subr.mxu0 0.0
    %2274 = vmatpush1.msra.mxu0 0.0
    %2275 = vmatprep.subr.mxu0 0.0
    %2276 = vmatpush1.msra.mxu0 0.0
    %2277 = vmatprep.subr.mxu0 0.0
    %2278 = vmatpush1.msra.mxu0 0.0
    %2279 = vmatprep.subr.mxu0 0.0
    %2280 = vmatpush1.msra.mxu0 0.0
    %2281 = vmatprep.subr.mxu0 0.0
    %2282 = vmatpush1.msra.mxu0 0.0
    %2283 = vmatprep.subr.mxu0 0.0
    %2284 = vmatpush1.msra.mxu0 0.0
    %2285 = vmatprep.mubr.f32.mxu0 0.0
    %2286 = vmatmul.mubr.f32.gmra.mrb[0].mxu0 %v2219
    %v2287 = vpop.f32.mrb[0].mxu0
    %v2288 = vadd.f32 0.0, %v2287
    %v2289 = vpop.f32.mrb[0].mxu0
    %2290 = vdwg.mxu0
    %v2291 = vrot.slane %v2215, 1
    %2292 = vrot.lane.b32.xlu0 %v2291, 32
    %v2293 = vpop.permute.xlu0 %2292
    %v2294 = vsel %vm171, %v2293, 0
    %2296 = vmatprep.subr.mxu0 0.0
    %2297 = vmatpush1.msra.mxu0 %v84
    %2298 = vmatprep.subr.mxu0 0.0
    %2299 = vmatpush1.msra.mxu0 %v85
    %2300 = vmatprep.subr.mxu0 0.0
    %2301 = vmatpush1.msra.mxu0 %v86
    %2302 = vmatprep.subr.mxu0 0.0
    %2303 = vmatpush1.msra.mxu0 %v87
    %2304 = vmatprep.subr.mxu0 0.0
    %2305 = vmatpush1.msra.mxu0 0.0
    %2306 = vmatprep.subr.mxu0 0.0
    %2307 = vmatpush1.msra.mxu0 0.0
    %2308 = vmatprep.subr.mxu0 0.0
    %2309 = vmatpush1.msra.mxu0 0.0
    %2310 = vmatprep.subr.mxu0 0.0
    %2311 = vmatpush1.msra.mxu0 0.0
    %2312 = vmatprep.subr.mxu0 0.0
    %2313 = vmatpush1.msra.mxu0 0.0
    %2314 = vmatprep.subr.mxu0 0.0
    %2315 = vmatpush1.msra.mxu0 0.0
    %2316 = vmatprep.subr.mxu0 0.0
    %2317 = vmatpush1.msra.mxu0 0.0
    %2318 = vmatprep.subr.mxu0 0.0
    %2319 = vmatpush1.msra.mxu0 0.0
    %2320 = vmatprep.subr.mxu0 0.0
    %2321 = vmatpush1.msra.mxu0 0.0
    %2322 = vmatprep.subr.mxu0 0.0
    %2323 = vmatpush1.msra.mxu0 0.0
    %2324 = vmatprep.subr.mxu0 0.0
    %2325 = vmatpush1.msra.mxu0 0.0
    %2326 = vmatprep.subr.mxu0 0.0
    %2327 = vmatpush1.msra.mxu0 0.0
    %2328 = vmatprep.subr.mxu0 0.0
    %2329 = vmatpush1.msra.mxu0 0.0
    %2330 = vmatprep.subr.mxu0 0.0
    %2331 = vmatpush1.msra.mxu0 0.0
    %2332 = vmatprep.subr.mxu0 0.0
    %2333 = vmatpush1.msra.mxu0 0.0
    %2334 = vmatprep.subr.mxu0 0.0
    %2335 = vmatpush1.msra.mxu0 0.0
    %2336 = vmatprep.subr.mxu0 0.0
    %2337 = vmatpush1.msra.mxu0 0.0
    %2338 = vmatprep.subr.mxu0 0.0
    %2339 = vmatpush1.msra.mxu0 0.0
    %2340 = vmatprep.subr.mxu0 0.0
    %2341 = vmatpush1.msra.mxu0 0.0
    %2342 = vmatprep.subr.mxu0 0.0
    %2343 = vmatpush1.msra.mxu0 0.0
    %2344 = vmatprep.subr.mxu0 0.0
    %2345 = vmatpush1.msra.mxu0 0.0
    %2346 = vmatprep.subr.mxu0 0.0
    %2347 = vmatpush1.msra.mxu0 0.0
    %2348 = vmatprep.subr.mxu0 0.0
    %2349 = vmatpush1.msra.mxu0 0.0
    %2350 = vmatprep.subr.mxu0 0.0
    %2351 = vmatpush1.msra.mxu0 0.0
    %2352 = vmatprep.subr.mxu0 0.0
    %2353 = vmatpush1.msra.mxu0 0.0
    %2354 = vmatprep.subr.mxu0 0.0
    %2355 = vmatpush1.msra.mxu0 0.0
    %2356 = vmatprep.subr.mxu0 0.0
    %2357 = vmatpush1.msra.mxu0 0.0
    %2358 = vmatprep.subr.mxu0 0.0
    %2359 = vmatpush1.msra.mxu0 0.0
    %2360 = vmatprep.mubr.f32.mxu0 0.0
    %2361 = vmatmul.mubr.f32.gmra.mrb[0].mxu0 %v2294
    %v2362 = vpop.f32.mrb[0].mxu0
    %v2363 = vadd.f32 0.0, %v2362
    %v2364 = vpop.f32.mrb[0].mxu0
    %2365 = vdwg.mxu0
    %v2367 = vrot.slane %v2363, 7
    %v2369 = vsel %vm608, %v2288, %v2367
    %v2370 = vadd.f32 %v2369, %v75
    %v2371 = vsel %vm611, %v2370, -inf
    %2372 = vmax.xlane.f32.xlu0 %v2371
    %v2373 = vpop.xlane.xlu0 %2372
    %v2374 = vsub.f32 %v2370, %v2373
    %v2375 = vmul.f32 %v2374, 1.442695
    %v2376 = vpow.pop %v2375
    %v2377 = vsel %vm611, %v2376, 0.0
    %2378 = vadd.xlane.f32.xlu0 %v2377
    %v2379 = vpop.xlane.xlu0 %2378
    %v2380 = vrcp.pop %v2379
    %v2381 = vmul.f32 %v2376, %v2380
    %v2383 = vsel %vm623, %v2381, 0
    %2385 = vmatprep.subr.mxu0 0.0
    %2386 = vmatpush1.msra.mxu0 %v76
    %2387 = vmatprep.subr.mxu0 0.0
    %2388 = vmatpush1.msra.mxu0 0.0
    %2389 = vmatprep.subr.mxu0 0.0
    %2390 = vmatpush1.msra.mxu0 0.0
    %2391 = vmatprep.subr.mxu0 0.0
    %2392 = vmatpush1.msra.mxu0 0.0
    %2393 = vmatprep.subr.mxu0 0.0
    %2394 = vmatpush1.msra.mxu0 0.0
    %2395 = vmatprep.subr.mxu0 0.0
    %2396 = vmatpush1.msra.mxu0 0.0
    %2397 = vmatprep.subr.mxu0 0.0
    %2398 = vmatpush1.msra.mxu0 0.0
    %2399 = vmatprep.subr.mxu0 0.0
    %2400 = vmatpush1.msra.mxu0 0.0
    %2401 = vmatprep.subr.mxu0 0.0
    %2402 = vmatpush1.msra.mxu0 0.0
    %2403 = vmatprep.subr.mxu0 0.0
    %2404 = vmatpush1.msra.mxu0 0.0
    %2405 = vmatprep.subr.mxu0 0.0
    %2406 = vmatpush1.msra.mxu0 0.0
    %2407 = vmatprep.subr.mxu0 0.0
    %2408 = vmatpush1.msra.mxu0 0.0
    %2409 = vmatprep.subr.mxu0 0.0
    %2410 = vmatpush1.msra.mxu0 0.0
    %2411 = vmatprep.subr.mxu0 0.0
    %2412 = vmatpush1.msra.mxu0 0.0
    %2413 = vmatprep.subr.mxu0 0.0
    %2414 = vmatpush1.msra.mxu0 0.0
    %2415 = vmatprep.subr.mxu0 0.0
    %2416 = vmatpush1.msra.mxu0 0.0
    %2417 = vmatprep.subr.mxu0 0.0
    %2418 = vmatpush1.msra.mxu0 0.0
    %2419 = vmatprep.subr.mxu0 0.0
    %2420 = vmatpush1.msra.mxu0 0.0
    %2421 = vmatprep.subr.mxu0 0.0
    %2422 = vmatpush1.msra.mxu0 0.0
    %2423 = vmatprep.subr.mxu0 0.0
    %2424 = vmatpush1.msra.mxu0 0.0
    %2425 = vmatprep.subr.mxu0 0.0
    %2426 = vmatpush1.msra.mxu0 0.0
    %2427 = vmatprep.subr.mxu0 0.0
    %2428 = vmatpush1.msra.mxu0 0.0
    %2429 = vmatprep.subr.mxu0 0.0
    %2430 = vmatpush1.msra.mxu0 0.0
    %2431 = vmatprep.subr.mxu0 0.0
    %2432 = vmatpush1.msra.mxu0 0.0
    %2433 = vmatprep.subr.mxu0 0.0
    %2434 = vmatpush1.msra.mxu0 0.0
    %2435 = vmatprep.subr.mxu0 0.0
    %2436 = vmatpush1.msra.mxu0 0.0
    %2437 = vmatprep.subr.mxu0 0.0
    %2438 = vmatpush1.msra.mxu0 0.0
    %2439 = vmatprep.subr.mxu0 0.0
    %2440 = vmatpush1.msra.mxu0 0.0
    %2441 = vmatprep.subr.mxu0 0.0
    %2442 = vmatpush1.msra.mxu0 0.0
    %2443 = vmatprep.subr.mxu0 0.0
    %2444 = vmatpush1.msra.mxu0 0.0
    %2445 = vmatprep.subr.mxu0 0.0
    %2446 = vmatpush1.msra.mxu0 0.0
    %2447 = vmatprep.subr.mxu0 0.0
    %2448 = vmatpush1.msra.mxu0 0.0
    %2449 = vmatprep.mubr.f32.mxu0 0.0
    %2450 = vmatmul.mubr.f32.gmra.mrb[0].mxu0 %v2383
    %v2451 = vpop.f32.mrb[0].mxu0
    %v2452 = vadd.f32 0.0, %v2451
    %v2453 = vpop.f32.mrb[0].mxu0
    %2454 = vdwg.mxu0
    %v2455 = vrot.slane %v2381, 1
    %v2456 = vsel %vm623, %v2455, 0
    %2458 = vmatprep.subr.mxu0 0.0
    %2459 = vmatpush1.msra.mxu0 %v78
    %2460 = vmatprep.subr.mxu0 0.0
    %2461 = vmatpush1.msra.mxu0 0.0
    %2462 = vmatprep.subr.mxu0 0.0
    %2463 = vmatpush1.msra.mxu0 0.0
    %2464 = vmatprep.subr.mxu0 0.0
    %2465 = vmatpush1.msra.mxu0 0.0
    %2466 = vmatprep.subr.mxu0 0.0
    %2467 = vmatpush1.msra.mxu0 0.0
    %2468 = vmatprep.subr.mxu0 0.0
    %2469 = vmatpush1.msra.mxu0 0.0
    %2470 = vmatprep.subr.mxu0 0.0
    %2471 = vmatpush1.msra.mxu0 0.0
    %2472 = vmatprep.subr.mxu0 0.0
    %2473 = vmatpush1.msra.mxu0 0.0
    %2474 = vmatprep.subr.mxu0 0.0
    %2475 = vmatpush1.msra.mxu0 0.0
    %2476 = vmatprep.subr.mxu0 0.0
    %2477 = vmatpush1.msra.mxu0 0.0
    %2478 = vmatprep.subr.mxu0 0.0
    %2479 = vmatpush1.msra.mxu0 0.0
    %2480 = vmatprep.subr.mxu0 0.0
    %2481 = vmatpush1.msra.mxu0 0.0
    %2482 = vmatprep.subr.mxu0 0.0
    %2483 = vmatpush1.msra.mxu0 0.0
    %2484 = vmatprep.subr.mxu0 0.0
    %2485 = vmatpush1.msra.mxu0 0.0
    %2486 = vmatprep.subr.mxu0 0.0
    %2487 = vmatpush1.msra.mxu0 0.0
    %2488 = vmatprep.subr.mxu0 0.0
    %2489 = vmatpush1.msra.mxu0 0.0
    %2490 = vmatprep.subr.mxu0 0.0
    %2491 = vmatpush1.msra.mxu0 0.0
    %2492 = vmatprep.subr.mxu0 0.0
    %2493 = vmatpush1.msra.mxu0 0.0
    %2494 = vmatprep.subr.mxu0 0.0
    %2495 = vmatpush1.msra.mxu0 0.0
    %2496 = vmatprep.subr.mxu0 0.0
    %2497 = vmatpush1.msra.mxu0 0.0
    %2498 = vmatprep.subr.mxu0 0.0
    %2499 = vmatpush1.msra.mxu0 0.0
    %2500 = vmatprep.subr.mxu0 0.0
    %2501 = vmatpush1.msra.mxu0 0.0
    %2502 = vmatprep.subr.mxu0 0.0
    %2503 = vmatpush1.msra.mxu0 0.0
    %2504 = vmatprep.subr.mxu0 0.0
    %2505 = vmatpush1.msra.mxu0 0.0
    %2506 = vmatprep.subr.mxu0 0.0
    %2507 = vmatpush1.msra.mxu0 0.0
    %2508 = vmatprep.subr.mxu0 0.0
    %2509 = vmatpush1.msra.mxu0 0.0
    %2510 = vmatprep.subr.mxu0 0.0
    %2511 = vmatpush1.msra.mxu0 0.0
    %2512 = vmatprep.subr.mxu0 0.0
    %2513 = vmatpush1.msra.mxu0 0.0
    %2514 = vmatprep.subr.mxu0 0.0
    %2515 = vmatpush1.msra.mxu0 0.0
    %2516 = vmatprep.subr.mxu0 0.0
    %2517 = vmatpush1.msra.mxu0 0.0
    %2518 = vmatprep.subr.mxu0 0.0
    %2519 = vmatpush1.msra.mxu0 0.0
    %2520 = vmatprep.subr.mxu0 0.0
    %2521 = vmatpush1.msra.mxu0 0.0
    %2522 = vmatprep.mubr.f32.mxu0 0.0
    %2523 = vmatmul.mubr.f32.gmra.mrb[0].mxu0 %v2456
    %v2524 = vpop.f32.mrb[0].mxu0
    %v2525 = vadd.f32 0.0, %v2524
    %v2526 = vpop.f32.mrb[0].mxu0
    %2527 = vdwg.mxu0
    %v2529 = vrot.slane %v2525, 7
    %v2531 = vsel %vm608, %v2452, %v2529
    %v2533 = vsel %vm171, %v2531, 0
    %2535 = vmatprep.subr.mxu0 0.0
    %2536 = vmatpush1.msra.mxu0 %v63
    %2537 = vmatprep.subr.mxu0 0.0
    %2538 = vmatpush1.msra.mxu0 %v64
    %2539 = vmatprep.subr.mxu0 0.0
    %2540 = vmatpush1.msra.mxu0 %v65
    %2541 = vmatprep.subr.mxu0 0.0
    %2542 = vmatpush1.msra.mxu0 %v66
    %2543 = vmatprep.subr.mxu0 0.0
    %2544 = vmatpush1.msra.mxu0 0.0
    %2545 = vmatprep.subr.mxu0 0.0
    %2546 = vmatpush1.msra.mxu0 0.0
    %2547 = vmatprep.subr.mxu0 0.0
    %2548 = vmatpush1.msra.mxu0 0.0
    %2549 = vmatprep.subr.mxu0 0.0
    %2550 = vmatpush1.msra.mxu0 0.0
    %2551 = vmatprep.subr.mxu0 0.0
    %2552 = vmatpush1.msra.mxu0 0.0
    %2553 = vmatprep.subr.mxu0 0.0
    %2554 = vmatpush1.msra.mxu0 0.0
    %2555 = vmatprep.subr.mxu0 0.0
    %2556 = vmatpush1.msra.mxu0 0.0
    %2557 = vmatprep.subr.mxu0 0.0
    %2558 = vmatpush1.msra.mxu0 0.0
    %2559 = vmatprep.subr.mxu0 0.0
    %2560 = vmatpush1.msra.mxu0 0.0
    %2561 = vmatprep.subr.mxu0 0.0
    %2562 = vmatpush1.msra.mxu0 0.0
    %2563 = vmatprep.subr.mxu0 0.0
    %2564 = vmatpush1.msra.mxu0 0.0
    %2565 = vmatprep.subr.mxu0 0.0
    %2566 = vmatpush1.msra.mxu0 0.0
    %2567 = vmatprep.subr.mxu0 0.0
    %2568 = vmatpush1.msra.mxu0 0.0
    %2569 = vmatprep.subr.mxu0 0.0
    %2570 = vmatpush1.msra.mxu0 0.0
    %2571 = vmatprep.subr.mxu0 0.0
    %2572 = vmatpush1.msra.mxu0 0.0
    %2573 = vmatprep.subr.mxu0 0.0
    %2574 = vmatpush1.msra.mxu0 0.0
    %2575 = vmatprep.subr.mxu0 0.0
    %2576 = vmatpush1.msra.mxu0 0.0
    %2577 = vmatprep.subr.mxu0 0.0
    %2578 = vmatpush1.msra.mxu0 0.0
    %2579 = vmatprep.subr.mxu0 0.0
    %2580 = vmatpush1.msra.mxu0 0.0
    %2581 = vmatprep.subr.mxu0 0.0
    %2582 = vmatpush1.msra.mxu0 0.0
    %2583 = vmatprep.subr.mxu0 0.0
    %2584 = vmatpush1.msra.mxu0 0.0
    %2585 = vmatprep.subr.mxu0 0.0
    %2586 = vmatpush1.msra.mxu0 0.0
    %2587 = vmatprep.subr.mxu0 0.0
    %2588 = vmatpush1.msra.mxu0 0.0
    %2589 = vmatprep.subr.mxu0 0.0
    %2590 = vmatpush1.msra.mxu0 0.0
    %2591 = vmatprep.subr.mxu0 0.0
    %2592 = vmatpush1.msra.mxu0 0.0
    %2593 = vmatprep.subr.mxu0 0.0
    %2594 = vmatpush1.msra.mxu0 0.0
    %2595 = vmatprep.subr.mxu0 0.0
    %2596 = vmatpush1.msra.mxu0 0.0
    %2597 = vmatprep.subr.mxu0 0.0
    %2598 = vmatpush1.msra.mxu0 0.0
    %2599 = vmatprep.mubr.f32.mxu0 0.0
    %2600 = vmatmul.mubr.f32.gmra.mrb[0].mxu0 %v2533
    %v2601 = vpop.f32.mrb[0].mxu0
    %v2602 = vadd.f32 0.0, %v2601
    %v2603 = vpop.f32.mrb[0].mxu0
    %2604 = vdwg.mxu0
    %2605 = vmatprep.subr.mxu0 0.0
    %2606 = vmatpush1.msra.mxu0 %v59
    %2607 = vmatprep.subr.mxu0 0.0
    %2608 = vmatpush1.msra.mxu0 %v60
    %2609 = vmatprep.subr.mxu0 0.0
    %2610 = vmatpush1.msra.mxu0 %v61
    %2611 = vmatprep.subr.mxu0 0.0
    %2612 = vmatpush1.msra.mxu0 %v62
    %2613 = vmatprep.subr.mxu0 0.0
    %2614 = vmatpush1.msra.mxu0 0.0
    %2615 = vmatprep.subr.mxu0 0.0
    %2616 = vmatpush1.msra.mxu0 0.0
    %2617 = vmatprep.subr.mxu0 0.0
    %2618 = vmatpush1.msra.mxu0 0.0
    %2619 = vmatprep.subr.mxu0 0.0
    %2620 = vmatpush1.msra.mxu0 0.0
    %2621 = vmatprep.subr.mxu0 0.0
    %2622 = vmatpush1.msra.mxu0 0.0
    %2623 = vmatprep.subr.mxu0 0.0
    %2624 = vmatpush1.msra.mxu0 0.0
    %2625 = vmatprep.subr.mxu0 0.0
    %2626 = vmatpush1.msra.mxu0 0.0
    %2627 = vmatprep.subr.mxu0 0.0
    %2628 = vmatpush1.msra.mxu0 0.0
    %2629 = vmatprep.subr.mxu0 0.0
    %2630 = vmatpush1.msra.mxu0 0.0
    %2631 = vmatprep.subr.mxu0 0.0
    %2632 = vmatpush1.msra.mxu0 0.0
    %2633 = vmatprep.subr.mxu0 0.0
    %2634 = vmatpush1.msra.mxu0 0.0
    %2635 = vmatprep.subr.mxu0 0.0
    %2636 = vmatpush1.msra.mxu0 0.0
    %2637 = vmatprep.subr.mxu0 0.0
    %2638 = vmatpush1.msra.mxu0 0.0
    %2639 = vmatprep.subr.mxu0 0.0
    %2640 = vmatpush1.msra.mxu0 0.0
    %2641 = vmatprep.subr.mxu0 0.0
    %2642 = vmatpush1.msra.mxu0 0.0
    %2643 = vmatprep.subr.mxu0 0.0
    %2644 = vmatpush1.msra.mxu0 0.0
    %2645 = vmatprep.subr.mxu0 0.0
    %2646 = vmatpush1.msra.mxu0 0.0
    %2647 = vmatprep.subr.mxu0 0.0
    %2648 = vmatpush1.msra.mxu0 0.0
    %2649 = vmatprep.subr.mxu0 0.0
    %2650 = vmatpush1.msra.mxu0 0.0
    %2651 = vmatprep.subr.mxu0 0.0
    %2652 = vmatpush1.msra.mxu0 0.0
    %2653 = vmatprep.subr.mxu0 0.0
    %2654 = vmatpush1.msra.mxu0 0.0
    %2655 = vmatprep.subr.mxu0 0.0
    %2656 = vmatpush1.msra.mxu0 0.0
    %2657 = vmatprep.subr.mxu0 0.0
    %2658 = vmatpush1.msra.mxu0 0.0
    %2659 = vmatprep.subr.mxu0 0.0
    %2660 = vmatpush1.msra.mxu0 0.0
    %2661 = vmatprep.subr.mxu0 0.0
    %2662 = vmatpush1.msra.mxu0 0.0
    %2663 = vmatprep.subr.mxu0 0.0
    %2664 = vmatpush1.msra.mxu0 0.0
    %2665 = vmatprep.subr.mxu0 0.0
    %2666 = vmatpush1.msra.mxu0 0.0
    %2667 = vmatprep.subr.mxu0 0.0
    %2668 = vmatpush1.msra.mxu0 0.0
    %2669 = vmatprep.mubr.f32.mxu0 0.0
    %2670 = vmatmul.mubr.f32.gmra.mrb[0].mxu0 %v2219
    %v2671 = vpop.f32.mrb[0].mxu0
    %v2672 = vadd.f32 %v2602, %v2671
    %v2673 = vpop.f32.mrb[0].mxu0
    %2674 = vdwg.mxu0
    %v2675 = vadd.f32 %v2672, %v920
    %v2676 = vtanh.pop %v2675
    %v2678 = vsel %vm171, %v2676, 0
    %2680 = vmatprep.subr.mxu0 0.0
    %2681 = vmatpush1.msra.mxu0 %v68
    %2682 = vmatprep.subr.mxu0 0.0
    %2683 = vmatpush1.msra.mxu0 %v69
    %2684 = vmatprep.subr.mxu0 0.0
    %2685 = vmatpush1.msra.mxu0 %v70
    %2686 = vmatprep.subr.mxu0 0.0
    %2687 = vmatpush1.msra.mxu0 %v71
    %2688 = vmatprep.subr.mxu0 0.0
    %2689 = vmatpush1.msra.mxu0 0.0
    %2690 = vmatprep.subr.mxu0 0.0
    %2691 = vmatpush1.msra.mxu0 0.0
    %2692 = vmatprep.subr.mxu0 0.0
    %2693 = vmatpush1.msra.mxu0 0.0
    %2694 = vmatprep.subr.mxu0 0.0
    %2695 = vmatpush1.msra.mxu0 0.0
    %2696 = vmatprep.subr.mxu0 0.0
    %2697 = vmatpush1.msra.mxu0 0.0
    %2698 = vmatprep.subr.mxu0 0.0
    %2699 = vmatpush1.msra.mxu0 0.0
    %2700 = vmatprep.subr.mxu0 0.0
    %2701 = vmatpush1.msra.mxu0 0.0
    %2702 = vmatprep.subr.mxu0 0.0
    %2703 = vmatpush1.msra.mxu0 0.0
    %2704 = vmatprep.subr.mxu0 0.0
    %2705 = vmatpush1.msra.mxu0 0.0
    %2706 = vmatprep.subr.mxu0 0.0
    %2707 = vmatpush1.msra.mxu0 0.0
    %2708 = vmatprep.subr.mxu0 0.0
    %2709 = vmatpush1.msra.mxu0 0.0
    %2710 = vmatprep.subr.mxu0 0.0
    %2711 = vmatpush1.msra.mxu0 0.0
    %2712 = vmatprep.subr.mxu0 0.0
    %2713 = vmatpush1.msra.mxu0 0.0
    %2714 = vmatprep.subr.mxu0 0.0
    %2715 = vmatpush1.msra.mxu0 0.0
    %2716 = vmatprep.subr.mxu0 0.0
    %2717 = vmatpush1.msra.mxu0 0.0
    %2718 = vmatprep.subr.mxu0 0.0
    %2719 = vmatpush1.msra.mxu0 0.0
    %2720 = vmatprep.subr.mxu0 0.0
    %2721 = vmatpush1.msra.mxu0 0.0
    %2722 = vmatprep.subr.mxu0 0.0
    %2723 = vmatpush1.msra.mxu0 0.0
    %2724 = vmatprep.subr.mxu0 0.0
    %2725 = vmatpush1.msra.mxu0 0.0
    %2726 = vmatprep.subr.mxu0 0.0
    %2727 = vmatpush1.msra.mxu0 0.0
    %2728 = vmatprep.subr.mxu0 0.0
    %2729 = vmatpush1.msra.mxu0 0.0
    %2730 = vmatprep.subr.mxu0 0.0
    %2731 = vmatpush1.msra.mxu0 0.0
    %2732 = vmatprep.subr.mxu0 0.0
    %2733 = vmatpush1.msra.mxu0 0.0
    %2734 = vmatprep.subr.mxu0 0.0
    %2735 = vmatpush1.msra.mxu0 0.0
    %2736 = vmatprep.subr.mxu0 0.0
    %2737 = vmatpush1.msra.mxu0 0.0
    %2738 = vmatprep.subr.mxu0 0.0
    %2739 = vmatpush1.msra.mxu0 0.0
    %2740 = vmatprep.subr.mxu0 0.0
    %2741 = vmatpush1.msra.mxu0 0.0
    %2742 = vmatprep.subr.mxu0 0.0
    %2743 = vmatpush1.msra.mxu0 0.0
    %2744 = vmatprep.mubr.f32.mxu0 0.0
    %2745 = vmatmul.mubr.f32.gmra.mrb[0].mxu0 %v2678
    %v2746 = vpop.f32.mrb[0].mxu0
    %v2747 = vadd.f32 %v926, %v2746
    %v2748 = vpop.f32.mrb[0].mxu0
    %2749 = vdwg.mxu0
    %s2750 = scalar_lea.vmem %s0, 6
    %v2751 = vld [vmem:[%s2750] sm:$0x3]
    %v2753 = vsel %vm96, %v2747, 0
    %2755 = vmatprep.subr.mxu0 0.0
    %2756 = vmatpush1.msra.mxu0 %v44
    %2757 = vmatprep.subr.mxu0 0.0
    %2758 = vmatpush1.msra.mxu0 %v45
    %2759 = vmatprep.subr.mxu0 0.0
    %2760 = vmatpush1.msra.mxu0 0.0
    %2761 = vmatprep.subr.mxu0 0.0
    %2762 = vmatpush1.msra.mxu0 0.0
    %2763 = vmatprep.subr.mxu0 0.0
    %2764 = vmatpush1.msra.mxu0 0.0
    %2765 = vmatprep.subr.mxu0 0.0
    %2766 = vmatpush1.msra.mxu0 0.0
    %2767 = vmatprep.subr.mxu0 0.0
    %2768 = vmatpush1.msra.mxu0 0.0
    %2769 = vmatprep.subr.mxu0 0.0
    %2770 = vmatpush1.msra.mxu0 0.0
    %2771 = vmatprep.subr.mxu0 0.0
    %2772 = vmatpush1.msra.mxu0 0.0
    %2773 = vmatprep.subr.mxu0 0.0
    %2774 = vmatpush1.msra.mxu0 0.0
    %2775 = vmatprep.subr.mxu0 0.0
    %2776 = vmatpush1.msra.mxu0 0.0
    %2777 = vmatprep.subr.mxu0 0.0
    %2778 = vmatpush1.msra.mxu0 0.0
    %2779 = vmatprep.subr.mxu0 0.0
    %2780 = vmatpush1.msra.mxu0 0.0
    %2781 = vmatprep.subr.mxu0 0.0
    %2782 = vmatpush1.msra.mxu0 0.0
    %2783 = vmatprep.subr.mxu0 0.0
    %2784 = vmatpush1.msra.mxu0 0.0
    %2785 = vmatprep.subr.mxu0 0.0
    %2786 = vmatpush1.msra.mxu0 0.0
    %2787 = vmatprep.subr.mxu0 0.0
    %2788 = vmatpush1.msra.mxu0 0.0
    %2789 = vmatprep.subr.mxu0 0.0
    %2790 = vmatpush1.msra.mxu0 0.0
    %2791 = vmatprep.subr.mxu0 0.0
    %2792 = vmatpush1.msra.mxu0 0.0
    %2793 = vmatprep.subr.mxu0 0.0
    %2794 = vmatpush1.msra.mxu0 0.0
    %2795 = vmatprep.subr.mxu0 0.0
    %2796 = vmatpush1.msra.mxu0 0.0
    %2797 = vmatprep.subr.mxu0 0.0
    %2798 = vmatpush1.msra.mxu0 0.0
    %2799 = vmatprep.subr.mxu0 0.0
    %2800 = vmatpush1.msra.mxu0 0.0
    %2801 = vmatprep.subr.mxu0 0.0
    %2802 = vmatpush1.msra.mxu0 0.0
    %2803 = vmatprep.subr.mxu0 0.0
    %2804 = vmatpush1.msra.mxu0 0.0
    %2805 = vmatprep.subr.mxu0 0.0
    %2806 = vmatpush1.msra.mxu0 0.0
    %2807 = vmatprep.subr.mxu0 0.0
    %2808 = vmatpush1.msra.mxu0 0.0
    %2809 = vmatprep.subr.mxu0 0.0
    %2810 = vmatpush1.msra.mxu0 0.0
    %2811 = vmatprep.subr.mxu0 0.0
    %2812 = vmatpush1.msra.mxu0 0.0
    %2813 = vmatprep.subr.mxu0 0.0
    %2814 = vmatpush1.msra.mxu0 0.0
    %2815 = vmatprep.subr.mxu0 0.0
    %2816 = vmatpush1.msra.mxu0 0.0
    %2817 = vmatprep.subr.mxu0 0.0
    %2818 = vmatpush1.msra.mxu0 0.0
    %2819 = vmatprep.mubr.f32.mxu0 0.0
    %2820 = vmatmul.mubr.f32.gmra.mrb[0].mxu0 %v2753
    %v2821 = vpop.f32.mrb[0].mxu0
    %v2822 = vadd.f32 0.0, %v2821
    %v2823 = vpop.f32.mrb[0].mxu0
    %2824 = vdwg.mxu0
    %v2825 = vadd.f32 %v2751, %v2822
    %2826 = vmatprep.subr.mxu0 0.0
    %2827 = vmatpush1.msra.mxu0 %v50
    %2828 = vmatprep.subr.mxu0 0.0
    %2829 = vmatpush1.msra.mxu0 %v51
    %2830 = vmatprep.subr.mxu0 0.0
    %2831 = vmatpush1.msra.mxu0 %v52
    %2832 = vmatprep.subr.mxu0 0.0
    %2833 = vmatpush1.msra.mxu0 %v53
    %2834 = vmatprep.subr.mxu0 0.0
    %2835 = vmatpush1.msra.mxu0 0.0
    %2836 = vmatprep.subr.mxu0 0.0
    %2837 = vmatpush1.msra.mxu0 0.0
    %2838 = vmatprep.subr.mxu0 0.0
    %2839 = vmatpush1.msra.mxu0 0.0
    %2840 = vmatprep.subr.mxu0 0.0
    %2841 = vmatpush1.msra.mxu0 0.0
    %2842 = vmatprep.subr.mxu0 0.0
    %2843 = vmatpush1.msra.mxu0 0.0
    %2844 = vmatprep.subr.mxu0 0.0
    %2845 = vmatpush1.msra.mxu0 0.0
    %2846 = vmatprep.subr.mxu0 0.0
    %2847 = vmatpush1.msra.mxu0 0.0
    %2848 = vmatprep.subr.mxu0 0.0
    %2849 = vmatpush1.msra.mxu0 0.0
    %2850 = vmatprep.subr.mxu0 0.0
    %2851 = vmatpush1.msra.mxu0 0.0
    %2852 = vmatprep.subr.mxu0 0.0
    %2853 = vmatpush1.msra.mxu0 0.0
    %2854 = vmatprep.subr.mxu0 0.0
    %2855 = vmatpush1.msra.mxu0 0.0
    %2856 = vmatprep.subr.mxu0 0.0
    %2857 = vmatpush1.msra.mxu0 0.0
    %2858 = vmatprep.subr.mxu0 0.0
    %2859 = vmatpush1.msra.mxu0 0.0
    %2860 = vmatprep.subr.mxu0 0.0
    %2861 = vmatpush1.msra.mxu0 0.0
    %2862 = vmatprep.subr.mxu0 0.0
    %2863 = vmatpush1.msra.mxu0 0.0
    %2864 = vmatprep.subr.mxu0 0.0
    %2865 = vmatpush1.msra.mxu0 0.0
    %2866 = vmatprep.subr.mxu0 0.0
    %2867 = vmatpush1.msra.mxu0 0.0
    %2868 = vmatprep.subr.mxu0 0.0
    %2869 = vmatpush1.msra.mxu0 0.0
    %2870 = vmatprep.subr.mxu0 0.0
    %2871 = vmatpush1.msra.mxu0 0.0
    %2872 = vmatprep.subr.mxu0 0.0
    %2873 = vmatpush1.msra.mxu0 0.0
    %2874 = vmatprep.subr.mxu0 0.0
    %2875 = vmatpush1.msra.mxu0 0.0
    %2876 = vmatprep.subr.mxu0 0.0
    %2877 = vmatpush1.msra.mxu0 0.0
    %2878 = vmatprep.subr.mxu0 0.0
    %2879 = vmatpush1.msra.mxu0 0.0
    %2880 = vmatprep.subr.mxu0 0.0
    %2881 = vmatpush1.msra.mxu0 0.0
    %2882 = vmatprep.subr.mxu0 0.0
    %2883 = vmatpush1.msra.mxu0 0.0
    %2884 = vmatprep.subr.mxu0 0.0
    %2885 = vmatpush1.msra.mxu0 0.0
    %2886 = vmatprep.subr.mxu0 0.0
    %2887 = vmatpush1.msra.mxu0 0.0
    %2888 = vmatprep.subr.mxu0 0.0
    %2889 = vmatpush1.msra.mxu0 0.0
    %2890 = vmatprep.mubr.f32.mxu0 0.0
    %2891 = vmatmul.mubr.f32.gmra.mrb[0].mxu0 %v2049
    %v2892 = vpop.f32.mrb[0].mxu0
    %v2893 = vadd.f32 0.0, %v2892
    %v2894 = vpop.f32.mrb[0].mxu0
    %2895 = vdwg.mxu0
    %v2896 = vadd.f32 %v2825, %v2893
    %v2897 = vxor.u32 %v2896, 2147483648
    %v2898 = vmul.f32 %v2897, 1.442695
    %v2899 = vpow.pop %v2898
    %v2900 = vadd.f32 %v2899, 1.0
    %v2901 = vrcp.pop %v2900
    %v2902 = vmul.f32 1.0, %v2901
    %v2903 = vtanh.pop %v2896
    %v2904 = vmul.f32 %v2902, %v2039
    %2906 = vrot.lane.b32.xlu0 %v2903, 64
    %v2907 = vpop.permute.xlu0 %2906
    %v2909 = vmul.f32 %v2902, %v2907
    %2911 = vrot.lane.b32.xlu0 %v2909, 32
    %v2912 = vpop.permute.xlu0 %2911
    %v2914 = vadd.f32 %v2904, %v2912
    %v2915 = vtanh.pop %v2914
    %2917 = vrot.lane.b32.xlu0 %v2915, 64
    %v2918 = vpop.permute.xlu0 %2917
    %v2920 = vmul.f32 %v2902, %v2918
    %2922 = vrot.lane.b32.xlu0 %v2920, 32
    %v2923 = vpop.permute.xlu0 %2922
    %v2924 = vsel %vm171, %v2923, 0
    %2926 = vmatprep.subr.mxu0 0.0
    %2927 = vmatpush1.msra.mxu0 %v46
    %2928 = vmatprep.subr.mxu0 0.0
    %2929 = vmatpush1.msra.mxu0 %v47
    %2930 = vmatprep.subr.mxu0 0.0
    %2931 = vmatpush1.msra.mxu0 %v48
    %2932 = vmatprep.subr.mxu0 0.0
    %2933 = vmatpush1.msra.mxu0 %v49
    %2934 = vmatprep.subr.mxu0 0.0
    %2935 = vmatpush1.msra.mxu0 0.0
    %2936 = vmatprep.subr.mxu0 0.0
    %2937 = vmatpush1.msra.mxu0 0.0
    %2938 = vmatprep.subr.mxu0 0.0
    %2939 = vmatpush1.msra.mxu0 0.0
    %2940 = vmatprep.subr.mxu0 0.0
    %2941 = vmatpush1.msra.mxu0 0.0
    %2942 = vmatprep.subr.mxu0 0.0
    %2943 = vmatpush1.msra.mxu0 0.0
    %2944 = vmatprep.subr.mxu0 0.0
    %2945 = vmatpush1.msra.mxu0 0.0
    %2946 = vmatprep.subr.mxu0 0.0
    %2947 = vmatpush1.msra.mxu0 0.0
    %2948 = vmatprep.subr.mxu0 0.0
    %2949 = vmatpush1.msra.mxu0 0.0
    %2950 = vmatprep.subr.mxu0 0.0
    %2951 = vmatpush1.msra.mxu0 0.0
    %2952 = vmatprep.subr.mxu0 0.0
    %2953 = vmatpush1.msra.mxu0 0.0
    %2954 = vmatprep.subr.mxu0 0.0
    %2955 = vmatpush1.msra.mxu0 0.0
    %2956 = vmatprep.subr.mxu0 0.0
    %2957 = vmatpush1.msra.mxu0 0.0
    %2958 = vmatprep.subr.mxu0 0.0
    %2959 = vmatpush1.msra.mxu0 0.0
    %2960 = vmatprep.subr.mxu0 0.0
    %2961 = vmatpush1.msra.mxu0 0.0
    %2962 = vmatprep.subr.mxu0 0.0
    %2963 = vmatpush1.msra.mxu0 0.0
    %2964 = vmatprep.subr.mxu0 0.0
    %2965 = vmatpush1.msra.mxu0 0.0
    %2966 = vmatprep.subr.mxu0 0.0
    %2967 = vmatpush1.msra.mxu0 0.0
    %2968 = vmatprep.subr.mxu0 0.0
    %2969 = vmatpush1.msra.mxu0 0.0
    %2970 = vmatprep.subr.mxu0 0.0
    %2971 = vmatpush1.msra.mxu0 0.0
    %2972 = vmatprep.subr.mxu0 0.0
    %2973 = vmatpush1.msra.mxu0 0.0
    %2974 = vmatprep.subr.mxu0 0.0
    %2975 = vmatpush1.msra.mxu0 0.0
    %2976 = vmatprep.subr.mxu0 0.0
    %2977 = vmatpush1.msra.mxu0 0.0
    %2978 = vmatprep.subr.mxu0 0.0
    %2979 = vmatpush1.msra.mxu0 0.0
    %2980 = vmatprep.subr.mxu0 0.0
    %2981 = vmatpush1.msra.mxu0 0.0
    %2982 = vmatprep.subr.mxu0 0.0
    %2983 = vmatpush1.msra.mxu0 0.0
    %2984 = vmatprep.subr.mxu0 0.0
    %2985 = vmatpush1.msra.mxu0 0.0
    %2986 = vmatprep.subr.mxu0 0.0
    %2987 = vmatpush1.msra.mxu0 0.0
    %2988 = vmatprep.subr.mxu0 0.0
    %2989 = vmatpush1.msra.mxu0 0.0
    %2990 = vmatprep.mubr.f32.mxu0 0.0
    %2991 = vmatmul.mubr.f32.gmra.mrb[0].mxu0 %v2924
    %v2992 = vpop.f32.mrb[0].mxu0
    %v2993 = vadd.f32 %v277, %v2992
    %v2994 = vpop.f32.mrb[0].mxu0
    %2995 = vdwg.mxu0
    %2996 = vmatprep.subr.mxu0 0.0
    %2997 = vmatpush1.msra.mxu0 %v54
    %2998 = vmatprep.subr.mxu0 0.0
    %2999 = vmatpush1.msra.mxu0 %v55
    %3000 = vmatprep.subr.mxu0 0.0
    %3001 = vmatpush1.msra.mxu0 %v56
    %3002 = vmatprep.subr.mxu0 0.0
    %3003 = vmatpush1.msra.mxu0 %v57
    %3004 = vmatprep.subr.mxu0 0.0
    %3005 = vmatpush1.msra.mxu0 0.0
    %3006 = vmatprep.subr.mxu0 0.0
    %3007 = vmatpush1.msra.mxu0 0.0
    %3008 = vmatprep.subr.mxu0 0.0
    %3009 = vmatpush1.msra.mxu0 0.0
    %3010 = vmatprep.subr.mxu0 0.0
    %3011 = vmatpush1.msra.mxu0 0.0
    %3012 = vmatprep.subr.mxu0 0.0
    %3013 = vmatpush1.msra.mxu0 0.0
    %3014 = vmatprep.subr.mxu0 0.0
    %3015 = vmatpush1.msra.mxu0 0.0
    %3016 = vmatprep.subr.mxu0 0.0
    %3017 = vmatpush1.msra.mxu0 0.0
    %3018 = vmatprep.subr.mxu0 0.0
    %3019 = vmatpush1.msra.mxu0 0.0
    %3020 = vmatprep.subr.mxu0 0.0
    %3021 = vmatpush1.msra.mxu0 0.0
    %3022 = vmatprep.subr.mxu0 0.0
    %3023 = vmatpush1.msra.mxu0 0.0
    %3024 = vmatprep.subr.mxu0 0.0
    %3025 = vmatpush1.msra.mxu0 0.0
    %3026 = vmatprep.subr.mxu0 0.0
    %3027 = vmatpush1.msra.mxu0 0.0
    %3028 = vmatprep.subr.mxu0 0.0
    %3029 = vmatpush1.msra.mxu0 0.0
    %3030 = vmatprep.subr.mxu0 0.0
    %3031 = vmatpush1.msra.mxu0 0.0
    %3032 = vmatprep.subr.mxu0 0.0
    %3033 = vmatpush1.msra.mxu0 0.0
    %3034 = vmatprep.subr.mxu0 0.0
    %3035 = vmatpush1.msra.mxu0 0.0
    %3036 = vmatprep.subr.mxu0 0.0
    %3037 = vmatpush1.msra.mxu0 0.0
    %3038 = vmatprep.subr.mxu0 0.0
    %3039 = vmatpush1.msra.mxu0 0.0
    %3040 = vmatprep.subr.mxu0 0.0
    %3041 = vmatpush1.msra.mxu0 0.0
    %3042 = vmatprep.subr.mxu0 0.0
    %3043 = vmatpush1.msra.mxu0 0.0
    %3044 = vmatprep.subr.mxu0 0.0
    %3045 = vmatpush1.msra.mxu0 0.0
    %3046 = vmatprep.subr.mxu0 0.0
    %3047 = vmatpush1.msra.mxu0 0.0
    %3048 = vmatprep.subr.mxu0 0.0
    %3049 = vmatpush1.msra.mxu0 0.0
    %3050 = vmatprep.subr.mxu0 0.0
    %3051 = vmatpush1.msra.mxu0 0.0
    %3052 = vmatprep.subr.mxu0 0.0
    %3053 = vmatpush1.msra.mxu0 0.0
    %3054 = vmatprep.subr.mxu0 0.0
    %3055 = vmatpush1.msra.mxu0 0.0
    %3056 = vmatprep.subr.mxu0 0.0
    %3057 = vmatpush1.msra.mxu0 0.0
    %3058 = vmatprep.subr.mxu0 0.0
    %3059 = vmatpush1.msra.mxu0 0.0
    %3060 = vmatprep.mubr.f32.mxu0 0.0
    %3061 = vmatmul.mubr.f32.gmra.mrb[0].mxu0 %v2219
    %v3062 = vpop.f32.mrb[0].mxu0
    %v3063 = vadd.f32 0.0, %v3062
    %v3064 = vpop.f32.mrb[0].mxu0
    %3065 = vdwg.mxu0
    %v3066 = vadd.f32 %v2993, %v3063
    %v3067 = vxor.u32 %v3066, 2147483648
    %v3068 = vmul.f32 %v3067, 1.442695
    %v3069 = vpow.pop %v3068
    %v3070 = vadd.f32 %v3069, 1.0
    %v3071 = vrcp.pop %v3070
    %v3072 = vmul.f32 1.0, %v3071
    %v3073 = vtanh.pop %v3066
    %v3074 = vmul.f32 %v3072, %v2209
    %3076 = vrot.lane.b32.xlu0 %v3073, 64
    %v3077 = vpop.permute.xlu0 %3076
    %v3079 = vmul.f32 %v3072, %v3077
    %3081 = vrot.lane.b32.xlu0 %v3079, 32
    %v3082 = vpop.permute.xlu0 %3081
    %v3084 = vadd.f32 %v3074, %v3082
    %v3085 = vtanh.pop %v3084
    %3087 = vrot.lane.b32.xlu0 %v3085, 64
    %v3088 = vpop.permute.xlu0 %3087
    %v3090 = vmul.f32 %v3072, %v3088
    %3092 = vrot.lane.b32.xlu0 %v3090, 32
    %v3093 = vpop.permute.xlu0 %3092
    %v3094 = vsel %vm171, %v3093, 0
    %3096 = vmatprep.subr.mxu0 0.0
    %3097 = vmatpush1.msra.mxu0 %v79
    %3098 = vmatprep.subr.mxu0 0.0
    %3099 = vmatpush1.msra.mxu0 %v80
    %3100 = vmatprep.subr.mxu0 0.0
    %3101 = vmatpush1.msra.mxu0 %v81
    %3102 = vmatprep.subr.mxu0 0.0
    %3103 = vmatpush1.msra.mxu0 %v82
    %3104 = vmatprep.subr.mxu0 0.0
    %3105 = vmatpush1.msra.mxu0 0.0
    %3106 = vmatprep.subr.mxu0 0.0
    %3107 = vmatpush1.msra.mxu0 0.0
    %3108 = vmatprep.subr.mxu0 0.0
    %3109 = vmatpush1.msra.mxu0 0.0
    %3110 = vmatprep.subr.mxu0 0.0
    %3111 = vmatpush1.msra.mxu0 0.0
    %3112 = vmatprep.subr.mxu0 0.0
    %3113 = vmatpush1.msra.mxu0 0.0
    %3114 = vmatprep.subr.mxu0 0.0
    %3115 = vmatpush1.msra.mxu0 0.0
    %3116 = vmatprep.subr.mxu0 0.0
    %3117 = vmatpush1.msra.mxu0 0.0
    %3118 = vmatprep.subr.mxu0 0.0
    %3119 = vmatpush1.msra.mxu0 0.0
    %3120 = vmatprep.subr.mxu0 0.0
    %3121 = vmatpush1.msra.mxu0 0.0
    %3122 = vmatprep.subr.mxu0 0.0
    %3123 = vmatpush1.msra.mxu0 0.0
    %3124 = vmatprep.subr.mxu0 0.0
    %3125 = vmatpush1.msra.mxu0 0.0
    %3126 = vmatprep.subr.mxu0 0.0
    %3127 = vmatpush1.msra.mxu0 0.0
    %3128 = vmatprep.subr.mxu0 0.0
    %3129 = vmatpush1.msra.mxu0 0.0
    %3130 = vmatprep.subr.mxu0 0.0
    %3131 = vmatpush1.msra.mxu0 0.0
    %3132 = vmatprep.subr.mxu0 0.0
    %3133 = vmatpush1.msra.mxu0 0.0
    %3134 = vmatprep.subr.mxu0 0.0
    %3135 = vmatpush1.msra.mxu0 0.0
    %3136 = vmatprep.subr.mxu0 0.0
    %3137 = vmatpush1.msra.mxu0 0.0
    %3138 = vmatprep.subr.mxu0 0.0
    %3139 = vmatpush1.msra.mxu0 0.0
    %3140 = vmatprep.subr.mxu0 0.0
    %3141 = vmatpush1.msra.mxu0 0.0
    %3142 = vmatprep.subr.mxu0 0.0
    %3143 = vmatpush1.msra.mxu0 0.0
    %3144 = vmatprep.subr.mxu0 0.0
    %3145 = vmatpush1.msra.mxu0 0.0
    %3146 = vmatprep.subr.mxu0 0.0
    %3147 = vmatpush1.msra.mxu0 0.0
    %3148 = vmatprep.subr.mxu0 0.0
    %3149 = vmatpush1.msra.mxu0 0.0
    %3150 = vmatprep.subr.mxu0 0.0
    %3151 = vmatpush1.msra.mxu0 0.0
    %3152 = vmatprep.subr.mxu0 0.0
    %3153 = vmatpush1.msra.mxu0 0.0
    %3154 = vmatprep.subr.mxu0 0.0
    %3155 = vmatpush1.msra.mxu0 0.0
    %3156 = vmatprep.subr.mxu0 0.0
    %3157 = vmatpush1.msra.mxu0 0.0
    %3158 = vmatprep.subr.mxu0 0.0
    %3159 = vmatpush1.msra.mxu0 0.0
    %3160 = vmatprep.mubr.f32.mxu0 0.0
    %3161 = vmatmul.mubr.f32.gmra.mrb[0].mxu0 %v3094
    %v3162 = vpop.f32.mrb[0].mxu0
    %v3163 = vadd.f32 0.0, %v3162
    %v3164 = vpop.f32.mrb[0].mxu0
    %3165 = vdwg.mxu0
    %v3166 = vrot.slane %v3090, 1
    %3167 = vrot.lane.b32.xlu0 %v3166, 32
    %v3168 = vpop.permute.xlu0 %3167
    %v3169 = vsel %vm171, %v3168, 0
    %3171 = vmatprep.subr.mxu0 0.0
    %3172 = vmatpush1.msra.mxu0 %v84
    %3173 = vmatprep.subr.mxu0 0.0
    %3174 = vmatpush1.msra.mxu0 %v85
    %3175 = vmatprep.subr.mxu0 0.0
    %3176 = vmatpush1.msra.mxu0 %v86
    %3177 = vmatprep.subr.mxu0 0.0
    %3178 = vmatpush1.msra.mxu0 %v87
    %3179 = vmatprep.subr.mxu0 0.0
    %3180 = vmatpush1.msra.mxu0 0.0
    %3181 = vmatprep.subr.mxu0 0.0
    %3182 = vmatpush1.msra.mxu0 0.0
    %3183 = vmatprep.subr.mxu0 0.0
    %3184 = vmatpush1.msra.mxu0 0.0
    %3185 = vmatprep.subr.mxu0 0.0
    %3186 = vmatpush1.msra.mxu0 0.0
    %3187 = vmatprep.subr.mxu0 0.0
    %3188 = vmatpush1.msra.mxu0 0.0
    %3189 = vmatprep.subr.mxu0 0.0
    %3190 = vmatpush1.msra.mxu0 0.0
    %3191 = vmatprep.subr.mxu0 0.0
    %3192 = vmatpush1.msra.mxu0 0.0
    %3193 = vmatprep.subr.mxu0 0.0
    %3194 = vmatpush1.msra.mxu0 0.0
    %3195 = vmatprep.subr.mxu0 0.0
    %3196 = vmatpush1.msra.mxu0 0.0
    %3197 = vmatprep.subr.mxu0 0.0
    %3198 = vmatpush1.msra.mxu0 0.0
    %3199 = vmatprep.subr.mxu0 0.0
    %3200 = vmatpush1.msra.mxu0 0.0
    %3201 = vmatprep.subr.mxu0 0.0
    %3202 = vmatpush1.msra.mxu0 0.0
    %3203 = vmatprep.subr.mxu0 0.0
    %3204 = vmatpush1.msra.mxu0 0.0
    %3205 = vmatprep.subr.mxu0 0.0
    %3206 = vmatpush1.msra.mxu0 0.0
    %3207 = vmatprep.subr.mxu0 0.0
    %3208 = vmatpush1.msra.mxu0 0.0
    %3209 = vmatprep.subr.mxu0 0.0
    %3210 = vmatpush1.msra.mxu0 0.0
    %3211 = vmatprep.subr.mxu0 0.0
    %3212 = vmatpush1.msra.mxu0 0.0
    %3213 = vmatprep.subr.mxu0 0.0
    %3214 = vmatpush1.msra.mxu0 0.0
    %3215 = vmatprep.subr.mxu0 0.0
    %3216 = vmatpush1.msra.mxu0 0.0
    %3217 = vmatprep.subr.mxu0 0.0
    %3218 = vmatpush1.msra.mxu0 0.0
    %3219 = vmatprep.subr.mxu0 0.0
    %3220 = vmatpush1.msra.mxu0 0.0
    %3221 = vmatprep.subr.mxu0 0.0
    %3222 = vmatpush1.msra.mxu0 0.0
    %3223 = vmatprep.subr.mxu0 0.0
    %3224 = vmatpush1.msra.mxu0 0.0
    %3225 = vmatprep.subr.mxu0 0.0
    %3226 = vmatpush1.msra.mxu0 0.0
    %3227 = vmatprep.subr.mxu0 0.0
    %3228 = vmatpush1.msra.mxu0 0.0
    %3229 = vmatprep.subr.mxu0 0.0
    %3230 = vmatpush1.msra.mxu0 0.0
    %3231 = vmatprep.subr.mxu0 0.0
    %3232 = vmatpush1.msra.mxu0 0.0
    %3233 = vmatprep.subr.mxu0 0.0
    %3234 = vmatpush1.msra.mxu0 0.0
    %3235 = vmatprep.mubr.f32.mxu0 0.0
    %3236 = vmatmul.mubr.f32.gmra.mrb[0].mxu0 %v3169
    %v3237 = vpop.f32.mrb[0].mxu0
    %v3238 = vadd.f32 0.0, %v3237
    %v3239 = vpop.f32.mrb[0].mxu0
    %3240 = vdwg.mxu0
    %v3242 = vrot.slane %v3238, 7
    %v3244 = vsel %vm608, %v3163, %v3242
    %v3245 = vadd.f32 %v3244, %v75
    %v3246 = vsel %vm611, %v3245, -inf
    %3247 = vmax.xlane.f32.xlu0 %v3246
    %v3248 = vpop.xlane.xlu0 %3247
    %v3249 = vsub.f32 %v3245, %v3248
    %v3250 = vmul.f32 %v3249, 1.442695
    %v3251 = vpow.pop %v3250
    %v3252 = vsel %vm611, %v3251, 0.0
    %3253 = vadd.xlane.f32.xlu0 %v3252
    %v3254 = vpop.xlane.xlu0 %3253
    %v3255 = vrcp.pop %v3254
    %v3256 = vmul.f32 %v3251, %v3255
    %v3258 = vsel %vm623, %v3256, 0
    %3260 = vmatprep.subr.mxu0 0.0
    %3261 = vmatpush1.msra.mxu0 %v76
    %3262 = vmatprep.subr.mxu0 0.0
    %3263 = vmatpush1.msra.mxu0 0.0
    %3264 = vmatprep.subr.mxu0 0.0
    %3265 = vmatpush1.msra.mxu0 0.0
    %3266 = vmatprep.subr.mxu0 0.0
    %3267 = vmatpush1.msra.mxu0 0.0
    %3268 = vmatprep.subr.mxu0 0.0
    %3269 = vmatpush1.msra.mxu0 0.0
    %3270 = vmatprep.subr.mxu0 0.0
    %3271 = vmatpush1.msra.mxu0 0.0
    %3272 = vmatprep.subr.mxu0 0.0
    %3273 = vmatpush1.msra.mxu0 0.0
    %3274 = vmatprep.subr.mxu0 0.0
    %3275 = vmatpush1.msra.mxu0 0.0
    %3276 = vmatprep.subr.mxu0 0.0
    %3277 = vmatpush1.msra.mxu0 0.0
    %3278 = vmatprep.subr.mxu0 0.0
    %3279 = vmatpush1.msra.mxu0 0.0
    %3280 = vmatprep.subr.mxu0 0.0
    %3281 = vmatpush1.msra.mxu0 0.0
    %3282 = vmatprep.subr.mxu0 0.0
    %3283 = vmatpush1.msra.mxu0 0.0
    %3284 = vmatprep.subr.mxu0 0.0
    %3285 = vmatpush1.msra.mxu0 0.0
    %3286 = vmatprep.subr.mxu0 0.0
    %3287 = vmatpush1.msra.mxu0 0.0
    %3288 = vmatprep.subr.mxu0 0.0
    %3289 = vmatpush1.msra.mxu0 0.0
    %3290 = vmatprep.subr.mxu0 0.0
    %3291 = vmatpush1.msra.mxu0 0.0
    %3292 = vmatprep.subr.mxu0 0.0
    %3293 = vmatpush1.msra.mxu0 0.0
    %3294 = vmatprep.subr.mxu0 0.0
    %3295 = vmatpush1.msra.mxu0 0.0
    %3296 = vmatprep.subr.mxu0 0.0
    %3297 = vmatpush1.msra.mxu0 0.0
    %3298 = vmatprep.subr.mxu0 0.0
    %3299 = vmatpush1.msra.mxu0 0.0
    %3300 = vmatprep.subr.mxu0 0.0
    %3301 = vmatpush1.msra.mxu0 0.0
    %3302 = vmatprep.subr.mxu0 0.0
    %3303 = vmatpush1.msra.mxu0 0.0
    %3304 = vmatprep.subr.mxu0 0.0
    %3305 = vmatpush1.msra.mxu0 0.0
    %3306 = vmatprep.subr.mxu0 0.0
    %3307 = vmatpush1.msra.mxu0 0.0
    %3308 = vmatprep.subr.mxu0 0.0
    %3309 = vmatpush1.msra.mxu0 0.0
    %3310 = vmatprep.subr.mxu0 0.0
    %3311 = vmatpush1.msra.mxu0 0.0
    %3312 = vmatprep.subr.mxu0 0.0
    %3313 = vmatpush1.msra.mxu0 0.0
    %3314 = vmatprep.subr.mxu0 0.0
    %3315 = vmatpush1.msra.mxu0 0.0
    %3316 = vmatprep.subr.mxu0 0.0
    %3317 = vmatpush1.msra.mxu0 0.0
    %3318 = vmatprep.subr.mxu0 0.0
    %3319 = vmatpush1.msra.mxu0 0.0
    %3320 = vmatprep.subr.mxu0 0.0
    %3321 = vmatpush1.msra.mxu0 0.0
    %3322 = vmatprep.subr.mxu0 0.0
    %3323 = vmatpush1.msra.mxu0 0.0
    %3324 = vmatprep.mubr.f32.mxu0 0.0
    %3325 = vmatmul.mubr.f32.gmra.mrb[0].mxu0 %v3258
    %v3326 = vpop.f32.mrb[0].mxu0
    %v3327 = vadd.f32 0.0, %v3326
    %v3328 = vpop.f32.mrb[0].mxu0
    %3329 = vdwg.mxu0
    %v3330 = vrot.slane %v3256, 1
    %v3331 = vsel %vm623, %v3330, 0
    %3333 = vmatprep.subr.mxu0 0.0
    %3334 = vmatpush1.msra.mxu0 %v78
    %3335 = vmatprep.subr.mxu0 0.0
    %3336 = vmatpush1.msra.mxu0 0.0
    %3337 = vmatprep.subr.mxu0 0.0
    %3338 = vmatpush1.msra.mxu0 0.0
    %3339 = vmatprep.subr.mxu0 0.0
    %3340 = vmatpush1.msra.mxu0 0.0
    %3341 = vmatprep.subr.mxu0 0.0
    %3342 = vmatpush1.msra.mxu0 0.0
    %3343 = vmatprep.subr.mxu0 0.0
    %3344 = vmatpush1.msra.mxu0 0.0
    %3345 = vmatprep.subr.mxu0 0.0
    %3346 = vmatpush1.msra.mxu0 0.0
    %3347 = vmatprep.subr.mxu0 0.0
    %3348 = vmatpush1.msra.mxu0 0.0
    %3349 = vmatprep.subr.mxu0 0.0
    %3350 = vmatpush1.msra.mxu0 0.0
    %3351 = vmatprep.subr.mxu0 0.0
    %3352 = vmatpush1.msra.mxu0 0.0
    %3353 = vmatprep.subr.mxu0 0.0
    %3354 = vmatpush1.msra.mxu0 0.0
    %3355 = vmatprep.subr.mxu0 0.0
    %3356 = vmatpush1.msra.mxu0 0.0
    %3357 = vmatprep.subr.mxu0 0.0
    %3358 = vmatpush1.msra.mxu0 0.0
    %3359 = vmatprep.subr.mxu0 0.0
    %3360 = vmatpush1.msra.mxu0 0.0
    %3361 = vmatprep.subr.mxu0 0.0
    %3362 = vmatpush1.msra.mxu0 0.0
    %3363 = vmatprep.subr.mxu0 0.0
    %3364 = vmatpush1.msra.mxu0 0.0
    %3365 = vmatprep.subr.mxu0 0.0
    %3366 = vmatpush1.msra.mxu0 0.0
    %3367 = vmatprep.subr.mxu0 0.0
    %3368 = vmatpush1.msra.mxu0 0.0
    %3369 = vmatprep.subr.mxu0 0.0
    %3370 = vmatpush1.msra.mxu0 0.0
    %3371 = vmatprep.subr.mxu0 0.0
    %3372 = vmatpush1.msra.mxu0 0.0
    %3373 = vmatprep.subr.mxu0 0.0
    %3374 = vmatpush1.msra.mxu0 0.0
    %3375 = vmatprep.subr.mxu0 0.0
    %3376 = vmatpush1.msra.mxu0 0.0
    %3377 = vmatprep.subr.mxu0 0.0
    %3378 = vmatpush1.msra.mxu0 0.0
    %3379 = vmatprep.subr.mxu0 0.0
    %3380 = vmatpush1.msra.mxu0 0.0
    %3381 = vmatprep.subr.mxu0 0.0
    %3382 = vmatpush1.msra.mxu0 0.0
    %3383 = vmatprep.subr.mxu0 0.0
    %3384 = vmatpush1.msra.mxu0 0.0
    %3385 = vmatprep.subr.mxu0 0.0
    %3386 = vmatpush1.msra.mxu0 0.0
    %3387 = vmatprep.subr.mxu0 0.0
    %3388 = vmatpush1.msra.mxu0 0.0
    %3389 = vmatprep.subr.mxu0 0.0
    %3390 = vmatpush1.msra.mxu0 0.0
    %3391 = vmatprep.subr.mxu0 0.0
    %3392 = vmatpush1.msra.mxu0 0.0
    %3393 = vmatprep.subr.mxu0 0.0
    %3394 = vmatpush1.msra.mxu0 0.0
    %3395 = vmatprep.subr.mxu0 0.0
    %3396 = vmatpush1.msra.mxu0 0.0
    %3397 = vmatprep.mubr.f32.mxu0 0.0
    %3398 = vmatmul.mubr.f32.gmra.mrb[0].mxu0 %v3331
    %v3399 = vpop.f32.mrb[0].mxu0
    %v3400 = vadd.f32 0.0, %v3399
    %v3401 = vpop.f32.mrb[0].mxu0
    %3402 = vdwg.mxu0
    %v3404 = vrot.slane %v3400, 7
    %v3406 = vsel %vm608, %v3327, %v3404
    %v3408 = vsel %vm171, %v3406, 0
    %3410 = vmatprep.subr.mxu0 0.0
    %3411 = vmatpush1.msra.mxu0 %v63
    %3412 = vmatprep.subr.mxu0 0.0
    %3413 = vmatpush1.msra.mxu0 %v64
    %3414 = vmatprep.subr.mxu0 0.0
    %3415 = vmatpush1.msra.mxu0 %v65
    %3416 = vmatprep.subr.mxu0 0.0
    %3417 = vmatpush1.msra.mxu0 %v66
    %3418 = vmatprep.subr.mxu0 0.0
    %3419 = vmatpush1.msra.mxu0 0.0
    %3420 = vmatprep.subr.mxu0 0.0
    %3421 = vmatpush1.msra.mxu0 0.0
    %3422 = vmatprep.subr.mxu0 0.0
    %3423 = vmatpush1.msra.mxu0 0.0
    %3424 = vmatprep.subr.mxu0 0.0
    %3425 = vmatpush1.msra.mxu0 0.0
    %3426 = vmatprep.subr.mxu0 0.0
    %3427 = vmatpush1.msra.mxu0 0.0
    %3428 = vmatprep.subr.mxu0 0.0
    %3429 = vmatpush1.msra.mxu0 0.0
    %3430 = vmatprep.subr.mxu0 0.0
    %3431 = vmatpush1.msra.mxu0 0.0
    %3432 = vmatprep.subr.mxu0 0.0
    %3433 = vmatpush1.msra.mxu0 0.0
    %3434 = vmatprep.subr.mxu0 0.0
    %3435 = vmatpush1.msra.mxu0 0.0
    %3436 = vmatprep.subr.mxu0 0.0
    %3437 = vmatpush1.msra.mxu0 0.0
    %3438 = vmatprep.subr.mxu0 0.0
    %3439 = vmatpush1.msra.mxu0 0.0
    %3440 = vmatprep.subr.mxu0 0.0
    %3441 = vmatpush1.msra.mxu0 0.0
    %3442 = vmatprep.subr.mxu0 0.0
    %3443 = vmatpush1.msra.mxu0 0.0
    %3444 = vmatprep.subr.mxu0 0.0
    %3445 = vmatpush1.msra.mxu0 0.0
    %3446 = vmatprep.subr.mxu0 0.0
    %3447 = vmatpush1.msra.mxu0 0.0
    %3448 = vmatprep.subr.mxu0 0.0
    %3449 = vmatpush1.msra.mxu0 0.0
    %3450 = vmatprep.subr.mxu0 0.0
    %3451 = vmatpush1.msra.mxu0 0.0
    %3452 = vmatprep.subr.mxu0 0.0
    %3453 = vmatpush1.msra.mxu0 0.0
    %3454 = vmatprep.subr.mxu0 0.0
    %3455 = vmatpush1.msra.mxu0 0.0
    %3456 = vmatprep.subr.mxu0 0.0
    %3457 = vmatpush1.msra.mxu0 0.0
    %3458 = vmatprep.subr.mxu0 0.0
    %3459 = vmatpush1.msra.mxu0 0.0
    %3460 = vmatprep.subr.mxu0 0.0
    %3461 = vmatpush1.msra.mxu0 0.0
    %3462 = vmatprep.subr.mxu0 0.0
    %3463 = vmatpush1.msra.mxu0 0.0
    %3464 = vmatprep.subr.mxu0 0.0
    %3465 = vmatpush1.msra.mxu0 0.0
    %3466 = vmatprep.subr.mxu0 0.0
    %3467 = vmatpush1.msra.mxu0 0.0
    %3468 = vmatprep.subr.mxu0 0.0
    %3469 = vmatpush1.msra.mxu0 0.0
    %3470 = vmatprep.subr.mxu0 0.0
    %3471 = vmatpush1.msra.mxu0 0.0
    %3472 = vmatprep.subr.mxu0 0.0
    %3473 = vmatpush1.msra.mxu0 0.0
    %3474 = vmatprep.mubr.f32.mxu0 0.0
    %3475 = vmatmul.mubr.f32.gmra.mrb[0].mxu0 %v3408
    %v3476 = vpop.f32.mrb[0].mxu0
    %v3477 = vadd.f32 0.0, %v3476
    %v3478 = vpop.f32.mrb[0].mxu0
    %3479 = vdwg.mxu0
    %3480 = vmatprep.subr.mxu0 0.0
    %3481 = vmatpush1.msra.mxu0 %v59
    %3482 = vmatprep.subr.mxu0 0.0
    %3483 = vmatpush1.msra.mxu0 %v60
    %3484 = vmatprep.subr.mxu0 0.0
    %3485 = vmatpush1.msra.mxu0 %v61
    %3486 = vmatprep.subr.mxu0 0.0
    %3487 = vmatpush1.msra.mxu0 %v62
    %3488 = vmatprep.subr.mxu0 0.0
    %3489 = vmatpush1.msra.mxu0 0.0
    %3490 = vmatprep.subr.mxu0 0.0
    %3491 = vmatpush1.msra.mxu0 0.0
    %3492 = vmatprep.subr.mxu0 0.0
    %3493 = vmatpush1.msra.mxu0 0.0
    %3494 = vmatprep.subr.mxu0 0.0
    %3495 = vmatpush1.msra.mxu0 0.0
    %3496 = vmatprep.subr.mxu0 0.0
    %3497 = vmatpush1.msra.mxu0 0.0
    %3498 = vmatprep.subr.mxu0 0.0
    %3499 = vmatpush1.msra.mxu0 0.0
    %3500 = vmatprep.subr.mxu0 0.0
    %3501 = vmatpush1.msra.mxu0 0.0
    %3502 = vmatprep.subr.mxu0 0.0
    %3503 = vmatpush1.msra.mxu0 0.0
    %3504 = vmatprep.subr.mxu0 0.0
    %3505 = vmatpush1.msra.mxu0 0.0
    %3506 = vmatprep.subr.mxu0 0.0
    %3507 = vmatpush1.msra.mxu0 0.0
    %3508 = vmatprep.subr.mxu0 0.0
    %3509 = vmatpush1.msra.mxu0 0.0
    %3510 = vmatprep.subr.mxu0 0.0
    %3511 = vmatpush1.msra.mxu0 0.0
    %3512 = vmatprep.subr.mxu0 0.0
    %3513 = vmatpush1.msra.mxu0 0.0
    %3514 = vmatprep.subr.mxu0 0.0
    %3515 = vmatpush1.msra.mxu0 0.0
    %3516 = vmatprep.subr.mxu0 0.0
    %3517 = vmatpush1.msra.mxu0 0.0
    %3518 = vmatprep.subr.mxu0 0.0
    %3519 = vmatpush1.msra.mxu0 0.0
    %3520 = vmatprep.subr.mxu0 0.0
    %3521 = vmatpush1.msra.mxu0 0.0
    %3522 = vmatprep.subr.mxu0 0.0
    %3523 = vmatpush1.msra.mxu0 0.0
    %3524 = vmatprep.subr.mxu0 0.0
    %3525 = vmatpush1.msra.mxu0 0.0
    %3526 = vmatprep.subr.mxu0 0.0
    %3527 = vmatpush1.msra.mxu0 0.0
    %3528 = vmatprep.subr.mxu0 0.0
    %3529 = vmatpush1.msra.mxu0 0.0
    %3530 = vmatprep.subr.mxu0 0.0
    %3531 = vmatpush1.msra.mxu0 0.0
    %3532 = vmatprep.subr.mxu0 0.0
    %3533 = vmatpush1.msra.mxu0 0.0
    %3534 = vmatprep.subr.mxu0 0.0
    %3535 = vmatpush1.msra.mxu0 0.0
    %3536 = vmatprep.subr.mxu0 0.0
    %3537 = vmatpush1.msra.mxu0 0.0
    %3538 = vmatprep.subr.mxu0 0.0
    %3539 = vmatpush1.msra.mxu0 0.0
    %3540 = vmatprep.subr.mxu0 0.0
    %3541 = vmatpush1.msra.mxu0 0.0
    %3542 = vmatprep.subr.mxu0 0.0
    %3543 = vmatpush1.msra.mxu0 0.0
    %3544 = vmatprep.mubr.f32.mxu0 0.0
    %3545 = vmatmul.mubr.f32.gmra.mrb[0].mxu0 %v3094
    %v3546 = vpop.f32.mrb[0].mxu0
    %v3547 = vadd.f32 %v3477, %v3546
    %v3548 = vpop.f32.mrb[0].mxu0
    %3549 = vdwg.mxu0
    %v3550 = vadd.f32 %v3547, %v920
    %v3551 = vtanh.pop %v3550
    %v3553 = vsel %vm171, %v3551, 0
    %3555 = vmatprep.subr.mxu0 0.0
    %3556 = vmatpush1.msra.mxu0 %v68
    %3557 = vmatprep.subr.mxu0 0.0
    %3558 = vmatpush1.msra.mxu0 %v69
    %3559 = vmatprep.subr.mxu0 0.0
    %3560 = vmatpush1.msra.mxu0 %v70
    %3561 = vmatprep.subr.mxu0 0.0
    %3562 = vmatpush1.msra.mxu0 %v71
    %3563 = vmatprep.subr.mxu0 0.0
    %3564 = vmatpush1.msra.mxu0 0.0
    %3565 = vmatprep.subr.mxu0 0.0
    %3566 = vmatpush1.msra.mxu0 0.0
    %3567 = vmatprep.subr.mxu0 0.0
    %3568 = vmatpush1.msra.mxu0 0.0
    %3569 = vmatprep.subr.mxu0 0.0
    %3570 = vmatpush1.msra.mxu0 0.0
    %3571 = vmatprep.subr.mxu0 0.0
    %3572 = vmatpush1.msra.mxu0 0.0
    %3573 = vmatprep.subr.mxu0 0.0
    %3574 = vmatpush1.msra.mxu0 0.0
    %3575 = vmatprep.subr.mxu0 0.0
    %3576 = vmatpush1.msra.mxu0 0.0
    %3577 = vmatprep.subr.mxu0 0.0
    %3578 = vmatpush1.msra.mxu0 0.0
    %3579 = vmatprep.subr.mxu0 0.0
    %3580 = vmatpush1.msra.mxu0 0.0
    %3581 = vmatprep.subr.mxu0 0.0
    %3582 = vmatpush1.msra.mxu0 0.0
    %3583 = vmatprep.subr.mxu0 0.0
    %3584 = vmatpush1.msra.mxu0 0.0
    %3585 = vmatprep.subr.mxu0 0.0
    %3586 = vmatpush1.msra.mxu0 0.0
    %3587 = vmatprep.subr.mxu0 0.0
    %3588 = vmatpush1.msra.mxu0 0.0
    %3589 = vmatprep.subr.mxu0 0.0
    %3590 = vmatpush1.msra.mxu0 0.0
    %3591 = vmatprep.subr.mxu0 0.0
    %3592 = vmatpush1.msra.mxu0 0.0
    %3593 = vmatprep.subr.mxu0 0.0
    %3594 = vmatpush1.msra.mxu0 0.0
    %3595 = vmatprep.subr.mxu0 0.0
    %3596 = vmatpush1.msra.mxu0 0.0
    %3597 = vmatprep.subr.mxu0 0.0
    %3598 = vmatpush1.msra.mxu0 0.0
    %3599 = vmatprep.subr.mxu0 0.0
    %3600 = vmatpush1.msra.mxu0 0.0
    %3601 = vmatprep.subr.mxu0 0.0
    %3602 = vmatpush1.msra.mxu0 0.0
    %3603 = vmatprep.subr.mxu0 0.0
    %3604 = vmatpush1.msra.mxu0 0.0
    %3605 = vmatprep.subr.mxu0 0.0
    %3606 = vmatpush1.msra.mxu0 0.0
    %3607 = vmatprep.subr.mxu0 0.0
    %3608 = vmatpush1.msra.mxu0 0.0
    %3609 = vmatprep.subr.mxu0 0.0
    %3610 = vmatpush1.msra.mxu0 0.0
    %3611 = vmatprep.subr.mxu0 0.0
    %3612 = vmatpush1.msra.mxu0 0.0
    %3613 = vmatprep.subr.mxu0 0.0
    %3614 = vmatpush1.msra.mxu0 0.0
    %3615 = vmatprep.subr.mxu0 0.0
    %3616 = vmatpush1.msra.mxu0 0.0
    %3617 = vmatprep.subr.mxu0 0.0
    %3618 = vmatpush1.msra.mxu0 0.0
    %3619 = vmatprep.mubr.f32.mxu0 0.0
    %3620 = vmatmul.mubr.f32.gmra.mrb[0].mxu0 %v3553
    %v3621 = vpop.f32.mrb[0].mxu0
    %v3622 = vadd.f32 %v926, %v3621
    %v3623 = vpop.f32.mrb[0].mxu0
    %3624 = vdwg.mxu0
    %s3625 = scalar_lea.vmem %s0, 8
    %v3626 = vld [vmem:[%s3625] sm:$0x3]
    %v3628 = vsel %vm96, %v3622, 0
    %3630 = vmatprep.subr.mxu0 0.0
    %3631 = vmatpush1.msra.mxu0 %v44
    %3632 = vmatprep.subr.mxu0 0.0
    %3633 = vmatpush1.msra.mxu0 %v45
    %3634 = vmatprep.subr.mxu0 0.0
    %3635 = vmatpush1.msra.mxu0 0.0
    %3636 = vmatprep.subr.mxu0 0.0
    %3637 = vmatpush1.msra.mxu0 0.0
    %3638 = vmatprep.subr.mxu0 0.0
    %3639 = vmatpush1.msra.mxu0 0.0
    %3640 = vmatprep.subr.mxu0 0.0
    %3641 = vmatpush1.msra.mxu0 0.0
    %3642 = vmatprep.subr.mxu0 0.0
    %3643 = vmatpush1.msra.mxu0 0.0
    %3644 = vmatprep.subr.mxu0 0.0
    %3645 = vmatpush1.msra.mxu0 0.0
    %3646 = vmatprep.subr.mxu0 0.0
    %3647 = vmatpush1.msra.mxu0 0.0
    %3648 = vmatprep.subr.mxu0 0.0
    %3649 = vmatpush1.msra.mxu0 0.0
    %3650 = vmatprep.subr.mxu0 0.0
    %3651 = vmatpush1.msra.mxu0 0.0
    %3652 = vmatprep.subr.mxu0 0.0
    %3653 = vmatpush1.msra.mxu0 0.0
    %3654 = vmatprep.subr.mxu0 0.0
    %3655 = vmatpush1.msra.mxu0 0.0
    %3656 = vmatprep.subr.mxu0 0.0
    %3657 = vmatpush1.msra.mxu0 0.0
    %3658 = vmatprep.subr.mxu0 0.0
    %3659 = vmatpush1.msra.mxu0 0.0
    %3660 = vmatprep.subr.mxu0 0.0
    %3661 = vmatpush1.msra.mxu0 0.0
    %3662 = vmatprep.subr.mxu0 0.0
    %3663 = vmatpush1.msra.mxu0 0.0
    %3664 = vmatprep.subr.mxu0 0.0
    %3665 = vmatpush1.msra.mxu0 0.0
    %3666 = vmatprep.subr.mxu0 0.0
    %3667 = vmatpush1.msra.mxu0 0.0
    %3668 = vmatprep.subr.mxu0 0.0
    %3669 = vmatpush1.msra.mxu0 0.0
    %3670 = vmatprep.subr.mxu0 0.0
    %3671 = vmatpush1.msra.mxu0 0.0
    %3672 = vmatprep.subr.mxu0 0.0
    %3673 = vmatpush1.msra.mxu0 0.0
    %3674 = vmatprep.subr.mxu0 0.0
    %3675 = vmatpush1.msra.mxu0 0.0
    %3676 = vmatprep.subr.mxu0 0.0
    %3677 = vmatpush1.msra.mxu0 0.0
    %3678 = vmatprep.subr.mxu0 0.0
    %3679 = vmatpush1.msra.mxu0 0.0
    %3680 = vmatprep.subr.mxu0 0.0
    %3681 = vmatpush1.msra.mxu0 0.0
    %3682 = vmatprep.subr.mxu0 0.0
    %3683 = vmatpush1.msra.mxu0 0.0
    %3684 = vmatprep.subr.mxu0 0.0
    %3685 = vmatpush1.msra.mxu0 0.0
    %3686 = vmatprep.subr.mxu0 0.0
    %3687 = vmatpush1.msra.mxu0 0.0
    %3688 = vmatprep.subr.mxu0 0.0
    %3689 = vmatpush1.msra.mxu0 0.0
    %3690 = vmatprep.subr.mxu0 0.0
    %3691 = vmatpush1.msra.mxu0 0.0
    %3692 = vmatprep.subr.mxu0 0.0
    %3693 = vmatpush1.msra.mxu0 0.0
    %3694 = vmatprep.mubr.f32.mxu0 0.0
    %3695 = vmatmul.mubr.f32.gmra.mrb[0].mxu0 %v3628
    %v3696 = vpop.f32.mrb[0].mxu0
    %v3697 = vadd.f32 0.0, %v3696
    %v3698 = vpop.f32.mrb[0].mxu0
    %3699 = vdwg.mxu0
    %v3700 = vadd.f32 %v3626, %v3697
    %3701 = vmatprep.subr.mxu0 0.0
    %3702 = vmatpush1.msra.mxu0 %v50
    %3703 = vmatprep.subr.mxu0 0.0
    %3704 = vmatpush1.msra.mxu0 %v51
    %3705 = vmatprep.subr.mxu0 0.0
    %3706 = vmatpush1.msra.mxu0 %v52
    %3707 = vmatprep.subr.mxu0 0.0
    %3708 = vmatpush1.msra.mxu0 %v53
    %3709 = vmatprep.subr.mxu0 0.0
    %3710 = vmatpush1.msra.mxu0 0.0
    %3711 = vmatprep.subr.mxu0 0.0
    %3712 = vmatpush1.msra.mxu0 0.0
    %3713 = vmatprep.subr.mxu0 0.0
    %3714 = vmatpush1.msra.mxu0 0.0
    %3715 = vmatprep.subr.mxu0 0.0
    %3716 = vmatpush1.msra.mxu0 0.0
    %3717 = vmatprep.subr.mxu0 0.0
    %3718 = vmatpush1.msra.mxu0 0.0
    %3719 = vmatprep.subr.mxu0 0.0
    %3720 = vmatpush1.msra.mxu0 0.0
    %3721 = vmatprep.subr.mxu0 0.0
    %3722 = vmatpush1.msra.mxu0 0.0
    %3723 = vmatprep.subr.mxu0 0.0
    %3724 = vmatpush1.msra.mxu0 0.0
    %3725 = vmatprep.subr.mxu0 0.0
    %3726 = vmatpush1.msra.mxu0 0.0
    %3727 = vmatprep.subr.mxu0 0.0
    %3728 = vmatpush1.msra.mxu0 0.0
    %3729 = vmatprep.subr.mxu0 0.0
    %3730 = vmatpush1.msra.mxu0 0.0
    %3731 = vmatprep.subr.mxu0 0.0
    %3732 = vmatpush1.msra.mxu0 0.0
    %3733 = vmatprep.subr.mxu0 0.0
    %3734 = vmatpush1.msra.mxu0 0.0
    %3735 = vmatprep.subr.mxu0 0.0
    %3736 = vmatpush1.msra.mxu0 0.0
    %3737 = vmatprep.subr.mxu0 0.0
    %3738 = vmatpush1.msra.mxu0 0.0
    %3739 = vmatprep.subr.mxu0 0.0
    %3740 = vmatpush1.msra.mxu0 0.0
    %3741 = vmatprep.subr.mxu0 0.0
    %3742 = vmatpush1.msra.mxu0 0.0
    %3743 = vmatprep.subr.mxu0 0.0
    %3744 = vmatpush1.msra.mxu0 0.0
    %3745 = vmatprep.subr.mxu0 0.0
    %3746 = vmatpush1.msra.mxu0 0.0
    %3747 = vmatprep.subr.mxu0 0.0
    %3748 = vmatpush1.msra.mxu0 0.0
    %3749 = vmatprep.subr.mxu0 0.0
    %3750 = vmatpush1.msra.mxu0 0.0
    %3751 = vmatprep.subr.mxu0 0.0
    %3752 = vmatpush1.msra.mxu0 0.0
    %3753 = vmatprep.subr.mxu0 0.0
    %3754 = vmatpush1.msra.mxu0 0.0
    %3755 = vmatprep.subr.mxu0 0.0
    %3756 = vmatpush1.msra.mxu0 0.0
    %3757 = vmatprep.subr.mxu0 0.0
    %3758 = vmatpush1.msra.mxu0 0.0
    %3759 = vmatprep.subr.mxu0 0.0
    %3760 = vmatpush1.msra.mxu0 0.0
    %3761 = vmatprep.subr.mxu0 0.0
    %3762 = vmatpush1.msra.mxu0 0.0
    %3763 = vmatprep.subr.mxu0 0.0
    %3764 = vmatpush1.msra.mxu0 0.0
    %3765 = vmatprep.mubr.f32.mxu0 0.0
    %3766 = vmatmul.mubr.f32.gmra.mrb[0].mxu0 %v2924
    %v3767 = vpop.f32.mrb[0].mxu0
    %v3768 = vadd.f32 0.0, %v3767
    %v3769 = vpop.f32.mrb[0].mxu0
    %3770 = vdwg.mxu0
    %v3771 = vadd.f32 %v3700, %v3768
    %v3772 = vxor.u32 %v3771, 2147483648
    %v3773 = vmul.f32 %v3772, 1.442695
    %v3774 = vpow.pop %v3773
    %v3775 = vadd.f32 %v3774, 1.0
    %v3776 = vrcp.pop %v3775
    %v3777 = vmul.f32 1.0, %v3776
    %v3778 = vtanh.pop %v3771
    %v3779 = vmul.f32 %v3777, %v2914
    %3781 = vrot.lane.b32.xlu0 %v3778, 64
    %v3782 = vpop.permute.xlu0 %3781
    %v3784 = vmul.f32 %v3777, %v3782
    %3786 = vrot.lane.b32.xlu0 %v3784, 32
    %v3787 = vpop.permute.xlu0 %3786
    %v3789 = vadd.f32 %v3779, %v3787
    %v3790 = vtanh.pop %v3789
    %3792 = vrot.lane.b32.xlu0 %v3790, 64
    %v3793 = vpop.permute.xlu0 %3792
    %v3795 = vmul.f32 %v3777, %v3793
    %3797 = vrot.lane.b32.xlu0 %v3795, 32
    %v3798 = vpop.permute.xlu0 %3797
    %v3799 = vsel %vm171, %v3798, 0
    %3801 = vmatprep.subr.mxu0 0.0
    %3802 = vmatpush1.msra.mxu0 %v46
    %3803 = vmatprep.subr.mxu0 0.0
    %3804 = vmatpush1.msra.mxu0 %v47
    %3805 = vmatprep.subr.mxu0 0.0
    %3806 = vmatpush1.msra.mxu0 %v48
    %3807 = vmatprep.subr.mxu0 0.0
    %3808 = vmatpush1.msra.mxu0 %v49
    %3809 = vmatprep.subr.mxu0 0.0
    %3810 = vmatpush1.msra.mxu0 0.0
    %3811 = vmatprep.subr.mxu0 0.0
    %3812 = vmatpush1.msra.mxu0 0.0
    %3813 = vmatprep.subr.mxu0 0.0
    %3814 = vmatpush1.msra.mxu0 0.0
    %3815 = vmatprep.subr.mxu0 0.0
    %3816 = vmatpush1.msra.mxu0 0.0
    %3817 = vmatprep.subr.mxu0 0.0
    %3818 = vmatpush1.msra.mxu0 0.0
    %3819 = vmatprep.subr.mxu0 0.0
    %3820 = vmatpush1.msra.mxu0 0.0
    %3821 = vmatprep.subr.mxu0 0.0
    %3822 = vmatpush1.msra.mxu0 0.0
    %3823 = vmatprep.subr.mxu0 0.0
    %3824 = vmatpush1.msra.mxu0 0.0
    %3825 = vmatprep.subr.mxu0 0.0
    %3826 = vmatpush1.msra.mxu0 0.0
    %3827 = vmatprep.subr.mxu0 0.0
    %3828 = vmatpush1.msra.mxu0 0.0
    %3829 = vmatprep.subr.mxu0 0.0
    %3830 = vmatpush1.msra.mxu0 0.0
    %3831 = vmatprep.subr.mxu0 0.0
    %3832 = vmatpush1.msra.mxu0 0.0
    %3833 = vmatprep.subr.mxu0 0.0
    %3834 = vmatpush1.msra.mxu0 0.0
    %3835 = vmatprep.subr.mxu0 0.0
    %3836 = vmatpush1.msra.mxu0 0.0
    %3837 = vmatprep.subr.mxu0 0.0
    %3838 = vmatpush1.msra.mxu0 0.0
    %3839 = vmatprep.subr.mxu0 0.0
    %3840 = vmatpush1.msra.mxu0 0.0
    %3841 = vmatprep.subr.mxu0 0.0
    %3842 = vmatpush1.msra.mxu0 0.0
    %3843 = vmatprep.subr.mxu0 0.0
    %3844 = vmatpush1.msra.mxu0 0.0
    %3845 = vmatprep.subr.mxu0 0.0
    %3846 = vmatpush1.msra.mxu0 0.0
    %3847 = vmatprep.subr.mxu0 0.0
    %3848 = vmatpush1.msra.mxu0 0.0
    %3849 = vmatprep.subr.mxu0 0.0
    %3850 = vmatpush1.msra.mxu0 0.0
    %3851 = vmatprep.subr.mxu0 0.0
    %3852 = vmatpush1.msra.mxu0 0.0
    %3853 = vmatprep.subr.mxu0 0.0
    %3854 = vmatpush1.msra.mxu0 0.0
    %3855 = vmatprep.subr.mxu0 0.0
    %3856 = vmatpush1.msra.mxu0 0.0
    %3857 = vmatprep.subr.mxu0 0.0
    %3858 = vmatpush1.msra.mxu0 0.0
    %3859 = vmatprep.subr.mxu0 0.0
    %3860 = vmatpush1.msra.mxu0 0.0
    %3861 = vmatprep.subr.mxu0 0.0
    %3862 = vmatpush1.msra.mxu0 0.0
    %3863 = vmatprep.subr.mxu0 0.0
    %3864 = vmatpush1.msra.mxu0 0.0
    %3865 = vmatprep.mubr.f32.mxu0 0.0
    %3866 = vmatmul.mubr.f32.gmra.mrb[0].mxu0 %v3799
    %v3867 = vpop.f32.mrb[0].mxu0
    %v3868 = vadd.f32 %v277, %v3867
    %v3869 = vpop.f32.mrb[0].mxu0
    %3870 = vdwg.mxu0
    %3871 = vmatprep.subr.mxu0 0.0
    %3872 = vmatpush1.msra.mxu0 %v54
    %3873 = vmatprep.subr.mxu0 0.0
    %3874 = vmatpush1.msra.mxu0 %v55
    %3875 = vmatprep.subr.mxu0 0.0
    %3876 = vmatpush1.msra.mxu0 %v56
    %3877 = vmatprep.subr.mxu0 0.0
    %3878 = vmatpush1.msra.mxu0 %v57
    %3879 = vmatprep.subr.mxu0 0.0
    %3880 = vmatpush1.msra.mxu0 0.0
    %3881 = vmatprep.subr.mxu0 0.0
    %3882 = vmatpush1.msra.mxu0 0.0
    %3883 = vmatprep.subr.mxu0 0.0
    %3884 = vmatpush1.msra.mxu0 0.0
    %3885 = vmatprep.subr.mxu0 0.0
    %3886 = vmatpush1.msra.mxu0 0.0
    %3887 = vmatprep.subr.mxu0 0.0
    %3888 = vmatpush1.msra.mxu0 0.0
    %3889 = vmatprep.subr.mxu0 0.0
    %3890 = vmatpush1.msra.mxu0 0.0
    %3891 = vmatprep.subr.mxu0 0.0
    %3892 = vmatpush1.msra.mxu0 0.0
    %3893 = vmatprep.subr.mxu0 0.0
    %3894 = vmatpush1.msra.mxu0 0.0
    %3895 = vmatprep.subr.mxu0 0.0
    %3896 = vmatpush1.msra.mxu0 0.0
    %3897 = vmatprep.subr.mxu0 0.0
    %3898 = vmatpush1.msra.mxu0 0.0
    %3899 = vmatprep.subr.mxu0 0.0
    %3900 = vmatpush1.msra.mxu0 0.0
    %3901 = vmatprep.subr.mxu0 0.0
    %3902 = vmatpush1.msra.mxu0 0.0
    %3903 = vmatprep.subr.mxu0 0.0
    %3904 = vmatpush1.msra.mxu0 0.0
    %3905 = vmatprep.subr.mxu0 0.0
    %3906 = vmatpush1.msra.mxu0 0.0
    %3907 = vmatprep.subr.mxu0 0.0
    %3908 = vmatpush1.msra.mxu0 0.0
    %3909 = vmatprep.subr.mxu0 0.0
    %3910 = vmatpush1.msra.mxu0 0.0
    %3911 = vmatprep.subr.mxu0 0.0
    %3912 = vmatpush1.msra.mxu0 0.0
    %3913 = vmatprep.subr.mxu0 0.0
    %3914 = vmatpush1.msra.mxu0 0.0
    %3915 = vmatprep.subr.mxu0 0.0
    %3916 = vmatpush1.msra.mxu0 0.0
    %3917 = vmatprep.subr.mxu0 0.0
    %3918 = vmatpush1.msra.mxu0 0.0
    %3919 = vmatprep.subr.mxu0 0.0
    %3920 = vmatpush1.msra.mxu0 0.0
    %3921 = vmatprep.subr.mxu0 0.0
    %3922 = vmatpush1.msra.mxu0 0.0
    %3923 = vmatprep.subr.mxu0 0.0
    %3924 = vmatpush1.msra.mxu0 0.0
    %3925 = vmatprep.subr.mxu0 0.0
    %3926 = vmatpush1.msra.mxu0 0.0
    %3927 = vmatprep.subr.mxu0 0.0
    %3928 = vmatpush1.msra.mxu0 0.0
    %3929 = vmatprep.subr.mxu0 0.0
    %3930 = vmatpush1.msra.mxu0 0.0
    %3931 = vmatprep.subr.mxu0 0.0
    %3932 = vmatpush1.msra.mxu0 0.0
    %3933 = vmatprep.subr.mxu0 0.0
    %3934 = vmatpush1.msra.mxu0 0.0
    %3935 = vmatprep.mubr.f32.mxu0 0.0
    %3936 = vmatmul.mubr.f32.gmra.mrb[0].mxu0 %v3094
    %v3937 = vpop.f32.mrb[0].mxu0
    %v3938 = vadd.f32 0.0, %v3937
    %v3939 = vpop.f32.mrb[0].mxu0
    %3940 = vdwg.mxu0
    %v3941 = vadd.f32 %v3868, %v3938
    %v3942 = vxor.u32 %v3941, 2147483648
    %v3943 = vmul.f32 %v3942, 1.442695
    %v3944 = vpow.pop %v3943
    %v3945 = vadd.f32 %v3944, 1.0
    %v3946 = vrcp.pop %v3945
    %v3947 = vmul.f32 1.0, %v3946
    %v3948 = vtanh.pop %v3941
    %v3949 = vmul.f32 %v3947, %v3084
    %3951 = vrot.lane.b32.xlu0 %v3948, 64
    %v3952 = vpop.permute.xlu0 %3951
    %v3954 = vmul.f32 %v3947, %v3952
    %3956 = vrot.lane.b32.xlu0 %v3954, 32
    %v3957 = vpop.permute.xlu0 %3956
    %v3959 = vadd.f32 %v3949, %v3957
    %v3960 = vtanh.pop %v3959
    %3962 = vrot.lane.b32.xlu0 %v3960, 64
    %v3963 = vpop.permute.xlu0 %3962
    %v3965 = vmul.f32 %v3947, %v3963
    %3967 = vrot.lane.b32.xlu0 %v3965, 32
    %v3968 = vpop.permute.xlu0 %3967
    %v3969 = vsel %vm171, %v3968, 0
    %3971 = vmatprep.subr.mxu0 0.0
    %3972 = vmatpush1.msra.mxu0 %v79
    %3973 = vmatprep.subr.mxu0 0.0
    %3974 = vmatpush1.msra.mxu0 %v80
    %3975 = vmatprep.subr.mxu0 0.0
    %3976 = vmatpush1.msra.mxu0 %v81
    %3977 = vmatprep.subr.mxu0 0.0
    %3978 = vmatpush1.msra.mxu0 %v82
    %3979 = vmatprep.subr.mxu0 0.0
    %3980 = vmatpush1.msra.mxu0 0.0
    %3981 = vmatprep.subr.mxu0 0.0
    %3982 = vmatpush1.msra.mxu0 0.0
    %3983 = vmatprep.subr.mxu0 0.0
    %3984 = vmatpush1.msra.mxu0 0.0
    %3985 = vmatprep.subr.mxu0 0.0
    %3986 = vmatpush1.msra.mxu0 0.0
    %3987 = vmatprep.subr.mxu0 0.0
    %3988 = vmatpush1.msra.mxu0 0.0
    %3989 = vmatprep.subr.mxu0 0.0
    %3990 = vmatpush1.msra.mxu0 0.0
    %3991 = vmatprep.subr.mxu0 0.0
    %3992 = vmatpush1.msra.mxu0 0.0
    %3993 = vmatprep.subr.mxu0 0.0
    %3994 = vmatpush1.msra.mxu0 0.0
    %3995 = vmatprep.subr.mxu0 0.0
    %3996 = vmatpush1.msra.mxu0 0.0
    %3997 = vmatprep.subr.mxu0 0.0
    %3998 = vmatpush1.msra.mxu0 0.0
    %3999 = vmatprep.subr.mxu0 0.0
    %4000 = vmatpush1.msra.mxu0 0.0
    %4001 = vmatprep.subr.mxu0 0.0
    %4002 = vmatpush1.msra.mxu0 0.0
    %4003 = vmatprep.subr.mxu0 0.0
    %4004 = vmatpush1.msra.mxu0 0.0
    %4005 = vmatprep.subr.mxu0 0.0
    %4006 = vmatpush1.msra.mxu0 0.0
    %4007 = vmatprep.subr.mxu0 0.0
    %4008 = vmatpush1.msra.mxu0 0.0
    %4009 = vmatprep.subr.mxu0 0.0
    %4010 = vmatpush1.msra.mxu0 0.0
    %4011 = vmatprep.subr.mxu0 0.0
    %4012 = vmatpush1.msra.mxu0 0.0
    %4013 = vmatprep.subr.mxu0 0.0
    %4014 = vmatpush1.msra.mxu0 0.0
    %4015 = vmatprep.subr.mxu0 0.0
    %4016 = vmatpush1.msra.mxu0 0.0
    %4017 = vmatprep.subr.mxu0 0.0
    %4018 = vmatpush1.msra.mxu0 0.0
    %4019 = vmatprep.subr.mxu0 0.0
    %4020 = vmatpush1.msra.mxu0 0.0
    %4021 = vmatprep.subr.mxu0 0.0
    %4022 = vmatpush1.msra.mxu0 0.0
    %4023 = vmatprep.subr.mxu0 0.0
    %4024 = vmatpush1.msra.mxu0 0.0
    %4025 = vmatprep.subr.mxu0 0.0
    %4026 = vmatpush1.msra.mxu0 0.0
    %4027 = vmatprep.subr.mxu0 0.0
    %4028 = vmatpush1.msra.mxu0 0.0
    %4029 = vmatprep.subr.mxu0 0.0
    %4030 = vmatpush1.msra.mxu0 0.0
    %4031 = vmatprep.subr.mxu0 0.0
    %4032 = vmatpush1.msra.mxu0 0.0
    %4033 = vmatprep.subr.mxu0 0.0
    %4034 = vmatpush1.msra.mxu0 0.0
    %4035 = vmatprep.mubr.f32.mxu0 0.0
    %4036 = vmatmul.mubr.f32.gmra.mrb[0].mxu0 %v3969
    %v4037 = vpop.f32.mrb[0].mxu0
    %v4038 = vadd.f32 0.0, %v4037
    %v4039 = vpop.f32.mrb[0].mxu0
    %4040 = vdwg.mxu0
    %v4041 = vrot.slane %v3965, 1
    %4042 = vrot.lane.b32.xlu0 %v4041, 32
    %v4043 = vpop.permute.xlu0 %4042
    %v4044 = vsel %vm171, %v4043, 0
    %4046 = vmatprep.subr.mxu0 0.0
    %4047 = vmatpush1.msra.mxu0 %v84
    %4048 = vmatprep.subr.mxu0 0.0
    %4049 = vmatpush1.msra.mxu0 %v85
    %4050 = vmatprep.subr.mxu0 0.0
    %4051 = vmatpush1.msra.mxu0 %v86
    %4052 = vmatprep.subr.mxu0 0.0
    %4053 = vmatpush1.msra.mxu0 %v87
    %4054 = vmatprep.subr.mxu0 0.0
    %4055 = vmatpush1.msra.mxu0 0.0
    %4056 = vmatprep.subr.mxu0 0.0
    %4057 = vmatpush1.msra.mxu0 0.0
    %4058 = vmatprep.subr.mxu0 0.0
    %4059 = vmatpush1.msra.mxu0 0.0
    %4060 = vmatprep.subr.mxu0 0.0
    %4061 = vmatpush1.msra.mxu0 0.0
    %4062 = vmatprep.subr.mxu0 0.0
    %4063 = vmatpush1.msra.mxu0 0.0
    %4064 = vmatprep.subr.mxu0 0.0
    %4065 = vmatpush1.msra.mxu0 0.0
    %4066 = vmatprep.subr.mxu0 0.0
    %4067 = vmatpush1.msra.mxu0 0.0
    %4068 = vmatprep.subr.mxu0 0.0
    %4069 = vmatpush1.msra.mxu0 0.0
    %4070 = vmatprep.subr.mxu0 0.0
    %4071 = vmatpush1.msra.mxu0 0.0
    %4072 = vmatprep.subr.mxu0 0.0
    %4073 = vmatpush1.msra.mxu0 0.0
    %4074 = vmatprep.subr.mxu0 0.0
    %4075 = vmatpush1.msra.mxu0 0.0
    %4076 = vmatprep.subr.mxu0 0.0
    %4077 = vmatpush1.msra.mxu0 0.0
    %4078 = vmatprep.subr.mxu0 0.0
    %4079 = vmatpush1.msra.mxu0 0.0
    %4080 = vmatprep.subr.mxu0 0.0
    %4081 = vmatpush1.msra.mxu0 0.0
    %4082 = vmatprep.subr.mxu0 0.0
    %4083 = vmatpush1.msra.mxu0 0.0
    %4084 = vmatprep.subr.mxu0 0.0
    %4085 = vmatpush1.msra.mxu0 0.0
    %4086 = vmatprep.subr.mxu0 0.0
    %4087 = vmatpush1.msra.mxu0 0.0
    %4088 = vmatprep.subr.mxu0 0.0
    %4089 = vmatpush1.msra.mxu0 0.0
    %4090 = vmatprep.subr.mxu0 0.0
    %4091 = vmatpush1.msra.mxu0 0.0
    %4092 = vmatprep.subr.mxu0 0.0
    %4093 = vmatpush1.msra.mxu0 0.0
    %4094 = vmatprep.subr.mxu0 0.0
    %4095 = vmatpush1.msra.mxu0 0.0
    %4096 = vmatprep.subr.mxu0 0.0
    %4097 = vmatpush1.msra.mxu0 0.0
    %4098 = vmatprep.subr.mxu0 0.0
    %4099 = vmatpush1.msra.mxu0 0.0
    %4100 = vmatprep.subr.mxu0 0.0
    %4101 = vmatpush1.msra.mxu0 0.0
    %4102 = vmatprep.subr.mxu0 0.0
    %4103 = vmatpush1.msra.mxu0 0.0
    %4104 = vmatprep.subr.mxu0 0.0
    %4105 = vmatpush1.msra.mxu0 0.0
    %4106 = vmatprep.subr.mxu0 0.0
    %4107 = vmatpush1.msra.mxu0 0.0
    %4108 = vmatprep.subr.mxu0 0.0
    %4109 = vmatpush1.msra.mxu0 0.0
    %4110 = vmatprep.mubr.f32.mxu0 0.0
    %4111 = vmatmul.mubr.f32.gmra.mrb[0].mxu0 %v4044
    %v4112 = vpop.f32.mrb[0].mxu0
    %v4113 = vadd.f32 0.0, %v4112
    %v4114 = vpop.f32.mrb[0].mxu0
    %4115 = vdwg.mxu0
    %v4117 = vrot.slane %v4113, 7
    %v4119 = vsel %vm608, %v4038, %v4117
    %v4120 = vadd.f32 %v4119, %v75
    %v4121 = vsel %vm611, %v4120, -inf
    %4122 = vmax.xlane.f32.xlu0 %v4121
    %v4123 = vpop.xlane.xlu0 %4122
    %v4124 = vsub.f32 %v4120, %v4123
    %v4125 = vmul.f32 %v4124, 1.442695
    %v4126 = vpow.pop %v4125
    %v4127 = vsel %vm611, %v4126, 0.0
    %4128 = vadd.xlane.f32.xlu0 %v4127
    %v4129 = vpop.xlane.xlu0 %4128
    %v4130 = vrcp.pop %v4129
    %v4131 = vmul.f32 %v4126, %v4130
    %v4133 = vsel %vm623, %v4131, 0
    %4135 = vmatprep.subr.mxu0 0.0
    %4136 = vmatpush1.msra.mxu0 %v76
    %4137 = vmatprep.subr.mxu0 0.0
    %4138 = vmatpush1.msra.mxu0 0.0
    %4139 = vmatprep.subr.mxu0 0.0
    %4140 = vmatpush1.msra.mxu0 0.0
    %4141 = vmatprep.subr.mxu0 0.0
    %4142 = vmatpush1.msra.mxu0 0.0
    %4143 = vmatprep.subr.mxu0 0.0
    %4144 = vmatpush1.msra.mxu0 0.0
    %4145 = vmatprep.subr.mxu0 0.0
    %4146 = vmatpush1.msra.mxu0 0.0
    %4147 = vmatprep.subr.mxu0 0.0
    %4148 = vmatpush1.msra.mxu0 0.0
    %4149 = vmatprep.subr.mxu0 0.0
    %4150 = vmatpush1.msra.mxu0 0.0
    %4151 = vmatprep.subr.mxu0 0.0
    %4152 = vmatpush1.msra.mxu0 0.0
    %4153 = vmatprep.subr.mxu0 0.0
    %4154 = vmatpush1.msra.mxu0 0.0
    %4155 = vmatprep.subr.mxu0 0.0
    %4156 = vmatpush1.msra.mxu0 0.0
    %4157 = vmatprep.subr.mxu0 0.0
    %4158 = vmatpush1.msra.mxu0 0.0
    %4159 = vmatprep.subr.mxu0 0.0
    %4160 = vmatpush1.msra.mxu0 0.0
    %4161 = vmatprep.subr.mxu0 0.0
    %4162 = vmatpush1.msra.mxu0 0.0
    %4163 = vmatprep.subr.mxu0 0.0
    %4164 = vmatpush1.msra.mxu0 0.0
    %4165 = vmatprep.subr.mxu0 0.0
    %4166 = vmatpush1.msra.mxu0 0.0
    %4167 = vmatprep.subr.mxu0 0.0
    %4168 = vmatpush1.msra.mxu0 0.0
    %4169 = vmatprep.subr.mxu0 0.0
    %4170 = vmatpush1.msra.mxu0 0.0
    %4171 = vmatprep.subr.mxu0 0.0
    %4172 = vmatpush1.msra.mxu0 0.0
    %4173 = vmatprep.subr.mxu0 0.0
    %4174 = vmatpush1.msra.mxu0 0.0
    %4175 = vmatprep.subr.mxu0 0.0
    %4176 = vmatpush1.msra.mxu0 0.0
    %4177 = vmatprep.subr.mxu0 0.0
    %4178 = vmatpush1.msra.mxu0 0.0
    %4179 = vmatprep.subr.mxu0 0.0
    %4180 = vmatpush1.msra.mxu0 0.0
    %4181 = vmatprep.subr.mxu0 0.0
    %4182 = vmatpush1.msra.mxu0 0.0
    %4183 = vmatprep.subr.mxu0 0.0
    %4184 = vmatpush1.msra.mxu0 0.0
    %4185 = vmatprep.subr.mxu0 0.0
    %4186 = vmatpush1.msra.mxu0 0.0
    %4187 = vmatprep.subr.mxu0 0.0
    %4188 = vmatpush1.msra.mxu0 0.0
    %4189 = vmatprep.subr.mxu0 0.0
    %4190 = vmatpush1.msra.mxu0 0.0
    %4191 = vmatprep.subr.mxu0 0.0
    %4192 = vmatpush1.msra.mxu0 0.0
    %4193 = vmatprep.subr.mxu0 0.0
    %4194 = vmatpush1.msra.mxu0 0.0
    %4195 = vmatprep.subr.mxu0 0.0
    %4196 = vmatpush1.msra.mxu0 0.0
    %4197 = vmatprep.subr.mxu0 0.0
    %4198 = vmatpush1.msra.mxu0 0.0
    %4199 = vmatprep.mubr.f32.mxu0 0.0
    %4200 = vmatmul.mubr.f32.gmra.mrb[0].mxu0 %v4133
    %v4201 = vpop.f32.mrb[0].mxu0
    %v4202 = vadd.f32 0.0, %v4201
    %v4203 = vpop.f32.mrb[0].mxu0
    %4204 = vdwg.mxu0
    %v4205 = vrot.slane %v4131, 1
    %v4206 = vsel %vm623, %v4205, 0
    %4208 = vmatprep.subr.mxu0 0.0
    %4209 = vmatpush1.msra.mxu0 %v78
    %4210 = vmatprep.subr.mxu0 0.0
    %4211 = vmatpush1.msra.mxu0 0.0
    %4212 = vmatprep.subr.mxu0 0.0
    %4213 = vmatpush1.msra.mxu0 0.0
    %4214 = vmatprep.subr.mxu0 0.0
    %4215 = vmatpush1.msra.mxu0 0.0
    %4216 = vmatprep.subr.mxu0 0.0
    %4217 = vmatpush1.msra.mxu0 0.0
    %4218 = vmatprep.subr.mxu0 0.0
    %4219 = vmatpush1.msra.mxu0 0.0
    %4220 = vmatprep.subr.mxu0 0.0
    %4221 = vmatpush1.msra.mxu0 0.0
    %4222 = vmatprep.subr.mxu0 0.0
    %4223 = vmatpush1.msra.mxu0 0.0
    %4224 = vmatprep.subr.mxu0 0.0
    %4225 = vmatpush1.msra.mxu0 0.0
    %4226 = vmatprep.subr.mxu0 0.0
    %4227 = vmatpush1.msra.mxu0 0.0
    %4228 = vmatprep.subr.mxu0 0.0
    %4229 = vmatpush1.msra.mxu0 0.0
    %4230 = vmatprep.subr.mxu0 0.0
    %4231 = vmatpush1.msra.mxu0 0.0
    %4232 = vmatprep.subr.mxu0 0.0
    %4233 = vmatpush1.msra.mxu0 0.0
    %4234 = vmatprep.subr.mxu0 0.0
    %4235 = vmatpush1.msra.mxu0 0.0
    %4236 = vmatprep.subr.mxu0 0.0
    %4237 = vmatpush1.msra.mxu0 0.0
    %4238 = vmatprep.subr.mxu0 0.0
    %4239 = vmatpush1.msra.mxu0 0.0
    %4240 = vmatprep.subr.mxu0 0.0
    %4241 = vmatpush1.msra.mxu0 0.0
    %4242 = vmatprep.subr.mxu0 0.0
    %4243 = vmatpush1.msra.mxu0 0.0
    %4244 = vmatprep.subr.mxu0 0.0
    %4245 = vmatpush1.msra.mxu0 0.0
    %4246 = vmatprep.subr.mxu0 0.0
    %4247 = vmatpush1.msra.mxu0 0.0
    %4248 = vmatprep.subr.mxu0 0.0
    %4249 = vmatpush1.msra.mxu0 0.0
    %4250 = vmatprep.subr.mxu0 0.0
    %4251 = vmatpush1.msra.mxu0 0.0
    %4252 = vmatprep.subr.mxu0 0.0
    %4253 = vmatpush1.msra.mxu0 0.0
    %4254 = vmatprep.subr.mxu0 0.0
    %4255 = vmatpush1.msra.mxu0 0.0
    %4256 = vmatprep.subr.mxu0 0.0
    %4257 = vmatpush1.msra.mxu0 0.0
    %4258 = vmatprep.subr.mxu0 0.0
    %4259 = vmatpush1.msra.mxu0 0.0
    %4260 = vmatprep.subr.mxu0 0.0
    %4261 = vmatpush1.msra.mxu0 0.0
    %4262 = vmatprep.subr.mxu0 0.0
    %4263 = vmatpush1.msra.mxu0 0.0
    %4264 = vmatprep.subr.mxu0 0.0
    %4265 = vmatpush1.msra.mxu0 0.0
    %4266 = vmatprep.subr.mxu0 0.0
    %4267 = vmatpush1.msra.mxu0 0.0
    %4268 = vmatprep.subr.mxu0 0.0
    %4269 = vmatpush1.msra.mxu0 0.0
    %4270 = vmatprep.subr.mxu0 0.0
    %4271 = vmatpush1.msra.mxu0 0.0
    %4272 = vmatprep.mubr.f32.mxu0 0.0
    %4273 = vmatmul.mubr.f32.gmra.mrb[0].mxu0 %v4206
    %v4274 = vpop.f32.mrb[0].mxu0
    %v4275 = vadd.f32 0.0, %v4274
    %v4276 = vpop.f32.mrb[0].mxu0
    %4277 = vdwg.mxu0
    %v4279 = vrot.slane %v4275, 7
    %v4281 = vsel %vm608, %v4202, %v4279
    %v4283 = vsel %vm171, %v4281, 0
    %4285 = vmatprep.subr.mxu0 0.0
    %4286 = vmatpush1.msra.mxu0 %v63
    %4287 = vmatprep.subr.mxu0 0.0
    %4288 = vmatpush1.msra.mxu0 %v64
    %4289 = vmatprep.subr.mxu0 0.0
    %4290 = vmatpush1.msra.mxu0 %v65
    %4291 = vmatprep.subr.mxu0 0.0
    %4292 = vmatpush1.msra.mxu0 %v66
    %4293 = vmatprep.subr.mxu0 0.0
    %4294 = vmatpush1.msra.mxu0 0.0
    %4295 = vmatprep.subr.mxu0 0.0
    %4296 = vmatpush1.msra.mxu0 0.0
    %4297 = vmatprep.subr.mxu0 0.0
    %4298 = vmatpush1.msra.mxu0 0.0
    %4299 = vmatprep.subr.mxu0 0.0
    %4300 = vmatpush1.msra.mxu0 0.0
    %4301 = vmatprep.subr.mxu0 0.0
    %4302 = vmatpush1.msra.mxu0 0.0
    %4303 = vmatprep.subr.mxu0 0.0
    %4304 = vmatpush1.msra.mxu0 0.0
    %4305 = vmatprep.subr.mxu0 0.0
    %4306 = vmatpush1.msra.mxu0 0.0
    %4307 = vmatprep.subr.mxu0 0.0
    %4308 = vmatpush1.msra.mxu0 0.0
    %4309 = vmatprep.subr.mxu0 0.0
    %4310 = vmatpush1.msra.mxu0 0.0
    %4311 = vmatprep.subr.mxu0 0.0
    %4312 = vmatpush1.msra.mxu0 0.0
    %4313 = vmatprep.subr.mxu0 0.0
    %4314 = vmatpush1.msra.mxu0 0.0
    %4315 = vmatprep.subr.mxu0 0.0
    %4316 = vmatpush1.msra.mxu0 0.0
    %4317 = vmatprep.subr.mxu0 0.0
    %4318 = vmatpush1.msra.mxu0 0.0
    %4319 = vmatprep.subr.mxu0 0.0
    %4320 = vmatpush1.msra.mxu0 0.0
    %4321 = vmatprep.subr.mxu0 0.0
    %4322 = vmatpush1.msra.mxu0 0.0
    %4323 = vmatprep.subr.mxu0 0.0
    %4324 = vmatpush1.msra.mxu0 0.0
    %4325 = vmatprep.subr.mxu0 0.0
    %4326 = vmatpush1.msra.mxu0 0.0
    %4327 = vmatprep.subr.mxu0 0.0
    %4328 = vmatpush1.msra.mxu0 0.0
    %4329 = vmatprep.subr.mxu0 0.0
    %4330 = vmatpush1.msra.mxu0 0.0
    %4331 = vmatprep.subr.mxu0 0.0
    %4332 = vmatpush1.msra.mxu0 0.0
    %4333 = vmatprep.subr.mxu0 0.0
    %4334 = vmatpush1.msra.mxu0 0.0
    %4335 = vmatprep.subr.mxu0 0.0
    %4336 = vmatpush1.msra.mxu0 0.0
    %4337 = vmatprep.subr.mxu0 0.0
    %4338 = vmatpush1.msra.mxu0 0.0
    %4339 = vmatprep.subr.mxu0 0.0
    %4340 = vmatpush1.msra.mxu0 0.0
    %4341 = vmatprep.subr.mxu0 0.0
    %4342 = vmatpush1.msra.mxu0 0.0
    %4343 = vmatprep.subr.mxu0 0.0
    %4344 = vmatpush1.msra.mxu0 0.0
    %4345 = vmatprep.subr.mxu0 0.0
    %4346 = vmatpush1.msra.mxu0 0.0
    %4347 = vmatprep.subr.mxu0 0.0
    %4348 = vmatpush1.msra.mxu0 0.0
    %4349 = vmatprep.mubr.f32.mxu0 0.0
    %4350 = vmatmul.mubr.f32.gmra.mrb[0].mxu0 %v4283
    %v4351 = vpop.f32.mrb[0].mxu0
    %v4352 = vadd.f32 0.0, %v4351
    %v4353 = vpop.f32.mrb[0].mxu0
    %4354 = vdwg.mxu0
    %4355 = vmatprep.subr.mxu0 0.0
    %4356 = vmatpush1.msra.mxu0 %v59
    %4357 = vmatprep.subr.mxu0 0.0
    %4358 = vmatpush1.msra.mxu0 %v60
    %4359 = vmatprep.subr.mxu0 0.0
    %4360 = vmatpush1.msra.mxu0 %v61
    %4361 = vmatprep.subr.mxu0 0.0
    %4362 = vmatpush1.msra.mxu0 %v62
    %4363 = vmatprep.subr.mxu0 0.0
    %4364 = vmatpush1.msra.mxu0 0.0
    %4365 = vmatprep.subr.mxu0 0.0
    %4366 = vmatpush1.msra.mxu0 0.0
    %4367 = vmatprep.subr.mxu0 0.0
    %4368 = vmatpush1.msra.mxu0 0.0
    %4369 = vmatprep.subr.mxu0 0.0
    %4370 = vmatpush1.msra.mxu0 0.0
    %4371 = vmatprep.subr.mxu0 0.0
    %4372 = vmatpush1.msra.mxu0 0.0
    %4373 = vmatprep.subr.mxu0 0.0
    %4374 = vmatpush1.msra.mxu0 0.0
    %4375 = vmatprep.subr.mxu0 0.0
    %4376 = vmatpush1.msra.mxu0 0.0
    %4377 = vmatprep.subr.mxu0 0.0
    %4378 = vmatpush1.msra.mxu0 0.0
    %4379 = vmatprep.subr.mxu0 0.0
    %4380 = vmatpush1.msra.mxu0 0.0
    %4381 = vmatprep.subr.mxu0 0.0
    %4382 = vmatpush1.msra.mxu0 0.0
    %4383 = vmatprep.subr.mxu0 0.0
    %4384 = vmatpush1.msra.mxu0 0.0
    %4385 = vmatprep.subr.mxu0 0.0
    %4386 = vmatpush1.msra.mxu0 0.0
    %4387 = vmatprep.subr.mxu0 0.0
    %4388 = vmatpush1.msra.mxu0 0.0
    %4389 = vmatprep.subr.mxu0 0.0
    %4390 = vmatpush1.msra.mxu0 0.0
    %4391 = vmatprep.subr.mxu0 0.0
    %4392 = vmatpush1.msra.mxu0 0.0
    %4393 = vmatprep.subr.mxu0 0.0
    %4394 = vmatpush1.msra.mxu0 0.0
    %4395 = vmatprep.subr.mxu0 0.0
    %4396 = vmatpush1.msra.mxu0 0.0
    %4397 = vmatprep.subr.mxu0 0.0
    %4398 = vmatpush1.msra.mxu0 0.0
    %4399 = vmatprep.subr.mxu0 0.0
    %4400 = vmatpush1.msra.mxu0 0.0
    %4401 = vmatprep.subr.mxu0 0.0
    %4402 = vmatpush1.msra.mxu0 0.0
    %4403 = vmatprep.subr.mxu0 0.0
    %4404 = vmatpush1.msra.mxu0 0.0
    %4405 = vmatprep.subr.mxu0 0.0
    %4406 = vmatpush1.msra.mxu0 0.0
    %4407 = vmatprep.subr.mxu0 0.0
    %4408 = vmatpush1.msra.mxu0 0.0
    %4409 = vmatprep.subr.mxu0 0.0
    %4410 = vmatpush1.msra.mxu0 0.0
    %4411 = vmatprep.subr.mxu0 0.0
    %4412 = vmatpush1.msra.mxu0 0.0
    %4413 = vmatprep.subr.mxu0 0.0
    %4414 = vmatpush1.msra.mxu0 0.0
    %4415 = vmatprep.subr.mxu0 0.0
    %4416 = vmatpush1.msra.mxu0 0.0
    %4417 = vmatprep.subr.mxu0 0.0
    %4418 = vmatpush1.msra.mxu0 0.0
    %4419 = vmatprep.mubr.f32.mxu0 0.0
    %4420 = vmatmul.mubr.f32.gmra.mrb[0].mxu0 %v3969
    %v4421 = vpop.f32.mrb[0].mxu0
    %v4422 = vadd.f32 %v4352, %v4421
    %v4423 = vpop.f32.mrb[0].mxu0
    %4424 = vdwg.mxu0
    %v4425 = vadd.f32 %v4422, %v920
    %v4426 = vtanh.pop %v4425
    %v4428 = vsel %vm171, %v4426, 0
    %4430 = vmatprep.subr.mxu0 0.0
    %4431 = vmatpush1.msra.mxu0 %v68
    %4432 = vmatprep.subr.mxu0 0.0
    %4433 = vmatpush1.msra.mxu0 %v69
    %4434 = vmatprep.subr.mxu0 0.0
    %4435 = vmatpush1.msra.mxu0 %v70
    %4436 = vmatprep.subr.mxu0 0.0
    %4437 = vmatpush1.msra.mxu0 %v71
    %4438 = vmatprep.subr.mxu0 0.0
    %4439 = vmatpush1.msra.mxu0 0.0
    %4440 = vmatprep.subr.mxu0 0.0
    %4441 = vmatpush1.msra.mxu0 0.0
    %4442 = vmatprep.subr.mxu0 0.0
    %4443 = vmatpush1.msra.mxu0 0.0
    %4444 = vmatprep.subr.mxu0 0.0
    %4445 = vmatpush1.msra.mxu0 0.0
    %4446 = vmatprep.subr.mxu0 0.0
    %4447 = vmatpush1.msra.mxu0 0.0
    %4448 = vmatprep.subr.mxu0 0.0
    %4449 = vmatpush1.msra.mxu0 0.0
    %4450 = vmatprep.subr.mxu0 0.0
    %4451 = vmatpush1.msra.mxu0 0.0
    %4452 = vmatprep.subr.mxu0 0.0
    %4453 = vmatpush1.msra.mxu0 0.0
    %4454 = vmatprep.subr.mxu0 0.0
    %4455 = vmatpush1.msra.mxu0 0.0
    %4456 = vmatprep.subr.mxu0 0.0
    %4457 = vmatpush1.msra.mxu0 0.0
    %4458 = vmatprep.subr.mxu0 0.0
    %4459 = vmatpush1.msra.mxu0 0.0
    %4460 = vmatprep.subr.mxu0 0.0
    %4461 = vmatpush1.msra.mxu0 0.0
    %4462 = vmatprep.subr.mxu0 0.0
    %4463 = vmatpush1.msra.mxu0 0.0
    %4464 = vmatprep.subr.mxu0 0.0
    %4465 = vmatpush1.msra.mxu0 0.0
    %4466 = vmatprep.subr.mxu0 0.0
    %4467 = vmatpush1.msra.mxu0 0.0
    %4468 = vmatprep.subr.mxu0 0.0
    %4469 = vmatpush1.msra.mxu0 0.0
    %4470 = vmatprep.subr.mxu0 0.0
    %4471 = vmatpush1.msra.mxu0 0.0
    %4472 = vmatprep.subr.mxu0 0.0
    %4473 = vmatpush1.msra.mxu0 0.0
    %4474 = vmatprep.subr.mxu0 0.0
    %4475 = vmatpush1.msra.mxu0 0.0
    %4476 = vmatprep.subr.mxu0 0.0
    %4477 = vmatpush1.msra.mxu0 0.0
    %4478 = vmatprep.subr.mxu0 0.0
    %4479 = vmatpush1.msra.mxu0 0.0
    %4480 = vmatprep.subr.mxu0 0.0
    %4481 = vmatpush1.msra.mxu0 0.0
    %4482 = vmatprep.subr.mxu0 0.0
    %4483 = vmatpush1.msra.mxu0 0.0
    %4484 = vmatprep.subr.mxu0 0.0
    %4485 = vmatpush1.msra.mxu0 0.0
    %4486 = vmatprep.subr.mxu0 0.0
    %4487 = vmatpush1.msra.mxu0 0.0
    %4488 = vmatprep.subr.mxu0 0.0
    %4489 = vmatpush1.msra.mxu0 0.0
    %4490 = vmatprep.subr.mxu0 0.0
    %4491 = vmatpush1.msra.mxu0 0.0
    %4492 = vmatprep.subr.mxu0 0.0
    %4493 = vmatpush1.msra.mxu0 0.0
    %4494 = vmatprep.mubr.f32.mxu0 0.0
    %4495 = vmatmul.mubr.f32.gmra.mrb[0].mxu0 %v4428
    %v4496 = vpop.f32.mrb[0].mxu0
    %v4497 = vadd.f32 %v926, %v4496
    %v4498 = vpop.f32.mrb[0].mxu0
    %4499 = vdwg.mxu0
    %s4500 = scalar_lea.vmem %s0, 10
    %v4501 = vld [vmem:[%s4500] sm:$0x3]
    %v4503 = vsel %vm96, %v4497, 0
    %4505 = vmatprep.subr.mxu0 0.0
    %4506 = vmatpush1.msra.mxu0 %v44
    %4507 = vmatprep.subr.mxu0 0.0
    %4508 = vmatpush1.msra.mxu0 %v45
    %4509 = vmatprep.subr.mxu0 0.0
    %4510 = vmatpush1.msra.mxu0 0.0
    %4511 = vmatprep.subr.mxu0 0.0
    %4512 = vmatpush1.msra.mxu0 0.0
    %4513 = vmatprep.subr.mxu0 0.0
    %4514 = vmatpush1.msra.mxu0 0.0
    %4515 = vmatprep.subr.mxu0 0.0
    %4516 = vmatpush1.msra.mxu0 0.0
    %4517 = vmatprep.subr.mxu0 0.0
    %4518 = vmatpush1.msra.mxu0 0.0
    %4519 = vmatprep.subr.mxu0 0.0
    %4520 = vmatpush1.msra.mxu0 0.0
    %4521 = vmatprep.subr.mxu0 0.0
    %4522 = vmatpush1.msra.mxu0 0.0
    %4523 = vmatprep.subr.mxu0 0.0
    %4524 = vmatpush1.msra.mxu0 0.0
    %4525 = vmatprep.subr.mxu0 0.0
    %4526 = vmatpush1.msra.mxu0 0.0
    %4527 = vmatprep.subr.mxu0 0.0
    %4528 = vmatpush1.msra.mxu0 0.0
    %4529 = vmatprep.subr.mxu0 0.0
    %4530 = vmatpush1.msra.mxu0 0.0
    %4531 = vmatprep.subr.mxu0 0.0
    %4532 = vmatpush1.msra.mxu0 0.0
    %4533 = vmatprep.subr.mxu0 0.0
    %4534 = vmatpush1.msra.mxu0 0.0
    %4535 = vmatprep.subr.mxu0 0.0
    %4536 = vmatpush1.msra.mxu0 0.0
    %4537 = vmatprep.subr.mxu0 0.0
    %4538 = vmatpush1.msra.mxu0 0.0
    %4539 = vmatprep.subr.mxu0 0.0
    %4540 = vmatpush1.msra.mxu0 0.0
    %4541 = vmatprep.subr.mxu0 0.0
    %4542 = vmatpush1.msra.mxu0 0.0
    %4543 = vmatprep.subr.mxu0 0.0
    %4544 = vmatpush1.msra.mxu0 0.0
    %4545 = vmatprep.subr.mxu0 0.0
    %4546 = vmatpush1.msra.mxu0 0.0
    %4547 = vmatprep.subr.mxu0 0.0
    %4548 = vmatpush1.msra.mxu0 0.0
    %4549 = vmatprep.subr.mxu0 0.0
    %4550 = vmatpush1.msra.mxu0 0.0
    %4551 = vmatprep.subr.mxu0 0.0
    %4552 = vmatpush1.msra.mxu0 0.0
    %4553 = vmatprep.subr.mxu0 0.0
    %4554 = vmatpush1.msra.mxu0 0.0
    %4555 = vmatprep.subr.mxu0 0.0
    %4556 = vmatpush1.msra.mxu0 0.0
    %4557 = vmatprep.subr.mxu0 0.0
    %4558 = vmatpush1.msra.mxu0 0.0
    %4559 = vmatprep.subr.mxu0 0.0
    %4560 = vmatpush1.msra.mxu0 0.0
    %4561 = vmatprep.subr.mxu0 0.0
    %4562 = vmatpush1.msra.mxu0 0.0
    %4563 = vmatprep.subr.mxu0 0.0
    %4564 = vmatpush1.msra.mxu0 0.0
    %4565 = vmatprep.subr.mxu0 0.0
    %4566 = vmatpush1.msra.mxu0 0.0
    %4567 = vmatprep.subr.mxu0 0.0
    %4568 = vmatpush1.msra.mxu0 0.0
    %4569 = vmatprep.mubr.f32.mxu0 0.0
    %4570 = vmatmul.mubr.f32.gmra.mrb[0].mxu0 %v4503
    %v4571 = vpop.f32.mrb[0].mxu0
    %v4572 = vadd.f32 0.0, %v4571
    %v4573 = vpop.f32.mrb[0].mxu0
    %4574 = vdwg.mxu0
    %v4575 = vadd.f32 %v4501, %v4572
    %4576 = vmatprep.subr.mxu0 0.0
    %4577 = vmatpush1.msra.mxu0 %v50
    %4578 = vmatprep.subr.mxu0 0.0
    %4579 = vmatpush1.msra.mxu0 %v51
    %4580 = vmatprep.subr.mxu0 0.0
    %4581 = vmatpush1.msra.mxu0 %v52
    %4582 = vmatprep.subr.mxu0 0.0
    %4583 = vmatpush1.msra.mxu0 %v53
    %4584 = vmatprep.subr.mxu0 0.0
    %4585 = vmatpush1.msra.mxu0 0.0
    %4586 = vmatprep.subr.mxu0 0.0
    %4587 = vmatpush1.msra.mxu0 0.0
    %4588 = vmatprep.subr.mxu0 0.0
    %4589 = vmatpush1.msra.mxu0 0.0
    %4590 = vmatprep.subr.mxu0 0.0
    %4591 = vmatpush1.msra.mxu0 0.0
    %4592 = vmatprep.subr.mxu0 0.0
    %4593 = vmatpush1.msra.mxu0 0.0
    %4594 = vmatprep.subr.mxu0 0.0
    %4595 = vmatpush1.msra.mxu0 0.0
    %4596 = vmatprep.subr.mxu0 0.0
    %4597 = vmatpush1.msra.mxu0 0.0
    %4598 = vmatprep.subr.mxu0 0.0
    %4599 = vmatpush1.msra.mxu0 0.0
    %4600 = vmatprep.subr.mxu0 0.0
    %4601 = vmatpush1.msra.mxu0 0.0
    %4602 = vmatprep.subr.mxu0 0.0
    %4603 = vmatpush1.msra.mxu0 0.0
    %4604 = vmatprep.subr.mxu0 0.0
    %4605 = vmatpush1.msra.mxu0 0.0
    %4606 = vmatprep.subr.mxu0 0.0
    %4607 = vmatpush1.msra.mxu0 0.0
    %4608 = vmatprep.subr.mxu0 0.0
    %4609 = vmatpush1.msra.mxu0 0.0
    %4610 = vmatprep.subr.mxu0 0.0
    %4611 = vmatpush1.msra.mxu0 0.0
    %4612 = vmatprep.subr.mxu0 0.0
    %4613 = vmatpush1.msra.mxu0 0.0
    %4614 = vmatprep.subr.mxu0 0.0
    %4615 = vmatpush1.msra.mxu0 0.0
    %4616 = vmatprep.subr.mxu0 0.0
    %4617 = vmatpush1.msra.mxu0 0.0
    %4618 = vmatprep.subr.mxu0 0.0
    %4619 = vmatpush1.msra.mxu0 0.0
    %4620 = vmatprep.subr.mxu0 0.0
    %4621 = vmatpush1.msra.mxu0 0.0
    %4622 = vmatprep.subr.mxu0 0.0
    %4623 = vmatpush1.msra.mxu0 0.0
    %4624 = vmatprep.subr.mxu0 0.0
    %4625 = vmatpush1.msra.mxu0 0.0
    %4626 = vmatprep.subr.mxu0 0.0
    %4627 = vmatpush1.msra.mxu0 0.0
    %4628 = vmatprep.subr.mxu0 0.0
    %4629 = vmatpush1.msra.mxu0 0.0
    %4630 = vmatprep.subr.mxu0 0.0
    %4631 = vmatpush1.msra.mxu0 0.0
    %4632 = vmatprep.subr.mxu0 0.0
    %4633 = vmatpush1.msra.mxu0 0.0
    %4634 = vmatprep.subr.mxu0 0.0
    %4635 = vmatpush1.msra.mxu0 0.0
    %4636 = vmatprep.subr.mxu0 0.0
    %4637 = vmatpush1.msra.mxu0 0.0
    %4638 = vmatprep.subr.mxu0 0.0
    %4639 = vmatpush1.msra.mxu0 0.0
    %4640 = vmatprep.mubr.f32.mxu0 0.0
    %4641 = vmatmul.mubr.f32.gmra.mrb[0].mxu0 %v3799
    %v4642 = vpop.f32.mrb[0].mxu0
    %v4643 = vadd.f32 0.0, %v4642
    %v4644 = vpop.f32.mrb[0].mxu0
    %4645 = vdwg.mxu0
    %v4646 = vadd.f32 %v4575, %v4643
    %v4647 = vxor.u32 %v4646, 2147483648
    %v4648 = vmul.f32 %v4647, 1.442695
    %v4649 = vpow.pop %v4648
    %v4650 = vadd.f32 %v4649, 1.0
    %v4651 = vrcp.pop %v4650
    %v4652 = vmul.f32 1.0, %v4651
    %v4653 = vtanh.pop %v4646
    %v4654 = vmul.f32 %v4652, %v3789
    %4656 = vrot.lane.b32.xlu0 %v4653, 64
    %v4657 = vpop.permute.xlu0 %4656
    %v4659 = vmul.f32 %v4652, %v4657
    %4661 = vrot.lane.b32.xlu0 %v4659, 32
    %v4662 = vpop.permute.xlu0 %4661
    %v4664 = vadd.f32 %v4654, %v4662
    %v4665 = vtanh.pop %v4664
    %4667 = vrot.lane.b32.xlu0 %v4665, 64
    %v4668 = vpop.permute.xlu0 %4667
    %v4670 = vmul.f32 %v4652, %v4668
    %4672 = vrot.lane.b32.xlu0 %v4670, 32
    %v4673 = vpop.permute.xlu0 %4672
    %v4674 = vsel %vm171, %v4673, 0
    %4676 = vmatprep.subr.mxu0 0.0
    %4677 = vmatpush1.msra.mxu0 %v46
    %4678 = vmatprep.subr.mxu0 0.0
    %4679 = vmatpush1.msra.mxu0 %v47
    %4680 = vmatprep.subr.mxu0 0.0
    %4681 = vmatpush1.msra.mxu0 %v48
    %4682 = vmatprep.subr.mxu0 0.0
    %4683 = vmatpush1.msra.mxu0 %v49
    %4684 = vmatprep.subr.mxu0 0.0
    %4685 = vmatpush1.msra.mxu0 0.0
    %4686 = vmatprep.subr.mxu0 0.0
    %4687 = vmatpush1.msra.mxu0 0.0
    %4688 = vmatprep.subr.mxu0 0.0
    %4689 = vmatpush1.msra.mxu0 0.0
    %4690 = vmatprep.subr.mxu0 0.0
    %4691 = vmatpush1.msra.mxu0 0.0
    %4692 = vmatprep.subr.mxu0 0.0
    %4693 = vmatpush1.msra.mxu0 0.0
    %4694 = vmatprep.subr.mxu0 0.0
    %4695 = vmatpush1.msra.mxu0 0.0
    %4696 = vmatprep.subr.mxu0 0.0
    %4697 = vmatpush1.msra.mxu0 0.0
    %4698 = vmatprep.subr.mxu0 0.0
    %4699 = vmatpush1.msra.mxu0 0.0
    %4700 = vmatprep.subr.mxu0 0.0
    %4701 = vmatpush1.msra.mxu0 0.0
    %4702 = vmatprep.subr.mxu0 0.0
    %4703 = vmatpush1.msra.mxu0 0.0
    %4704 = vmatprep.subr.mxu0 0.0
    %4705 = vmatpush1.msra.mxu0 0.0
    %4706 = vmatprep.subr.mxu0 0.0
    %4707 = vmatpush1.msra.mxu0 0.0
    %4708 = vmatprep.subr.mxu0 0.0
    %4709 = vmatpush1.msra.mxu0 0.0
    %4710 = vmatprep.subr.mxu0 0.0
    %4711 = vmatpush1.msra.mxu0 0.0
    %4712 = vmatprep.subr.mxu0 0.0
    %4713 = vmatpush1.msra.mxu0 0.0
    %4714 = vmatprep.subr.mxu0 0.0
    %4715 = vmatpush1.msra.mxu0 0.0
    %4716 = vmatprep.subr.mxu0 0.0
    %4717 = vmatpush1.msra.mxu0 0.0
    %4718 = vmatprep.subr.mxu0 0.0
    %4719 = vmatpush1.msra.mxu0 0.0
    %4720 = vmatprep.subr.mxu0 0.0
    %4721 = vmatpush1.msra.mxu0 0.0
    %4722 = vmatprep.subr.mxu0 0.0
    %4723 = vmatpush1.msra.mxu0 0.0
    %4724 = vmatprep.subr.mxu0 0.0
    %4725 = vmatpush1.msra.mxu0 0.0
    %4726 = vmatprep.subr.mxu0 0.0
    %4727 = vmatpush1.msra.mxu0 0.0
    %4728 = vmatprep.subr.mxu0 0.0
    %4729 = vmatpush1.msra.mxu0 0.0
    %4730 = vmatprep.subr.mxu0 0.0
    %4731 = vmatpush1.msra.mxu0 0.0
    %4732 = vmatprep.subr.mxu0 0.0
    %4733 = vmatpush1.msra.mxu0 0.0
    %4734 = vmatprep.subr.mxu0 0.0
    %4735 = vmatpush1.msra.mxu0 0.0
    %4736 = vmatprep.subr.mxu0 0.0
    %4737 = vmatpush1.msra.mxu0 0.0
    %4738 = vmatprep.subr.mxu0 0.0
    %4739 = vmatpush1.msra.mxu0 0.0
    %4740 = vmatprep.mubr.f32.mxu0 0.0
    %4741 = vmatmul.mubr.f32.gmra.mrb[0].mxu0 %v4674
    %v4742 = vpop.f32.mrb[0].mxu0
    %v4743 = vadd.f32 %v277, %v4742
    %v4744 = vpop.f32.mrb[0].mxu0
    %4745 = vdwg.mxu0
    %4746 = vmatprep.subr.mxu0 0.0
    %4747 = vmatpush1.msra.mxu0 %v54
    %4748 = vmatprep.subr.mxu0 0.0
    %4749 = vmatpush1.msra.mxu0 %v55
    %4750 = vmatprep.subr.mxu0 0.0
    %4751 = vmatpush1.msra.mxu0 %v56
    %4752 = vmatprep.subr.mxu0 0.0
    %4753 = vmatpush1.msra.mxu0 %v57
    %4754 = vmatprep.subr.mxu0 0.0
    %4755 = vmatpush1.msra.mxu0 0.0
    %4756 = vmatprep.subr.mxu0 0.0
    %4757 = vmatpush1.msra.mxu0 0.0
    %4758 = vmatprep.subr.mxu0 0.0
    %4759 = vmatpush1.msra.mxu0 0.0
    %4760 = vmatprep.subr.mxu0 0.0
    %4761 = vmatpush1.msra.mxu0 0.0
    %4762 = vmatprep.subr.mxu0 0.0
    %4763 = vmatpush1.msra.mxu0 0.0
    %4764 = vmatprep.subr.mxu0 0.0
    %4765 = vmatpush1.msra.mxu0 0.0
    %4766 = vmatprep.subr.mxu0 0.0
    %4767 = vmatpush1.msra.mxu0 0.0
    %4768 = vmatprep.subr.mxu0 0.0
    %4769 = vmatpush1.msra.mxu0 0.0
    %4770 = vmatprep.subr.mxu0 0.0
    %4771 = vmatpush1.msra.mxu0 0.0
    %4772 = vmatprep.subr.mxu0 0.0
    %4773 = vmatpush1.msra.mxu0 0.0
    %4774 = vmatprep.subr.mxu0 0.0
    %4775 = vmatpush1.msra.mxu0 0.0
    %4776 = vmatprep.subr.mxu0 0.0
    %4777 = vmatpush1.msra.mxu0 0.0
    %4778 = vmatprep.subr.mxu0 0.0
    %4779 = vmatpush1.msra.mxu0 0.0
    %4780 = vmatprep.subr.mxu0 0.0
    %4781 = vmatpush1.msra.mxu0 0.0
    %4782 = vmatprep.subr.mxu0 0.0
    %4783 = vmatpush1.msra.mxu0 0.0
    %4784 = vmatprep.subr.mxu0 0.0
    %4785 = vmatpush1.msra.mxu0 0.0
    %4786 = vmatprep.subr.mxu0 0.0
    %4787 = vmatpush1.msra.mxu0 0.0
    %4788 = vmatprep.subr.mxu0 0.0
    %4789 = vmatpush1.msra.mxu0 0.0
    %4790 = vmatprep.subr.mxu0 0.0
    %4791 = vmatpush1.msra.mxu0 0.0
    %4792 = vmatprep.subr.mxu0 0.0
    %4793 = vmatpush1.msra.mxu0 0.0
    %4794 = vmatprep.subr.mxu0 0.0
    %4795 = vmatpush1.msra.mxu0 0.0
    %4796 = vmatprep.subr.mxu0 0.0
    %4797 = vmatpush1.msra.mxu0 0.0
    %4798 = vmatprep.subr.mxu0 0.0
    %4799 = vmatpush1.msra.mxu0 0.0
    %4800 = vmatprep.subr.mxu0 0.0
    %4801 = vmatpush1.msra.mxu0 0.0
    %4802 = vmatprep.subr.mxu0 0.0
    %4803 = vmatpush1.msra.mxu0 0.0
    %4804 = vmatprep.subr.mxu0 0.0
    %4805 = vmatpush1.msra.mxu0 0.0
    %4806 = vmatprep.subr.mxu0 0.0
    %4807 = vmatpush1.msra.mxu0 0.0
    %4808 = vmatprep.subr.mxu0 0.0
    %4809 = vmatpush1.msra.mxu0 0.0
    %4810 = vmatprep.mubr.f32.mxu0 0.0
    %4811 = vmatmul.mubr.f32.gmra.mrb[0].mxu0 %v3969
    %v4812 = vpop.f32.mrb[0].mxu0
    %v4813 = vadd.f32 0.0, %v4812
    %v4814 = vpop.f32.mrb[0].mxu0
    %4815 = vdwg.mxu0
    %v4816 = vadd.f32 %v4743, %v4813
    %v4817 = vxor.u32 %v4816, 2147483648
    %v4818 = vmul.f32 %v4817, 1.442695
    %v4819 = vpow.pop %v4818
    %v4820 = vadd.f32 %v4819, 1.0
    %v4821 = vrcp.pop %v4820
    %v4822 = vmul.f32 1.0, %v4821
    %v4823 = vtanh.pop %v4816
    %v4824 = vmul.f32 %v4822, %v3959
    %4826 = vrot.lane.b32.xlu0 %v4823, 64
    %v4827 = vpop.permute.xlu0 %4826
    %v4829 = vmul.f32 %v4822, %v4827
    %4831 = vrot.lane.b32.xlu0 %v4829, 32
    %v4832 = vpop.permute.xlu0 %4831
    %v4834 = vadd.f32 %v4824, %v4832
    %v4835 = vtanh.pop %v4834
    %4837 = vrot.lane.b32.xlu0 %v4835, 64
    %v4838 = vpop.permute.xlu0 %4837
    %v4840 = vmul.f32 %v4822, %v4838
    %4842 = vrot.lane.b32.xlu0 %v4840, 32
    %v4843 = vpop.permute.xlu0 %4842
    %v4844 = vsel %vm171, %v4843, 0
    %4846 = vmatprep.subr.mxu0 0.0
    %4847 = vmatpush1.msra.mxu0 %v79
    %4848 = vmatprep.subr.mxu0 0.0
    %4849 = vmatpush1.msra.mxu0 %v80
    %4850 = vmatprep.subr.mxu0 0.0
    %4851 = vmatpush1.msra.mxu0 %v81
    %4852 = vmatprep.subr.mxu0 0.0
    %4853 = vmatpush1.msra.mxu0 %v82
    %4854 = vmatprep.subr.mxu0 0.0
    %4855 = vmatpush1.msra.mxu0 0.0
    %4856 = vmatprep.subr.mxu0 0.0
    %4857 = vmatpush1.msra.mxu0 0.0
    %4858 = vmatprep.subr.mxu0 0.0
    %4859 = vmatpush1.msra.mxu0 0.0
    %4860 = vmatprep.subr.mxu0 0.0
    %4861 = vmatpush1.msra.mxu0 0.0
    %4862 = vmatprep.subr.mxu0 0.0
    %4863 = vmatpush1.msra.mxu0 0.0
    %4864 = vmatprep.subr.mxu0 0.0
    %4865 = vmatpush1.msra.mxu0 0.0
    %4866 = vmatprep.subr.mxu0 0.0
    %4867 = vmatpush1.msra.mxu0 0.0
    %4868 = vmatprep.subr.mxu0 0.0
    %4869 = vmatpush1.msra.mxu0 0.0
    %4870 = vmatprep.subr.mxu0 0.0
    %4871 = vmatpush1.msra.mxu0 0.0
    %4872 = vmatprep.subr.mxu0 0.0
    %4873 = vmatpush1.msra.mxu0 0.0
    %4874 = vmatprep.subr.mxu0 0.0
    %4875 = vmatpush1.msra.mxu0 0.0
    %4876 = vmatprep.subr.mxu0 0.0
    %4877 = vmatpush1.msra.mxu0 0.0
    %4878 = vmatprep.subr.mxu0 0.0
    %4879 = vmatpush1.msra.mxu0 0.0
    %4880 = vmatprep.subr.mxu0 0.0
    %4881 = vmatpush1.msra.mxu0 0.0
    %4882 = vmatprep.subr.mxu0 0.0
    %4883 = vmatpush1.msra.mxu0 0.0
    %4884 = vmatprep.subr.mxu0 0.0
    %4885 = vmatpush1.msra.mxu0 0.0
    %4886 = vmatprep.subr.mxu0 0.0
    %4887 = vmatpush1.msra.mxu0 0.0
    %4888 = vmatprep.subr.mxu0 0.0
    %4889 = vmatpush1.msra.mxu0 0.0
    %4890 = vmatprep.subr.mxu0 0.0
    %4891 = vmatpush1.msra.mxu0 0.0
    %4892 = vmatprep.subr.mxu0 0.0
    %4893 = vmatpush1.msra.mxu0 0.0
    %4894 = vmatprep.subr.mxu0 0.0
    %4895 = vmatpush1.msra.mxu0 0.0
    %4896 = vmatprep.subr.mxu0 0.0
    %4897 = vmatpush1.msra.mxu0 0.0
    %4898 = vmatprep.subr.mxu0 0.0
    %4899 = vmatpush1.msra.mxu0 0.0
    %4900 = vmatprep.subr.mxu0 0.0
    %4901 = vmatpush1.msra.mxu0 0.0
    %4902 = vmatprep.subr.mxu0 0.0
    %4903 = vmatpush1.msra.mxu0 0.0
    %4904 = vmatprep.subr.mxu0 0.0
    %4905 = vmatpush1.msra.mxu0 0.0
    %4906 = vmatprep.subr.mxu0 0.0
    %4907 = vmatpush1.msra.mxu0 0.0
    %4908 = vmatprep.subr.mxu0 0.0
    %4909 = vmatpush1.msra.mxu0 0.0
    %4910 = vmatprep.mubr.f32.mxu0 0.0
    %4911 = vmatmul.mubr.f32.gmra.mrb[0].mxu0 %v4844
    %v4912 = vpop.f32.mrb[0].mxu0
    %v4913 = vadd.f32 0.0, %v4912
    %v4914 = vpop.f32.mrb[0].mxu0
    %4915 = vdwg.mxu0
    %v4916 = vrot.slane %v4840, 1
    %4917 = vrot.lane.b32.xlu0 %v4916, 32
    %v4918 = vpop.permute.xlu0 %4917
    %v4919 = vsel %vm171, %v4918, 0
    %4921 = vmatprep.subr.mxu0 0.0
    %4922 = vmatpush1.msra.mxu0 %v84
    %4923 = vmatprep.subr.mxu0 0.0
    %4924 = vmatpush1.msra.mxu0 %v85
    %4925 = vmatprep.subr.mxu0 0.0
    %4926 = vmatpush1.msra.mxu0 %v86
    %4927 = vmatprep.subr.mxu0 0.0
    %4928 = vmatpush1.msra.mxu0 %v87
    %4929 = vmatprep.subr.mxu0 0.0
    %4930 = vmatpush1.msra.mxu0 0.0
    %4931 = vmatprep.subr.mxu0 0.0
    %4932 = vmatpush1.msra.mxu0 0.0
    %4933 = vmatprep.subr.mxu0 0.0
    %4934 = vmatpush1.msra.mxu0 0.0
    %4935 = vmatprep.subr.mxu0 0.0
    %4936 = vmatpush1.msra.mxu0 0.0
    %4937 = vmatprep.subr.mxu0 0.0
    %4938 = vmatpush1.msra.mxu0 0.0
    %4939 = vmatprep.subr.mxu0 0.0
    %4940 = vmatpush1.msra.mxu0 0.0
    %4941 = vmatprep.subr.mxu0 0.0
    %4942 = vmatpush1.msra.mxu0 0.0
    %4943 = vmatprep.subr.mxu0 0.0
    %4944 = vmatpush1.msra.mxu0 0.0
    %4945 = vmatprep.subr.mxu0 0.0
    %4946 = vmatpush1.msra.mxu0 0.0
    %4947 = vmatprep.subr.mxu0 0.0
    %4948 = vmatpush1.msra.mxu0 0.0
    %4949 = vmatprep.subr.mxu0 0.0
    %4950 = vmatpush1.msra.mxu0 0.0
    %4951 = vmatprep.subr.mxu0 0.0
    %4952 = vmatpush1.msra.mxu0 0.0
    %4953 = vmatprep.subr.mxu0 0.0
    %4954 = vmatpush1.msra.mxu0 0.0
    %4955 = vmatprep.subr.mxu0 0.0
    %4956 = vmatpush1.msra.mxu0 0.0
    %4957 = vmatprep.subr.mxu0 0.0
    %4958 = vmatpush1.msra.mxu0 0.0
    %4959 = vmatprep.subr.mxu0 0.0
    %4960 = vmatpush1.msra.mxu0 0.0
    %4961 = vmatprep.subr.mxu0 0.0
    %4962 = vmatpush1.msra.mxu0 0.0
    %4963 = vmatprep.subr.mxu0 0.0
    %4964 = vmatpush1.msra.mxu0 0.0
    %4965 = vmatprep.subr.mxu0 0.0
    %4966 = vmatpush1.msra.mxu0 0.0
    %4967 = vmatprep.subr.mxu0 0.0
    %4968 = vmatpush1.msra.mxu0 0.0
    %4969 = vmatprep.subr.mxu0 0.0
    %4970 = vmatpush1.msra.mxu0 0.0
    %4971 = vmatprep.subr.mxu0 0.0
    %4972 = vmatpush1.msra.mxu0 0.0
    %4973 = vmatprep.subr.mxu0 0.0
    %4974 = vmatpush1.msra.mxu0 0.0
    %4975 = vmatprep.subr.mxu0 0.0
    %4976 = vmatpush1.msra.mxu0 0.0
    %4977 = vmatprep.subr.mxu0 0.0
    %4978 = vmatpush1.msra.mxu0 0.0
    %4979 = vmatprep.subr.mxu0 0.0
    %4980 = vmatpush1.msra.mxu0 0.0
    %4981 = vmatprep.subr.mxu0 0.0
    %4982 = vmatpush1.msra.mxu0 0.0
    %4983 = vmatprep.subr.mxu0 0.0
    %4984 = vmatpush1.msra.mxu0 0.0
    %4985 = vmatprep.mubr.f32.mxu0 0.0
    %4986 = vmatmul.mubr.f32.gmra.mrb[0].mxu0 %v4919
    %v4987 = vpop.f32.mrb[0].mxu0
    %v4988 = vadd.f32 0.0, %v4987
    %v4989 = vpop.f32.mrb[0].mxu0
    %4990 = vdwg.mxu0
    %v4992 = vrot.slane %v4988, 7
    %v4994 = vsel %vm608, %v4913, %v4992
    %v4995 = vadd.f32 %v4994, %v75
    %v4996 = vsel %vm611, %v4995, -inf
    %4997 = vmax.xlane.f32.xlu0 %v4996
    %v4998 = vpop.xlane.xlu0 %4997
    %v4999 = vsub.f32 %v4995, %v4998
    %v5000 = vmul.f32 %v4999, 1.442695
    %v5001 = vpow.pop %v5000
    %v5002 = vsel %vm611, %v5001, 0.0
    %5003 = vadd.xlane.f32.xlu0 %v5002
    %v5004 = vpop.xlane.xlu0 %5003
    %v5005 = vrcp.pop %v5004
    %v5006 = vmul.f32 %v5001, %v5005
    %v5008 = vsel %vm623, %v5006, 0
    %5010 = vmatprep.subr.mxu0 0.0
    %5011 = vmatpush1.msra.mxu0 %v76
    %5012 = vmatprep.subr.mxu0 0.0
    %5013 = vmatpush1.msra.mxu0 0.0
    %5014 = vmatprep.subr.mxu0 0.0
    %5015 = vmatpush1.msra.mxu0 0.0
    %5016 = vmatprep.subr.mxu0 0.0
    %5017 = vmatpush1.msra.mxu0 0.0
    %5018 = vmatprep.subr.mxu0 0.0
    %5019 = vmatpush1.msra.mxu0 0.0
    %5020 = vmatprep.subr.mxu0 0.0
    %5021 = vmatpush1.msra.mxu0 0.0
    %5022 = vmatprep.subr.mxu0 0.0
    %5023 = vmatpush1.msra.mxu0 0.0
    %5024 = vmatprep.subr.mxu0 0.0
    %5025 = vmatpush1.msra.mxu0 0.0
    %5026 = vmatprep.subr.mxu0 0.0
    %5027 = vmatpush1.msra.mxu0 0.0
    %5028 = vmatprep.subr.mxu0 0.0
    %5029 = vmatpush1.msra.mxu0 0.0
    %5030 = vmatprep.subr.mxu0 0.0
    %5031 = vmatpush1.msra.mxu0 0.0
    %5032 = vmatprep.subr.mxu0 0.0
    %5033 = vmatpush1.msra.mxu0 0.0
    %5034 = vmatprep.subr.mxu0 0.0
    %5035 = vmatpush1.msra.mxu0 0.0
    %5036 = vmatprep.subr.mxu0 0.0
    %5037 = vmatpush1.msra.mxu0 0.0
    %5038 = vmatprep.subr.mxu0 0.0
    %5039 = vmatpush1.msra.mxu0 0.0
    %5040 = vmatprep.subr.mxu0 0.0
    %5041 = vmatpush1.msra.mxu0 0.0
    %5042 = vmatprep.subr.mxu0 0.0
    %5043 = vmatpush1.msra.mxu0 0.0
    %5044 = vmatprep.subr.mxu0 0.0
    %5045 = vmatpush1.msra.mxu0 0.0
    %5046 = vmatprep.subr.mxu0 0.0
    %5047 = vmatpush1.msra.mxu0 0.0
    %5048 = vmatprep.subr.mxu0 0.0
    %5049 = vmatpush1.msra.mxu0 0.0
    %5050 = vmatprep.subr.mxu0 0.0
    %5051 = vmatpush1.msra.mxu0 0.0
    %5052 = vmatprep.subr.mxu0 0.0
    %5053 = vmatpush1.msra.mxu0 0.0
    %5054 = vmatprep.subr.mxu0 0.0
    %5055 = vmatpush1.msra.mxu0 0.0
    %5056 = vmatprep.subr.mxu0 0.0
    %5057 = vmatpush1.msra.mxu0 0.0
    %5058 = vmatprep.subr.mxu0 0.0
    %5059 = vmatpush1.msra.mxu0 0.0
    %5060 = vmatprep.subr.mxu0 0.0
    %5061 = vmatpush1.msra.mxu0 0.0
    %5062 = vmatprep.subr.mxu0 0.0
    %5063 = vmatpush1.msra.mxu0 0.0
    %5064 = vmatprep.subr.mxu0 0.0
    %5065 = vmatpush1.msra.mxu0 0.0
    %5066 = vmatprep.subr.mxu0 0.0
    %5067 = vmatpush1.msra.mxu0 0.0
    %5068 = vmatprep.subr.mxu0 0.0
    %5069 = vmatpush1.msra.mxu0 0.0
    %5070 = vmatprep.subr.mxu0 0.0
    %5071 = vmatpush1.msra.mxu0 0.0
    %5072 = vmatprep.subr.mxu0 0.0
    %5073 = vmatpush1.msra.mxu0 0.0
    %5074 = vmatprep.mubr.f32.mxu0 0.0
    %5075 = vmatmul.mubr.f32.gmra.mrb[0].mxu0 %v5008
    %v5076 = vpop.f32.mrb[0].mxu0
    %v5077 = vadd.f32 0.0, %v5076
    %v5078 = vpop.f32.mrb[0].mxu0
    %5079 = vdwg.mxu0
    %v5080 = vrot.slane %v5006, 1
    %v5081 = vsel %vm623, %v5080, 0
    %5083 = vmatprep.subr.mxu0 0.0
    %5084 = vmatpush1.msra.mxu0 %v78
    %5085 = vmatprep.subr.mxu0 0.0
    %5086 = vmatpush1.msra.mxu0 0.0
    %5087 = vmatprep.subr.mxu0 0.0
    %5088 = vmatpush1.msra.mxu0 0.0
    %5089 = vmatprep.subr.mxu0 0.0
    %5090 = vmatpush1.msra.mxu0 0.0
    %5091 = vmatprep.subr.mxu0 0.0
    %5092 = vmatpush1.msra.mxu0 0.0
    %5093 = vmatprep.subr.mxu0 0.0
    %5094 = vmatpush1.msra.mxu0 0.0
    %5095 = vmatprep.subr.mxu0 0.0
    %5096 = vmatpush1.msra.mxu0 0.0
    %5097 = vmatprep.subr.mxu0 0.0
    %5098 = vmatpush1.msra.mxu0 0.0
    %5099 = vmatprep.subr.mxu0 0.0
    %5100 = vmatpush1.msra.mxu0 0.0
    %5101 = vmatprep.subr.mxu0 0.0
    %5102 = vmatpush1.msra.mxu0 0.0
    %5103 = vmatprep.subr.mxu0 0.0
    %5104 = vmatpush1.msra.mxu0 0.0
    %5105 = vmatprep.subr.mxu0 0.0
    %5106 = vmatpush1.msra.mxu0 0.0
    %5107 = vmatprep.subr.mxu0 0.0
    %5108 = vmatpush1.msra.mxu0 0.0
    %5109 = vmatprep.subr.mxu0 0.0
    %5110 = vmatpush1.msra.mxu0 0.0
    %5111 = vmatprep.subr.mxu0 0.0
    %5112 = vmatpush1.msra.mxu0 0.0
    %5113 = vmatprep.subr.mxu0 0.0
    %5114 = vmatpush1.msra.mxu0 0.0
    %5115 = vmatprep.subr.mxu0 0.0
    %5116 = vmatpush1.msra.mxu0 0.0
    %5117 = vmatprep.subr.mxu0 0.0
    %5118 = vmatpush1.msra.mxu0 0.0
    %5119 = vmatprep.subr.mxu0 0.0
    %5120 = vmatpush1.msra.mxu0 0.0
    %5121 = vmatprep.subr.mxu0 0.0
    %5122 = vmatpush1.msra.mxu0 0.0
    %5123 = vmatprep.subr.mxu0 0.0
    %5124 = vmatpush1.msra.mxu0 0.0
    %5125 = vmatprep.subr.mxu0 0.0
    %5126 = vmatpush1.msra.mxu0 0.0
    %5127 = vmatprep.subr.mxu0 0.0
    %5128 = vmatpush1.msra.mxu0 0.0
    %5129 = vmatprep.subr.mxu0 0.0
    %5130 = vmatpush1.msra.mxu0 0.0
    %5131 = vmatprep.subr.mxu0 0.0
    %5132 = vmatpush1.msra.mxu0 0.0
    %5133 = vmatprep.subr.mxu0 0.0
    %5134 = vmatpush1.msra.mxu0 0.0
    %5135 = vmatprep.subr.mxu0 0.0
    %5136 = vmatpush1.msra.mxu0 0.0
    %5137 = vmatprep.subr.mxu0 0.0
    %5138 = vmatpush1.msra.mxu0 0.0
    %5139 = vmatprep.subr.mxu0 0.0
    %5140 = vmatpush1.msra.mxu0 0.0
    %5141 = vmatprep.subr.mxu0 0.0
    %5142 = vmatpush1.msra.mxu0 0.0
    %5143 = vmatprep.subr.mxu0 0.0
    %5144 = vmatpush1.msra.mxu0 0.0
    %5145 = vmatprep.subr.mxu0 0.0
    %5146 = vmatpush1.msra.mxu0 0.0
    %5147 = vmatprep.mubr.f32.mxu0 0.0
    %5148 = vmatmul.mubr.f32.gmra.mrb[0].mxu0 %v5081
    %v5149 = vpop.f32.mrb[0].mxu0
    %v5150 = vadd.f32 0.0, %v5149
    %v5151 = vpop.f32.mrb[0].mxu0
    %5152 = vdwg.mxu0
    %v5154 = vrot.slane %v5150, 7
    %v5156 = vsel %vm608, %v5077, %v5154
    %v5158 = vsel %vm171, %v5156, 0
    %5160 = vmatprep.subr.mxu0 0.0
    %5161 = vmatpush1.msra.mxu0 %v63
    %5162 = vmatprep.subr.mxu0 0.0
    %5163 = vmatpush1.msra.mxu0 %v64
    %5164 = vmatprep.subr.mxu0 0.0
    %5165 = vmatpush1.msra.mxu0 %v65
    %5166 = vmatprep.subr.mxu0 0.0
    %5167 = vmatpush1.msra.mxu0 %v66
    %5168 = vmatprep.subr.mxu0 0.0
    %5169 = vmatpush1.msra.mxu0 0.0
    %5170 = vmatprep.subr.mxu0 0.0
    %5171 = vmatpush1.msra.mxu0 0.0
    %5172 = vmatprep.subr.mxu0 0.0
    %5173 = vmatpush1.msra.mxu0 0.0
    %5174 = vmatprep.subr.mxu0 0.0
    %5175 = vmatpush1.msra.mxu0 0.0
    %5176 = vmatprep.subr.mxu0 0.0
    %5177 = vmatpush1.msra.mxu0 0.0
    %5178 = vmatprep.subr.mxu0 0.0
    %5179 = vmatpush1.msra.mxu0 0.0
    %5180 = vmatprep.subr.mxu0 0.0
    %5181 = vmatpush1.msra.mxu0 0.0
    %5182 = vmatprep.subr.mxu0 0.0
    %5183 = vmatpush1.msra.mxu0 0.0
    %5184 = vmatprep.subr.mxu0 0.0
    %5185 = vmatpush1.msra.mxu0 0.0
    %5186 = vmatprep.subr.mxu0 0.0
    %5187 = vmatpush1.msra.mxu0 0.0
    %5188 = vmatprep.subr.mxu0 0.0
    %5189 = vmatpush1.msra.mxu0 0.0
    %5190 = vmatprep.subr.mxu0 0.0
    %5191 = vmatpush1.msra.mxu0 0.0
    %5192 = vmatprep.subr.mxu0 0.0
    %5193 = vmatpush1.msra.mxu0 0.0
    %5194 = vmatprep.subr.mxu0 0.0
    %5195 = vmatpush1.msra.mxu0 0.0
    %5196 = vmatprep.subr.mxu0 0.0
    %5197 = vmatpush1.msra.mxu0 0.0
    %5198 = vmatprep.subr.mxu0 0.0
    %5199 = vmatpush1.msra.mxu0 0.0
    %5200 = vmatprep.subr.mxu0 0.0
    %5201 = vmatpush1.msra.mxu0 0.0
    %5202 = vmatprep.subr.mxu0 0.0
    %5203 = vmatpush1.msra.mxu0 0.0
    %5204 = vmatprep.subr.mxu0 0.0
    %5205 = vmatpush1.msra.mxu0 0.0
    %5206 = vmatprep.subr.mxu0 0.0
    %5207 = vmatpush1.msra.mxu0 0.0
    %5208 = vmatprep.subr.mxu0 0.0
    %5209 = vmatpush1.msra.mxu0 0.0
    %5210 = vmatprep.subr.mxu0 0.0
    %5211 = vmatpush1.msra.mxu0 0.0
    %5212 = vmatprep.subr.mxu0 0.0
    %5213 = vmatpush1.msra.mxu0 0.0
    %5214 = vmatprep.subr.mxu0 0.0
    %5215 = vmatpush1.msra.mxu0 0.0
    %5216 = vmatprep.subr.mxu0 0.0
    %5217 = vmatpush1.msra.mxu0 0.0
    %5218 = vmatprep.subr.mxu0 0.0
    %5219 = vmatpush1.msra.mxu0 0.0
    %5220 = vmatprep.subr.mxu0 0.0
    %5221 = vmatpush1.msra.mxu0 0.0
    %5222 = vmatprep.subr.mxu0 0.0
    %5223 = vmatpush1.msra.mxu0 0.0
    %5224 = vmatprep.mubr.f32.mxu0 0.0
    %5225 = vmatmul.mubr.f32.gmra.mrb[0].mxu0 %v5158
    %v5226 = vpop.f32.mrb[0].mxu0
    %v5227 = vadd.f32 0.0, %v5226
    %v5228 = vpop.f32.mrb[0].mxu0
    %5229 = vdwg.mxu0
    %5230 = vmatprep.subr.mxu0 0.0
    %5231 = vmatpush1.msra.mxu0 %v59
    %5232 = vmatprep.subr.mxu0 0.0
    %5233 = vmatpush1.msra.mxu0 %v60
    %5234 = vmatprep.subr.mxu0 0.0
    %5235 = vmatpush1.msra.mxu0 %v61
    %5236 = vmatprep.subr.mxu0 0.0
    %5237 = vmatpush1.msra.mxu0 %v62
    %5238 = vmatprep.subr.mxu0 0.0
    %5239 = vmatpush1.msra.mxu0 0.0
    %5240 = vmatprep.subr.mxu0 0.0
    %5241 = vmatpush1.msra.mxu0 0.0
    %5242 = vmatprep.subr.mxu0 0.0
    %5243 = vmatpush1.msra.mxu0 0.0
    %5244 = vmatprep.subr.mxu0 0.0
    %5245 = vmatpush1.msra.mxu0 0.0
    %5246 = vmatprep.subr.mxu0 0.0
    %5247 = vmatpush1.msra.mxu0 0.0
    %5248 = vmatprep.subr.mxu0 0.0
    %5249 = vmatpush1.msra.mxu0 0.0
    %5250 = vmatprep.subr.mxu0 0.0
    %5251 = vmatpush1.msra.mxu0 0.0
    %5252 = vmatprep.subr.mxu0 0.0
    %5253 = vmatpush1.msra.mxu0 0.0
    %5254 = vmatprep.subr.mxu0 0.0
    %5255 = vmatpush1.msra.mxu0 0.0
    %5256 = vmatprep.subr.mxu0 0.0
    %5257 = vmatpush1.msra.mxu0 0.0
    %5258 = vmatprep.subr.mxu0 0.0
    %5259 = vmatpush1.msra.mxu0 0.0
    %5260 = vmatprep.subr.mxu0 0.0
    %5261 = vmatpush1.msra.mxu0 0.0
    %5262 = vmatprep.subr.mxu0 0.0
    %5263 = vmatpush1.msra.mxu0 0.0
    %5264 = vmatprep.subr.mxu0 0.0
    %5265 = vmatpush1.msra.mxu0 0.0
    %5266 = vmatprep.subr.mxu0 0.0
    %5267 = vmatpush1.msra.mxu0 0.0
    %5268 = vmatprep.subr.mxu0 0.0
    %5269 = vmatpush1.msra.mxu0 0.0
    %5270 = vmatprep.subr.mxu0 0.0
    %5271 = vmatpush1.msra.mxu0 0.0
    %5272 = vmatprep.subr.mxu0 0.0
    %5273 = vmatpush1.msra.mxu0 0.0
    %5274 = vmatprep.subr.mxu0 0.0
    %5275 = vmatpush1.msra.mxu0 0.0
    %5276 = vmatprep.subr.mxu0 0.0
    %5277 = vmatpush1.msra.mxu0 0.0
    %5278 = vmatprep.subr.mxu0 0.0
    %5279 = vmatpush1.msra.mxu0 0.0
    %5280 = vmatprep.subr.mxu0 0.0
    %5281 = vmatpush1.msra.mxu0 0.0
    %5282 = vmatprep.subr.mxu0 0.0
    %5283 = vmatpush1.msra.mxu0 0.0
    %5284 = vmatprep.subr.mxu0 0.0
    %5285 = vmatpush1.msra.mxu0 0.0
    %5286 = vmatprep.subr.mxu0 0.0
    %5287 = vmatpush1.msra.mxu0 0.0
    %5288 = vmatprep.subr.mxu0 0.0
    %5289 = vmatpush1.msra.mxu0 0.0
    %5290 = vmatprep.subr.mxu0 0.0
    %5291 = vmatpush1.msra.mxu0 0.0
    %5292 = vmatprep.subr.mxu0 0.0
    %5293 = vmatpush1.msra.mxu0 0.0
    %5294 = vmatprep.mubr.f32.mxu0 0.0
    %5295 = vmatmul.mubr.f32.gmra.mrb[0].mxu0 %v4844
    %v5296 = vpop.f32.mrb[0].mxu0
    %v5297 = vadd.f32 %v5227, %v5296
    %v5298 = vpop.f32.mrb[0].mxu0
    %5299 = vdwg.mxu0
    %v5300 = vadd.f32 %v5297, %v920
    %v5301 = vtanh.pop %v5300
    %v5303 = vsel %vm171, %v5301, 0
    %5305 = vmatprep.subr.mxu0 0.0
    %5306 = vmatpush1.msra.mxu0 %v68
    %5307 = vmatprep.subr.mxu0 0.0
    %5308 = vmatpush1.msra.mxu0 %v69
    %5309 = vmatprep.subr.mxu0 0.0
    %5310 = vmatpush1.msra.mxu0 %v70
    %5311 = vmatprep.subr.mxu0 0.0
    %5312 = vmatpush1.msra.mxu0 %v71
    %5313 = vmatprep.subr.mxu0 0.0
    %5314 = vmatpush1.msra.mxu0 0.0
    %5315 = vmatprep.subr.mxu0 0.0
    %5316 = vmatpush1.msra.mxu0 0.0
    %5317 = vmatprep.subr.mxu0 0.0
    %5318 = vmatpush1.msra.mxu0 0.0
    %5319 = vmatprep.subr.mxu0 0.0
    %5320 = vmatpush1.msra.mxu0 0.0
    %5321 = vmatprep.subr.mxu0 0.0
    %5322 = vmatpush1.msra.mxu0 0.0
    %5323 = vmatprep.subr.mxu0 0.0
    %5324 = vmatpush1.msra.mxu0 0.0
    %5325 = vmatprep.subr.mxu0 0.0
    %5326 = vmatpush1.msra.mxu0 0.0
    %5327 = vmatprep.subr.mxu0 0.0
    %5328 = vmatpush1.msra.mxu0 0.0
    %5329 = vmatprep.subr.mxu0 0.0
    %5330 = vmatpush1.msra.mxu0 0.0
    %5331 = vmatprep.subr.mxu0 0.0
    %5332 = vmatpush1.msra.mxu0 0.0
    %5333 = vmatprep.subr.mxu0 0.0
    %5334 = vmatpush1.msra.mxu0 0.0
    %5335 = vmatprep.subr.mxu0 0.0
    %5336 = vmatpush1.msra.mxu0 0.0
    %5337 = vmatprep.subr.mxu0 0.0
    %5338 = vmatpush1.msra.mxu0 0.0
    %5339 = vmatprep.subr.mxu0 0.0
    %5340 = vmatpush1.msra.mxu0 0.0
    %5341 = vmatprep.subr.mxu0 0.0
    %5342 = vmatpush1.msra.mxu0 0.0
    %5343 = vmatprep.subr.mxu0 0.0
    %5344 = vmatpush1.msra.mxu0 0.0
    %5345 = vmatprep.subr.mxu0 0.0
    %5346 = vmatpush1.msra.mxu0 0.0
    %5347 = vmatprep.subr.mxu0 0.0
    %5348 = vmatpush1.msra.mxu0 0.0
    %5349 = vmatprep.subr.mxu0 0.0
    %5350 = vmatpush1.msra.mxu0 0.0
    %5351 = vmatprep.subr.mxu0 0.0
    %5352 = vmatpush1.msra.mxu0 0.0
    %5353 = vmatprep.subr.mxu0 0.0
    %5354 = vmatpush1.msra.mxu0 0.0
    %5355 = vmatprep.subr.mxu0 0.0
    %5356 = vmatpush1.msra.mxu0 0.0
    %5357 = vmatprep.subr.mxu0 0.0
    %5358 = vmatpush1.msra.mxu0 0.0
    %5359 = vmatprep.subr.mxu0 0.0
    %5360 = vmatpush1.msra.mxu0 0.0
    %5361 = vmatprep.subr.mxu0 0.0
    %5362 = vmatpush1.msra.mxu0 0.0
    %5363 = vmatprep.subr.mxu0 0.0
    %5364 = vmatpush1.msra.mxu0 0.0
    %5365 = vmatprep.subr.mxu0 0.0
    %5366 = vmatpush1.msra.mxu0 0.0
    %5367 = vmatprep.subr.mxu0 0.0
    %5368 = vmatpush1.msra.mxu0 0.0
    %5369 = vmatprep.mubr.f32.mxu0 0.0
    %5370 = vmatmul.mubr.f32.gmra.mrb[0].mxu0 %v5303
    %v5371 = vpop.f32.mrb[0].mxu0
    %v5372 = vadd.f32 %v926, %v5371
    %v5373 = vpop.f32.mrb[0].mxu0
    %5374 = vdwg.mxu0
    %s5375 = scalar_lea.vmem %s0, 12
    %v5376 = vld [vmem:[%s5375] sm:$0x3]
    %v5378 = vsel %vm96, %v5372, 0
    %5380 = vmatprep.subr.mxu0 0.0
    %5381 = vmatpush1.msra.mxu0 %v44
    %5382 = vmatprep.subr.mxu0 0.0
    %5383 = vmatpush1.msra.mxu0 %v45
    %5384 = vmatprep.subr.mxu0 0.0
    %5385 = vmatpush1.msra.mxu0 0.0
    %5386 = vmatprep.subr.mxu0 0.0
    %5387 = vmatpush1.msra.mxu0 0.0
    %5388 = vmatprep.subr.mxu0 0.0
    %5389 = vmatpush1.msra.mxu0 0.0
    %5390 = vmatprep.subr.mxu0 0.0
    %5391 = vmatpush1.msra.mxu0 0.0
    %5392 = vmatprep.subr.mxu0 0.0
    %5393 = vmatpush1.msra.mxu0 0.0
    %5394 = vmatprep.subr.mxu0 0.0
    %5395 = vmatpush1.msra.mxu0 0.0
    %5396 = vmatprep.subr.mxu0 0.0
    %5397 = vmatpush1.msra.mxu0 0.0
    %5398 = vmatprep.subr.mxu0 0.0
    %5399 = vmatpush1.msra.mxu0 0.0
    %5400 = vmatprep.subr.mxu0 0.0
    %5401 = vmatpush1.msra.mxu0 0.0
    %5402 = vmatprep.subr.mxu0 0.0
    %5403 = vmatpush1.msra.mxu0 0.0
    %5404 = vmatprep.subr.mxu0 0.0
    %5405 = vmatpush1.msra.mxu0 0.0
    %5406 = vmatprep.subr.mxu0 0.0
    %5407 = vmatpush1.msra.mxu0 0.0
    %5408 = vmatprep.subr.mxu0 0.0
    %5409 = vmatpush1.msra.mxu0 0.0
    %5410 = vmatprep.subr.mxu0 0.0
    %5411 = vmatpush1.msra.mxu0 0.0
    %5412 = vmatprep.subr.mxu0 0.0
    %5413 = vmatpush1.msra.mxu0 0.0
    %5414 = vmatprep.subr.mxu0 0.0
    %5415 = vmatpush1.msra.mxu0 0.0
    %5416 = vmatprep.subr.mxu0 0.0
    %5417 = vmatpush1.msra.mxu0 0.0
    %5418 = vmatprep.subr.mxu0 0.0
    %5419 = vmatpush1.msra.mxu0 0.0
    %5420 = vmatprep.subr.mxu0 0.0
    %5421 = vmatpush1.msra.mxu0 0.0
    %5422 = vmatprep.subr.mxu0 0.0
    %5423 = vmatpush1.msra.mxu0 0.0
    %5424 = vmatprep.subr.mxu0 0.0
    %5425 = vmatpush1.msra.mxu0 0.0
    %5426 = vmatprep.subr.mxu0 0.0
    %5427 = vmatpush1.msra.mxu0 0.0
    %5428 = vmatprep.subr.mxu0 0.0
    %5429 = vmatpush1.msra.mxu0 0.0
    %5430 = vmatprep.subr.mxu0 0.0
    %5431 = vmatpush1.msra.mxu0 0.0
    %5432 = vmatprep.subr.mxu0 0.0
    %5433 = vmatpush1.msra.mxu0 0.0
    %5434 = vmatprep.subr.mxu0 0.0
    %5435 = vmatpush1.msra.mxu0 0.0
    %5436 = vmatprep.subr.mxu0 0.0
    %5437 = vmatpush1.msra.mxu0 0.0
    %5438 = vmatprep.subr.mxu0 0.0
    %5439 = vmatpush1.msra.mxu0 0.0
    %5440 = vmatprep.subr.mxu0 0.0
    %5441 = vmatpush1.msra.mxu0 0.0
    %5442 = vmatprep.subr.mxu0 0.0
    %5443 = vmatpush1.msra.mxu0 0.0
    %5444 = vmatprep.mubr.f32.mxu0 0.0
    %5445 = vmatmul.mubr.f32.gmra.mrb[0].mxu0 %v5378
    %v5446 = vpop.f32.mrb[0].mxu0
    %v5447 = vadd.f32 0.0, %v5446
    %v5448 = vpop.f32.mrb[0].mxu0
    %5449 = vdwg.mxu0
    %v5450 = vadd.f32 %v5376, %v5447
    %5451 = vmatprep.subr.mxu0 0.0
    %5452 = vmatpush1.msra.mxu0 %v50
    %5453 = vmatprep.subr.mxu0 0.0
    %5454 = vmatpush1.msra.mxu0 %v51
    %5455 = vmatprep.subr.mxu0 0.0
    %5456 = vmatpush1.msra.mxu0 %v52
    %5457 = vmatprep.subr.mxu0 0.0
    %5458 = vmatpush1.msra.mxu0 %v53
    %5459 = vmatprep.subr.mxu0 0.0
    %5460 = vmatpush1.msra.mxu0 0.0
    %5461 = vmatprep.subr.mxu0 0.0
    %5462 = vmatpush1.msra.mxu0 0.0
    %5463 = vmatprep.subr.mxu0 0.0
    %5464 = vmatpush1.msra.mxu0 0.0
    %5465 = vmatprep.subr.mxu0 0.0
    %5466 = vmatpush1.msra.mxu0 0.0
    %5467 = vmatprep.subr.mxu0 0.0
    %5468 = vmatpush1.msra.mxu0 0.0
    %5469 = vmatprep.subr.mxu0 0.0
    %5470 = vmatpush1.msra.mxu0 0.0
    %5471 = vmatprep.subr.mxu0 0.0
    %5472 = vmatpush1.msra.mxu0 0.0
    %5473 = vmatprep.subr.mxu0 0.0
    %5474 = vmatpush1.msra.mxu0 0.0
    %5475 = vmatprep.subr.mxu0 0.0
    %5476 = vmatpush1.msra.mxu0 0.0
    %5477 = vmatprep.subr.mxu0 0.0
    %5478 = vmatpush1.msra.mxu0 0.0
    %5479 = vmatprep.subr.mxu0 0.0
    %5480 = vmatpush1.msra.mxu0 0.0
    %5481 = vmatprep.subr.mxu0 0.0
    %5482 = vmatpush1.msra.mxu0 0.0
    %5483 = vmatprep.subr.mxu0 0.0
    %5484 = vmatpush1.msra.mxu0 0.0
    %5485 = vmatprep.subr.mxu0 0.0
    %5486 = vmatpush1.msra.mxu0 0.0
    %5487 = vmatprep.subr.mxu0 0.0
    %5488 = vmatpush1.msra.mxu0 0.0
    %5489 = vmatprep.subr.mxu0 0.0
    %5490 = vmatpush1.msra.mxu0 0.0
    %5491 = vmatprep.subr.mxu0 0.0
    %5492 = vmatpush1.msra.mxu0 0.0
    %5493 = vmatprep.subr.mxu0 0.0
    %5494 = vmatpush1.msra.mxu0 0.0
    %5495 = vmatprep.subr.mxu0 0.0
    %5496 = vmatpush1.msra.mxu0 0.0
    %5497 = vmatprep.subr.mxu0 0.0
    %5498 = vmatpush1.msra.mxu0 0.0
    %5499 = vmatprep.subr.mxu0 0.0
    %5500 = vmatpush1.msra.mxu0 0.0
    %5501 = vmatprep.subr.mxu0 0.0
    %5502 = vmatpush1.msra.mxu0 0.0
    %5503 = vmatprep.subr.mxu0 0.0
    %5504 = vmatpush1.msra.mxu0 0.0
    %5505 = vmatprep.subr.mxu0 0.0
    %5506 = vmatpush1.msra.mxu0 0.0
    %5507 = vmatprep.subr.mxu0 0.0
    %5508 = vmatpush1.msra.mxu0 0.0
    %5509 = vmatprep.subr.mxu0 0.0
    %5510 = vmatpush1.msra.mxu0 0.0
    %5511 = vmatprep.subr.mxu0 0.0
    %5512 = vmatpush1.msra.mxu0 0.0
    %5513 = vmatprep.subr.mxu0 0.0
    %5514 = vmatpush1.msra.mxu0 0.0
    %5515 = vmatprep.mubr.f32.mxu0 0.0
    %5516 = vmatmul.mubr.f32.gmra.mrb[0].mxu0 %v4674
    %v5517 = vpop.f32.mrb[0].mxu0
    %v5518 = vadd.f32 0.0, %v5517
    %v5519 = vpop.f32.mrb[0].mxu0
    %5520 = vdwg.mxu0
    %v5521 = vadd.f32 %v5450, %v5518
    %v5522 = vxor.u32 %v5521, 2147483648
    %v5523 = vmul.f32 %v5522, 1.442695
    %v5524 = vpow.pop %v5523
    %v5525 = vadd.f32 %v5524, 1.0
    %v5526 = vrcp.pop %v5525
    %v5527 = vmul.f32 1.0, %v5526
    %v5528 = vtanh.pop %v5521
    %v5529 = vmul.f32 %v5527, %v4664
    %5531 = vrot.lane.b32.xlu0 %v5528, 64
    %v5532 = vpop.permute.xlu0 %5531
    %v5534 = vmul.f32 %v5527, %v5532
    %5536 = vrot.lane.b32.xlu0 %v5534, 32
    %v5537 = vpop.permute.xlu0 %5536
    %v5539 = vadd.f32 %v5529, %v5537
    %v5540 = vtanh.pop %v5539
    %5542 = vrot.lane.b32.xlu0 %v5540, 64
    %v5543 = vpop.permute.xlu0 %5542
    %v5545 = vmul.f32 %v5527, %v5543
    %5547 = vrot.lane.b32.xlu0 %v5545, 32
    %v5548 = vpop.permute.xlu0 %5547
    %v5549 = vsel %vm171, %v5548, 0
    %5551 = vmatprep.subr.mxu0 0.0
    %5552 = vmatpush1.msra.mxu0 %v46
    %5553 = vmatprep.subr.mxu0 0.0
    %5554 = vmatpush1.msra.mxu0 %v47
    %5555 = vmatprep.subr.mxu0 0.0
    %5556 = vmatpush1.msra.mxu0 %v48
    %5557 = vmatprep.subr.mxu0 0.0
    %5558 = vmatpush1.msra.mxu0 %v49
    %5559 = vmatprep.subr.mxu0 0.0
    %5560 = vmatpush1.msra.mxu0 0.0
    %5561 = vmatprep.subr.mxu0 0.0
    %5562 = vmatpush1.msra.mxu0 0.0
    %5563 = vmatprep.subr.mxu0 0.0
    %5564 = vmatpush1.msra.mxu0 0.0
    %5565 = vmatprep.subr.mxu0 0.0
    %5566 = vmatpush1.msra.mxu0 0.0
    %5567 = vmatprep.subr.mxu0 0.0
    %5568 = vmatpush1.msra.mxu0 0.0
    %5569 = vmatprep.subr.mxu0 0.0
    %5570 = vmatpush1.msra.mxu0 0.0
    %5571 = vmatprep.subr.mxu0 0.0
    %5572 = vmatpush1.msra.mxu0 0.0
    %5573 = vmatprep.subr.mxu0 0.0
    %5574 = vmatpush1.msra.mxu0 0.0
    %5575 = vmatprep.subr.mxu0 0.0
    %5576 = vmatpush1.msra.mxu0 0.0
    %5577 = vmatprep.subr.mxu0 0.0
    %5578 = vmatpush1.msra.mxu0 0.0
    %5579 = vmatprep.subr.mxu0 0.0
    %5580 = vmatpush1.msra.mxu0 0.0
    %5581 = vmatprep.subr.mxu0 0.0
    %5582 = vmatpush1.msra.mxu0 0.0
    %5583 = vmatprep.subr.mxu0 0.0
    %5584 = vmatpush1.msra.mxu0 0.0
    %5585 = vmatprep.subr.mxu0 0.0
    %5586 = vmatpush1.msra.mxu0 0.0
    %5587 = vmatprep.subr.mxu0 0.0
    %5588 = vmatpush1.msra.mxu0 0.0
    %5589 = vmatprep.subr.mxu0 0.0
    %5590 = vmatpush1.msra.mxu0 0.0
    %5591 = vmatprep.subr.mxu0 0.0
    %5592 = vmatpush1.msra.mxu0 0.0
    %5593 = vmatprep.subr.mxu0 0.0
    %5594 = vmatpush1.msra.mxu0 0.0
    %5595 = vmatprep.subr.mxu0 0.0
    %5596 = vmatpush1.msra.mxu0 0.0
    %5597 = vmatprep.subr.mxu0 0.0
    %5598 = vmatpush1.msra.mxu0 0.0
    %5599 = vmatprep.subr.mxu0 0.0
    %5600 = vmatpush1.msra.mxu0 0.0
    %5601 = vmatprep.subr.mxu0 0.0
    %5602 = vmatpush1.msra.mxu0 0.0
    %5603 = vmatprep.subr.mxu0 0.0
    %5604 = vmatpush1.msra.mxu0 0.0
    %5605 = vmatprep.subr.mxu0 0.0
    %5606 = vmatpush1.msra.mxu0 0.0
    %5607 = vmatprep.subr.mxu0 0.0
    %5608 = vmatpush1.msra.mxu0 0.0
    %5609 = vmatprep.subr.mxu0 0.0
    %5610 = vmatpush1.msra.mxu0 0.0
    %5611 = vmatprep.subr.mxu0 0.0
    %5612 = vmatpush1.msra.mxu0 0.0
    %5613 = vmatprep.subr.mxu0 0.0
    %5614 = vmatpush1.msra.mxu0 0.0
    %5615 = vmatprep.mubr.f32.mxu0 0.0
    %5616 = vmatmul.mubr.f32.gmra.mrb[0].mxu0 %v5549
    %v5617 = vpop.f32.mrb[0].mxu0
    %v5618 = vadd.f32 %v277, %v5617
    %v5619 = vpop.f32.mrb[0].mxu0
    %5620 = vdwg.mxu0
    %5621 = vmatprep.subr.mxu0 0.0
    %5622 = vmatpush1.msra.mxu0 %v54
    %5623 = vmatprep.subr.mxu0 0.0
    %5624 = vmatpush1.msra.mxu0 %v55
    %5625 = vmatprep.subr.mxu0 0.0
    %5626 = vmatpush1.msra.mxu0 %v56
    %5627 = vmatprep.subr.mxu0 0.0
    %5628 = vmatpush1.msra.mxu0 %v57
    %5629 = vmatprep.subr.mxu0 0.0
    %5630 = vmatpush1.msra.mxu0 0.0
    %5631 = vmatprep.subr.mxu0 0.0
    %5632 = vmatpush1.msra.mxu0 0.0
    %5633 = vmatprep.subr.mxu0 0.0
    %5634 = vmatpush1.msra.mxu0 0.0
    %5635 = vmatprep.subr.mxu0 0.0
    %5636 = vmatpush1.msra.mxu0 0.0
    %5637 = vmatprep.subr.mxu0 0.0
    %5638 = vmatpush1.msra.mxu0 0.0
    %5639 = vmatprep.subr.mxu0 0.0
    %5640 = vmatpush1.msra.mxu0 0.0
    %5641 = vmatprep.subr.mxu0 0.0
    %5642 = vmatpush1.msra.mxu0 0.0
    %5643 = vmatprep.subr.mxu0 0.0
    %5644 = vmatpush1.msra.mxu0 0.0
    %5645 = vmatprep.subr.mxu0 0.0
    %5646 = vmatpush1.msra.mxu0 0.0
    %5647 = vmatprep.subr.mxu0 0.0
    %5648 = vmatpush1.msra.mxu0 0.0
    %5649 = vmatprep.subr.mxu0 0.0
    %5650 = vmatpush1.msra.mxu0 0.0
    %5651 = vmatprep.subr.mxu0 0.0
    %5652 = vmatpush1.msra.mxu0 0.0
    %5653 = vmatprep.subr.mxu0 0.0
    %5654 = vmatpush1.msra.mxu0 0.0
    %5655 = vmatprep.subr.mxu0 0.0
    %5656 = vmatpush1.msra.mxu0 0.0
    %5657 = vmatprep.subr.mxu0 0.0
    %5658 = vmatpush1.msra.mxu0 0.0
    %5659 = vmatprep.subr.mxu0 0.0
    %5660 = vmatpush1.msra.mxu0 0.0
    %5661 = vmatprep.subr.mxu0 0.0
    %5662 = vmatpush1.msra.mxu0 0.0
    %5663 = vmatprep.subr.mxu0 0.0
    %5664 = vmatpush1.msra.mxu0 0.0
    %5665 = vmatprep.subr.mxu0 0.0
    %5666 = vmatpush1.msra.mxu0 0.0
    %5667 = vmatprep.subr.mxu0 0.0
    %5668 = vmatpush1.msra.mxu0 0.0
    %5669 = vmatprep.subr.mxu0 0.0
    %5670 = vmatpush1.msra.mxu0 0.0
    %5671 = vmatprep.subr.mxu0 0.0
    %5672 = vmatpush1.msra.mxu0 0.0
    %5673 = vmatprep.subr.mxu0 0.0
    %5674 = vmatpush1.msra.mxu0 0.0
    %5675 = vmatprep.subr.mxu0 0.0
    %5676 = vmatpush1.msra.mxu0 0.0
    %5677 = vmatprep.subr.mxu0 0.0
    %5678 = vmatpush1.msra.mxu0 0.0
    %5679 = vmatprep.subr.mxu0 0.0
    %5680 = vmatpush1.msra.mxu0 0.0
    %5681 = vmatprep.subr.mxu0 0.0
    %5682 = vmatpush1.msra.mxu0 0.0
    %5683 = vmatprep.subr.mxu0 0.0
    %5684 = vmatpush1.msra.mxu0 0.0
    %5685 = vmatprep.mubr.f32.mxu0 0.0
    %5686 = vmatmul.mubr.f32.gmra.mrb[0].mxu0 %v4844
    %v5687 = vpop.f32.mrb[0].mxu0
    %v5688 = vadd.f32 0.0, %v5687
    %v5689 = vpop.f32.mrb[0].mxu0
    %5690 = vdwg.mxu0
    %v5691 = vadd.f32 %v5618, %v5688
    %v5692 = vxor.u32 %v5691, 2147483648
    %v5693 = vmul.f32 %v5692, 1.442695
    %v5694 = vpow.pop %v5693
    %v5695 = vadd.f32 %v5694, 1.0
    %v5696 = vrcp.pop %v5695
    %v5697 = vmul.f32 1.0, %v5696
    %v5698 = vtanh.pop %v5691
    %v5699 = vmul.f32 %v5697, %v4834
    %5701 = vrot.lane.b32.xlu0 %v5698, 64
    %v5702 = vpop.permute.xlu0 %5701
    %v5704 = vmul.f32 %v5697, %v5702
    %5706 = vrot.lane.b32.xlu0 %v5704, 32
    %v5707 = vpop.permute.xlu0 %5706
    %v5709 = vadd.f32 %v5699, %v5707
    %v5710 = vtanh.pop %v5709
    %5712 = vrot.lane.b32.xlu0 %v5710, 64
    %v5713 = vpop.permute.xlu0 %5712
    %v5715 = vmul.f32 %v5697, %v5713
    %5717 = vrot.lane.b32.xlu0 %v5715, 32
    %v5718 = vpop.permute.xlu0 %5717
    %v5719 = vsel %vm171, %v5718, 0
    %5721 = vmatprep.subr.mxu0 0.0
    %5722 = vmatpush1.msra.mxu0 %v79
    %5723 = vmatprep.subr.mxu0 0.0
    %5724 = vmatpush1.msra.mxu0 %v80
    %5725 = vmatprep.subr.mxu0 0.0
    %5726 = vmatpush1.msra.mxu0 %v81
    %5727 = vmatprep.subr.mxu0 0.0
    %5728 = vmatpush1.msra.mxu0 %v82
    %5729 = vmatprep.subr.mxu0 0.0
    %5730 = vmatpush1.msra.mxu0 0.0
    %5731 = vmatprep.subr.mxu0 0.0
    %5732 = vmatpush1.msra.mxu0 0.0
    %5733 = vmatprep.subr.mxu0 0.0
    %5734 = vmatpush1.msra.mxu0 0.0
    %5735 = vmatprep.subr.mxu0 0.0
    %5736 = vmatpush1.msra.mxu0 0.0
    %5737 = vmatprep.subr.mxu0 0.0
    %5738 = vmatpush1.msra.mxu0 0.0
    %5739 = vmatprep.subr.mxu0 0.0
    %5740 = vmatpush1.msra.mxu0 0.0
    %5741 = vmatprep.subr.mxu0 0.0
    %5742 = vmatpush1.msra.mxu0 0.0
    %5743 = vmatprep.subr.mxu0 0.0
    %5744 = vmatpush1.msra.mxu0 0.0
    %5745 = vmatprep.subr.mxu0 0.0
    %5746 = vmatpush1.msra.mxu0 0.0
    %5747 = vmatprep.subr.mxu0 0.0
    %5748 = vmatpush1.msra.mxu0 0.0
    %5749 = vmatprep.subr.mxu0 0.0
    %5750 = vmatpush1.msra.mxu0 0.0
    %5751 = vmatprep.subr.mxu0 0.0
    %5752 = vmatpush1.msra.mxu0 0.0
    %5753 = vmatprep.subr.mxu0 0.0
    %5754 = vmatpush1.msra.mxu0 0.0
    %5755 = vmatprep.subr.mxu0 0.0
    %5756 = vmatpush1.msra.mxu0 0.0
    %5757 = vmatprep.subr.mxu0 0.0
    %5758 = vmatpush1.msra.mxu0 0.0
    %5759 = vmatprep.subr.mxu0 0.0
    %5760 = vmatpush1.msra.mxu0 0.0
    %5761 = vmatprep.subr.mxu0 0.0
    %5762 = vmatpush1.msra.mxu0 0.0
    %5763 = vmatprep.subr.mxu0 0.0
    %5764 = vmatpush1.msra.mxu0 0.0
    %5765 = vmatprep.subr.mxu0 0.0
    %5766 = vmatpush1.msra.mxu0 0.0
    %5767 = vmatprep.subr.mxu0 0.0
    %5768 = vmatpush1.msra.mxu0 0.0
    %5769 = vmatprep.subr.mxu0 0.0
    %5770 = vmatpush1.msra.mxu0 0.0
    %5771 = vmatprep.subr.mxu0 0.0
    %5772 = vmatpush1.msra.mxu0 0.0
    %5773 = vmatprep.subr.mxu0 0.0
    %5774 = vmatpush1.msra.mxu0 0.0
    %5775 = vmatprep.subr.mxu0 0.0
    %5776 = vmatpush1.msra.mxu0 0.0
    %5777 = vmatprep.subr.mxu0 0.0
    %5778 = vmatpush1.msra.mxu0 0.0
    %5779 = vmatprep.subr.mxu0 0.0
    %5780 = vmatpush1.msra.mxu0 0.0
    %5781 = vmatprep.subr.mxu0 0.0
    %5782 = vmatpush1.msra.mxu0 0.0
    %5783 = vmatprep.subr.mxu0 0.0
    %5784 = vmatpush1.msra.mxu0 0.0
    %5785 = vmatprep.mubr.f32.mxu0 0.0
    %5786 = vmatmul.mubr.f32.gmra.mrb[0].mxu0 %v5719
    %v5787 = vpop.f32.mrb[0].mxu0
    %v5788 = vadd.f32 0.0, %v5787
    %v5789 = vpop.f32.mrb[0].mxu0
    %5790 = vdwg.mxu0
    %v5791 = vrot.slane %v5715, 1
    %5792 = vrot.lane.b32.xlu0 %v5791, 32
    %v5793 = vpop.permute.xlu0 %5792
    %v5794 = vsel %vm171, %v5793, 0
    %5796 = vmatprep.subr.mxu0 0.0
    %5797 = vmatpush1.msra.mxu0 %v84
    %5798 = vmatprep.subr.mxu0 0.0
    %5799 = vmatpush1.msra.mxu0 %v85
    %5800 = vmatprep.subr.mxu0 0.0
    %5801 = vmatpush1.msra.mxu0 %v86
    %5802 = vmatprep.subr.mxu0 0.0
    %5803 = vmatpush1.msra.mxu0 %v87
    %5804 = vmatprep.subr.mxu0 0.0
    %5805 = vmatpush1.msra.mxu0 0.0
    %5806 = vmatprep.subr.mxu0 0.0
    %5807 = vmatpush1.msra.mxu0 0.0
    %5808 = vmatprep.subr.mxu0 0.0
    %5809 = vmatpush1.msra.mxu0 0.0
    %5810 = vmatprep.subr.mxu0 0.0
    %5811 = vmatpush1.msra.mxu0 0.0
    %5812 = vmatprep.subr.mxu0 0.0
    %5813 = vmatpush1.msra.mxu0 0.0
    %5814 = vmatprep.subr.mxu0 0.0
    %5815 = vmatpush1.msra.mxu0 0.0
    %5816 = vmatprep.subr.mxu0 0.0
    %5817 = vmatpush1.msra.mxu0 0.0
    %5818 = vmatprep.subr.mxu0 0.0
    %5819 = vmatpush1.msra.mxu0 0.0
    %5820 = vmatprep.subr.mxu0 0.0
    %5821 = vmatpush1.msra.mxu0 0.0
    %5822 = vmatprep.subr.mxu0 0.0
    %5823 = vmatpush1.msra.mxu0 0.0
    %5824 = vmatprep.subr.mxu0 0.0
    %5825 = vmatpush1.msra.mxu0 0.0
    %5826 = vmatprep.subr.mxu0 0.0
    %5827 = vmatpush1.msra.mxu0 0.0
    %5828 = vmatprep.subr.mxu0 0.0
    %5829 = vmatpush1.msra.mxu0 0.0
    %5830 = vmatprep.subr.mxu0 0.0
    %5831 = vmatpush1.msra.mxu0 0.0
    %5832 = vmatprep.subr.mxu0 0.0
    %5833 = vmatpush1.msra.mxu0 0.0
    %5834 = vmatprep.subr.mxu0 0.0
    %5835 = vmatpush1.msra.mxu0 0.0
    %5836 = vmatprep.subr.mxu0 0.0
    %5837 = vmatpush1.msra.mxu0 0.0
    %5838 = vmatprep.subr.mxu0 0.0
    %5839 = vmatpush1.msra.mxu0 0.0
    %5840 = vmatprep.subr.mxu0 0.0
    %5841 = vmatpush1.msra.mxu0 0.0
    %5842 = vmatprep.subr.mxu0 0.0
    %5843 = vmatpush1.msra.mxu0 0.0
    %5844 = vmatprep.subr.mxu0 0.0
    %5845 = vmatpush1.msra.mxu0 0.0
    %5846 = vmatprep.subr.mxu0 0.0
    %5847 = vmatpush1.msra.mxu0 0.0
    %5848 = vmatprep.subr.mxu0 0.0
    %5849 = vmatpush1.msra.mxu0 0.0
    %5850 = vmatprep.subr.mxu0 0.0
    %5851 = vmatpush1.msra.mxu0 0.0
    %5852 = vmatprep.subr.mxu0 0.0
    %5853 = vmatpush1.msra.mxu0 0.0
    %5854 = vmatprep.subr.mxu0 0.0
    %5855 = vmatpush1.msra.mxu0 0.0
    %5856 = vmatprep.subr.mxu0 0.0
    %5857 = vmatpush1.msra.mxu0 0.0
    %5858 = vmatprep.subr.mxu0 0.0
    %5859 = vmatpush1.msra.mxu0 0.0
    %5860 = vmatprep.mubr.f32.mxu0 0.0
    %5861 = vmatmul.mubr.f32.gmra.mrb[0].mxu0 %v5794
    %v5862 = vpop.f32.mrb[0].mxu0
    %v5863 = vadd.f32 0.0, %v5862
    %v5864 = vpop.f32.mrb[0].mxu0
    %5865 = vdwg.mxu0
    %v5867 = vrot.slane %v5863, 7
    %v5869 = vsel %vm608, %v5788, %v5867
    %v5870 = vadd.f32 %v5869, %v75
    %v5871 = vsel %vm611, %v5870, -inf
    %5872 = vmax.xlane.f32.xlu0 %v5871
    %v5873 = vpop.xlane.xlu0 %5872
    %v5874 = vsub.f32 %v5870, %v5873
    %v5875 = vmul.f32 %v5874, 1.442695
    %v5876 = vpow.pop %v5875
    %v5877 = vsel %vm611, %v5876, 0.0
    %5878 = vadd.xlane.f32.xlu0 %v5877
    %v5879 = vpop.xlane.xlu0 %5878
    %v5880 = vrcp.pop %v5879
    %v5881 = vmul.f32 %v5876, %v5880
    %v5883 = vsel %vm623, %v5881, 0
    %5885 = vmatprep.subr.mxu0 0.0
    %5886 = vmatpush1.msra.mxu0 %v76
    %5887 = vmatprep.subr.mxu0 0.0
    %5888 = vmatpush1.msra.mxu0 0.0
    %5889 = vmatprep.subr.mxu0 0.0
    %5890 = vmatpush1.msra.mxu0 0.0
    %5891 = vmatprep.subr.mxu0 0.0
    %5892 = vmatpush1.msra.mxu0 0.0
    %5893 = vmatprep.subr.mxu0 0.0
    %5894 = vmatpush1.msra.mxu0 0.0
    %5895 = vmatprep.subr.mxu0 0.0
    %5896 = vmatpush1.msra.mxu0 0.0
    %5897 = vmatprep.subr.mxu0 0.0
    %5898 = vmatpush1.msra.mxu0 0.0
    %5899 = vmatprep.subr.mxu0 0.0
    %5900 = vmatpush1.msra.mxu0 0.0
    %5901 = vmatprep.subr.mxu0 0.0
    %5902 = vmatpush1.msra.mxu0 0.0
    %5903 = vmatprep.subr.mxu0 0.0
    %5904 = vmatpush1.msra.mxu0 0.0
    %5905 = vmatprep.subr.mxu0 0.0
    %5906 = vmatpush1.msra.mxu0 0.0
    %5907 = vmatprep.subr.mxu0 0.0
    %5908 = vmatpush1.msra.mxu0 0.0
    %5909 = vmatprep.subr.mxu0 0.0
    %5910 = vmatpush1.msra.mxu0 0.0
    %5911 = vmatprep.subr.mxu0 0.0
    %5912 = vmatpush1.msra.mxu0 0.0
    %5913 = vmatprep.subr.mxu0 0.0
    %5914 = vmatpush1.msra.mxu0 0.0
    %5915 = vmatprep.subr.mxu0 0.0
    %5916 = vmatpush1.msra.mxu0 0.0
    %5917 = vmatprep.subr.mxu0 0.0
    %5918 = vmatpush1.msra.mxu0 0.0
    %5919 = vmatprep.subr.mxu0 0.0
    %5920 = vmatpush1.msra.mxu0 0.0
    %5921 = vmatprep.subr.mxu0 0.0
    %5922 = vmatpush1.msra.mxu0 0.0
    %5923 = vmatprep.subr.mxu0 0.0
    %5924 = vmatpush1.msra.mxu0 0.0
    %5925 = vmatprep.subr.mxu0 0.0
    %5926 = vmatpush1.msra.mxu0 0.0
    %5927 = vmatprep.subr.mxu0 0.0
    %5928 = vmatpush1.msra.mxu0 0.0
    %5929 = vmatprep.subr.mxu0 0.0
    %5930 = vmatpush1.msra.mxu0 0.0
    %5931 = vmatprep.subr.mxu0 0.0
    %5932 = vmatpush1.msra.mxu0 0.0
    %5933 = vmatprep.subr.mxu0 0.0
    %5934 = vmatpush1.msra.mxu0 0.0
    %5935 = vmatprep.subr.mxu0 0.0
    %5936 = vmatpush1.msra.mxu0 0.0
    %5937 = vmatprep.subr.mxu0 0.0
    %5938 = vmatpush1.msra.mxu0 0.0
    %5939 = vmatprep.subr.mxu0 0.0
    %5940 = vmatpush1.msra.mxu0 0.0
    %5941 = vmatprep.subr.mxu0 0.0
    %5942 = vmatpush1.msra.mxu0 0.0
    %5943 = vmatprep.subr.mxu0 0.0
    %5944 = vmatpush1.msra.mxu0 0.0
    %5945 = vmatprep.subr.mxu0 0.0
    %5946 = vmatpush1.msra.mxu0 0.0
    %5947 = vmatprep.subr.mxu0 0.0
    %5948 = vmatpush1.msra.mxu0 0.0
    %5949 = vmatprep.mubr.f32.mxu0 0.0
    %5950 = vmatmul.mubr.f32.gmra.mrb[0].mxu0 %v5883
    %v5951 = vpop.f32.mrb[0].mxu0
    %v5952 = vadd.f32 0.0, %v5951
    %v5953 = vpop.f32.mrb[0].mxu0
    %5954 = vdwg.mxu0
    %v5955 = vrot.slane %v5881, 1
    %v5956 = vsel %vm623, %v5955, 0
    %5958 = vmatprep.subr.mxu0 0.0
    %5959 = vmatpush1.msra.mxu0 %v78
    %5960 = vmatprep.subr.mxu0 0.0
    %5961 = vmatpush1.msra.mxu0 0.0
    %5962 = vmatprep.subr.mxu0 0.0
    %5963 = vmatpush1.msra.mxu0 0.0
    %5964 = vmatprep.subr.mxu0 0.0
    %5965 = vmatpush1.msra.mxu0 0.0
    %5966 = vmatprep.subr.mxu0 0.0
    %5967 = vmatpush1.msra.mxu0 0.0
    %5968 = vmatprep.subr.mxu0 0.0
    %5969 = vmatpush1.msra.mxu0 0.0
    %5970 = vmatprep.subr.mxu0 0.0
    %5971 = vmatpush1.msra.mxu0 0.0
    %5972 = vmatprep.subr.mxu0 0.0
    %5973 = vmatpush1.msra.mxu0 0.0
    %5974 = vmatprep.subr.mxu0 0.0
    %5975 = vmatpush1.msra.mxu0 0.0
    %5976 = vmatprep.subr.mxu0 0.0
    %5977 = vmatpush1.msra.mxu0 0.0
    %5978 = vmatprep.subr.mxu0 0.0
    %5979 = vmatpush1.msra.mxu0 0.0
    %5980 = vmatprep.subr.mxu0 0.0
    %5981 = vmatpush1.msra.mxu0 0.0
    %5982 = vmatprep.subr.mxu0 0.0
    %5983 = vmatpush1.msra.mxu0 0.0
    %5984 = vmatprep.subr.mxu0 0.0
    %5985 = vmatpush1.msra.mxu0 0.0
    %5986 = vmatprep.subr.mxu0 0.0
    %5987 = vmatpush1.msra.mxu0 0.0
    %5988 = vmatprep.subr.mxu0 0.0
    %5989 = vmatpush1.msra.mxu0 0.0
    %5990 = vmatprep.subr.mxu0 0.0
    %5991 = vmatpush1.msra.mxu0 0.0
    %5992 = vmatprep.subr.mxu0 0.0
    %5993 = vmatpush1.msra.mxu0 0.0
    %5994 = vmatprep.subr.mxu0 0.0
    %5995 = vmatpush1.msra.mxu0 0.0
    %5996 = vmatprep.subr.mxu0 0.0
    %5997 = vmatpush1.msra.mxu0 0.0
    %5998 = vmatprep.subr.mxu0 0.0
    %5999 = vmatpush1.msra.mxu0 0.0
    %6000 = vmatprep.subr.mxu0 0.0
    %6001 = vmatpush1.msra.mxu0 0.0
    %6002 = vmatprep.subr.mxu0 0.0
    %6003 = vmatpush1.msra.mxu0 0.0
    %6004 = vmatprep.subr.mxu0 0.0
    %6005 = vmatpush1.msra.mxu0 0.0
    %6006 = vmatprep.subr.mxu0 0.0
    %6007 = vmatpush1.msra.mxu0 0.0
    %6008 = vmatprep.subr.mxu0 0.0
    %6009 = vmatpush1.msra.mxu0 0.0
    %6010 = vmatprep.subr.mxu0 0.0
    %6011 = vmatpush1.msra.mxu0 0.0
    %6012 = vmatprep.subr.mxu0 0.0
    %6013 = vmatpush1.msra.mxu0 0.0
    %6014 = vmatprep.subr.mxu0 0.0
    %6015 = vmatpush1.msra.mxu0 0.0
    %6016 = vmatprep.subr.mxu0 0.0
    %6017 = vmatpush1.msra.mxu0 0.0
    %6018 = vmatprep.subr.mxu0 0.0
    %6019 = vmatpush1.msra.mxu0 0.0
    %6020 = vmatprep.subr.mxu0 0.0
    %6021 = vmatpush1.msra.mxu0 0.0
    %6022 = vmatprep.mubr.f32.mxu0 0.0
    %6023 = vmatmul.mubr.f32.gmra.mrb[0].mxu0 %v5956
    %v6024 = vpop.f32.mrb[0].mxu0
    %v6025 = vadd.f32 0.0, %v6024
    %v6026 = vpop.f32.mrb[0].mxu0
    %6027 = vdwg.mxu0
    %v6029 = vrot.slane %v6025, 7
    %v6031 = vsel %vm608, %v5952, %v6029
    %v6033 = vsel %vm171, %v6031, 0
    %6035 = vmatprep.subr.mxu0 0.0
    %6036 = vmatpush1.msra.mxu0 %v63
    %6037 = vmatprep.subr.mxu0 0.0
    %6038 = vmatpush1.msra.mxu0 %v64
    %6039 = vmatprep.subr.mxu0 0.0
    %6040 = vmatpush1.msra.mxu0 %v65
    %6041 = vmatprep.subr.mxu0 0.0
    %6042 = vmatpush1.msra.mxu0 %v66
    %6043 = vmatprep.subr.mxu0 0.0
    %6044 = vmatpush1.msra.mxu0 0.0
    %6045 = vmatprep.subr.mxu0 0.0
    %6046 = vmatpush1.msra.mxu0 0.0
    %6047 = vmatprep.subr.mxu0 0.0
    %6048 = vmatpush1.msra.mxu0 0.0
    %6049 = vmatprep.subr.mxu0 0.0
    %6050 = vmatpush1.msra.mxu0 0.0
    %6051 = vmatprep.subr.mxu0 0.0
    %6052 = vmatpush1.msra.mxu0 0.0
    %6053 = vmatprep.subr.mxu0 0.0
    %6054 = vmatpush1.msra.mxu0 0.0
    %6055 = vmatprep.subr.mxu0 0.0
    %6056 = vmatpush1.msra.mxu0 0.0
    %6057 = vmatprep.subr.mxu0 0.0
    %6058 = vmatpush1.msra.mxu0 0.0
    %6059 = vmatprep.subr.mxu0 0.0
    %6060 = vmatpush1.msra.mxu0 0.0
    %6061 = vmatprep.subr.mxu0 0.0
    %6062 = vmatpush1.msra.mxu0 0.0
    %6063 = vmatprep.subr.mxu0 0.0
    %6064 = vmatpush1.msra.mxu0 0.0
    %6065 = vmatprep.subr.mxu0 0.0
    %6066 = vmatpush1.msra.mxu0 0.0
    %6067 = vmatprep.subr.mxu0 0.0
    %6068 = vmatpush1.msra.mxu0 0.0
    %6069 = vmatprep.subr.mxu0 0.0
    %6070 = vmatpush1.msra.mxu0 0.0
    %6071 = vmatprep.subr.mxu0 0.0
    %6072 = vmatpush1.msra.mxu0 0.0
    %6073 = vmatprep.subr.mxu0 0.0
    %6074 = vmatpush1.msra.mxu0 0.0
    %6075 = vmatprep.subr.mxu0 0.0
    %6076 = vmatpush1.msra.mxu0 0.0
    %6077 = vmatprep.subr.mxu0 0.0
    %6078 = vmatpush1.msra.mxu0 0.0
    %6079 = vmatprep.subr.mxu0 0.0
    %6080 = vmatpush1.msra.mxu0 0.0
    %6081 = vmatprep.subr.mxu0 0.0
    %6082 = vmatpush1.msra.mxu0 0.0
    %6083 = vmatprep.subr.mxu0 0.0
    %6084 = vmatpush1.msra.mxu0 0.0
    %6085 = vmatprep.subr.mxu0 0.0
    %6086 = vmatpush1.msra.mxu0 0.0
    %6087 = vmatprep.subr.mxu0 0.0
    %6088 = vmatpush1.msra.mxu0 0.0
    %6089 = vmatprep.subr.mxu0 0.0
    %6090 = vmatpush1.msra.mxu0 0.0
    %6091 = vmatprep.subr.mxu0 0.0
    %6092 = vmatpush1.msra.mxu0 0.0
    %6093 = vmatprep.subr.mxu0 0.0
    %6094 = vmatpush1.msra.mxu0 0.0
    %6095 = vmatprep.subr.mxu0 0.0
    %6096 = vmatpush1.msra.mxu0 0.0
    %6097 = vmatprep.subr.mxu0 0.0
    %6098 = vmatpush1.msra.mxu0 0.0
    %6099 = vmatprep.mubr.f32.mxu0 0.0
    %6100 = vmatmul.mubr.f32.gmra.mrb[0].mxu0 %v6033
    %v6101 = vpop.f32.mrb[0].mxu0
    %v6102 = vadd.f32 0.0, %v6101
    %v6103 = vpop.f32.mrb[0].mxu0
    %6104 = vdwg.mxu0
    %6105 = vmatprep.subr.mxu0 0.0
    %6106 = vmatpush1.msra.mxu0 %v59
    %6107 = vmatprep.subr.mxu0 0.0
    %6108 = vmatpush1.msra.mxu0 %v60
    %6109 = vmatprep.subr.mxu0 0.0
    %6110 = vmatpush1.msra.mxu0 %v61
    %6111 = vmatprep.subr.mxu0 0.0
    %6112 = vmatpush1.msra.mxu0 %v62
    %6113 = vmatprep.subr.mxu0 0.0
    %6114 = vmatpush1.msra.mxu0 0.0
    %6115 = vmatprep.subr.mxu0 0.0
    %6116 = vmatpush1.msra.mxu0 0.0
    %6117 = vmatprep.subr.mxu0 0.0
    %6118 = vmatpush1.msra.mxu0 0.0
    %6119 = vmatprep.subr.mxu0 0.0
    %6120 = vmatpush1.msra.mxu0 0.0
    %6121 = vmatprep.subr.mxu0 0.0
    %6122 = vmatpush1.msra.mxu0 0.0
    %6123 = vmatprep.subr.mxu0 0.0
    %6124 = vmatpush1.msra.mxu0 0.0
    %6125 = vmatprep.subr.mxu0 0.0
    %6126 = vmatpush1.msra.mxu0 0.0
    %6127 = vmatprep.subr.mxu0 0.0
    %6128 = vmatpush1.msra.mxu0 0.0
    %6129 = vmatprep.subr.mxu0 0.0
    %6130 = vmatpush1.msra.mxu0 0.0
    %6131 = vmatprep.subr.mxu0 0.0
    %6132 = vmatpush1.msra.mxu0 0.0
    %6133 = vmatprep.subr.mxu0 0.0
    %6134 = vmatpush1.msra.mxu0 0.0
    %6135 = vmatprep.subr.mxu0 0.0
    %6136 = vmatpush1.msra.mxu0 0.0
    %6137 = vmatprep.subr.mxu0 0.0
    %6138 = vmatpush1.msra.mxu0 0.0
    %6139 = vmatprep.subr.mxu0 0.0
    %6140 = vmatpush1.msra.mxu0 0.0
    %6141 = vmatprep.subr.mxu0 0.0
    %6142 = vmatpush1.msra.mxu0 0.0
    %6143 = vmatprep.subr.mxu0 0.0
    %6144 = vmatpush1.msra.mxu0 0.0
    %6145 = vmatprep.subr.mxu0 0.0
    %6146 = vmatpush1.msra.mxu0 0.0
    %6147 = vmatprep.subr.mxu0 0.0
    %6148 = vmatpush1.msra.mxu0 0.0
    %6149 = vmatprep.subr.mxu0 0.0
    %6150 = vmatpush1.msra.mxu0 0.0
    %6151 = vmatprep.subr.mxu0 0.0
    %6152 = vmatpush1.msra.mxu0 0.0
    %6153 = vmatprep.subr.mxu0 0.0
    %6154 = vmatpush1.msra.mxu0 0.0
    %6155 = vmatprep.subr.mxu0 0.0
    %6156 = vmatpush1.msra.mxu0 0.0
    %6157 = vmatprep.subr.mxu0 0.0
    %6158 = vmatpush1.msra.mxu0 0.0
    %6159 = vmatprep.subr.mxu0 0.0
    %6160 = vmatpush1.msra.mxu0 0.0
    %6161 = vmatprep.subr.mxu0 0.0
    %6162 = vmatpush1.msra.mxu0 0.0
    %6163 = vmatprep.subr.mxu0 0.0
    %6164 = vmatpush1.msra.mxu0 0.0
    %6165 = vmatprep.subr.mxu0 0.0
    %6166 = vmatpush1.msra.mxu0 0.0
    %6167 = vmatprep.subr.mxu0 0.0
    %6168 = vmatpush1.msra.mxu0 0.0
    %6169 = vmatprep.mubr.f32.mxu0 0.0
    %6170 = vmatmul.mubr.f32.gmra.mrb[0].mxu0 %v5719
    %v6171 = vpop.f32.mrb[0].mxu0
    %v6172 = vadd.f32 %v6102, %v6171
    %v6173 = vpop.f32.mrb[0].mxu0
    %6174 = vdwg.mxu0
    %v6175 = vadd.f32 %v6172, %v920
    %v6176 = vtanh.pop %v6175
    %v6178 = vsel %vm171, %v6176, 0
    %6180 = vmatprep.subr.mxu0 0.0
    %6181 = vmatpush1.msra.mxu0 %v68
    %6182 = vmatprep.subr.mxu0 0.0
    %6183 = vmatpush1.msra.mxu0 %v69
    %6184 = vmatprep.subr.mxu0 0.0
    %6185 = vmatpush1.msra.mxu0 %v70
    %6186 = vmatprep.subr.mxu0 0.0
    %6187 = vmatpush1.msra.mxu0 %v71
    %6188 = vmatprep.subr.mxu0 0.0
    %6189 = vmatpush1.msra.mxu0 0.0
    %6190 = vmatprep.subr.mxu0 0.0
    %6191 = vmatpush1.msra.mxu0 0.0
    %6192 = vmatprep.subr.mxu0 0.0
    %6193 = vmatpush1.msra.mxu0 0.0
    %6194 = vmatprep.subr.mxu0 0.0
    %6195 = vmatpush1.msra.mxu0 0.0
    %6196 = vmatprep.subr.mxu0 0.0
    %6197 = vmatpush1.msra.mxu0 0.0
    %6198 = vmatprep.subr.mxu0 0.0
    %6199 = vmatpush1.msra.mxu0 0.0
    %6200 = vmatprep.subr.mxu0 0.0
    %6201 = vmatpush1.msra.mxu0 0.0
    %6202 = vmatprep.subr.mxu0 0.0
    %6203 = vmatpush1.msra.mxu0 0.0
    %6204 = vmatprep.subr.mxu0 0.0
    %6205 = vmatpush1.msra.mxu0 0.0
    %6206 = vmatprep.subr.mxu0 0.0
    %6207 = vmatpush1.msra.mxu0 0.0
    %6208 = vmatprep.subr.mxu0 0.0
    %6209 = vmatpush1.msra.mxu0 0.0
    %6210 = vmatprep.subr.mxu0 0.0
    %6211 = vmatpush1.msra.mxu0 0.0
    %6212 = vmatprep.subr.mxu0 0.0
    %6213 = vmatpush1.msra.mxu0 0.0
    %6214 = vmatprep.subr.mxu0 0.0
    %6215 = vmatpush1.msra.mxu0 0.0
    %6216 = vmatprep.subr.mxu0 0.0
    %6217 = vmatpush1.msra.mxu0 0.0
    %6218 = vmatprep.subr.mxu0 0.0
    %6219 = vmatpush1.msra.mxu0 0.0
    %6220 = vmatprep.subr.mxu0 0.0
    %6221 = vmatpush1.msra.mxu0 0.0
    %6222 = vmatprep.subr.mxu0 0.0
    %6223 = vmatpush1.msra.mxu0 0.0
    %6224 = vmatprep.subr.mxu0 0.0
    %6225 = vmatpush1.msra.mxu0 0.0
    %6226 = vmatprep.subr.mxu0 0.0
    %6227 = vmatpush1.msra.mxu0 0.0
    %6228 = vmatprep.subr.mxu0 0.0
    %6229 = vmatpush1.msra.mxu0 0.0
    %6230 = vmatprep.subr.mxu0 0.0
    %6231 = vmatpush1.msra.mxu0 0.0
    %6232 = vmatprep.subr.mxu0 0.0
    %6233 = vmatpush1.msra.mxu0 0.0
    %6234 = vmatprep.subr.mxu0 0.0
    %6235 = vmatpush1.msra.mxu0 0.0
    %6236 = vmatprep.subr.mxu0 0.0
    %6237 = vmatpush1.msra.mxu0 0.0
    %6238 = vmatprep.subr.mxu0 0.0
    %6239 = vmatpush1.msra.mxu0 0.0
    %6240 = vmatprep.subr.mxu0 0.0
    %6241 = vmatpush1.msra.mxu0 0.0
    %6242 = vmatprep.subr.mxu0 0.0
    %6243 = vmatpush1.msra.mxu0 0.0
    %6244 = vmatprep.mubr.f32.mxu0 0.0
    %6245 = vmatmul.mubr.f32.gmra.mrb[0].mxu0 %v6178
    %v6246 = vpop.f32.mrb[0].mxu0
    %v6247 = vadd.f32 %v926, %v6246
    %v6248 = vpop.f32.mrb[0].mxu0
    %6249 = vdwg.mxu0
    %s6250 = scalar_lea.vmem %s0, 14
    %v6251 = vld [vmem:[%s6250] sm:$0x3]
    %v6253 = vsel %vm96, %v6247, 0
    %6255 = vmatprep.subr.mxu0 0.0
    %6256 = vmatpush1.msra.mxu0 %v44
    %6257 = vmatprep.subr.mxu0 0.0
    %6258 = vmatpush1.msra.mxu0 %v45
    %6259 = vmatprep.subr.mxu0 0.0
    %6260 = vmatpush1.msra.mxu0 0.0
    %6261 = vmatprep.subr.mxu0 0.0
    %6262 = vmatpush1.msra.mxu0 0.0
    %6263 = vmatprep.subr.mxu0 0.0
    %6264 = vmatpush1.msra.mxu0 0.0
    %6265 = vmatprep.subr.mxu0 0.0
    %6266 = vmatpush1.msra.mxu0 0.0
    %6267 = vmatprep.subr.mxu0 0.0
    %6268 = vmatpush1.msra.mxu0 0.0
    %6269 = vmatprep.subr.mxu0 0.0
    %6270 = vmatpush1.msra.mxu0 0.0
    %6271 = vmatprep.subr.mxu0 0.0
    %6272 = vmatpush1.msra.mxu0 0.0
    %6273 = vmatprep.subr.mxu0 0.0
    %6274 = vmatpush1.msra.mxu0 0.0
    %6275 = vmatprep.subr.mxu0 0.0
    %6276 = vmatpush1.msra.mxu0 0.0
    %6277 = vmatprep.subr.mxu0 0.0
    %6278 = vmatpush1.msra.mxu0 0.0
    %6279 = vmatprep.subr.mxu0 0.0
    %6280 = vmatpush1.msra.mxu0 0.0
    %6281 = vmatprep.subr.mxu0 0.0
    %6282 = vmatpush1.msra.mxu0 0.0
    %6283 = vmatprep.subr.mxu0 0.0
    %6284 = vmatpush1.msra.mxu0 0.0
    %6285 = vmatprep.subr.mxu0 0.0
    %6286 = vmatpush1.msra.mxu0 0.0
    %6287 = vmatprep.subr.mxu0 0.0
    %6288 = vmatpush1.msra.mxu0 0.0
    %6289 = vmatprep.subr.mxu0 0.0
    %6290 = vmatpush1.msra.mxu0 0.0
    %6291 = vmatprep.subr.mxu0 0.0
    %6292 = vmatpush1.msra.mxu0 0.0
    %6293 = vmatprep.subr.mxu0 0.0
    %6294 = vmatpush1.msra.mxu0 0.0
    %6295 = vmatprep.subr.mxu0 0.0
    %6296 = vmatpush1.msra.mxu0 0.0
    %6297 = vmatprep.subr.mxu0 0.0
    %6298 = vmatpush1.msra.mxu0 0.0
    %6299 = vmatprep.subr.mxu0 0.0
    %6300 = vmatpush1.msra.mxu0 0.0
    %6301 = vmatprep.subr.mxu0 0.0
    %6302 = vmatpush1.msra.mxu0 0.0
    %6303 = vmatprep.subr.mxu0 0.0
    %6304 = vmatpush1.msra.mxu0 0.0
    %6305 = vmatprep.subr.mxu0 0.0
    %6306 = vmatpush1.msra.mxu0 0.0
    %6307 = vmatprep.subr.mxu0 0.0
    %6308 = vmatpush1.msra.mxu0 0.0
    %6309 = vmatprep.subr.mxu0 0.0
    %6310 = vmatpush1.msra.mxu0 0.0
    %6311 = vmatprep.subr.mxu0 0.0
    %6312 = vmatpush1.msra.mxu0 0.0
    %6313 = vmatprep.subr.mxu0 0.0
    %6314 = vmatpush1.msra.mxu0 0.0
    %6315 = vmatprep.subr.mxu0 0.0
    %6316 = vmatpush1.msra.mxu0 0.0
    %6317 = vmatprep.subr.mxu0 0.0
    %6318 = vmatpush1.msra.mxu0 0.0
    %6319 = vmatprep.mubr.f32.mxu0 0.0
    %6320 = vmatmul.mubr.f32.gmra.mrb[0].mxu0 %v6253
    %v6321 = vpop.f32.mrb[0].mxu0
    %v6322 = vadd.f32 0.0, %v6321
    %v6323 = vpop.f32.mrb[0].mxu0
    %6324 = vdwg.mxu0
    %v6325 = vadd.f32 %v6251, %v6322
    %6326 = vmatprep.subr.mxu0 0.0
    %6327 = vmatpush1.msra.mxu0 %v50
    %6328 = vmatprep.subr.mxu0 0.0
    %6329 = vmatpush1.msra.mxu0 %v51
    %6330 = vmatprep.subr.mxu0 0.0
    %6331 = vmatpush1.msra.mxu0 %v52
    %6332 = vmatprep.subr.mxu0 0.0
    %6333 = vmatpush1.msra.mxu0 %v53
    %6334 = vmatprep.subr.mxu0 0.0
    %6335 = vmatpush1.msra.mxu0 0.0
    %6336 = vmatprep.subr.mxu0 0.0
    %6337 = vmatpush1.msra.mxu0 0.0
    %6338 = vmatprep.subr.mxu0 0.0
    %6339 = vmatpush1.msra.mxu0 0.0
    %6340 = vmatprep.subr.mxu0 0.0
    %6341 = vmatpush1.msra.mxu0 0.0
    %6342 = vmatprep.subr.mxu0 0.0
    %6343 = vmatpush1.msra.mxu0 0.0
    %6344 = vmatprep.subr.mxu0 0.0
    %6345 = vmatpush1.msra.mxu0 0.0
    %6346 = vmatprep.subr.mxu0 0.0
    %6347 = vmatpush1.msra.mxu0 0.0
    %6348 = vmatprep.subr.mxu0 0.0
    %6349 = vmatpush1.msra.mxu0 0.0
    %6350 = vmatprep.subr.mxu0 0.0
    %6351 = vmatpush1.msra.mxu0 0.0
    %6352 = vmatprep.subr.mxu0 0.0
    %6353 = vmatpush1.msra.mxu0 0.0
    %6354 = vmatprep.subr.mxu0 0.0
    %6355 = vmatpush1.msra.mxu0 0.0
    %6356 = vmatprep.subr.mxu0 0.0
    %6357 = vmatpush1.msra.mxu0 0.0
    %6358 = vmatprep.subr.mxu0 0.0
    %6359 = vmatpush1.msra.mxu0 0.0
    %6360 = vmatprep.subr.mxu0 0.0
    %6361 = vmatpush1.msra.mxu0 0.0
    %6362 = vmatprep.subr.mxu0 0.0
    %6363 = vmatpush1.msra.mxu0 0.0
    %6364 = vmatprep.subr.mxu0 0.0
    %6365 = vmatpush1.msra.mxu0 0.0
    %6366 = vmatprep.subr.mxu0 0.0
    %6367 = vmatpush1.msra.mxu0 0.0
    %6368 = vmatprep.subr.mxu0 0.0
    %6369 = vmatpush1.msra.mxu0 0.0
    %6370 = vmatprep.subr.mxu0 0.0
    %6371 = vmatpush1.msra.mxu0 0.0
    %6372 = vmatprep.subr.mxu0 0.0
    %6373 = vmatpush1.msra.mxu0 0.0
    %6374 = vmatprep.subr.mxu0 0.0
    %6375 = vmatpush1.msra.mxu0 0.0
    %6376 = vmatprep.subr.mxu0 0.0
    %6377 = vmatpush1.msra.mxu0 0.0
    %6378 = vmatprep.subr.mxu0 0.0
    %6379 = vmatpush1.msra.mxu0 0.0
    %6380 = vmatprep.subr.mxu0 0.0
    %6381 = vmatpush1.msra.mxu0 0.0
    %6382 = vmatprep.subr.mxu0 0.0
    %6383 = vmatpush1.msra.mxu0 0.0
    %6384 = vmatprep.subr.mxu0 0.0
    %6385 = vmatpush1.msra.mxu0 0.0
    %6386 = vmatprep.subr.mxu0 0.0
    %6387 = vmatpush1.msra.mxu0 0.0
    %6388 = vmatprep.subr.mxu0 0.0
    %6389 = vmatpush1.msra.mxu0 0.0
    %6390 = vmatprep.mubr.f32.mxu0 0.0
    %6391 = vmatmul.mubr.f32.gmra.mrb[0].mxu0 %v5549
    %v6392 = vpop.f32.mrb[0].mxu0
    %v6393 = vadd.f32 0.0, %v6392
    %v6394 = vpop.f32.mrb[0].mxu0
    %6395 = vdwg.mxu0
    %v6396 = vadd.f32 %v6325, %v6393
    %v6397 = vxor.u32 %v6396, 2147483648
    %v6398 = vmul.f32 %v6397, 1.442695
    %v6399 = vpow.pop %v6398
    %v6400 = vadd.f32 %v6399, 1.0
    %v6401 = vrcp.pop %v6400
    %v6402 = vmul.f32 1.0, %v6401
    %v6403 = vtanh.pop %v6396
    %v6404 = vmul.f32 %v6402, %v5539
    %6406 = vrot.lane.b32.xlu0 %v6403, 64
    %v6407 = vpop.permute.xlu0 %6406
    %v6409 = vmul.f32 %v6402, %v6407
    %6411 = vrot.lane.b32.xlu0 %v6409, 32
    %v6412 = vpop.permute.xlu0 %6411
    %v6414 = vadd.f32 %v6404, %v6412
    %v6415 = vtanh.pop %v6414
    %6417 = vrot.lane.b32.xlu0 %v6415, 64
    %v6418 = vpop.permute.xlu0 %6417
    %v6420 = vmul.f32 %v6402, %v6418
    %6422 = vrot.lane.b32.xlu0 %v6420, 32
    %v6423 = vpop.permute.xlu0 %6422
    %v6424 = vsel %vm171, %v6423, 0
    %6426 = vmatprep.subr.mxu0 0.0
    %6427 = vmatpush1.msra.mxu0 %v46
    %6428 = vmatprep.subr.mxu0 0.0
    %6429 = vmatpush1.msra.mxu0 %v47
    %6430 = vmatprep.subr.mxu0 0.0
    %6431 = vmatpush1.msra.mxu0 %v48
    %6432 = vmatprep.subr.mxu0 0.0
    %6433 = vmatpush1.msra.mxu0 %v49
    %6434 = vmatprep.subr.mxu0 0.0
    %6435 = vmatpush1.msra.mxu0 0.0
    %6436 = vmatprep.subr.mxu0 0.0
    %6437 = vmatpush1.msra.mxu0 0.0
    %6438 = vmatprep.subr.mxu0 0.0
    %6439 = vmatpush1.msra.mxu0 0.0
    %6440 = vmatprep.subr.mxu0 0.0
    %6441 = vmatpush1.msra.mxu0 0.0
    %6442 = vmatprep.subr.mxu0 0.0
    %6443 = vmatpush1.msra.mxu0 0.0
    %6444 = vmatprep.subr.mxu0 0.0
    %6445 = vmatpush1.msra.mxu0 0.0
    %6446 = vmatprep.subr.mxu0 0.0
    %6447 = vmatpush1.msra.mxu0 0.0
    %6448 = vmatprep.subr.mxu0 0.0
    %6449 = vmatpush1.msra.mxu0 0.0
    %6450 = vmatprep.subr.mxu0 0.0
    %6451 = vmatpush1.msra.mxu0 0.0
    %6452 = vmatprep.subr.mxu0 0.0
    %6453 = vmatpush1.msra.mxu0 0.0
    %6454 = vmatprep.subr.mxu0 0.0
    %6455 = vmatpush1.msra.mxu0 0.0
    %6456 = vmatprep.subr.mxu0 0.0
    %6457 = vmatpush1.msra.mxu0 0.0
    %6458 = vmatprep.subr.mxu0 0.0
    %6459 = vmatpush1.msra.mxu0 0.0
    %6460 = vmatprep.subr.mxu0 0.0
    %6461 = vmatpush1.msra.mxu0 0.0
    %6462 = vmatprep.subr.mxu0 0.0
    %6463 = vmatpush1.msra.mxu0 0.0
    %6464 = vmatprep.subr.mxu0 0.0
    %6465 = vmatpush1.msra.mxu0 0.0
    %6466 = vmatprep.subr.mxu0 0.0
    %6467 = vmatpush1.msra.mxu0 0.0
    %6468 = vmatprep.subr.mxu0 0.0
    %6469 = vmatpush1.msra.mxu0 0.0
    %6470 = vmatprep.subr.mxu0 0.0
    %6471 = vmatpush1.msra.mxu0 0.0
    %6472 = vmatprep.subr.mxu0 0.0
    %6473 = vmatpush1.msra.mxu0 0.0
    %6474 = vmatprep.subr.mxu0 0.0
    %6475 = vmatpush1.msra.mxu0 0.0
    %6476 = vmatprep.subr.mxu0 0.0
    %6477 = vmatpush1.msra.mxu0 0.0
    %6478 = vmatprep.subr.mxu0 0.0
    %6479 = vmatpush1.msra.mxu0 0.0
    %6480 = vmatprep.subr.mxu0 0.0
    %6481 = vmatpush1.msra.mxu0 0.0
    %6482 = vmatprep.subr.mxu0 0.0
    %6483 = vmatpush1.msra.mxu0 0.0
    %6484 = vmatprep.subr.mxu0 0.0
    %6485 = vmatpush1.msra.mxu0 0.0
    %6486 = vmatprep.subr.mxu0 0.0
    %6487 = vmatpush1.msra.mxu0 0.0
    %6488 = vmatprep.subr.mxu0 0.0
    %6489 = vmatpush1.msra.mxu0 0.0
    %6490 = vmatprep.mubr.f32.mxu0 0.0
    %6491 = vmatmul.mubr.f32.gmra.mrb[0].mxu0 %v6424
    %v6492 = vpop.f32.mrb[0].mxu0
    %v6493 = vadd.f32 %v277, %v6492
    %v6494 = vpop.f32.mrb[0].mxu0
    %6495 = vdwg.mxu0
    %6496 = vmatprep.subr.mxu0 0.0
    %6497 = vmatpush1.msra.mxu0 %v54
    %6498 = vmatprep.subr.mxu0 0.0
    %6499 = vmatpush1.msra.mxu0 %v55
    %6500 = vmatprep.subr.mxu0 0.0
    %6501 = vmatpush1.msra.mxu0 %v56
    %6502 = vmatprep.subr.mxu0 0.0
    %6503 = vmatpush1.msra.mxu0 %v57
    %6504 = vmatprep.subr.mxu0 0.0
    %6505 = vmatpush1.msra.mxu0 0.0
    %6506 = vmatprep.subr.mxu0 0.0
    %6507 = vmatpush1.msra.mxu0 0.0
    %6508 = vmatprep.subr.mxu0 0.0
    %6509 = vmatpush1.msra.mxu0 0.0
    %6510 = vmatprep.subr.mxu0 0.0
    %6511 = vmatpush1.msra.mxu0 0.0
    %6512 = vmatprep.subr.mxu0 0.0
    %6513 = vmatpush1.msra.mxu0 0.0
    %6514 = vmatprep.subr.mxu0 0.0
    %6515 = vmatpush1.msra.mxu0 0.0
    %6516 = vmatprep.subr.mxu0 0.0
    %6517 = vmatpush1.msra.mxu0 0.0
    %6518 = vmatprep.subr.mxu0 0.0
    %6519 = vmatpush1.msra.mxu0 0.0
    %6520 = vmatprep.subr.mxu0 0.0
    %6521 = vmatpush1.msra.mxu0 0.0
    %6522 = vmatprep.subr.mxu0 0.0
    %6523 = vmatpush1.msra.mxu0 0.0
    %6524 = vmatprep.subr.mxu0 0.0
    %6525 = vmatpush1.msra.mxu0 0.0
    %6526 = vmatprep.subr.mxu0 0.0
    %6527 = vmatpush1.msra.mxu0 0.0
    %6528 = vmatprep.subr.mxu0 0.0
    %6529 = vmatpush1.msra.mxu0 0.0
    %6530 = vmatprep.subr.mxu0 0.0
    %6531 = vmatpush1.msra.mxu0 0.0
    %6532 = vmatprep.subr.mxu0 0.0
    %6533 = vmatpush1.msra.mxu0 0.0
    %6534 = vmatprep.subr.mxu0 0.0
    %6535 = vmatpush1.msra.mxu0 0.0
    %6536 = vmatprep.subr.mxu0 0.0
    %6537 = vmatpush1.msra.mxu0 0.0
    %6538 = vmatprep.subr.mxu0 0.0
    %6539 = vmatpush1.msra.mxu0 0.0
    %6540 = vmatprep.subr.mxu0 0.0
    %6541 = vmatpush1.msra.mxu0 0.0
    %6542 = vmatprep.subr.mxu0 0.0
    %6543 = vmatpush1.msra.mxu0 0.0
    %6544 = vmatprep.subr.mxu0 0.0
    %6545 = vmatpush1.msra.mxu0 0.0
    %6546 = vmatprep.subr.mxu0 0.0
    %6547 = vmatpush1.msra.mxu0 0.0
    %6548 = vmatprep.subr.mxu0 0.0
    %6549 = vmatpush1.msra.mxu0 0.0
    %6550 = vmatprep.subr.mxu0 0.0
    %6551 = vmatpush1.msra.mxu0 0.0
    %6552 = vmatprep.subr.mxu0 0.0
    %6553 = vmatpush1.msra.mxu0 0.0
    %6554 = vmatprep.subr.mxu0 0.0
    %6555 = vmatpush1.msra.mxu0 0.0
    %6556 = vmatprep.subr.mxu0 0.0
    %6557 = vmatpush1.msra.mxu0 0.0
    %6558 = vmatprep.subr.mxu0 0.0
    %6559 = vmatpush1.msra.mxu0 0.0
    %6560 = vmatprep.mubr.f32.mxu0 0.0
    %6561 = vmatmul.mubr.f32.gmra.mrb[0].mxu0 %v5719
    %v6562 = vpop.f32.mrb[0].mxu0
    %v6563 = vadd.f32 0.0, %v6562
    %v6564 = vpop.f32.mrb[0].mxu0
    %6565 = vdwg.mxu0
    %v6566 = vadd.f32 %v6493, %v6563
    %v6567 = vxor.u32 %v6566, 2147483648
    %v6568 = vmul.f32 %v6567, 1.442695
    %v6569 = vpow.pop %v6568
    %v6570 = vadd.f32 %v6569, 1.0
    %v6571 = vrcp.pop %v6570
    %v6572 = vmul.f32 1.0, %v6571
    %v6573 = vtanh.pop %v6566
    %v6574 = vmul.f32 %v6572, %v5709
    %6576 = vrot.lane.b32.xlu0 %v6573, 64
    %v6577 = vpop.permute.xlu0 %6576
    %v6579 = vmul.f32 %v6572, %v6577
    %6581 = vrot.lane.b32.xlu0 %v6579, 32
    %v6582 = vpop.permute.xlu0 %6581
    %v6584 = vadd.f32 %v6574, %v6582
    %v6585 = vtanh.pop %v6584
    %6587 = vrot.lane.b32.xlu0 %v6585, 64
    %v6588 = vpop.permute.xlu0 %6587
    %v6590 = vmul.f32 %v6572, %v6588
    %6592 = vrot.lane.b32.xlu0 %v6590, 32
    %v6593 = vpop.permute.xlu0 %6592
    %v6594 = vsel %vm171, %v6593, 0
    %6596 = vmatprep.subr.mxu0 0.0
    %6597 = vmatpush1.msra.mxu0 %v79
    %6598 = vmatprep.subr.mxu0 0.0
    %6599 = vmatpush1.msra.mxu0 %v80
    %6600 = vmatprep.subr.mxu0 0.0
    %6601 = vmatpush1.msra.mxu0 %v81
    %6602 = vmatprep.subr.mxu0 0.0
    %6603 = vmatpush1.msra.mxu0 %v82
    %6604 = vmatprep.subr.mxu0 0.0
    %6605 = vmatpush1.msra.mxu0 0.0
    %6606 = vmatprep.subr.mxu0 0.0
    %6607 = vmatpush1.msra.mxu0 0.0
    %6608 = vmatprep.subr.mxu0 0.0
    %6609 = vmatpush1.msra.mxu0 0.0
    %6610 = vmatprep.subr.mxu0 0.0
    %6611 = vmatpush1.msra.mxu0 0.0
    %6612 = vmatprep.subr.mxu0 0.0
    %6613 = vmatpush1.msra.mxu0 0.0
    %6614 = vmatprep.subr.mxu0 0.0
    %6615 = vmatpush1.msra.mxu0 0.0
    %6616 = vmatprep.subr.mxu0 0.0
    %6617 = vmatpush1.msra.mxu0 0.0
    %6618 = vmatprep.subr.mxu0 0.0
    %6619 = vmatpush1.msra.mxu0 0.0
    %6620 = vmatprep.subr.mxu0 0.0
    %6621 = vmatpush1.msra.mxu0 0.0
    %6622 = vmatprep.subr.mxu0 0.0
    %6623 = vmatpush1.msra.mxu0 0.0
    %6624 = vmatprep.subr.mxu0 0.0
    %6625 = vmatpush1.msra.mxu0 0.0
    %6626 = vmatprep.subr.mxu0 0.0
    %6627 = vmatpush1.msra.mxu0 0.0
    %6628 = vmatprep.subr.mxu0 0.0
    %6629 = vmatpush1.msra.mxu0 0.0
    %6630 = vmatprep.subr.mxu0 0.0
    %6631 = vmatpush1.msra.mxu0 0.0
    %6632 = vmatprep.subr.mxu0 0.0
    %6633 = vmatpush1.msra.mxu0 0.0
    %6634 = vmatprep.subr.mxu0 0.0
    %6635 = vmatpush1.msra.mxu0 0.0
    %6636 = vmatprep.subr.mxu0 0.0
    %6637 = vmatpush1.msra.mxu0 0.0
    %6638 = vmatprep.subr.mxu0 0.0
    %6639 = vmatpush1.msra.mxu0 0.0
    %6640 = vmatprep.subr.mxu0 0.0
    %6641 = vmatpush1.msra.mxu0 0.0
    %6642 = vmatprep.subr.mxu0 0.0
    %6643 = vmatpush1.msra.mxu0 0.0
    %6644 = vmatprep.subr.mxu0 0.0
    %6645 = vmatpush1.msra.mxu0 0.0
    %6646 = vmatprep.subr.mxu0 0.0
    %6647 = vmatpush1.msra.mxu0 0.0
    %6648 = vmatprep.subr.mxu0 0.0
    %6649 = vmatpush1.msra.mxu0 0.0
    %6650 = vmatprep.subr.mxu0 0.0
    %6651 = vmatpush1.msra.mxu0 0.0
    %6652 = vmatprep.subr.mxu0 0.0
    %6653 = vmatpush1.msra.mxu0 0.0
    %6654 = vmatprep.subr.mxu0 0.0
    %6655 = vmatpush1.msra.mxu0 0.0
    %6656 = vmatprep.subr.mxu0 0.0
    %6657 = vmatpush1.msra.mxu0 0.0
    %6658 = vmatprep.subr.mxu0 0.0
    %6659 = vmatpush1.msra.mxu0 0.0
    %6660 = vmatprep.mubr.f32.mxu0 0.0
    %6661 = vmatmul.mubr.f32.gmra.mrb[0].mxu0 %v6594
    %v6662 = vpop.f32.mrb[0].mxu0
    %v6663 = vadd.f32 0.0, %v6662
    %v6664 = vpop.f32.mrb[0].mxu0
    %6665 = vdwg.mxu0
    %v6666 = vrot.slane %v6590, 1
    %6667 = vrot.lane.b32.xlu0 %v6666, 32
    %v6668 = vpop.permute.xlu0 %6667
    %v6669 = vsel %vm171, %v6668, 0
    %6671 = vmatprep.subr.mxu0 0.0
    %6672 = vmatpush1.msra.mxu0 %v84
    %6673 = vmatprep.subr.mxu0 0.0
    %6674 = vmatpush1.msra.mxu0 %v85
    %6675 = vmatprep.subr.mxu0 0.0
    %6676 = vmatpush1.msra.mxu0 %v86
    %6677 = vmatprep.subr.mxu0 0.0
    %6678 = vmatpush1.msra.mxu0 %v87
    %6679 = vmatprep.subr.mxu0 0.0
    %6680 = vmatpush1.msra.mxu0 0.0
    %6681 = vmatprep.subr.mxu0 0.0
    %6682 = vmatpush1.msra.mxu0 0.0
    %6683 = vmatprep.subr.mxu0 0.0
    %6684 = vmatpush1.msra.mxu0 0.0
    %6685 = vmatprep.subr.mxu0 0.0
    %6686 = vmatpush1.msra.mxu0 0.0
    %6687 = vmatprep.subr.mxu0 0.0
    %6688 = vmatpush1.msra.mxu0 0.0
    %6689 = vmatprep.subr.mxu0 0.0
    %6690 = vmatpush1.msra.mxu0 0.0
    %6691 = vmatprep.subr.mxu0 0.0
    %6692 = vmatpush1.msra.mxu0 0.0
    %6693 = vmatprep.subr.mxu0 0.0
    %6694 = vmatpush1.msra.mxu0 0.0
    %6695 = vmatprep.subr.mxu0 0.0
    %6696 = vmatpush1.msra.mxu0 0.0
    %6697 = vmatprep.subr.mxu0 0.0
    %6698 = vmatpush1.msra.mxu0 0.0
    %6699 = vmatprep.subr.mxu0 0.0
    %6700 = vmatpush1.msra.mxu0 0.0
    %6701 = vmatprep.subr.mxu0 0.0
    %6702 = vmatpush1.msra.mxu0 0.0
    %6703 = vmatprep.subr.mxu0 0.0
    %6704 = vmatpush1.msra.mxu0 0.0
    %6705 = vmatprep.subr.mxu0 0.0
    %6706 = vmatpush1.msra.mxu0 0.0
    %6707 = vmatprep.subr.mxu0 0.0
    %6708 = vmatpush1.msra.mxu0 0.0
    %6709 = vmatprep.subr.mxu0 0.0
    %6710 = vmatpush1.msra.mxu0 0.0
    %6711 = vmatprep.subr.mxu0 0.0
    %6712 = vmatpush1.msra.mxu0 0.0
    %6713 = vmatprep.subr.mxu0 0.0
    %6714 = vmatpush1.msra.mxu0 0.0
    %6715 = vmatprep.subr.mxu0 0.0
    %6716 = vmatpush1.msra.mxu0 0.0
    %6717 = vmatprep.subr.mxu0 0.0
    %6718 = vmatpush1.msra.mxu0 0.0
    %6719 = vmatprep.subr.mxu0 0.0
    %6720 = vmatpush1.msra.mxu0 0.0
    %6721 = vmatprep.subr.mxu0 0.0
    %6722 = vmatpush1.msra.mxu0 0.0
    %6723 = vmatprep.subr.mxu0 0.0
    %6724 = vmatpush1.msra.mxu0 0.0
    %6725 = vmatprep.subr.mxu0 0.0
    %6726 = vmatpush1.msra.mxu0 0.0
    %6727 = vmatprep.subr.mxu0 0.0
    %6728 = vmatpush1.msra.mxu0 0.0
    %6729 = vmatprep.subr.mxu0 0.0
    %6730 = vmatpush1.msra.mxu0 0.0
    %6731 = vmatprep.subr.mxu0 0.0
    %6732 = vmatpush1.msra.mxu0 0.0
    %6733 = vmatprep.subr.mxu0 0.0
    %6734 = vmatpush1.msra.mxu0 0.0
    %6735 = vmatprep.mubr.f32.mxu0 0.0
    %6736 = vmatmul.mubr.f32.gmra.mrb[0].mxu0 %v6669
    %v6737 = vpop.f32.mrb[0].mxu0
    %v6738 = vadd.f32 0.0, %v6737
    %v6739 = vpop.f32.mrb[0].mxu0
    %6740 = vdwg.mxu0
    %v6742 = vrot.slane %v6738, 7
    %v6744 = vsel %vm608, %v6663, %v6742
    %v6745 = vadd.f32 %v6744, %v75
    %v6746 = vsel %vm611, %v6745, -inf
    %6747 = vmax.xlane.f32.xlu0 %v6746
    %v6748 = vpop.xlane.xlu0 %6747
    %v6749 = vsub.f32 %v6745, %v6748
    %v6750 = vmul.f32 %v6749, 1.442695
    %v6751 = vpow.pop %v6750
    %v6752 = vsel %vm611, %v6751, 0.0
    %6753 = vadd.xlane.f32.xlu0 %v6752
    %v6754 = vpop.xlane.xlu0 %6753
    %v6755 = vrcp.pop %v6754
    %v6756 = vmul.f32 %v6751, %v6755
    %v6758 = vsel %vm623, %v6756, 0
    %6760 = vmatprep.subr.mxu0 0.0
    %6761 = vmatpush1.msra.mxu0 %v76
    %6762 = vmatprep.subr.mxu0 0.0
    %6763 = vmatpush1.msra.mxu0 0.0
    %6764 = vmatprep.subr.mxu0 0.0
    %6765 = vmatpush1.msra.mxu0 0.0
    %6766 = vmatprep.subr.mxu0 0.0
    %6767 = vmatpush1.msra.mxu0 0.0
    %6768 = vmatprep.subr.mxu0 0.0
    %6769 = vmatpush1.msra.mxu0 0.0
    %6770 = vmatprep.subr.mxu0 0.0
    %6771 = vmatpush1.msra.mxu0 0.0
    %6772 = vmatprep.subr.mxu0 0.0
    %6773 = vmatpush1.msra.mxu0 0.0
    %6774 = vmatprep.subr.mxu0 0.0
    %6775 = vmatpush1.msra.mxu0 0.0
    %6776 = vmatprep.subr.mxu0 0.0
    %6777 = vmatpush1.msra.mxu0 0.0
    %6778 = vmatprep.subr.mxu0 0.0
    %6779 = vmatpush1.msra.mxu0 0.0
    %6780 = vmatprep.subr.mxu0 0.0
    %6781 = vmatpush1.msra.mxu0 0.0
    %6782 = vmatprep.subr.mxu0 0.0
    %6783 = vmatpush1.msra.mxu0 0.0
    %6784 = vmatprep.subr.mxu0 0.0
    %6785 = vmatpush1.msra.mxu0 0.0
    %6786 = vmatprep.subr.mxu0 0.0
    %6787 = vmatpush1.msra.mxu0 0.0
    %6788 = vmatprep.subr.mxu0 0.0
    %6789 = vmatpush1.msra.mxu0 0.0
    %6790 = vmatprep.subr.mxu0 0.0
    %6791 = vmatpush1.msra.mxu0 0.0
    %6792 = vmatprep.subr.mxu0 0.0
    %6793 = vmatpush1.msra.mxu0 0.0
    %6794 = vmatprep.subr.mxu0 0.0
    %6795 = vmatpush1.msra.mxu0 0.0
    %6796 = vmatprep.subr.mxu0 0.0
    %6797 = vmatpush1.msra.mxu0 0.0
    %6798 = vmatprep.subr.mxu0 0.0
    %6799 = vmatpush1.msra.mxu0 0.0
    %6800 = vmatprep.subr.mxu0 0.0
    %6801 = vmatpush1.msra.mxu0 0.0
    %6802 = vmatprep.subr.mxu0 0.0
    %6803 = vmatpush1.msra.mxu0 0.0
    %6804 = vmatprep.subr.mxu0 0.0
    %6805 = vmatpush1.msra.mxu0 0.0
    %6806 = vmatprep.subr.mxu0 0.0
    %6807 = vmatpush1.msra.mxu0 0.0
    %6808 = vmatprep.subr.mxu0 0.0
    %6809 = vmatpush1.msra.mxu0 0.0
    %6810 = vmatprep.subr.mxu0 0.0
    %6811 = vmatpush1.msra.mxu0 0.0
    %6812 = vmatprep.subr.mxu0 0.0
    %6813 = vmatpush1.msra.mxu0 0.0
    %6814 = vmatprep.subr.mxu0 0.0
    %6815 = vmatpush1.msra.mxu0 0.0
    %6816 = vmatprep.subr.mxu0 0.0
    %6817 = vmatpush1.msra.mxu0 0.0
    %6818 = vmatprep.subr.mxu0 0.0
    %6819 = vmatpush1.msra.mxu0 0.0
    %6820 = vmatprep.subr.mxu0 0.0
    %6821 = vmatpush1.msra.mxu0 0.0
    %6822 = vmatprep.subr.mxu0 0.0
    %6823 = vmatpush1.msra.mxu0 0.0
    %6824 = vmatprep.mubr.f32.mxu0 0.0
    %6825 = vmatmul.mubr.f32.gmra.mrb[0].mxu0 %v6758
    %v6826 = vpop.f32.mrb[0].mxu0
    %v6827 = vadd.f32 0.0, %v6826
    %v6828 = vpop.f32.mrb[0].mxu0
    %6829 = vdwg.mxu0
    %v6830 = vrot.slane %v6756, 1
    %v6831 = vsel %vm623, %v6830, 0
    %6833 = vmatprep.subr.mxu0 0.0
    %6834 = vmatpush1.msra.mxu0 %v78
    %6835 = vmatprep.subr.mxu0 0.0
    %6836 = vmatpush1.msra.mxu0 0.0
    %6837 = vmatprep.subr.mxu0 0.0
    %6838 = vmatpush1.msra.mxu0 0.0
    %6839 = vmatprep.subr.mxu0 0.0
    %6840 = vmatpush1.msra.mxu0 0.0
    %6841 = vmatprep.subr.mxu0 0.0
    %6842 = vmatpush1.msra.mxu0 0.0
    %6843 = vmatprep.subr.mxu0 0.0
    %6844 = vmatpush1.msra.mxu0 0.0
    %6845 = vmatprep.subr.mxu0 0.0
    %6846 = vmatpush1.msra.mxu0 0.0
    %6847 = vmatprep.subr.mxu0 0.0
    %6848 = vmatpush1.msra.mxu0 0.0
    %6849 = vmatprep.subr.mxu0 0.0
    %6850 = vmatpush1.msra.mxu0 0.0
    %6851 = vmatprep.subr.mxu0 0.0
    %6852 = vmatpush1.msra.mxu0 0.0
    %6853 = vmatprep.subr.mxu0 0.0
    %6854 = vmatpush1.msra.mxu0 0.0
    %6855 = vmatprep.subr.mxu0 0.0
    %6856 = vmatpush1.msra.mxu0 0.0
    %6857 = vmatprep.subr.mxu0 0.0
    %6858 = vmatpush1.msra.mxu0 0.0
    %6859 = vmatprep.subr.mxu0 0.0
    %6860 = vmatpush1.msra.mxu0 0.0
    %6861 = vmatprep.subr.mxu0 0.0
    %6862 = vmatpush1.msra.mxu0 0.0
    %6863 = vmatprep.subr.mxu0 0.0
    %6864 = vmatpush1.msra.mxu0 0.0
    %6865 = vmatprep.subr.mxu0 0.0
    %6866 = vmatpush1.msra.mxu0 0.0
    %6867 = vmatprep.subr.mxu0 0.0
    %6868 = vmatpush1.msra.mxu0 0.0
    %6869 = vmatprep.subr.mxu0 0.0
    %6870 = vmatpush1.msra.mxu0 0.0
    %6871 = vmatprep.subr.mxu0 0.0
    %6872 = vmatpush1.msra.mxu0 0.0
    %6873 = vmatprep.subr.mxu0 0.0
    %6874 = vmatpush1.msra.mxu0 0.0
    %6875 = vmatprep.subr.mxu0 0.0
    %6876 = vmatpush1.msra.mxu0 0.0
    %6877 = vmatprep.subr.mxu0 0.0
    %6878 = vmatpush1.msra.mxu0 0.0
    %6879 = vmatprep.subr.mxu0 0.0
    %6880 = vmatpush1.msra.mxu0 0.0
    %6881 = vmatprep.subr.mxu0 0.0
    %6882 = vmatpush1.msra.mxu0 0.0
    %6883 = vmatprep.subr.mxu0 0.0
    %6884 = vmatpush1.msra.mxu0 0.0
    %6885 = vmatprep.subr.mxu0 0.0
    %6886 = vmatpush1.msra.mxu0 0.0
    %6887 = vmatprep.subr.mxu0 0.0
    %6888 = vmatpush1.msra.mxu0 0.0
    %6889 = vmatprep.subr.mxu0 0.0
    %6890 = vmatpush1.msra.mxu0 0.0
    %6891 = vmatprep.subr.mxu0 0.0
    %6892 = vmatpush1.msra.mxu0 0.0
    %6893 = vmatprep.subr.mxu0 0.0
    %6894 = vmatpush1.msra.mxu0 0.0
    %6895 = vmatprep.subr.mxu0 0.0
    %6896 = vmatpush1.msra.mxu0 0.0
    %6897 = vmatprep.mubr.f32.mxu0 0.0
    %6898 = vmatmul.mubr.f32.gmra.mrb[0].mxu0 %v6831
    %v6899 = vpop.f32.mrb[0].mxu0
    %v6900 = vadd.f32 0.0, %v6899
    %v6901 = vpop.f32.mrb[0].mxu0
    %6902 = vdwg.mxu0
    %v6904 = vrot.slane %v6900, 7
    %v6906 = vsel %vm608, %v6827, %v6904
    %v6908 = vsel %vm171, %v6906, 0
    %6910 = vmatprep.subr.mxu0 0.0
    %6911 = vmatpush1.msra.mxu0 %v63
    %6912 = vmatprep.subr.mxu0 0.0
    %6913 = vmatpush1.msra.mxu0 %v64
    %6914 = vmatprep.subr.mxu0 0.0
    %6915 = vmatpush1.msra.mxu0 %v65
    %6916 = vmatprep.subr.mxu0 0.0
    %6917 = vmatpush1.msra.mxu0 %v66
    %6918 = vmatprep.subr.mxu0 0.0
    %6919 = vmatpush1.msra.mxu0 0.0
    %6920 = vmatprep.subr.mxu0 0.0
    %6921 = vmatpush1.msra.mxu0 0.0
    %6922 = vmatprep.subr.mxu0 0.0
    %6923 = vmatpush1.msra.mxu0 0.0
    %6924 = vmatprep.subr.mxu0 0.0
    %6925 = vmatpush1.msra.mxu0 0.0
    %6926 = vmatprep.subr.mxu0 0.0
    %6927 = vmatpush1.msra.mxu0 0.0
    %6928 = vmatprep.subr.mxu0 0.0
    %6929 = vmatpush1.msra.mxu0 0.0
    %6930 = vmatprep.subr.mxu0 0.0
    %6931 = vmatpush1.msra.mxu0 0.0
    %6932 = vmatprep.subr.mxu0 0.0
    %6933 = vmatpush1.msra.mxu0 0.0
    %6934 = vmatprep.subr.mxu0 0.0
    %6935 = vmatpush1.msra.mxu0 0.0
    %6936 = vmatprep.subr.mxu0 0.0
    %6937 = vmatpush1.msra.mxu0 0.0
    %6938 = vmatprep.subr.mxu0 0.0
    %6939 = vmatpush1.msra.mxu0 0.0
    %6940 = vmatprep.subr.mxu0 0.0
    %6941 = vmatpush1.msra.mxu0 0.0
    %6942 = vmatprep.subr.mxu0 0.0
    %6943 = vmatpush1.msra.mxu0 0.0
    %6944 = vmatprep.subr.mxu0 0.0
    %6945 = vmatpush1.msra.mxu0 0.0
    %6946 = vmatprep.subr.mxu0 0.0
    %6947 = vmatpush1.msra.mxu0 0.0
    %6948 = vmatprep.subr.mxu0 0.0
    %6949 = vmatpush1.msra.mxu0 0.0
    %6950 = vmatprep.subr.mxu0 0.0
    %6951 = vmatpush1.msra.mxu0 0.0
    %6952 = vmatprep.subr.mxu0 0.0
    %6953 = vmatpush1.msra.mxu0 0.0
    %6954 = vmatprep.subr.mxu0 0.0
    %6955 = vmatpush1.msra.mxu0 0.0
    %6956 = vmatprep.subr.mxu0 0.0
    %6957 = vmatpush1.msra.mxu0 0.0
    %6958 = vmatprep.subr.mxu0 0.0
    %6959 = vmatpush1.msra.mxu0 0.0
    %6960 = vmatprep.subr.mxu0 0.0
    %6961 = vmatpush1.msra.mxu0 0.0
    %6962 = vmatprep.subr.mxu0 0.0
    %6963 = vmatpush1.msra.mxu0 0.0
    %6964 = vmatprep.subr.mxu0 0.0
    %6965 = vmatpush1.msra.mxu0 0.0
    %6966 = vmatprep.subr.mxu0 0.0
    %6967 = vmatpush1.msra.mxu0 0.0
    %6968 = vmatprep.subr.mxu0 0.0
    %6969 = vmatpush1.msra.mxu0 0.0
    %6970 = vmatprep.subr.mxu0 0.0
    %6971 = vmatpush1.msra.mxu0 0.0
    %6972 = vmatprep.subr.mxu0 0.0
    %6973 = vmatpush1.msra.mxu0 0.0
    %6974 = vmatprep.mubr.f32.mxu0 0.0
    %6975 = vmatmul.mubr.f32.gmra.mrb[0].mxu0 %v6908
    %v6976 = vpop.f32.mrb[0].mxu0
    %v6977 = vadd.f32 0.0, %v6976
    %v6978 = vpop.f32.mrb[0].mxu0
    %6979 = vdwg.mxu0
    %6980 = vmatprep.subr.mxu0 0.0
    %6981 = vmatpush1.msra.mxu0 %v59
    %6982 = vmatprep.subr.mxu0 0.0
    %6983 = vmatpush1.msra.mxu0 %v60
    %6984 = vmatprep.subr.mxu0 0.0
    %6985 = vmatpush1.msra.mxu0 %v61
    %6986 = vmatprep.subr.mxu0 0.0
    %6987 = vmatpush1.msra.mxu0 %v62
    %6988 = vmatprep.subr.mxu0 0.0
    %6989 = vmatpush1.msra.mxu0 0.0
    %6990 = vmatprep.subr.mxu0 0.0
    %6991 = vmatpush1.msra.mxu0 0.0
    %6992 = vmatprep.subr.mxu0 0.0
    %6993 = vmatpush1.msra.mxu0 0.0
    %6994 = vmatprep.subr.mxu0 0.0
    %6995 = vmatpush1.msra.mxu0 0.0
    %6996 = vmatprep.subr.mxu0 0.0
    %6997 = vmatpush1.msra.mxu0 0.0
    %6998 = vmatprep.subr.mxu0 0.0
    %6999 = vmatpush1.msra.mxu0 0.0
    %7000 = vmatprep.subr.mxu0 0.0
    %7001 = vmatpush1.msra.mxu0 0.0
    %7002 = vmatprep.subr.mxu0 0.0
    %7003 = vmatpush1.msra.mxu0 0.0
    %7004 = vmatprep.subr.mxu0 0.0
    %7005 = vmatpush1.msra.mxu0 0.0
    %7006 = vmatprep.subr.mxu0 0.0
    %7007 = vmatpush1.msra.mxu0 0.0
    %7008 = vmatprep.subr.mxu0 0.0
    %7009 = vmatpush1.msra.mxu0 0.0
    %7010 = vmatprep.subr.mxu0 0.0
    %7011 = vmatpush1.msra.mxu0 0.0
    %7012 = vmatprep.subr.mxu0 0.0
    %7013 = vmatpush1.msra.mxu0 0.0
    %7014 = vmatprep.subr.mxu0 0.0
    %7015 = vmatpush1.msra.mxu0 0.0
    %7016 = vmatprep.subr.mxu0 0.0
    %7017 = vmatpush1.msra.mxu0 0.0
    %7018 = vmatprep.subr.mxu0 0.0
    %7019 = vmatpush1.msra.mxu0 0.0
    %7020 = vmatprep.subr.mxu0 0.0
    %7021 = vmatpush1.msra.mxu0 0.0
    %7022 = vmatprep.subr.mxu0 0.0
    %7023 = vmatpush1.msra.mxu0 0.0
    %7024 = vmatprep.subr.mxu0 0.0
    %7025 = vmatpush1.msra.mxu0 0.0
    %7026 = vmatprep.subr.mxu0 0.0
    %7027 = vmatpush1.msra.mxu0 0.0
    %7028 = vmatprep.subr.mxu0 0.0
    %7029 = vmatpush1.msra.mxu0 0.0
    %7030 = vmatprep.subr.mxu0 0.0
    %7031 = vmatpush1.msra.mxu0 0.0
    %7032 = vmatprep.subr.mxu0 0.0
    %7033 = vmatpush1.msra.mxu0 0.0
    %7034 = vmatprep.subr.mxu0 0.0
    %7035 = vmatpush1.msra.mxu0 0.0
    %7036 = vmatprep.subr.mxu0 0.0
    %7037 = vmatpush1.msra.mxu0 0.0
    %7038 = vmatprep.subr.mxu0 0.0
    %7039 = vmatpush1.msra.mxu0 0.0
    %7040 = vmatprep.subr.mxu0 0.0
    %7041 = vmatpush1.msra.mxu0 0.0
    %7042 = vmatprep.subr.mxu0 0.0
    %7043 = vmatpush1.msra.mxu0 0.0
    %7044 = vmatprep.mubr.f32.mxu0 0.0
    %7045 = vmatmul.mubr.f32.gmra.mrb[0].mxu0 %v6594
    %v7046 = vpop.f32.mrb[0].mxu0
    %v7047 = vadd.f32 %v6977, %v7046
    %v7048 = vpop.f32.mrb[0].mxu0
    %7049 = vdwg.mxu0
    %v7050 = vadd.f32 %v7047, %v920
    %v7051 = vtanh.pop %v7050
    %v7053 = vsel %vm171, %v7051, 0
    %7055 = vmatprep.subr.mxu0 0.0
    %7056 = vmatpush1.msra.mxu0 %v68
    %7057 = vmatprep.subr.mxu0 0.0
    %7058 = vmatpush1.msra.mxu0 %v69
    %7059 = vmatprep.subr.mxu0 0.0
    %7060 = vmatpush1.msra.mxu0 %v70
    %7061 = vmatprep.subr.mxu0 0.0
    %7062 = vmatpush1.msra.mxu0 %v71
    %7063 = vmatprep.subr.mxu0 0.0
    %7064 = vmatpush1.msra.mxu0 0.0
    %7065 = vmatprep.subr.mxu0 0.0
    %7066 = vmatpush1.msra.mxu0 0.0
    %7067 = vmatprep.subr.mxu0 0.0
    %7068 = vmatpush1.msra.mxu0 0.0
    %7069 = vmatprep.subr.mxu0 0.0
    %7070 = vmatpush1.msra.mxu0 0.0
    %7071 = vmatprep.subr.mxu0 0.0
    %7072 = vmatpush1.msra.mxu0 0.0
    %7073 = vmatprep.subr.mxu0 0.0
    %7074 = vmatpush1.msra.mxu0 0.0
    %7075 = vmatprep.subr.mxu0 0.0
    %7076 = vmatpush1.msra.mxu0 0.0
    %7077 = vmatprep.subr.mxu0 0.0
    %7078 = vmatpush1.msra.mxu0 0.0
    %7079 = vmatprep.subr.mxu0 0.0
    %7080 = vmatpush1.msra.mxu0 0.0
    %7081 = vmatprep.subr.mxu0 0.0
    %7082 = vmatpush1.msra.mxu0 0.0
    %7083 = vmatprep.subr.mxu0 0.0
    %7084 = vmatpush1.msra.mxu0 0.0
    %7085 = vmatprep.subr.mxu0 0.0
    %7086 = vmatpush1.msra.mxu0 0.0
    %7087 = vmatprep.subr.mxu0 0.0
    %7088 = vmatpush1.msra.mxu0 0.0
    %7089 = vmatprep.subr.mxu0 0.0
    %7090 = vmatpush1.msra.mxu0 0.0
    %7091 = vmatprep.subr.mxu0 0.0
    %7092 = vmatpush1.msra.mxu0 0.0
    %7093 = vmatprep.subr.mxu0 0.0
    %7094 = vmatpush1.msra.mxu0 0.0
    %7095 = vmatprep.subr.mxu0 0.0
    %7096 = vmatpush1.msra.mxu0 0.0
    %7097 = vmatprep.subr.mxu0 0.0
    %7098 = vmatpush1.msra.mxu0 0.0
    %7099 = vmatprep.subr.mxu0 0.0
    %7100 = vmatpush1.msra.mxu0 0.0
    %7101 = vmatprep.subr.mxu0 0.0
    %7102 = vmatpush1.msra.mxu0 0.0
    %7103 = vmatprep.subr.mxu0 0.0
    %7104 = vmatpush1.msra.mxu0 0.0
    %7105 = vmatprep.subr.mxu0 0.0
    %7106 = vmatpush1.msra.mxu0 0.0
    %7107 = vmatprep.subr.mxu0 0.0
    %7108 = vmatpush1.msra.mxu0 0.0
    %7109 = vmatprep.subr.mxu0 0.0
    %7110 = vmatpush1.msra.mxu0 0.0
    %7111 = vmatprep.subr.mxu0 0.0
    %7112 = vmatpush1.msra.mxu0 0.0
    %7113 = vmatprep.subr.mxu0 0.0
    %7114 = vmatpush1.msra.mxu0 0.0
    %7115 = vmatprep.subr.mxu0 0.0
    %7116 = vmatpush1.msra.mxu0 0.0
    %7117 = vmatprep.subr.mxu0 0.0
    %7118 = vmatpush1.msra.mxu0 0.0
    %7119 = vmatprep.mubr.f32.mxu0 0.0
    %7120 = vmatmul.mubr.f32.gmra.mrb[0].mxu0 %v7053
    %v7121 = vpop.f32.mrb[0].mxu0
    %v7122 = vadd.f32 %v926, %v7121
    %v7123 = vpop.f32.mrb[0].mxu0
    %7124 = vdwg.mxu0
    %v7125 = vrot.slane %v1872, 6
    %v7127 = vrot.slane %v2747, 4
    %v7129 = vrot.slane %v3622, 2
    %v7131 = vrot.slane %v5372, 6
    %v7133 = vrot.slane %v6247, 4
    %v7136 = vrot.slane %v7122, 2
    %vm7138 = vcmask 1041408
    %v7139 = vsel %vm7138, %v997, %v7125
    %vm7140 = vcmask 1043456
    %v7141 = vsel %vm7140, %v7139, %v7127
    %vm7142 = vcmask 1045504
    %v7143 = vsel %vm7142, %v7141, %v7129
    %v7144 = vsel %vm7138, %v4497, %v7131
    %v7145 = vsel %vm7140, %v7144, %v7133
    %v7146 = vsel %vm7142, %v7145, %v7136
    %v7148 = vsel %vm96, %v7143, 0
    %v7151 = vsel %vm96, %v7146, 0
    %7153 = vmatprep.subr.mxu0 0.0
    %7154 = vmatpush1.msra.mxu0 %v73
    %7155 = vmatprep.subr.mxu0 0.0
    %7156 = vmatpush1.msra.mxu0 %v74
    %7157 = vmatprep.subr.mxu0 0.0
    %7158 = vmatpush1.msra.mxu0 0.0
    %7159 = vmatprep.subr.mxu0 0.0
    %7160 = vmatpush1.msra.mxu0 0.0
    %7161 = vmatprep.subr.mxu0 0.0
    %7162 = vmatpush1.msra.mxu0 0.0
    %7163 = vmatprep.subr.mxu0 0.0
    %7164 = vmatpush1.msra.mxu0 0.0
    %7165 = vmatprep.subr.mxu0 0.0
    %7166 = vmatpush1.msra.mxu0 0.0
    %7167 = vmatprep.subr.mxu0 0.0
    %7168 = vmatpush1.msra.mxu0 0.0
    %7169 = vmatprep.subr.mxu0 0.0
    %7170 = vmatpush1.msra.mxu0 0.0
    %7171 = vmatprep.subr.mxu0 0.0
    %7172 = vmatpush1.msra.mxu0 0.0
    %7173 = vmatprep.subr.mxu0 0.0
    %7174 = vmatpush1.msra.mxu0 0.0
    %7175 = vmatprep.subr.mxu0 0.0
    %7176 = vmatpush1.msra.mxu0 0.0
    %7177 = vmatprep.subr.mxu0 0.0
    %7178 = vmatpush1.msra.mxu0 0.0
    %7179 = vmatprep.subr.mxu0 0.0
    %7180 = vmatpush1.msra.mxu0 0.0
    %7181 = vmatprep.subr.mxu0 0.0
    %7182 = vmatpush1.msra.mxu0 0.0
    %7183 = vmatprep.subr.mxu0 0.0
    %7184 = vmatpush1.msra.mxu0 0.0
    %7185 = vmatprep.subr.mxu0 0.0
    %7186 = vmatpush1.msra.mxu0 0.0
    %7187 = vmatprep.subr.mxu0 0.0
    %7188 = vmatpush1.msra.mxu0 0.0
    %7189 = vmatprep.subr.mxu0 0.0
    %7190 = vmatpush1.msra.mxu0 0.0
    %7191 = vmatprep.subr.mxu0 0.0
    %7192 = vmatpush1.msra.mxu0 0.0
    %7193 = vmatprep.subr.mxu0 0.0
    %7194 = vmatpush1.msra.mxu0 0.0
    %7195 = vmatprep.subr.mxu0 0.0
    %7196 = vmatpush1.msra.mxu0 0.0
    %7197 = vmatprep.subr.mxu0 0.0
    %7198 = vmatpush1.msra.mxu0 0.0
    %7199 = vmatprep.subr.mxu0 0.0
    %7200 = vmatpush1.msra.mxu0 0.0
    %7201 = vmatprep.subr.mxu0 0.0
    %7202 = vmatpush1.msra.mxu0 0.0
    %7203 = vmatprep.subr.mxu0 0.0
    %7204 = vmatpush1.msra.mxu0 0.0
    %7205 = vmatprep.subr.mxu0 0.0
    %7206 = vmatpush1.msra.mxu0 0.0
    %7207 = vmatprep.subr.mxu0 0.0
    %7208 = vmatpush1.msra.mxu0 0.0
    %7209 = vmatprep.subr.mxu0 0.0
    %7210 = vmatpush1.msra.mxu0 0.0
    %7211 = vmatprep.subr.mxu0 0.0
    %7212 = vmatpush1.msra.mxu0 0.0
    %7213 = vmatprep.subr.mxu0 0.0
    %7214 = vmatpush1.msra.mxu0 0.0
    %7215 = vmatprep.subr.mxu0 0.0
    %7216 = vmatpush1.msra.mxu0 0.0
    %7217 = vmatprep.mubr.f32.mxu0 0.0
    %7218 = vmatmul.mubr.f32.gmra.mrb[0].mxu0 %v7148
    %v7219 = vpop.f32.mrb[0].mxu0
    %v7220 = vadd.f32 0.0, %v7219
    %v7221 = vpop.f32.mrb[0].mxu0
    %7222 = vmatprep.mubr.f32.mxu0 0.0
    %7223 = vmatmul.mubr.f32.gmra.mrb[0].mxu0 %v7151
    %v7224 = vpop.f32.mrb[0].mxu0
    %v7225 = vadd.f32 0.0, %v7224
    %v7226 = vpop.f32.mrb[0].mxu0
    %7227 = vdwg.mxu0
    %7228 = vst [vmem:[#allocation5] sm:$0xff] %v7220
    %7229 = vst [vmem:[#allocation5 + $0x8] sm:$0xff] %v7225
    // Predicated region
    $region38: #{tpu_custom_call.1} parent=1 // pred_check
      _
    $region39: #{tpu_custom_call.1} parent=1 // pred_check_branch
      %7231 = sbr.rel (0) target = $region41
    $region40: #{tpu_custom_call.1} parent=1 // pred_region
      %s7233 = ssub.s32 256, 256
      %7234 = vsyncadd [#allocation4], %s7233
      %s7235 = sshll.u32 [#allocation5], 4
      %s7236 = int_to_ptr.vmem [resolvable:$true] %s7235
      %7241 = dma.vmem_to_hbm [thread:$0]  %s7236, 256, %s8, [#allocation4], 128, 128, 8
    $region41: #{tpu_custom_call.1} parent=1 // pred_fallthru
      _
    // Predicated region
    $region42: #{tpu_custom_call.1} parent=1 // pred_check
      _
    $region43: #{tpu_custom_call.1} parent=1 // pred_check_branch
      %7243 = sbr.rel (0) target = $region45
    $region44: #{tpu_custom_call.1} parent=1 // pred_region
      %7244 = dma.done [#allocation4], 256
    $region45: #{tpu_custom_call.1} parent=1 // pred_fallthru
      _
    %7245 = vsyncpa [#allocation3], 1
    %7246 = vsyncpa [#allocation4], 1

</llo_original>
